<compile_context>
chip_gen: v7x
topology: tpu7x:2x2x1
jax: 0.10.0
libtpu: 0.0.40
codegen_flags: <defaults>
</compile_context>

<pallas_src>
import functools
import numpy as np
import jax
import jax.numpy as jnp
from jax.experimental import pallas as pl
from jax.experimental.pallas import tpu as pltpu

BN_EPS = 1e-5


def _make_divisible(v, divisor, min_value=None):
    if min_value is None:
        min_value = divisor
    new_v = max(min_value, int(v + divisor / 2) // divisor * divisor)
    if new_v < 0.9 * v:
        new_v += divisor
    return new_v


# ----------------- trace-time constants (numpy, passed as operands) ----------

def _bilinear_matrix(n_in, n_out):
    # align_corners=True interpolation (== nn.UpsamplingBilinear2d).
    m = np.zeros((n_out, n_in), np.float32)
    if n_in == 1:
        m[:, 0] = 1.0
        return m
    for i in range(n_out):
        src = i * (n_in - 1) / (n_out - 1)
        i0 = int(np.floor(src))
        i1 = min(i0 + 1, n_in - 1)
        w1 = src - i0
        m[i, i0] += 1.0 - w1
        m[i, i1] += w1
    return m


def _upsample_matrix_t(H, W):
    # (H*W, 4*H*W):  out_flat = y_flat @ U_T  == bilinear x2 (align_corners).
    uh = _bilinear_matrix(H, 2 * H)
    uw = _bilinear_matrix(W, 2 * W)
    return np.ascontiguousarray(np.kron(uh, uw).T.astype(np.float32))


def _tap_masks(H, W):
    # (9, 1, H*W) 0/1 masks: tap t = ky*3+kx (dy=ky-1, dx=kx-1) is valid at
    # output pixel p=(h,w) iff (h+dy, w+dx) lies inside the image.
    hw = H * W
    hh, ww = np.divmod(np.arange(hw), W)
    m = np.zeros((9, 1, hw), np.float32)
    for ky in range(3):
        for kx in range(3):
            dy, dx = ky - 1, kx - 1
            valid = ((hh + dy >= 0) & (hh + dy < H) &
                     (ww + dx >= 0) & (ww + dx < W))
            m[ky * 3 + kx, 0] = valid.astype(np.float32)
    return m


# --------------------------------- kernel ------------------------------------

def _prelu(y, alpha):
    return jnp.where(y > 0, y, alpha * y)


def _shift_pixels(y, d, hw):
    # out[:, p] = y[:, (p + d) % hw]; wrapped lanes are zeroed by the caller's
    # boundary mask, so a circular shift is sufficient.
    d = d % hw
    if d == 0:
        return y
    return jnp.concatenate([y[:, d:], y[:, :d]], axis=1)


def _conv3x3(y1, w2_ref, b2_ref, a2_ref, m_ref, H, W):
    """3x3 conv (pad=1) + folded BN/bias + PReLU on a (mid, H*W) slab.

    Shifts + masks replace the old dense (HW,HW) permutation matmuls; the nine
    shifted slabs are stacked along K and contracted in one MXU matmul.
    """
    hw = H * W
    taps = []
    for ky in range(3):
        for kx in range(3):
            dy, dx = ky - 1, kx - 1
            if dy == 0 and dx == 0:
                taps.append(y1)
            else:
                t = _shift_pixels(y1, dy * W + dx, hw)
                taps.append(t * m_ref[ky * 3 + kx])          # (1,HW) bcast mask
    stacked = jnp.concatenate(taps, axis=0).astype(jnp.bfloat16)  # (9*mid, HW)
    y2 = jnp.dot(w2_ref[...], stacked, preferred_element_type=jnp.float32)
    return _prelu(y2 + b2_ref[...], a2_ref[...])              # (out, HW) f32


def _skhead_kernel(x0_ref, x_ref, x1_ref, x2_ref,
                   w1s0, w1x0, b10, a10, w20, b20, a20, m0,
                   w1s1, w1x1, b11, a11, w21, b21, a21, m1, u0,
                   w1s2, w1x2, b12, a12, w22, b22, a22, m2, u1,
                   wf, bf, u2,
                   o_ref, *, dims):
    (H0, W0, H1, W1, H2, W2) = dims
    f32, bf16 = jnp.float32, jnp.bfloat16

    # ---- stage 0: Conv1x1(cat[x0, x]) -> BN -> PReLU -> Conv3x3 -> BN -> PReLU
    y1 = jnp.dot(w1s0[...], x0_ref[0], preferred_element_type=f32)
    y1 = y1 + jnp.dot(w1x0[...], x_ref[0], preferred_element_type=f32)
    y1 = _prelu(y1 + b10[...], a10[...])
    y2 = _conv3x3(y1, w20, b20, a20, m0, H0, W0)             # (256, HW0) f32

    # ---- stage 1: the carry-path 1x1 conv and the bilinear x2 commute, so
    #      project the carry at LOW resolution (256->mid1) and then upsample.
    c = jnp.dot(w1x1[...], y2.astype(bf16), preferred_element_type=f32)
    c = jnp.dot(c.astype(bf16), u0[...], preferred_element_type=f32)  # (mid1,HW1)
    y1 = jnp.dot(w1s1[...], x1_ref[0], preferred_element_type=f32) + c
    y1 = _prelu(y1 + b11[...], a11[...])
    y2 = _conv3x3(y1, w21, b21, a21, m1, H1, W1)             # (256, HW1) f32

    # ---- stage 2
    c = jnp.dot(w1x2[...], y2.astype(bf16), preferred_element_type=f32)
    c = jnp.dot(c.astype(bf16), u1[...], preferred_element_type=f32)  # (mid2,HW2)
    y1 = jnp.dot(w1s2[...], x2_ref[0], preferred_element_type=f32) + c
    y1 = _prelu(y1 + b12[...], a12[...])
    y2 = _conv3x3(y1, w22, b22, a22, m2, H2, W2)             # (256, HW2) f32

    # ---- final_layer o final_layer2 pre-fused to one (nk_pad x 256) linear.
    #      Project first (nk_pad rows), then bilinear x2, then bias.
    proj = jnp.dot(wf[...], y2.astype(bf16), preferred_element_type=f32)
    out = jnp.dot(proj.astype(bf16), u2[...], preferred_element_type=f32)
    o_ref[0] = out + bf[...]


# ------------------------------ wrapper / glue --------------------------------

def fold_bn(bn):
    scale = bn["gamma"] * jax.lax.rsqrt(bn["var"] + BN_EPS)
    shift = bn["beta"] - bn["mean"] * scale
    return scale, shift


def _fold_stage(p, n_skip):
    """Fold eval-mode BN + conv biases; return MXU-ready operands."""
    mid = p["w1"].shape[1]
    out_ch = p["w2"].shape[-1]
    s1, sh1 = fold_bn(p["bn1"])
    w1 = (p["w1"] * s1[None, :]).T                      # (mid, Cs+Ccarry), concat order
    w1s, w1x = w1[:, :n_skip], w1[:, n_skip:]
    b1 = (p["b1"] * s1 + sh1).reshape(mid, 1)
    a1 = p["alpha1"].reshape(mid, 1)
    s2, sh2 = fold_bn(p["bn2"])
    w2 = (p["w2"] * s2).reshape(9, mid, out_ch)         # HWIO taps, BN folded
    w2 = jnp.transpose(w2, (2, 0, 1)).reshape(out_ch, 9 * mid)   # (out, 9*mid)
    b2 = (p["b2"] * s2 + sh2).reshape(out_ch, 1)
    a2 = p["alpha2"].reshape(out_ch, 1)
    return w1s, w1x, b1, a1, w2, b2, a2


def skhead_apply(params, x0, x1, x2, x):
    B, Cx, H0, W0 = x.shape
    Cs0, Cs1, Cs2 = x0.shape[1], x1.shape[1], x2.shape[1]
    H1, W1 = x1.shape[2], x1.shape[3]
    H2, W2 = x2.shape[2], x2.shape[3]
    assert (H1, W1) == (2 * H0, 2 * W0) and (H2, W2) == (2 * H1, 2 * W1)
    HW0, HW1, HW2 = H0 * W0, H1 * W1, H2 * W2
    HWo = 4 * HW2
    f32, bf16 = jnp.float32, jnp.bfloat16

    # Pre-fuse final_layer o final_layer2 (two pure linear 1x1 convs) and pad
    # the keypoint channel dim to a sublane multiple.
    nk = params["final2_w"].shape[-1]
    nk_pad = -(-nk // 8) * 8
    wf = (params["final_w"] @ params["final2_w"]).T                      # (nk, 256)
    bf_ = (params["final_b"] @ params["final2_w"]
           + params["final2_b"]).reshape(nk, 1)
    wf = jnp.pad(wf, ((0, nk_pad - nk), (0, 0)))
    bf_ = jnp.pad(bf_, ((0, nk_pad - nk), (0, 0)))

    operands, in_specs = [], []

    def add(arr, dt, spec=None):
        arr = jnp.asarray(arr, dt)
        operands.append(arr)
        if spec is None:
            spec = pl.BlockSpec(arr.shape, lambda b, _r=arr.ndim: (0,) * _r)
        in_specs.append(spec)

    def cm(t):  # NCHW -> (B, C, H*W) bf16 (free reshape, no transpose)
        t = jnp.asarray(t)
        return t.reshape(t.shape[0], t.shape[1], -1).astype(bf16)

    def batched(arr, C, HW):
        add(arr, bf16, pl.BlockSpec((1, C, HW), lambda b: (b, 0, 0)))

    batched(cm(x0), Cs0, HW0)
    batched(cm(x), Cx, HW0)
    batched(cm(x1), Cs1, HW1)
    batched(cm(x2), Cs2, HW2)

    def add_stage(key, n_skip, H, W, up_src=None):
        w1s, w1x, b1, a1, w2f, b2, a2 = _fold_stage(params[key], n_skip)
        add(w1s, bf16); add(w1x, bf16); add(b1, f32); add(a1, f32)
        add(w2f, bf16); add(b2, f32); add(a2, f32)
        add(_tap_masks(H, W), f32)
        if up_src is not None:
            add(_upsample_matrix_t(*up_src), bf16)

    add_stage("deconv0", Cs0, H0, W0)
    add_stage("deconv1", Cs1, H1, W1, up_src=(H0, W0))
    add_stage("deconv2", Cs2, H2, W2, up_src=(H1, W1))
    add(wf, bf16); add(bf_, f32); add(_upsample_matrix_t(H2, W2), bf16)

    kernel = functools.partial(_skhead_kernel, dims=(H0, W0, H1, W1, H2, W2))
    out = pl.pallas_call(
        kernel,
        out_shape=jax.ShapeDtypeStruct((B, nk_pad, HWo), f32),
        grid=(B,),
        in_specs=in_specs,
        out_specs=pl.BlockSpec((1, nk_pad, HWo), lambda b: (b, 0, 0)),
        compiler_params=pltpu.CompilerParams(
            dimension_semantics=("parallel",)),
    )(*operands)

    return out[:, :nk, :].reshape(B, nk, 2 * H2, 2 * W2)


# --------------------------- parameter construction --------------------------

def _init_deconv(key, in_ch, mid_ch, out_ch):
    k = jax.random.split(key, 8)

    def n(kk, shape, s=0.05):
        return s * jax.random.normal(kk, shape, jnp.float32)

    return {
        # 1x1 conv over the channel concat; rows follow torch.cat([skip, carry]).
        "w1": n(k[0], (mid_ch + in_ch, mid_ch)),
        "b1": n(k[1], (mid_ch,)),
        "bn1": {"gamma": 1.0 + n(k[2], (mid_ch,)),
                "beta": n(k[3], (mid_ch,)),
                "mean": 0.5 * n(k[3], (mid_ch,)),
                "var": jnp.abs(1.0 + n(k[2], (mid_ch,)))},
        "alpha1": jnp.full((mid_ch,), 0.25, jnp.float32),
        # 3x3 conv weight in HWIO layout (taps row-major over ky, kx).
        "w2": n(k[4], (3, 3, mid_ch, out_ch)),
        "b2": n(k[5], (out_ch,)),
        "bn2": {"gamma": 1.0 + n(k[6], (out_ch,)),
                "beta": n(k[7], (out_ch,)),
                "mean": 0.5 * n(k[7], (out_ch,)),
                "var": jnp.abs(1.0 + n(k[6], (out_ch,)))},
        "alpha2": jnp.full((out_ch,), 0.25, jnp.float32),
    }


if __name__ == "__main__":
    # "args" of the PyTorch module (small, deterministic, synthetic).
    embedding_size = 32
    width_mult = 0.5
    round_nearest = 8
    num_keypoints = 2
    mid0 = _make_divisible(96 * width_mult, round_nearest)   # 48
    mid1 = _make_divisible(64 * width_mult, round_nearest)   # 32
    mid2 = _make_divisible(48 * width_mult, round_nearest)   # 24

    key = jax.random.PRNGKey(0)
    kp, kx = jax.random.split(key)
    kd0, kd1, kd2, kf1, kf2 = jax.random.split(kp, 5)
    params = {
        "deconv0": _init_deconv(kd0, embedding_size, mid0, 256),
        "deconv1": _init_deconv(kd1, 256, mid1, 256),
        "deconv2": _init_deconv(kd2, 256, mid2, 256),
        "final_w": 0.001 * jax.random.normal(
            kf1, (256, num_keypoints * 32), jnp.float32),
        "final_b": jnp.zeros((num_keypoints * 32,), jnp.float32),
        "final2_w": 0.02 * jax.random.normal(
            kf2, (num_keypoints * 32, num_keypoints), jnp.float32),
        "final2_b": 0.01 * jnp.ones((num_keypoints,), jnp.float32),
    }

    B, S = 2, 4   # base spatial; output spatial = 8*S
    k0, k1, k2, k3 = jax.random.split(kx, 4)
    x = jax.random.normal(k0, (B, embedding_size, S, S), jnp.float32)   # NCHW
    x0 = jax.random.normal(k1, (B, mid0, S, S), jnp.float32)
    x1 = jax.random.normal(k2, (B, mid1, 2 * S, 2 * S), jnp.float32)
    x2 = jax.random.normal(k3, (B, mid2, 4 * S, 4 * S), jnp.float32)

    out = jax.jit(skhead_apply)(params, x0, x1, x2, x)
    out = jax.block_until_ready(out)

    assert out.shape == (B, num_keypoints, 8 * S, 8 * S), out.shape
    assert bool(jnp.all(jnp.isfinite(out)))
    print("KERNEL_OK")
</pallas_src>

<mosaic_0001>
module attributes {stable_mosaic.version = 11 : i64} {
  func.func @_skhead_kernel(%arg0: i32, %arg1: memref<1x48x16xbf16, #tpu.memory_space<vmem>>, %arg2: memref<1x32x16xbf16, #tpu.memory_space<vmem>>, %arg3: memref<1x32x64xbf16, #tpu.memory_space<vmem>>, %arg4: memref<1x24x256xbf16, #tpu.memory_space<vmem>>, %arg5: memref<48x48xbf16, #tpu.memory_space<vmem>>, %arg6: memref<48x32xbf16, #tpu.memory_space<vmem>>, %arg7: memref<48x1xf32, #tpu.memory_space<vmem>>, %arg8: memref<48x1xf32, #tpu.memory_space<vmem>>, %arg9: memref<256x432xbf16, #tpu.memory_space<vmem>>, %arg10: memref<256x1xf32, #tpu.memory_space<vmem>>, %arg11: memref<256x1xf32, #tpu.memory_space<vmem>>, %arg12: memref<9x1x16xf32, #tpu.memory_space<vmem>>, %arg13: memref<32x32xbf16, #tpu.memory_space<vmem>>, %arg14: memref<32x256xbf16, #tpu.memory_space<vmem>>, %arg15: memref<32x1xf32, #tpu.memory_space<vmem>>, %arg16: memref<32x1xf32, #tpu.memory_space<vmem>>, %arg17: memref<256x288xbf16, #tpu.memory_space<vmem>>, %arg18: memref<256x1xf32, #tpu.memory_space<vmem>>, %arg19: memref<256x1xf32, #tpu.memory_space<vmem>>, %arg20: memref<9x1x64xf32, #tpu.memory_space<vmem>>, %arg21: memref<16x64xbf16, #tpu.memory_space<vmem>>, %arg22: memref<24x24xbf16, #tpu.memory_space<vmem>>, %arg23: memref<24x256xbf16, #tpu.memory_space<vmem>>, %arg24: memref<24x1xf32, #tpu.memory_space<vmem>>, %arg25: memref<24x1xf32, #tpu.memory_space<vmem>>, %arg26: memref<256x216xbf16, #tpu.memory_space<vmem>>, %arg27: memref<256x1xf32, #tpu.memory_space<vmem>>, %arg28: memref<256x1xf32, #tpu.memory_space<vmem>>, %arg29: memref<9x1x256xf32, #tpu.memory_space<vmem>>, %arg30: memref<64x256xbf16, #tpu.memory_space<vmem>>, %arg31: memref<8x256xbf16, #tpu.memory_space<vmem>>, %arg32: memref<8x1xf32, #tpu.memory_space<vmem>>, %arg33: memref<256x1024xbf16, #tpu.memory_space<vmem>>, %arg34: memref<1x8x1024xf32, #tpu.memory_space<vmem>>) attributes {dimension_semantics = [#tpu.dimension_semantics<parallel>], iteration_bounds = array<i64: 2>, scalar_prefetch = 0 : i64, scratch_operands = 0 : i64, tpu.core_type = #tpu.core_type<tc>, window_params = [{transform_indices = @transform_0, window_bounds = array<i64: 1, 48, 16>}, {transform_indices = @transform_1, window_bounds = array<i64: 1, 32, 16>}, {transform_indices = @transform_2, window_bounds = array<i64: 1, 32, 64>}, {transform_indices = @transform_3, window_bounds = array<i64: 1, 24, 256>}, {pipeline_mode = #tpu.pipeline_mode<synchronous>, transform_indices = @transform_4, window_bounds = array<i64: 48, 48>}, {pipeline_mode = #tpu.pipeline_mode<synchronous>, transform_indices = @transform_5, window_bounds = array<i64: 48, 32>}, {pipeline_mode = #tpu.pipeline_mode<synchronous>, transform_indices = @transform_6, window_bounds = array<i64: 48, 1>}, {pipeline_mode = #tpu.pipeline_mode<synchronous>, transform_indices = @transform_7, window_bounds = array<i64: 48, 1>}, {pipeline_mode = #tpu.pipeline_mode<synchronous>, transform_indices = @transform_8, window_bounds = array<i64: 256, 432>}, {pipeline_mode = #tpu.pipeline_mode<synchronous>, transform_indices = @transform_9, window_bounds = array<i64: 256, 1>}, {pipeline_mode = #tpu.pipeline_mode<synchronous>, transform_indices = @transform_10, window_bounds = array<i64: 256, 1>}, {pipeline_mode = #tpu.pipeline_mode<synchronous>, transform_indices = @transform_11, window_bounds = array<i64: 9, 1, 16>}, {pipeline_mode = #tpu.pipeline_mode<synchronous>, transform_indices = @transform_12, window_bounds = array<i64: 32, 32>}, {pipeline_mode = #tpu.pipeline_mode<synchronous>, transform_indices = @transform_13, window_bounds = array<i64: 32, 256>}, {pipeline_mode = #tpu.pipeline_mode<synchronous>, transform_indices = @transform_14, window_bounds = array<i64: 32, 1>}, {pipeline_mode = #tpu.pipeline_mode<synchronous>, transform_indices = @transform_15, window_bounds = array<i64: 32, 1>}, {pipeline_mode = #tpu.pipeline_mode<synchronous>, transform_indices = @transform_16, window_bounds = array<i64: 256, 288>}, {pipeline_mode = #tpu.pipeline_mode<synchronous>, transform_indices = @transform_17, window_bounds = array<i64: 256, 1>}, {pipeline_mode = #tpu.pipeline_mode<synchronous>, transform_indices = @transform_18, window_bounds = array<i64: 256, 1>}, {pipeline_mode = #tpu.pipeline_mode<synchronous>, transform_indices = @transform_19, window_bounds = array<i64: 9, 1, 64>}, {pipeline_mode = #tpu.pipeline_mode<synchronous>, transform_indices = @transform_20, window_bounds = array<i64: 16, 64>}, {pipeline_mode = #tpu.pipeline_mode<synchronous>, transform_indices = @transform_21, window_bounds = array<i64: 24, 24>}, {pipeline_mode = #tpu.pipeline_mode<synchronous>, transform_indices = @transform_22, window_bounds = array<i64: 24, 256>}, {pipeline_mode = #tpu.pipeline_mode<synchronous>, transform_indices = @transform_23, window_bounds = array<i64: 24, 1>}, {pipeline_mode = #tpu.pipeline_mode<synchronous>, transform_indices = @transform_24, window_bounds = array<i64: 24, 1>}, {pipeline_mode = #tpu.pipeline_mode<synchronous>, transform_indices = @transform_25, window_bounds = array<i64: 256, 216>}, {pipeline_mode = #tpu.pipeline_mode<synchronous>, transform_indices = @transform_26, window_bounds = array<i64: 256, 1>}, {pipeline_mode = #tpu.pipeline_mode<synchronous>, transform_indices = @transform_27, window_bounds = array<i64: 256, 1>}, {pipeline_mode = #tpu.pipeline_mode<synchronous>, transform_indices = @transform_28, window_bounds = array<i64: 9, 1, 256>}, {pipeline_mode = #tpu.pipeline_mode<synchronous>, transform_indices = @transform_29, window_bounds = array<i64: 64, 256>}, {pipeline_mode = #tpu.pipeline_mode<synchronous>, transform_indices = @transform_30, window_bounds = array<i64: 8, 256>}, {pipeline_mode = #tpu.pipeline_mode<synchronous>, transform_indices = @transform_31, window_bounds = array<i64: 8, 1>}, {pipeline_mode = #tpu.pipeline_mode<synchronous>, transform_indices = @transform_32, window_bounds = array<i64: 256, 1024>}, {transform_indices = @transform_33, window_bounds = array<i64: 1, 8, 1024>}]} {
    %c0 = arith.constant 0 : index
    %c0_0 = arith.constant 0 : index
    %0 = vector.load %arg5[%c0, %c0_0] : memref<48x48xbf16, #tpu.memory_space<vmem>>, vector<48x48xbf16>
    %c0_1 = arith.constant 0 : index
    %c0_2 = arith.constant 0 : index
    %c0_3 = arith.constant 0 : index
    %1 = vector.load %arg1[%c0_1, %c0_2, %c0_3] : memref<1x48x16xbf16, #tpu.memory_space<vmem>>, vector<1x48x16xbf16>
    %2 = vector.shape_cast %1 : vector<1x48x16xbf16> to vector<48x16xbf16>
    %cst = arith.constant dense<0.000000e+00> : vector<48x16xf32>
    %3 = tpu.matmul %0, %2, %cst {dimension_numbers = #tpu.dot_dimension_numbers<[1], [0], [0], [1], [0, 0, 1, 1], [], []>} : vector<48x48xbf16>, vector<48x16xbf16>, vector<48x16xf32> -> vector<48x16xf32>
    %c0_4 = arith.constant 0 : index
    %c0_5 = arith.constant 0 : index
    %4 = vector.load %arg6[%c0_4, %c0_5] : memref<48x32xbf16, #tpu.memory_space<vmem>>, vector<48x32xbf16>
    %c0_6 = arith.constant 0 : index
    %c0_7 = arith.constant 0 : index
    %c0_8 = arith.constant 0 : index
    %5 = vector.load %arg2[%c0_6, %c0_7, %c0_8] : memref<1x32x16xbf16, #tpu.memory_space<vmem>>, vector<1x32x16xbf16>
    %6 = vector.shape_cast %5 : vector<1x32x16xbf16> to vector<32x16xbf16>
    %cst_9 = arith.constant dense<0.000000e+00> : vector<48x16xf32>
    %7 = tpu.matmul %4, %6, %cst_9 {dimension_numbers = #tpu.dot_dimension_numbers<[1], [0], [0], [1], [0, 0, 1, 1], [], []>} : vector<48x32xbf16>, vector<32x16xbf16>, vector<48x16xf32> -> vector<48x16xf32>
    %8 = arith.addf %3, %7 : vector<48x16xf32>
    %c0_10 = arith.constant 0 : index
    %c0_11 = arith.constant 0 : index
    %9 = vector.load %arg7[%c0_10, %c0_11] : memref<48x1xf32, #tpu.memory_space<vmem>>, vector<48x1xf32>
    %10 = vector.broadcast %9 : vector<48x1xf32> to vector<48x16xf32>
    %11 = arith.addf %8, %10 : vector<48x16xf32>
    %c0_12 = arith.constant 0 : index
    %c0_13 = arith.constant 0 : index
    %12 = vector.load %arg8[%c0_12, %c0_13] : memref<48x1xf32, #tpu.memory_space<vmem>>, vector<48x1xf32>
    %cst_14 = arith.constant 0.000000e+00 : f32
    %13 = vector.broadcast %cst_14 : f32 to vector<48x16xf32>
    %14 = arith.cmpf ogt, %11, %13 : vector<48x16xf32>
    %15 = vector.broadcast %12 : vector<48x1xf32> to vector<48x16xf32>
    %16 = arith.mulf %15, %11 : vector<48x16xf32>
    %17 = arith.select %14, %11, %16 : vector<48x16xi1>, vector<48x16xf32>
    %18 = vector.extract_strided_slice %17 {offsets = [0, 11], sizes = [48, 5], strides = [1, 1]} : vector<48x16xf32> to vector<48x5xf32>
    %19 = vector.extract_strided_slice %17 {offsets = [0, 0], sizes = [48, 11], strides = [1, 1]} : vector<48x16xf32> to vector<48x11xf32>
    %20 = tpu.concatenate %18, %19 in 1 : vector<48x5xf32>, vector<48x11xf32> -> vector<48x16xf32>
    %c0_15 = arith.constant 0 : index
    %c0_16 = arith.constant 0 : index
    %c0_17 = arith.constant 0 : index
    %21 = vector.load %arg12[%c0_15, %c0_16, %c0_17] : memref<9x1x16xf32, #tpu.memory_space<vmem>>, vector<1x1x16xf32>
    %22 = vector.shape_cast %21 : vector<1x1x16xf32> to vector<1x16xf32>
    %23 = vector.broadcast %22 : vector<1x16xf32> to vector<48x16xf32>
    %24 = arith.mulf %20, %23 : vector<48x16xf32>
    %25 = vector.extract_strided_slice %17 {offsets = [0, 12], sizes = [48, 4], strides = [1, 1]} : vector<48x16xf32> to vector<48x4xf32>
    %26 = vector.extract_strided_slice %17 {offsets = [0, 0], sizes = [48, 12], strides = [1, 1]} : vector<48x16xf32> to vector<48x12xf32>
    %27 = tpu.concatenate %25, %26 in 1 : vector<48x4xf32>, vector<48x12xf32> -> vector<48x16xf32>
    %c1 = arith.constant 1 : index
    %c0_18 = arith.constant 0 : index
    %c0_19 = arith.constant 0 : index
    %28 = vector.load %arg12[%c1, %c0_18, %c0_19] : memref<9x1x16xf32, #tpu.memory_space<vmem>>, vector<1x1x16xf32>
    %29 = vector.shape_cast %28 : vector<1x1x16xf32> to vector<1x16xf32>
    %30 = vector.broadcast %29 : vector<1x16xf32> to vector<48x16xf32>
    %31 = arith.mulf %27, %30 : vector<48x16xf32>
    %32 = vector.extract_strided_slice %17 {offsets = [0, 13], sizes = [48, 3], strides = [1, 1]} : vector<48x16xf32> to vector<48x3xf32>
    %33 = vector.extract_strided_slice %17 {offsets = [0, 0], sizes = [48, 13], strides = [1, 1]} : vector<48x16xf32> to vector<48x13xf32>
    %34 = tpu.concatenate %32, %33 in 1 : vector<48x3xf32>, vector<48x13xf32> -> vector<48x16xf32>
    %c2 = arith.constant 2 : index
    %c0_20 = arith.constant 0 : index
    %c0_21 = arith.constant 0 : index
    %35 = vector.load %arg12[%c2, %c0_20, %c0_21] : memref<9x1x16xf32, #tpu.memory_space<vmem>>, vector<1x1x16xf32>
    %36 = vector.shape_cast %35 : vector<1x1x16xf32> to vector<1x16xf32>
    %37 = vector.broadcast %36 : vector<1x16xf32> to vector<48x16xf32>
    %38 = arith.mulf %34, %37 : vector<48x16xf32>
    %39 = vector.extract_strided_slice %17 {offsets = [0, 15], sizes = [48, 1], strides = [1, 1]} : vector<48x16xf32> to vector<48x1xf32>
    %40 = vector.extract_strided_slice %17 {offsets = [0, 0], sizes = [48, 15], strides = [1, 1]} : vector<48x16xf32> to vector<48x15xf32>
    %41 = tpu.concatenate %39, %40 in 1 : vector<48x1xf32>, vector<48x15xf32> -> vector<48x16xf32>
    %c3 = arith.constant 3 : index
    %c0_22 = arith.constant 0 : index
    %c0_23 = arith.constant 0 : index
    %42 = vector.load %arg12[%c3, %c0_22, %c0_23] : memref<9x1x16xf32, #tpu.memory_space<vmem>>, vector<1x1x16xf32>
    %43 = vector.shape_cast %42 : vector<1x1x16xf32> to vector<1x16xf32>
    %44 = vector.broadcast %43 : vector<1x16xf32> to vector<48x16xf32>
    %45 = arith.mulf %41, %44 : vector<48x16xf32>
    %46 = vector.extract_strided_slice %17 {offsets = [0, 1], sizes = [48, 15], strides = [1, 1]} : vector<48x16xf32> to vector<48x15xf32>
    %47 = vector.extract_strided_slice %17 {offsets = [0, 0], sizes = [48, 1], strides = [1, 1]} : vector<48x16xf32> to vector<48x1xf32>
    %48 = tpu.concatenate %46, %47 in 1 : vector<48x15xf32>, vector<48x1xf32> -> vector<48x16xf32>
    %c5 = arith.constant 5 : index
    %c0_24 = arith.constant 0 : index
    %c0_25 = arith.constant 0 : index
    %49 = vector.load %arg12[%c5, %c0_24, %c0_25] : memref<9x1x16xf32, #tpu.memory_space<vmem>>, vector<1x1x16xf32>
    %50 = vector.shape_cast %49 : vector<1x1x16xf32> to vector<1x16xf32>
    %51 = vector.broadcast %50 : vector<1x16xf32> to vector<48x16xf32>
    %52 = arith.mulf %48, %51 : vector<48x16xf32>
    %53 = vector.extract_strided_slice %17 {offsets = [0, 3], sizes = [48, 13], strides = [1, 1]} : vector<48x16xf32> to vector<48x13xf32>
    %54 = vector.extract_strided_slice %17 {offsets = [0, 0], sizes = [48, 3], strides = [1, 1]} : vector<48x16xf32> to vector<48x3xf32>
    %55 = tpu.concatenate %53, %54 in 1 : vector<48x13xf32>, vector<48x3xf32> -> vector<48x16xf32>
    %c6 = arith.constant 6 : index
    %c0_26 = arith.constant 0 : index
    %c0_27 = arith.constant 0 : index
    %56 = vector.load %arg12[%c6, %c0_26, %c0_27] : memref<9x1x16xf32, #tpu.memory_space<vmem>>, vector<1x1x16xf32>
    %57 = vector.shape_cast %56 : vector<1x1x16xf32> to vector<1x16xf32>
    %58 = vector.broadcast %57 : vector<1x16xf32> to vector<48x16xf32>
    %59 = arith.mulf %55, %58 : vector<48x16xf32>
    %60 = vector.extract_strided_slice %17 {offsets = [0, 4], sizes = [48, 12], strides = [1, 1]} : vector<48x16xf32> to vector<48x12xf32>
    %61 = vector.extract_strided_slice %17 {offsets = [0, 0], sizes = [48, 4], strides = [1, 1]} : vector<48x16xf32> to vector<48x4xf32>
    %62 = tpu.concatenate %60, %61 in 1 : vector<48x12xf32>, vector<48x4xf32> -> vector<48x16xf32>
    %c7 = arith.constant 7 : index
    %c0_28 = arith.constant 0 : index
    %c0_29 = arith.constant 0 : index
    %63 = vector.load %arg12[%c7, %c0_28, %c0_29] : memref<9x1x16xf32, #tpu.memory_space<vmem>>, vector<1x1x16xf32>
    %64 = vector.shape_cast %63 : vector<1x1x16xf32> to vector<1x16xf32>
    %65 = vector.broadcast %64 : vector<1x16xf32> to vector<48x16xf32>
    %66 = arith.mulf %62, %65 : vector<48x16xf32>
    %67 = vector.extract_strided_slice %17 {offsets = [0, 5], sizes = [48, 11], strides = [1, 1]} : vector<48x16xf32> to vector<48x11xf32>
    %68 = vector.extract_strided_slice %17 {offsets = [0, 0], sizes = [48, 5], strides = [1, 1]} : vector<48x16xf32> to vector<48x5xf32>
    %69 = tpu.concatenate %67, %68 in 1 : vector<48x11xf32>, vector<48x5xf32> -> vector<48x16xf32>
    %c8 = arith.constant 8 : index
    %c0_30 = arith.constant 0 : index
    %c0_31 = arith.constant 0 : index
    %70 = vector.load %arg12[%c8, %c0_30, %c0_31] : memref<9x1x16xf32, #tpu.memory_space<vmem>>, vector<1x1x16xf32>
    %71 = vector.shape_cast %70 : vector<1x1x16xf32> to vector<1x16xf32>
    %72 = vector.broadcast %71 : vector<1x16xf32> to vector<48x16xf32>
    %73 = arith.mulf %69, %72 : vector<48x16xf32>
    %74 = tpu.concatenate %24, %31, %38, %45, %17, %52, %59, %66, %73 in 0 : vector<48x16xf32>, vector<48x16xf32>, vector<48x16xf32>, vector<48x16xf32>, vector<48x16xf32>, vector<48x16xf32>, vector<48x16xf32>, vector<48x16xf32>, vector<48x16xf32> -> vector<432x16xf32>
    %75 = arith.truncf %74 : vector<432x16xf32> to vector<432x16xbf16>
    %c0_32 = arith.constant 0 : index
    %c0_33 = arith.constant 0 : index
    %76 = vector.load %arg9[%c0_32, %c0_33] : memref<256x432xbf16, #tpu.memory_space<vmem>>, vector<256x432xbf16>
    %cst_34 = arith.constant dense<0.000000e+00> : vector<256x16xf32>
    %77 = tpu.matmul %76, %75, %cst_34 {dimension_numbers = #tpu.dot_dimension_numbers<[1], [0], [0], [1], [0, 0, 1, 1], [], []>} : vector<256x432xbf16>, vector<432x16xbf16>, vector<256x16xf32> -> vector<256x16xf32>
    %c0_35 = arith.constant 0 : index
    %c0_36 = arith.constant 0 : index
    %78 = vector.load %arg10[%c0_35, %c0_36] : memref<256x1xf32, #tpu.memory_space<vmem>>, vector<256x1xf32>
    %79 = vector.broadcast %78 : vector<256x1xf32> to vector<256x16xf32>
    %80 = arith.addf %77, %79 : vector<256x16xf32>
    %c0_37 = arith.constant 0 : index
    %c0_38 = arith.constant 0 : index
    %81 = vector.load %arg11[%c0_37, %c0_38] : memref<256x1xf32, #tpu.memory_space<vmem>>, vector<256x1xf32>
    %cst_39 = arith.constant 0.000000e+00 : f32
    %82 = vector.broadcast %cst_39 : f32 to vector<256x16xf32>
    %83 = arith.cmpf ogt, %80, %82 : vector<256x16xf32>
    %84 = vector.broadcast %81 : vector<256x1xf32> to vector<256x16xf32>
    %85 = arith.mulf %84, %80 : vector<256x16xf32>
    %86 = arith.select %83, %80, %85 : vector<256x16xi1>, vector<256x16xf32>
    %c0_40 = arith.constant 0 : index
    %c0_41 = arith.constant 0 : index
    %87 = vector.load %arg14[%c0_40, %c0_41] : memref<32x256xbf16, #tpu.memory_space<vmem>>, vector<32x256xbf16>
    %88 = arith.truncf %86 : vector<256x16xf32> to vector<256x16xbf16>
    %cst_42 = arith.constant dense<0.000000e+00> : vector<32x16xf32>
    %89 = tpu.matmul %87, %88, %cst_42 {dimension_numbers = #tpu.dot_dimension_numbers<[1], [0], [0], [1], [0, 0, 1, 1], [], []>} : vector<32x256xbf16>, vector<256x16xbf16>, vector<32x16xf32> -> vector<32x16xf32>
    %90 = arith.truncf %89 : vector<32x16xf32> to vector<32x16xbf16>
    %c0_43 = arith.constant 0 : index
    %c0_44 = arith.constant 0 : index
    %91 = vector.load %arg21[%c0_43, %c0_44] : memref<16x64xbf16, #tpu.memory_space<vmem>>, vector<16x64xbf16>
    %cst_45 = arith.constant dense<0.000000e+00> : vector<32x64xf32>
    %92 = tpu.matmul %90, %91, %cst_45 {dimension_numbers = #tpu.dot_dimension_numbers<[1], [0], [0], [1], [0, 0, 1, 1], [], []>} : vector<32x16xbf16>, vector<16x64xbf16>, vector<32x64xf32> -> vector<32x64xf32>
    %c0_46 = arith.constant 0 : index
    %c0_47 = arith.constant 0 : index
    %93 = vector.load %arg13[%c0_46, %c0_47] : memref<32x32xbf16, #tpu.memory_space<vmem>>, vector<32x32xbf16>
    %c0_48 = arith.constant 0 : index
    %c0_49 = arith.constant 0 : index
    %c0_50 = arith.constant 0 : index
    %94 = vector.load %arg3[%c0_48, %c0_49, %c0_50] : memref<1x32x64xbf16, #tpu.memory_space<vmem>>, vector<1x32x64xbf16>
    %95 = vector.shape_cast %94 : vector<1x32x64xbf16> to vector<32x64xbf16>
    %cst_51 = arith.constant dense<0.000000e+00> : vector<32x64xf32>
    %96 = tpu.matmul %93, %95, %cst_51 {dimension_numbers = #tpu.dot_dimension_numbers<[1], [0], [0], [1], [0, 0, 1, 1], [], []>} : vector<32x32xbf16>, vector<32x64xbf16>, vector<32x64xf32> -> vector<32x64xf32>
    %97 = arith.addf %96, %92 : vector<32x64xf32>
    %c0_52 = arith.constant 0 : index
    %c0_53 = arith.constant 0 : index
    %98 = vector.load %arg15[%c0_52, %c0_53] : memref<32x1xf32, #tpu.memory_space<vmem>>, vector<32x1xf32>
    %99 = vector.broadcast %98 : vector<32x1xf32> to vector<32x64xf32>
    %100 = arith.addf %97, %99 : vector<32x64xf32>
    %c0_54 = arith.constant 0 : index
    %c0_55 = arith.constant 0 : index
    %101 = vector.load %arg16[%c0_54, %c0_55] : memref<32x1xf32, #tpu.memory_space<vmem>>, vector<32x1xf32>
    %cst_56 = arith.constant 0.000000e+00 : f32
    %102 = vector.broadcast %cst_56 : f32 to vector<32x64xf32>
    %103 = arith.cmpf ogt, %100, %102 : vector<32x64xf32>
    %104 = vector.broadcast %101 : vector<32x1xf32> to vector<32x64xf32>
    %105 = arith.mulf %104, %100 : vector<32x64xf32>
    %106 = arith.select %103, %100, %105 : vector<32x64xi1>, vector<32x64xf32>
    %107 = vector.extract_strided_slice %106 {offsets = [0, 55], sizes = [32, 9], strides = [1, 1]} : vector<32x64xf32> to vector<32x9xf32>
    %108 = vector.extract_strided_slice %106 {offsets = [0, 0], sizes = [32, 55], strides = [1, 1]} : vector<32x64xf32> to vector<32x55xf32>
    %109 = tpu.concatenate %107, %108 in 1 : vector<32x9xf32>, vector<32x55xf32> -> vector<32x64xf32>
    %c0_57 = arith.constant 0 : index
    %c0_58 = arith.constant 0 : index
    %c0_59 = arith.constant 0 : index
    %110 = vector.load %arg20[%c0_57, %c0_58, %c0_59] : memref<9x1x64xf32, #tpu.memory_space<vmem>>, vector<1x1x64xf32>
    %111 = vector.shape_cast %110 : vector<1x1x64xf32> to vector<1x64xf32>
    %112 = vector.broadcast %111 : vector<1x64xf32> to vector<32x64xf32>
    %113 = arith.mulf %109, %112 : vector<32x64xf32>
    %114 = vector.extract_strided_slice %106 {offsets = [0, 56], sizes = [32, 8], strides = [1, 1]} : vector<32x64xf32> to vector<32x8xf32>
    %115 = vector.extract_strided_slice %106 {offsets = [0, 0], sizes = [32, 56], strides = [1, 1]} : vector<32x64xf32> to vector<32x56xf32>
    %116 = tpu.concatenate %114, %115 in 1 : vector<32x8xf32>, vector<32x56xf32> -> vector<32x64xf32>
    %c1_60 = arith.constant 1 : index
    %c0_61 = arith.constant 0 : index
    %c0_62 = arith.constant 0 : index
    %117 = vector.load %arg20[%c1_60, %c0_61, %c0_62] : memref<9x1x64xf32, #tpu.memory_space<vmem>>, vector<1x1x64xf32>
    %118 = vector.shape_cast %117 : vector<1x1x64xf32> to vector<1x64xf32>
    %119 = vector.broadcast %118 : vector<1x64xf32> to vector<32x64xf32>
    %120 = arith.mulf %116, %119 : vector<32x64xf32>
    %121 = vector.extract_strided_slice %106 {offsets = [0, 57], sizes = [32, 7], strides = [1, 1]} : vector<32x64xf32> to vector<32x7xf32>
    %122 = vector.extract_strided_slice %106 {offsets = [0, 0], sizes = [32, 57], strides = [1, 1]} : vector<32x64xf32> to vector<32x57xf32>
    %123 = tpu.concatenate %121, %122 in 1 : vector<32x7xf32>, vector<32x57xf32> -> vector<32x64xf32>
    %c2_63 = arith.constant 2 : index
    %c0_64 = arith.constant 0 : index
    %c0_65 = arith.constant 0 : index
    %124 = vector.load %arg20[%c2_63, %c0_64, %c0_65] : memref<9x1x64xf32, #tpu.memory_space<vmem>>, vector<1x1x64xf32>
    %125 = vector.shape_cast %124 : vector<1x1x64xf32> to vector<1x64xf32>
    %126 = vector.broadcast %125 : vector<1x64xf32> to vector<32x64xf32>
    %127 = arith.mulf %123, %126 : vector<32x64xf32>
    %128 = vector.extract_strided_slice %106 {offsets = [0, 63], sizes = [32, 1], strides = [1, 1]} : vector<32x64xf32> to vector<32x1xf32>
    %129 = vector.extract_strided_slice %106 {offsets = [0, 0], sizes = [32, 63], strides = [1, 1]} : vector<32x64xf32> to vector<32x63xf32>
    %130 = tpu.concatenate %128, %129 in 1 : vector<32x1xf32>, vector<32x63xf32> -> vector<32x64xf32>
    %c3_66 = arith.constant 3 : index
    %c0_67 = arith.constant 0 : index
    %c0_68 = arith.constant 0 : index
    %131 = vector.load %arg20[%c3_66, %c0_67, %c0_68] : memref<9x1x64xf32, #tpu.memory_space<vmem>>, vector<1x1x64xf32>
    %132 = vector.shape_cast %131 : vector<1x1x64xf32> to vector<1x64xf32>
    %133 = vector.broadcast %132 : vector<1x64xf32> to vector<32x64xf32>
    %134 = arith.mulf %130, %133 : vector<32x64xf32>
    %135 = vector.extract_strided_slice %106 {offsets = [0, 1], sizes = [32, 63], strides = [1, 1]} : vector<32x64xf32> to vector<32x63xf32>
    %136 = vector.extract_strided_slice %106 {offsets = [0, 0], sizes = [32, 1], strides = [1, 1]} : vector<32x64xf32> to vector<32x1xf32>
    %137 = tpu.concatenate %135, %136 in 1 : vector<32x63xf32>, vector<32x1xf32> -> vector<32x64xf32>
    %c5_69 = arith.constant 5 : index
    %c0_70 = arith.constant 0 : index
    %c0_71 = arith.constant 0 : index
    %138 = vector.load %arg20[%c5_69, %c0_70, %c0_71] : memref<9x1x64xf32, #tpu.memory_space<vmem>>, vector<1x1x64xf32>
    %139 = vector.shape_cast %138 : vector<1x1x64xf32> to vector<1x64xf32>
    %140 = vector.broadcast %139 : vector<1x64xf32> to vector<32x64xf32>
    %141 = arith.mulf %137, %140 : vector<32x64xf32>
    %142 = vector.extract_strided_slice %106 {offsets = [0, 7], sizes = [32, 57], strides = [1, 1]} : vector<32x64xf32> to vector<32x57xf32>
    %143 = vector.extract_strided_slice %106 {offsets = [0, 0], sizes = [32, 7], strides = [1, 1]} : vector<32x64xf32> to vector<32x7xf32>
    %144 = tpu.concatenate %142, %143 in 1 : vector<32x57xf32>, vector<32x7xf32> -> vector<32x64xf32>
    %c6_72 = arith.constant 6 : index
    %c0_73 = arith.constant 0 : index
    %c0_74 = arith.constant 0 : index
    %145 = vector.load %arg20[%c6_72, %c0_73, %c0_74] : memref<9x1x64xf32, #tpu.memory_space<vmem>>, vector<1x1x64xf32>
    %146 = vector.shape_cast %145 : vector<1x1x64xf32> to vector<1x64xf32>
    %147 = vector.broadcast %146 : vector<1x64xf32> to vector<32x64xf32>
    %148 = arith.mulf %144, %147 : vector<32x64xf32>
    %149 = vector.extract_strided_slice %106 {offsets = [0, 8], sizes = [32, 56], strides = [1, 1]} : vector<32x64xf32> to vector<32x56xf32>
    %150 = vector.extract_strided_slice %106 {offsets = [0, 0], sizes = [32, 8], strides = [1, 1]} : vector<32x64xf32> to vector<32x8xf32>
    %151 = tpu.concatenate %149, %150 in 1 : vector<32x56xf32>, vector<32x8xf32> -> vector<32x64xf32>
    %c7_75 = arith.constant 7 : index
    %c0_76 = arith.constant 0 : index
    %c0_77 = arith.constant 0 : index
    %152 = vector.load %arg20[%c7_75, %c0_76, %c0_77] : memref<9x1x64xf32, #tpu.memory_space<vmem>>, vector<1x1x64xf32>
    %153 = vector.shape_cast %152 : vector<1x1x64xf32> to vector<1x64xf32>
    %154 = vector.broadcast %153 : vector<1x64xf32> to vector<32x64xf32>
    %155 = arith.mulf %151, %154 : vector<32x64xf32>
    %156 = vector.extract_strided_slice %106 {offsets = [0, 9], sizes = [32, 55], strides = [1, 1]} : vector<32x64xf32> to vector<32x55xf32>
    %157 = vector.extract_strided_slice %106 {offsets = [0, 0], sizes = [32, 9], strides = [1, 1]} : vector<32x64xf32> to vector<32x9xf32>
    %158 = tpu.concatenate %156, %157 in 1 : vector<32x55xf32>, vector<32x9xf32> -> vector<32x64xf32>
    %c8_78 = arith.constant 8 : index
    %c0_79 = arith.constant 0 : index
    %c0_80 = arith.constant 0 : index
    %159 = vector.load %arg20[%c8_78, %c0_79, %c0_80] : memref<9x1x64xf32, #tpu.memory_space<vmem>>, vector<1x1x64xf32>
    %160 = vector.shape_cast %159 : vector<1x1x64xf32> to vector<1x64xf32>
    %161 = vector.broadcast %160 : vector<1x64xf32> to vector<32x64xf32>
    %162 = arith.mulf %158, %161 : vector<32x64xf32>
    %163 = tpu.concatenate %113, %120, %127, %134, %106, %141, %148, %155, %162 in 0 : vector<32x64xf32>, vector<32x64xf32>, vector<32x64xf32>, vector<32x64xf32>, vector<32x64xf32>, vector<32x64xf32>, vector<32x64xf32>, vector<32x64xf32>, vector<32x64xf32> -> vector<288x64xf32>
    %164 = arith.truncf %163 : vector<288x64xf32> to vector<288x64xbf16>
    %c0_81 = arith.constant 0 : index
    %c0_82 = arith.constant 0 : index
    %165 = vector.load %arg17[%c0_81, %c0_82] : memref<256x288xbf16, #tpu.memory_space<vmem>>, vector<256x288xbf16>
    %cst_83 = arith.constant dense<0.000000e+00> : vector<256x64xf32>
    %166 = tpu.matmul %165, %164, %cst_83 {dimension_numbers = #tpu.dot_dimension_numbers<[1], [0], [0], [1], [0, 0, 1, 1], [], []>} : vector<256x288xbf16>, vector<288x64xbf16>, vector<256x64xf32> -> vector<256x64xf32>
    %c0_84 = arith.constant 0 : index
    %c0_85 = arith.constant 0 : index
    %167 = vector.load %arg18[%c0_84, %c0_85] : memref<256x1xf32, #tpu.memory_space<vmem>>, vector<256x1xf32>
    %168 = vector.broadcast %167 : vector<256x1xf32> to vector<256x64xf32>
    %169 = arith.addf %166, %168 : vector<256x64xf32>
    %c0_86 = arith.constant 0 : index
    %c0_87 = arith.constant 0 : index
    %170 = vector.load %arg19[%c0_86, %c0_87] : memref<256x1xf32, #tpu.memory_space<vmem>>, vector<256x1xf32>
    %cst_88 = arith.constant 0.000000e+00 : f32
    %171 = vector.broadcast %cst_88 : f32 to vector<256x64xf32>
    %172 = arith.cmpf ogt, %169, %171 : vector<256x64xf32>
    %173 = vector.broadcast %170 : vector<256x1xf32> to vector<256x64xf32>
    %174 = arith.mulf %173, %169 : vector<256x64xf32>
    %175 = arith.select %172, %169, %174 : vector<256x64xi1>, vector<256x64xf32>
    %c0_89 = arith.constant 0 : index
    %c0_90 = arith.constant 0 : index
    %176 = vector.load %arg23[%c0_89, %c0_90] : memref<24x256xbf16, #tpu.memory_space<vmem>>, vector<24x256xbf16>
    %177 = arith.truncf %175 : vector<256x64xf32> to vector<256x64xbf16>
    %cst_91 = arith.constant dense<0.000000e+00> : vector<24x64xf32>
    %178 = tpu.matmul %176, %177, %cst_91 {dimension_numbers = #tpu.dot_dimension_numbers<[1], [0], [0], [1], [0, 0, 1, 1], [], []>} : vector<24x256xbf16>, vector<256x64xbf16>, vector<24x64xf32> -> vector<24x64xf32>
    %179 = arith.truncf %178 : vector<24x64xf32> to vector<24x64xbf16>
    %c0_92 = arith.constant 0 : index
    %c0_93 = arith.constant 0 : index
    %180 = vector.load %arg30[%c0_92, %c0_93] : memref<64x256xbf16, #tpu.memory_space<vmem>>, vector<64x256xbf16>
    %cst_94 = arith.constant dense<0.000000e+00> : vector<24x256xf32>
    %181 = tpu.matmul %179, %180, %cst_94 {dimension_numbers = #tpu.dot_dimension_numbers<[1], [0], [0], [1], [0, 0, 1, 1], [], []>} : vector<24x64xbf16>, vector<64x256xbf16>, vector<24x256xf32> -> vector<24x256xf32>
    %c0_95 = arith.constant 0 : index
    %c0_96 = arith.constant 0 : index
    %182 = vector.load %arg22[%c0_95, %c0_96] : memref<24x24xbf16, #tpu.memory_space<vmem>>, vector<24x24xbf16>
    %c0_97 = arith.constant 0 : index
    %c0_98 = arith.constant 0 : index
    %c0_99 = arith.constant 0 : index
    %183 = vector.load %arg4[%c0_97, %c0_98, %c0_99] : memref<1x24x256xbf16, #tpu.memory_space<vmem>>, vector<1x24x256xbf16>
    %184 = vector.shape_cast %183 : vector<1x24x256xbf16> to vector<24x256xbf16>
    %cst_100 = arith.constant dense<0.000000e+00> : vector<24x256xf32>
    %185 = tpu.matmul %182, %184, %cst_100 {dimension_numbers = #tpu.dot_dimension_numbers<[1], [0], [0], [1], [0, 0, 1, 1], [], []>} : vector<24x24xbf16>, vector<24x256xbf16>, vector<24x256xf32> -> vector<24x256xf32>
    %186 = arith.addf %185, %181 : vector<24x256xf32>
    %c0_101 = arith.constant 0 : index
    %c0_102 = arith.constant 0 : index
    %187 = vector.load %arg24[%c0_101, %c0_102] : memref<24x1xf32, #tpu.memory_space<vmem>>, vector<24x1xf32>
    %188 = vector.broadcast %187 : vector<24x1xf32> to vector<24x256xf32>
    %189 = arith.addf %186, %188 : vector<24x256xf32>
    %c0_103 = arith.constant 0 : index
    %c0_104 = arith.constant 0 : index
    %190 = vector.load %arg25[%c0_103, %c0_104] : memref<24x1xf32, #tpu.memory_space<vmem>>, vector<24x1xf32>
    %cst_105 = arith.constant 0.000000e+00 : f32
    %191 = vector.broadcast %cst_105 : f32 to vector<24x256xf32>
    %192 = arith.cmpf ogt, %189, %191 : vector<24x256xf32>
    %193 = vector.broadcast %190 : vector<24x1xf32> to vector<24x256xf32>
    %194 = arith.mulf %193, %189 : vector<24x256xf32>
    %195 = arith.select %192, %189, %194 : vector<24x256xi1>, vector<24x256xf32>
    %196 = vector.extract_strided_slice %195 {offsets = [0, 239], sizes = [24, 17], strides = [1, 1]} : vector<24x256xf32> to vector<24x17xf32>
    %197 = vector.extract_strided_slice %195 {offsets = [0, 0], sizes = [24, 239], strides = [1, 1]} : vector<24x256xf32> to vector<24x239xf32>
    %198 = tpu.concatenate %196, %197 in 1 : vector<24x17xf32>, vector<24x239xf32> -> vector<24x256xf32>
    %c0_106 = arith.constant 0 : index
    %c0_107 = arith.constant 0 : index
    %c0_108 = arith.constant 0 : index
    %199 = vector.load %arg29[%c0_106, %c0_107, %c0_108] : memref<9x1x256xf32, #tpu.memory_space<vmem>>, vector<1x1x256xf32>
    %200 = vector.shape_cast %199 : vector<1x1x256xf32> to vector<1x256xf32>
    %201 = vector.broadcast %200 : vector<1x256xf32> to vector<24x256xf32>
    %202 = arith.mulf %198, %201 : vector<24x256xf32>
    %203 = vector.extract_strided_slice %195 {offsets = [0, 240], sizes = [24, 16], strides = [1, 1]} : vector<24x256xf32> to vector<24x16xf32>
    %204 = vector.extract_strided_slice %195 {offsets = [0, 0], sizes = [24, 240], strides = [1, 1]} : vector<24x256xf32> to vector<24x240xf32>
    %205 = tpu.concatenate %203, %204 in 1 : vector<24x16xf32>, vector<24x240xf32> -> vector<24x256xf32>
    %c1_109 = arith.constant 1 : index
    %c0_110 = arith.constant 0 : index
    %c0_111 = arith.constant 0 : index
    %206 = vector.load %arg29[%c1_109, %c0_110, %c0_111] : memref<9x1x256xf32, #tpu.memory_space<vmem>>, vector<1x1x256xf32>
    %207 = vector.shape_cast %206 : vector<1x1x256xf32> to vector<1x256xf32>
    %208 = vector.broadcast %207 : vector<1x256xf32> to vector<24x256xf32>
    %209 = arith.mulf %205, %208 : vector<24x256xf32>
    %210 = vector.extract_strided_slice %195 {offsets = [0, 241], sizes = [24, 15], strides = [1, 1]} : vector<24x256xf32> to vector<24x15xf32>
    %211 = vector.extract_strided_slice %195 {offsets = [0, 0], sizes = [24, 241], strides = [1, 1]} : vector<24x256xf32> to vector<24x241xf32>
    %212 = tpu.concatenate %210, %211 in 1 : vector<24x15xf32>, vector<24x241xf32> -> vector<24x256xf32>
    %c2_112 = arith.constant 2 : index
    %c0_113 = arith.constant 0 : index
    %c0_114 = arith.constant 0 : index
    %213 = vector.load %arg29[%c2_112, %c0_113, %c0_114] : memref<9x1x256xf32, #tpu.memory_space<vmem>>, vector<1x1x256xf32>
    %214 = vector.shape_cast %213 : vector<1x1x256xf32> to vector<1x256xf32>
    %215 = vector.broadcast %214 : vector<1x256xf32> to vector<24x256xf32>
    %216 = arith.mulf %212, %215 : vector<24x256xf32>
    %217 = vector.extract_strided_slice %195 {offsets = [0, 255], sizes = [24, 1], strides = [1, 1]} : vector<24x256xf32> to vector<24x1xf32>
    %218 = vector.extract_strided_slice %195 {offsets = [0, 0], sizes = [24, 255], strides = [1, 1]} : vector<24x256xf32> to vector<24x255xf32>
    %219 = tpu.concatenate %217, %218 in 1 : vector<24x1xf32>, vector<24x255xf32> -> vector<24x256xf32>
    %c3_115 = arith.constant 3 : index
    %c0_116 = arith.constant 0 : index
    %c0_117 = arith.constant 0 : index
    %220 = vector.load %arg29[%c3_115, %c0_116, %c0_117] : memref<9x1x256xf32, #tpu.memory_space<vmem>>, vector<1x1x256xf32>
    %221 = vector.shape_cast %220 : vector<1x1x256xf32> to vector<1x256xf32>
    %222 = vector.broadcast %221 : vector<1x256xf32> to vector<24x256xf32>
    %223 = arith.mulf %219, %222 : vector<24x256xf32>
    %224 = vector.extract_strided_slice %195 {offsets = [0, 1], sizes = [24, 255], strides = [1, 1]} : vector<24x256xf32> to vector<24x255xf32>
    %225 = vector.extract_strided_slice %195 {offsets = [0, 0], sizes = [24, 1], strides = [1, 1]} : vector<24x256xf32> to vector<24x1xf32>
    %226 = tpu.concatenate %224, %225 in 1 : vector<24x255xf32>, vector<24x1xf32> -> vector<24x256xf32>
    %c5_118 = arith.constant 5 : index
    %c0_119 = arith.constant 0 : index
    %c0_120 = arith.constant 0 : index
    %227 = vector.load %arg29[%c5_118, %c0_119, %c0_120] : memref<9x1x256xf32, #tpu.memory_space<vmem>>, vector<1x1x256xf32>
    %228 = vector.shape_cast %227 : vector<1x1x256xf32> to vector<1x256xf32>
    %229 = vector.broadcast %228 : vector<1x256xf32> to vector<24x256xf32>
    %230 = arith.mulf %226, %229 : vector<24x256xf32>
    %231 = vector.extract_strided_slice %195 {offsets = [0, 15], sizes = [24, 241], strides = [1, 1]} : vector<24x256xf32> to vector<24x241xf32>
    %232 = vector.extract_strided_slice %195 {offsets = [0, 0], sizes = [24, 15], strides = [1, 1]} : vector<24x256xf32> to vector<24x15xf32>
    %233 = tpu.concatenate %231, %232 in 1 : vector<24x241xf32>, vector<24x15xf32> -> vector<24x256xf32>
    %c6_121 = arith.constant 6 : index
    %c0_122 = arith.constant 0 : index
    %c0_123 = arith.constant 0 : index
    %234 = vector.load %arg29[%c6_121, %c0_122, %c0_123] : memref<9x1x256xf32, #tpu.memory_space<vmem>>, vector<1x1x256xf32>
    %235 = vector.shape_cast %234 : vector<1x1x256xf32> to vector<1x256xf32>
    %236 = vector.broadcast %235 : vector<1x256xf32> to vector<24x256xf32>
    %237 = arith.mulf %233, %236 : vector<24x256xf32>
    %238 = vector.extract_strided_slice %195 {offsets = [0, 16], sizes = [24, 240], strides = [1, 1]} : vector<24x256xf32> to vector<24x240xf32>
    %239 = vector.extract_strided_slice %195 {offsets = [0, 0], sizes = [24, 16], strides = [1, 1]} : vector<24x256xf32> to vector<24x16xf32>
    %240 = tpu.concatenate %238, %239 in 1 : vector<24x240xf32>, vector<24x16xf32> -> vector<24x256xf32>
    %c7_124 = arith.constant 7 : index
    %c0_125 = arith.constant 0 : index
    %c0_126 = arith.constant 0 : index
    %241 = vector.load %arg29[%c7_124, %c0_125, %c0_126] : memref<9x1x256xf32, #tpu.memory_space<vmem>>, vector<1x1x256xf32>
    %242 = vector.shape_cast %241 : vector<1x1x256xf32> to vector<1x256xf32>
    %243 = vector.broadcast %242 : vector<1x256xf32> to vector<24x256xf32>
    %244 = arith.mulf %240, %243 : vector<24x256xf32>
    %245 = vector.extract_strided_slice %195 {offsets = [0, 17], sizes = [24, 239], strides = [1, 1]} : vector<24x256xf32> to vector<24x239xf32>
    %246 = vector.extract_strided_slice %195 {offsets = [0, 0], sizes = [24, 17], strides = [1, 1]} : vector<24x256xf32> to vector<24x17xf32>
    %247 = tpu.concatenate %245, %246 in 1 : vector<24x239xf32>, vector<24x17xf32> -> vector<24x256xf32>
    %c8_127 = arith.constant 8 : index
    %c0_128 = arith.constant 0 : index
    %c0_129 = arith.constant 0 : index
    %248 = vector.load %arg29[%c8_127, %c0_128, %c0_129] : memref<9x1x256xf32, #tpu.memory_space<vmem>>, vector<1x1x256xf32>
    %249 = vector.shape_cast %248 : vector<1x1x256xf32> to vector<1x256xf32>
    %250 = vector.broadcast %249 : vector<1x256xf32> to vector<24x256xf32>
    %251 = arith.mulf %247, %250 : vector<24x256xf32>
    %252 = tpu.concatenate %202, %209, %216, %223, %195, %230, %237, %244, %251 in 0 : vector<24x256xf32>, vector<24x256xf32>, vector<24x256xf32>, vector<24x256xf32>, vector<24x256xf32>, vector<24x256xf32>, vector<24x256xf32>, vector<24x256xf32>, vector<24x256xf32> -> vector<216x256xf32>
    %253 = arith.truncf %252 : vector<216x256xf32> to vector<216x256xbf16>
    %c0_130 = arith.constant 0 : index
    %c0_131 = arith.constant 0 : index
    %254 = vector.load %arg26[%c0_130, %c0_131] : memref<256x216xbf16, #tpu.memory_space<vmem>>, vector<256x216xbf16>
    %cst_132 = arith.constant dense<0.000000e+00> : vector<256x256xf32>
    %255 = tpu.matmul %254, %253, %cst_132 {dimension_numbers = #tpu.dot_dimension_numbers<[1], [0], [0], [1], [0, 0, 1, 1], [], []>} : vector<256x216xbf16>, vector<216x256xbf16>, vector<256x256xf32> -> vector<256x256xf32>
    %c0_133 = arith.constant 0 : index
    %c0_134 = arith.constant 0 : index
    %256 = vector.load %arg27[%c0_133, %c0_134] : memref<256x1xf32, #tpu.memory_space<vmem>>, vector<256x1xf32>
    %257 = vector.broadcast %256 : vector<256x1xf32> to vector<256x256xf32>
    %258 = arith.addf %255, %257 : vector<256x256xf32>
    %c0_135 = arith.constant 0 : index
    %c0_136 = arith.constant 0 : index
    %259 = vector.load %arg28[%c0_135, %c0_136] : memref<256x1xf32, #tpu.memory_space<vmem>>, vector<256x1xf32>
    %cst_137 = arith.constant 0.000000e+00 : f32
    %260 = vector.broadcast %cst_137 : f32 to vector<256x256xf32>
    %261 = arith.cmpf ogt, %258, %260 : vector<256x256xf32>
    %262 = vector.broadcast %259 : vector<256x1xf32> to vector<256x256xf32>
    %263 = arith.mulf %262, %258 : vector<256x256xf32>
    %264 = arith.select %261, %258, %263 : vector<256x256xi1>, vector<256x256xf32>
    %c0_138 = arith.constant 0 : index
    %c0_139 = arith.constant 0 : index
    %265 = vector.load %arg31[%c0_138, %c0_139] : memref<8x256xbf16, #tpu.memory_space<vmem>>, vector<8x256xbf16>
    %266 = arith.truncf %264 : vector<256x256xf32> to vector<256x256xbf16>
    %cst_140 = arith.constant dense<0.000000e+00> : vector<8x256xf32>
    %267 = tpu.matmul %265, %266, %cst_140 {dimension_numbers = #tpu.dot_dimension_numbers<[1], [0], [0], [1], [0, 0, 1, 1], [], []>} : vector<8x256xbf16>, vector<256x256xbf16>, vector<8x256xf32> -> vector<8x256xf32>
    %268 = arith.truncf %267 : vector<8x256xf32> to vector<8x256xbf16>
    %c0_141 = arith.constant 0 : index
    %c0_142 = arith.constant 0 : index
    %269 = vector.load %arg33[%c0_141, %c0_142] : memref<256x1024xbf16, #tpu.memory_space<vmem>>, vector<256x1024xbf16>
    %cst_143 = arith.constant dense<0.000000e+00> : vector<8x1024xf32>
    %270 = tpu.matmul %268, %269, %cst_143 {dimension_numbers = #tpu.dot_dimension_numbers<[1], [0], [0], [1], [0, 0, 1, 1], [], []>} : vector<8x256xbf16>, vector<256x1024xbf16>, vector<8x1024xf32> -> vector<8x1024xf32>
    %c0_144 = arith.constant 0 : index
    %c0_145 = arith.constant 0 : index
    %271 = vector.load %arg32[%c0_144, %c0_145] : memref<8x1xf32, #tpu.memory_space<vmem>>, vector<8x1xf32>
    %272 = vector.broadcast %271 : vector<8x1xf32> to vector<8x1024xf32>
    %273 = arith.addf %270, %272 : vector<8x1024xf32>
    %c0_146 = arith.constant 0 : index
    %c0_147 = arith.constant 0 : index
    %c0_148 = arith.constant 0 : index
    %274 = vector.load %arg34[%c0_146, %c0_147, %c0_148] : memref<1x8x1024xf32, #tpu.memory_space<vmem>>, vector<1x8x1024xf32>
    %275 = vector.shape_cast %274 : vector<1x8x1024xf32> to vector<8x1024xf32>
    %276 = vector.shape_cast %273 : vector<8x1024xf32> to vector<1x8x1024xf32>
    tpu.vector_store %arg34[%c0_146, %c0_147, %c0_148], %276 {strides = array<i32>} : memref<1x8x1024xf32, #tpu.memory_space<vmem>>, vector<1x8x1024xf32>,
    return
  }
  func.func @transform_0(%arg0: i32) -> (i32, i32, i32) {
    %c0_i32 = arith.constant 0 : i32
    %c0_i32_0 = arith.constant 0 : i32
    %c0_i32_1 = arith.constant 0 : i32
    return %arg0, %c0_i32, %c0_i32_0 : i32, i32, i32
  }
  func.func @transform_1(%arg0: i32) -> (i32, i32, i32) {
    %c0_i32 = arith.constant 0 : i32
    %c0_i32_0 = arith.constant 0 : i32
    %c0_i32_1 = arith.constant 0 : i32
    return %arg0, %c0_i32, %c0_i32_0 : i32, i32, i32
  }
  func.func @transform_2(%arg0: i32) -> (i32, i32, i32) {
    %c0_i32 = arith.constant 0 : i32
    %c0_i32_0 = arith.constant 0 : i32
    %c0_i32_1 = arith.constant 0 : i32
    return %arg0, %c0_i32, %c0_i32_0 : i32, i32, i32
  }
  func.func @transform_3(%arg0: i32) -> (i32, i32, i32) {
    %c0_i32 = arith.constant 0 : i32
    %c0_i32_0 = arith.constant 0 : i32
    %c0_i32_1 = arith.constant 0 : i32
    return %arg0, %c0_i32, %c0_i32_0 : i32, i32, i32
  }
  func.func @transform_4(%arg0: i32) -> (i32, i32) {
    %c0_i32 = arith.constant 0 : i32
    %c0_i32_0 = arith.constant 0 : i32
    %c0_i32_1 = arith.constant 0 : i32
    return %c0_i32, %c0_i32_0 : i32, i32
  }
  func.func @transform_5(%arg0: i32) -> (i32, i32) {
    %c0_i32 = arith.constant 0 : i32
    %c0_i32_0 = arith.constant 0 : i32
    %c0_i32_1 = arith.constant 0 : i32
    return %c0_i32, %c0_i32_0 : i32, i32
  }
  func.func @transform_6(%arg0: i32) -> (i32, i32) {
    %c0_i32 = arith.constant 0 : i32
    %c0_i32_0 = arith.constant 0 : i32
    %c0_i32_1 = arith.constant 0 : i32
    return %c0_i32, %c0_i32_0 : i32, i32
  }
  func.func @transform_7(%arg0: i32) -> (i32, i32) {
    %c0_i32 = arith.constant 0 : i32
    %c0_i32_0 = arith.constant 0 : i32
    %c0_i32_1 = arith.constant 0 : i32
    return %c0_i32, %c0_i32_0 : i32, i32
  }
  func.func @transform_8(%arg0: i32) -> (i32, i32) {
    %c0_i32 = arith.constant 0 : i32
    %c0_i32_0 = arith.constant 0 : i32
    %c0_i32_1 = arith.constant 0 : i32
    return %c0_i32, %c0_i32_0 : i32, i32
  }
  func.func @transform_9(%arg0: i32) -> (i32, i32) {
    %c0_i32 = arith.constant 0 : i32
    %c0_i32_0 = arith.constant 0 : i32
    %c0_i32_1 = arith.constant 0 : i32
    return %c0_i32, %c0_i32_0 : i32, i32
  }
  func.func @transform_10(%arg0: i32) -> (i32, i32) {
    %c0_i32 = arith.constant 0 : i32
    %c0_i32_0 = arith.constant 0 : i32
    %c0_i32_1 = arith.constant 0 : i32
    return %c0_i32, %c0_i32_0 : i32, i32
  }
  func.func @transform_11(%arg0: i32) -> (i32, i32, i32) {
    %c0_i32 = arith.constant 0 : i32
    %c0_i32_0 = arith.constant 0 : i32
    %c0_i32_1 = arith.constant 0 : i32
    %c0_i32_2 = arith.constant 0 : i32
    return %c0_i32, %c0_i32_0, %c0_i32_1 : i32, i32, i32
  }
  func.func @transform_12(%arg0: i32) -> (i32, i32) {
    %c0_i32 = arith.constant 0 : i32
    %c0_i32_0 = arith.constant 0 : i32
    %c0_i32_1 = arith.constant 0 : i32
    return %c0_i32, %c0_i32_0 : i32, i32
  }
  func.func @transform_13(%arg0: i32) -> (i32, i32) {
    %c0_i32 = arith.constant 0 : i32
    %c0_i32_0 = arith.constant 0 : i32
    %c0_i32_1 = arith.constant 0 : i32
    return %c0_i32, %c0_i32_0 : i32, i32
  }
  func.func @transform_14(%arg0: i32) -> (i32, i32) {
    %c0_i32 = arith.constant 0 : i32
    %c0_i32_0 = arith.constant 0 : i32
    %c0_i32_1 = arith.constant 0 : i32
    return %c0_i32, %c0_i32_0 : i32, i32
  }
  func.func @transform_15(%arg0: i32) -> (i32, i32) {
    %c0_i32 = arith.constant 0 : i32
    %c0_i32_0 = arith.constant 0 : i32
    %c0_i32_1 = arith.constant 0 : i32
    return %c0_i32, %c0_i32_0 : i32, i32
  }
  func.func @transform_16(%arg0: i32) -> (i32, i32) {
    %c0_i32 = arith.constant 0 : i32
    %c0_i32_0 = arith.constant 0 : i32
    %c0_i32_1 = arith.constant 0 : i32
    return %c0_i32, %c0_i32_0 : i32, i32
  }
  func.func @transform_17(%arg0: i32) -> (i32, i32) {
    %c0_i32 = arith.constant 0 : i32
    %c0_i32_0 = arith.constant 0 : i32
    %c0_i32_1 = arith.constant 0 : i32
    return %c0_i32, %c0_i32_0 : i32, i32
  }
  func.func @transform_18(%arg0: i32) -> (i32, i32) {
    %c0_i32 = arith.constant 0 : i32
    %c0_i32_0 = arith.constant 0 : i32
    %c0_i32_1 = arith.constant 0 : i32
    return %c0_i32, %c0_i32_0 : i32, i32
  }
  func.func @transform_19(%arg0: i32) -> (i32, i32, i32) {
    %c0_i32 = arith.constant 0 : i32
    %c0_i32_0 = arith.constant 0 : i32
    %c0_i32_1 = arith.constant 0 : i32
    %c0_i32_2 = arith.constant 0 : i32
    return %c0_i32, %c0_i32_0, %c0_i32_1 : i32, i32, i32
  }
  func.func @transform_20(%arg0: i32) -> (i32, i32) {
    %c0_i32 = arith.constant 0 : i32
    %c0_i32_0 = arith.constant 0 : i32
    %c0_i32_1 = arith.constant 0 : i32
    return %c0_i32, %c0_i32_0 : i32, i32
  }
  func.func @transform_21(%arg0: i32) -> (i32, i32) {
    %c0_i32 = arith.constant 0 : i32
    %c0_i32_0 = arith.constant 0 : i32
    %c0_i32_1 = arith.constant 0 : i32
    return %c0_i32, %c0_i32_0 : i32, i32
  }
  func.func @transform_22(%arg0: i32) -> (i32, i32) {
    %c0_i32 = arith.constant 0 : i32
    %c0_i32_0 = arith.constant 0 : i32
    %c0_i32_1 = arith.constant 0 : i32
    return %c0_i32, %c0_i32_0 : i32, i32
  }
  func.func @transform_23(%arg0: i32) -> (i32, i32) {
    %c0_i32 = arith.constant 0 : i32
    %c0_i32_0 = arith.constant 0 : i32
    %c0_i32_1 = arith.constant 0 : i32
    return %c0_i32, %c0_i32_0 : i32, i32
  }
  func.func @transform_24(%arg0: i32) -> (i32, i32) {
    %c0_i32 = arith.constant 0 : i32
    %c0_i32_0 = arith.constant 0 : i32
    %c0_i32_1 = arith.constant 0 : i32
    return %c0_i32, %c0_i32_0 : i32, i32
  }
  func.func @transform_25(%arg0: i32) -> (i32, i32) {
    %c0_i32 = arith.constant 0 : i32
    %c0_i32_0 = arith.constant 0 : i32
    %c0_i32_1 = arith.constant 0 : i32
    return %c0_i32, %c0_i32_0 : i32, i32
  }
  func.func @transform_26(%arg0: i32) -> (i32, i32) {
    %c0_i32 = arith.constant 0 : i32
    %c0_i32_0 = arith.constant 0 : i32
    %c0_i32_1 = arith.constant 0 : i32
    return %c0_i32, %c0_i32_0 : i32, i32
  }
  func.func @transform_27(%arg0: i32) -> (i32, i32) {
    %c0_i32 = arith.constant 0 : i32
    %c0_i32_0 = arith.constant 0 : i32
    %c0_i32_1 = arith.constant 0 : i32
    return %c0_i32, %c0_i32_0 : i32, i32
  }
  func.func @transform_28(%arg0: i32) -> (i32, i32, i32) {
    %c0_i32 = arith.constant 0 : i32
    %c0_i32_0 = arith.constant 0 : i32
    %c0_i32_1 = arith.constant 0 : i32
    %c0_i32_2 = arith.constant 0 : i32
    return %c0_i32, %c0_i32_0, %c0_i32_1 : i32, i32, i32
  }
  func.func @transform_29(%arg0: i32) -> (i32, i32) {
    %c0_i32 = arith.constant 0 : i32
    %c0_i32_0 = arith.constant 0 : i32
    %c0_i32_1 = arith.constant 0 : i32
    return %c0_i32, %c0_i32_0 : i32, i32
  }
  func.func @transform_30(%arg0: i32) -> (i32, i32) {
    %c0_i32 = arith.constant 0 : i32
    %c0_i32_0 = arith.constant 0 : i32
    %c0_i32_1 = arith.constant 0 : i32
    return %c0_i32, %c0_i32_0 : i32, i32
  }
  func.func @transform_31(%arg0: i32) -> (i32, i32) {
    %c0_i32 = arith.constant 0 : i32
    %c0_i32_0 = arith.constant 0 : i32
    %c0_i32_1 = arith.constant 0 : i32
    return %c0_i32, %c0_i32_0 : i32, i32
  }
  func.func @transform_32(%arg0: i32) -> (i32, i32) {
    %c0_i32 = arith.constant 0 : i32
    %c0_i32_0 = arith.constant 0 : i32
    %c0_i32_1 = arith.constant 0 : i32
    return %c0_i32, %c0_i32_0 : i32, i32
  }
  func.func @transform_33(%arg0: i32) -> (i32, i32, i32) {
    %c0_i32 = arith.constant 0 : i32
    %c0_i32_0 = arith.constant 0 : i32
    %c0_i32_1 = arith.constant 0 : i32
    return %arg0, %c0_i32, %c0_i32_0 : i32, i32, i32
  }
}

</mosaic_0001>

<llo_original>
// kernel: skhead_apply.1
$region0: #{skhead_apply.1}
  #allocation0 [shape = 'u32[]', space=smem, size = 0x4, offset = 0x4, fixed_abs, tag = 'smem constant byte address 0x4 - core index']
  #allocation1 [shape = 'u32[144,128]{1,0:T(1,128)}', space=vmem, size = 0x12000, scoped, tag = 'internal scratch']
  %s0 = inlined_call_operand.smem [shape: u32[34], index: -1, kind: input, shape index: {}]
  %s1 = sld [smem:[%s0]]
  %s2 = scalar_lea.smem %s0, 1
  %s3 = sld [smem:[%s2]]
  %s4 = scalar_lea.smem %s0, 2
  %s5 = sld [smem:[%s4]]
  %s6 = scalar_lea.smem %s0, 3
  %s7 = sld [smem:[%s6]]
  %s8 = scalar_lea.smem %s0, 4
  %s9 = sld [smem:[%s8]]
  %s10 = scalar_lea.smem %s0, 5
  %s11 = sld [smem:[%s10]]
  %s12 = scalar_lea.smem %s0, 6
  %s13 = sld [smem:[%s12]]
  %s14 = scalar_lea.smem %s0, 7
  %s15 = sld [smem:[%s14]]
  %s16 = scalar_lea.smem %s0, 8
  %s17 = sld [smem:[%s16]]
  %s18 = scalar_lea.smem %s0, 9
  %s19 = sld [smem:[%s18]]
  %s20 = scalar_lea.smem %s0, 10
  %s21 = sld [smem:[%s20]]
  %s22 = scalar_lea.smem %s0, 11
  %s23 = sld [smem:[%s22]]
  %s24 = scalar_lea.smem %s0, 12
  %s25 = sld [smem:[%s24]]
  %s26 = scalar_lea.smem %s0, 13
  %s27 = sld [smem:[%s26]]
  %s28 = scalar_lea.smem %s0, 14
  %s29 = sld [smem:[%s28]]
  %s30 = scalar_lea.smem %s0, 15
  %s31 = sld [smem:[%s30]]
  %s32 = scalar_lea.smem %s0, 16
  %s33 = sld [smem:[%s32]]
  %s34 = scalar_lea.smem %s0, 17
  %s35 = sld [smem:[%s34]]
  %s36 = scalar_lea.smem %s0, 18
  %s37 = sld [smem:[%s36]]
  %s38 = scalar_lea.smem %s0, 19
  %s39 = sld [smem:[%s38]]
  %s40 = scalar_lea.smem %s0, 20
  %s41 = sld [smem:[%s40]]
  %s42 = scalar_lea.smem %s0, 21
  %s43 = sld [smem:[%s42]]
  %s44 = scalar_lea.smem %s0, 22
  %s45 = sld [smem:[%s44]]
  %s46 = scalar_lea.smem %s0, 23
  %s47 = sld [smem:[%s46]]
  %s48 = scalar_lea.smem %s0, 24
  %s49 = sld [smem:[%s48]]
  %s50 = scalar_lea.smem %s0, 25
  %s51 = sld [smem:[%s50]]
  %s52 = scalar_lea.smem %s0, 26
  %s53 = sld [smem:[%s52]]
  %s54 = scalar_lea.smem %s0, 27
  %s55 = sld [smem:[%s54]]
  %s56 = scalar_lea.smem %s0, 28
  %s57 = sld [smem:[%s56]]
  %s58 = scalar_lea.smem %s0, 29
  %s59 = sld [smem:[%s58]]
  %s60 = scalar_lea.smem %s0, 30
  %s61 = sld [smem:[%s60]]
  %s62 = scalar_lea.smem %s0, 31
  %s63 = sld [smem:[%s62]]
  %s64 = scalar_lea.smem %s0, 32
  %s65 = sld [smem:[%s64]]
  %s66 = scalar_lea.smem %s0, 33
  %s67 = sld [smem:[%s66]]
  %s68 = sld [smem:[#allocation0]]
  $region165: #{skhead_apply.1} parent=0
    _
  %s70 = ssub.s32 1, %s68
  %s71 = scalar_select 0, %s70, %s68
  loop: start=0, step=1, limit=4
  $region2: #{skhead_apply.1} parent=0 // loop_pre_header
    _
  $region3: #{skhead_apply.1} parent=0 // loop_header
    %s73 = sphi 0, %s77
    %p74 = scmp.ge.s32.totalorder %s73, 4
    %s83 = sphi 0, %s85
    %s86 = sphi 0, %s83
    %s87 = sphi 0, %s86
    %s103 = sphi 0, %s87
    %s109 = sphi 0, %s111
    %s112 = sphi 0, %s109
    %s113 = sphi 0, %s112
    %s129 = sphi 0, %s113
    %s135 = sphi 0, %s137
    %s138 = sphi 0, %s135
    %s139 = sphi 0, %s138
    %s155 = sphi 0, %s139
    %s161 = sphi 0, %s163
    %s164 = sphi 0, %s161
    %s165 = sphi 0, %s164
    %s181 = sphi 0, %s165
    %s185 = sphi 0, %s185
    %s187 = sphi 0, %s185
    %s188 = sphi 0, %s187
    %s202 = sphi 0, %s188
    %s206 = sphi 0, %s206
    %s208 = sphi 0, %s206
    %s209 = sphi 0, %s208
    %s223 = sphi 0, %s209
    %s227 = sphi 0, %s227
    %s229 = sphi 0, %s227
    %s230 = sphi 0, %s229
    %s244 = sphi 0, %s230
    %s248 = sphi 0, %s248
    %s250 = sphi 0, %s248
    %s251 = sphi 0, %s250
    %s265 = sphi 0, %s251
    %s269 = sphi 0, %s269
    %s271 = sphi 0, %s269
    %s272 = sphi 0, %s271
    %s286 = sphi 0, %s272
    %s290 = sphi 0, %s290
    %s292 = sphi 0, %s290
    %s293 = sphi 0, %s292
    %s307 = sphi 0, %s293
    %s311 = sphi 0, %s311
    %s313 = sphi 0, %s311
    %s314 = sphi 0, %s313
    %s328 = sphi 0, %s314
    %s332 = sphi 0, %s332
    %s334 = sphi 0, %s332
    %s335 = sphi 0, %s334
    %s349 = sphi 0, %s335
    %s353 = sphi 0, %s353
    %s355 = sphi 0, %s353
    %s356 = sphi 0, %s355
    %s370 = sphi 0, %s356
    %s374 = sphi 0, %s374
    %s376 = sphi 0, %s374
    %s377 = sphi 0, %s376
    %s391 = sphi 0, %s377
    %s395 = sphi 0, %s395
    %s397 = sphi 0, %s395
    %s398 = sphi 0, %s397
    %s412 = sphi 0, %s398
    %s416 = sphi 0, %s416
    %s418 = sphi 0, %s416
    %s419 = sphi 0, %s418
    %s433 = sphi 0, %s419
    %s437 = sphi 0, %s437
    %s439 = sphi 0, %s437
    %s440 = sphi 0, %s439
    %s454 = sphi 0, %s440
    %s458 = sphi 0, %s458
    %s460 = sphi 0, %s458
    %s461 = sphi 0, %s460
    %s475 = sphi 0, %s461
    %s479 = sphi 0, %s479
    %s481 = sphi 0, %s479
    %s482 = sphi 0, %s481
    %s496 = sphi 0, %s482
    %s500 = sphi 0, %s500
    %s502 = sphi 0, %s500
    %s503 = sphi 0, %s502
    %s517 = sphi 0, %s503
    %s521 = sphi 0, %s521
    %s523 = sphi 0, %s521
    %s524 = sphi 0, %s523
    %s538 = sphi 0, %s524
    %s542 = sphi 0, %s542
    %s544 = sphi 0, %s542
    %s545 = sphi 0, %s544
    %s559 = sphi 0, %s545
    %s563 = sphi 0, %s563
    %s565 = sphi 0, %s563
    %s566 = sphi 0, %s565
    %s580 = sphi 0, %s566
    %s584 = sphi 0, %s584
    %s586 = sphi 0, %s584
    %s587 = sphi 0, %s586
    %s601 = sphi 0, %s587
    %s605 = sphi 0, %s605
    %s607 = sphi 0, %s605
    %s608 = sphi 0, %s607
    %s622 = sphi 0, %s608
    %s626 = sphi 0, %s626
    %s628 = sphi 0, %s626
    %s629 = sphi 0, %s628
    %s643 = sphi 0, %s629
    %s647 = sphi 0, %s647
    %s649 = sphi 0, %s647
    %s650 = sphi 0, %s649
    %s664 = sphi 0, %s650
    %s668 = sphi 0, %s668
    %s670 = sphi 0, %s668
    %s671 = sphi 0, %s670
    %s685 = sphi 0, %s671
    %s689 = sphi 0, %s689
    %s691 = sphi 0, %s689
    %s692 = sphi 0, %s691
    %s706 = sphi 0, %s692
    %s710 = sphi 0, %s710
    %s712 = sphi 0, %s710
    %s713 = sphi 0, %s712
    %s727 = sphi 0, %s713
    %s731 = sphi 0, %s731
    %s733 = sphi 0, %s731
    %s734 = sphi 0, %s733
    %s748 = sphi 0, %s734
    %s752 = sphi 0, %s752
    %s754 = sphi 0, %s752
    %s755 = sphi 0, %s754
    %s769 = sphi 0, %s755
    %s773 = sphi 0, %s773
    %s775 = sphi 0, %s773
    %s776 = sphi 0, %s775
    %s790 = sphi 0, %s776
    %s796 = sphi 0, %s798
    %s799 = sphi 0, %s796
    %s800 = sphi 0, %s799
    %s816 = sphi 0, %s800
  $region4: #{skhead_apply.1} parent=0 // loop_header_branch
    %76 = sbr.rel (%p74) target = $region8
  $region5: #{skhead_apply.1} parent=0 // loop_body
    %s78 = ssub.s32 %s73, 1
    %s79 = ssub.s32 %s73, 2
    %s80 = sadd.s32 %s73, 1
    %s81 = ssub.s32 %s73, %s80
    %p82 = scmp.eq.s32.totalorder %s81, 0
    %s84 = sadd.s32 %s83, 1
    %s85 = scalar_select %p82, %s83, %s84
    %p88 = pneg %p82
    %p89 = scmp.eq.s32.totalorder %s73, 1
    %p90 = por %p88, %p89
    %p91 = scmp.ne.s32.totalorder %s83, %s86
    %p92 = scmp.eq.s32.totalorder %s73, 0
    %p93 = por %p91, %p92
    %p94 = scmp.ne.s32.totalorder %s83, %s86
    %p95 = scmp.eq.s32.totalorder %s78, 1
    %p96 = por %p94, %p95
    %p97 = scmp.ne.s32.totalorder %s86, %s87
    %p98 = scmp.eq.s32.totalorder %s78, 0
    %p99 = por %p97, %p98
    %p100 = scmp.ne.s32.totalorder %s86, %s87
    %p101 = scmp.eq.s32.totalorder %s79, 1
    %p102 = por %p100, %p101
    %p104 = scmp.ne.s32.totalorder %s87, %s103
    %p105 = scmp.eq.s32.totalorder %s79, 0
    %p106 = por %p104, %p105
    %s107 = ssub.s32 %s73, %s80
    %p108 = scmp.eq.s32.totalorder %s107, 0
    %s110 = sadd.s32 %s109, 1
    %s111 = scalar_select %p108, %s109, %s110
    %p114 = pneg %p108
    %p115 = scmp.eq.s32.totalorder %s73, 1
    %p116 = por %p114, %p115
    %p117 = scmp.ne.s32.totalorder %s109, %s112
    %p118 = scmp.eq.s32.totalorder %s73, 0
    %p119 = por %p117, %p118
    %p120 = scmp.ne.s32.totalorder %s109, %s112
    %p121 = scmp.eq.s32.totalorder %s78, 1
    %p122 = por %p120, %p121
    %p123 = scmp.ne.s32.totalorder %s112, %s113
    %p124 = scmp.eq.s32.totalorder %s78, 0
    %p125 = por %p123, %p124
    %p126 = scmp.ne.s32.totalorder %s112, %s113
    %p127 = scmp.eq.s32.totalorder %s79, 1
    %p128 = por %p126, %p127
    %p130 = scmp.ne.s32.totalorder %s113, %s129
    %p131 = scmp.eq.s32.totalorder %s79, 0
    %p132 = por %p130, %p131
    %s133 = ssub.s32 %s73, %s80
    %p134 = scmp.eq.s32.totalorder %s133, 0
    %s136 = sadd.s32 %s135, 1
    %s137 = scalar_select %p134, %s135, %s136
    %p140 = pneg %p134
    %p141 = scmp.eq.s32.totalorder %s73, 1
    %p142 = por %p140, %p141
    %p143 = scmp.ne.s32.totalorder %s135, %s138
    %p144 = scmp.eq.s32.totalorder %s73, 0
    %p145 = por %p143, %p144
    %p146 = scmp.ne.s32.totalorder %s135, %s138
    %p147 = scmp.eq.s32.totalorder %s78, 1
    %p148 = por %p146, %p147
    %p149 = scmp.ne.s32.totalorder %s138, %s139
    %p150 = scmp.eq.s32.totalorder %s78, 0
    %p151 = por %p149, %p150
    %p152 = scmp.ne.s32.totalorder %s138, %s139
    %p153 = scmp.eq.s32.totalorder %s79, 1
    %p154 = por %p152, %p153
    %p156 = scmp.ne.s32.totalorder %s139, %s155
    %p157 = scmp.eq.s32.totalorder %s79, 0
    %p158 = por %p156, %p157
    %s159 = ssub.s32 %s73, %s80
    %p160 = scmp.eq.s32.totalorder %s159, 0
    %s162 = sadd.s32 %s161, 1
    %s163 = scalar_select %p160, %s161, %s162
    %p166 = pneg %p160
    %p167 = scmp.eq.s32.totalorder %s73, 1
    %p168 = por %p166, %p167
    %p169 = scmp.ne.s32.totalorder %s161, %s164
    %p170 = scmp.eq.s32.totalorder %s73, 0
    %p171 = por %p169, %p170
    %p172 = scmp.ne.s32.totalorder %s161, %s164
    %p173 = scmp.eq.s32.totalorder %s78, 1
    %p174 = por %p172, %p173
    %p175 = scmp.ne.s32.totalorder %s164, %s165
    %p176 = scmp.eq.s32.totalorder %s78, 0
    %p177 = por %p175, %p176
    %p178 = scmp.ne.s32.totalorder %s164, %s165
    %p179 = scmp.eq.s32.totalorder %s79, 1
    %p180 = por %p178, %p179
    %p182 = scmp.ne.s32.totalorder %s165, %s181
    %p183 = scmp.eq.s32.totalorder %s79, 0
    %p184 = por %p182, %p183
    %s186 = sadd.s32 %s185, 1
    %p189 = scmp.eq.s32.totalorder %s73, 1
    %p190 = scmp.ne.s32.totalorder %s185, %s187
    %p191 = scmp.eq.s32.totalorder %s73, 0
    %p192 = por %p190, %p191
    %p193 = scmp.ne.s32.totalorder %s185, %s187
    %p194 = scmp.eq.s32.totalorder %s78, 1
    %p195 = por %p193, %p194
    %p196 = scmp.ne.s32.totalorder %s187, %s188
    %p197 = scmp.eq.s32.totalorder %s78, 0
    %p198 = por %p196, %p197
    %p199 = scmp.ne.s32.totalorder %s187, %s188
    %p200 = scmp.eq.s32.totalorder %s79, 1
    %p201 = por %p199, %p200
    %p203 = scmp.ne.s32.totalorder %s188, %s202
    %p204 = scmp.eq.s32.totalorder %s79, 0
    %p205 = por %p203, %p204
    %s207 = sadd.s32 %s206, 1
    %p210 = scmp.eq.s32.totalorder %s73, 1
    %p211 = scmp.ne.s32.totalorder %s206, %s208
    %p212 = scmp.eq.s32.totalorder %s73, 0
    %p213 = por %p211, %p212
    %p214 = scmp.ne.s32.totalorder %s206, %s208
    %p215 = scmp.eq.s32.totalorder %s78, 1
    %p216 = por %p214, %p215
    %p217 = scmp.ne.s32.totalorder %s208, %s209
    %p218 = scmp.eq.s32.totalorder %s78, 0
    %p219 = por %p217, %p218
    %p220 = scmp.ne.s32.totalorder %s208, %s209
    %p221 = scmp.eq.s32.totalorder %s79, 1
    %p222 = por %p220, %p221
    %p224 = scmp.ne.s32.totalorder %s209, %s223
    %p225 = scmp.eq.s32.totalorder %s79, 0
    %p226 = por %p224, %p225
    %s228 = sadd.s32 %s227, 1
    %p231 = scmp.eq.s32.totalorder %s73, 1
    %p232 = scmp.ne.s32.totalorder %s227, %s229
    %p233 = scmp.eq.s32.totalorder %s73, 0
    %p234 = por %p232, %p233
    %p235 = scmp.ne.s32.totalorder %s227, %s229
    %p236 = scmp.eq.s32.totalorder %s78, 1
    %p237 = por %p235, %p236
    %p238 = scmp.ne.s32.totalorder %s229, %s230
    %p239 = scmp.eq.s32.totalorder %s78, 0
    %p240 = por %p238, %p239
    %p241 = scmp.ne.s32.totalorder %s229, %s230
    %p242 = scmp.eq.s32.totalorder %s79, 1
    %p243 = por %p241, %p242
    %p245 = scmp.ne.s32.totalorder %s230, %s244
    %p246 = scmp.eq.s32.totalorder %s79, 0
    %p247 = por %p245, %p246
    %s249 = sadd.s32 %s248, 1
    %p252 = scmp.eq.s32.totalorder %s73, 1
    %p253 = scmp.ne.s32.totalorder %s248, %s250
    %p254 = scmp.eq.s32.totalorder %s73, 0
    %p255 = por %p253, %p254
    %p256 = scmp.ne.s32.totalorder %s248, %s250
    %p257 = scmp.eq.s32.totalorder %s78, 1
    %p258 = por %p256, %p257
    %p259 = scmp.ne.s32.totalorder %s250, %s251
    %p260 = scmp.eq.s32.totalorder %s78, 0
    %p261 = por %p259, %p260
    %p262 = scmp.ne.s32.totalorder %s250, %s251
    %p263 = scmp.eq.s32.totalorder %s79, 1
    %p264 = por %p262, %p263
    %p266 = scmp.ne.s32.totalorder %s251, %s265
    %p267 = scmp.eq.s32.totalorder %s79, 0
    %p268 = por %p266, %p267
    %s270 = sadd.s32 %s269, 1
    %p273 = scmp.eq.s32.totalorder %s73, 1
    %p274 = scmp.ne.s32.totalorder %s269, %s271
    %p275 = scmp.eq.s32.totalorder %s73, 0
    %p276 = por %p274, %p275
    %p277 = scmp.ne.s32.totalorder %s269, %s271
    %p278 = scmp.eq.s32.totalorder %s78, 1
    %p279 = por %p277, %p278
    %p280 = scmp.ne.s32.totalorder %s271, %s272
    %p281 = scmp.eq.s32.totalorder %s78, 0
    %p282 = por %p280, %p281
    %p283 = scmp.ne.s32.totalorder %s271, %s272
    %p284 = scmp.eq.s32.totalorder %s79, 1
    %p285 = por %p283, %p284
    %p287 = scmp.ne.s32.totalorder %s272, %s286
    %p288 = scmp.eq.s32.totalorder %s79, 0
    %p289 = por %p287, %p288
    %s291 = sadd.s32 %s290, 1
    %p294 = scmp.eq.s32.totalorder %s73, 1
    %p295 = scmp.ne.s32.totalorder %s290, %s292
    %p296 = scmp.eq.s32.totalorder %s73, 0
    %p297 = por %p295, %p296
    %p298 = scmp.ne.s32.totalorder %s290, %s292
    %p299 = scmp.eq.s32.totalorder %s78, 1
    %p300 = por %p298, %p299
    %p301 = scmp.ne.s32.totalorder %s292, %s293
    %p302 = scmp.eq.s32.totalorder %s78, 0
    %p303 = por %p301, %p302
    %p304 = scmp.ne.s32.totalorder %s292, %s293
    %p305 = scmp.eq.s32.totalorder %s79, 1
    %p306 = por %p304, %p305
    %p308 = scmp.ne.s32.totalorder %s293, %s307
    %p309 = scmp.eq.s32.totalorder %s79, 0
    %p310 = por %p308, %p309
    %s312 = sadd.s32 %s311, 1
    %p315 = scmp.eq.s32.totalorder %s73, 1
    %p316 = scmp.ne.s32.totalorder %s311, %s313
    %p317 = scmp.eq.s32.totalorder %s73, 0
    %p318 = por %p316, %p317
    %p319 = scmp.ne.s32.totalorder %s311, %s313
    %p320 = scmp.eq.s32.totalorder %s78, 1
    %p321 = por %p319, %p320
    %p322 = scmp.ne.s32.totalorder %s313, %s314
    %p323 = scmp.eq.s32.totalorder %s78, 0
    %p324 = por %p322, %p323
    %p325 = scmp.ne.s32.totalorder %s313, %s314
    %p326 = scmp.eq.s32.totalorder %s79, 1
    %p327 = por %p325, %p326
    %p329 = scmp.ne.s32.totalorder %s314, %s328
    %p330 = scmp.eq.s32.totalorder %s79, 0
    %p331 = por %p329, %p330
    %s333 = sadd.s32 %s332, 1
    %p336 = scmp.eq.s32.totalorder %s73, 1
    %p337 = scmp.ne.s32.totalorder %s332, %s334
    %p338 = scmp.eq.s32.totalorder %s73, 0
    %p339 = por %p337, %p338
    %p340 = scmp.ne.s32.totalorder %s332, %s334
    %p341 = scmp.eq.s32.totalorder %s78, 1
    %p342 = por %p340, %p341
    %p343 = scmp.ne.s32.totalorder %s334, %s335
    %p344 = scmp.eq.s32.totalorder %s78, 0
    %p345 = por %p343, %p344
    %p346 = scmp.ne.s32.totalorder %s334, %s335
    %p347 = scmp.eq.s32.totalorder %s79, 1
    %p348 = por %p346, %p347
    %p350 = scmp.ne.s32.totalorder %s335, %s349
    %p351 = scmp.eq.s32.totalorder %s79, 0
    %p352 = por %p350, %p351
    %s354 = sadd.s32 %s353, 1
    %p357 = scmp.eq.s32.totalorder %s73, 1
    %p358 = scmp.ne.s32.totalorder %s353, %s355
    %p359 = scmp.eq.s32.totalorder %s73, 0
    %p360 = por %p358, %p359
    %p361 = scmp.ne.s32.totalorder %s353, %s355
    %p362 = scmp.eq.s32.totalorder %s78, 1
    %p363 = por %p361, %p362
    %p364 = scmp.ne.s32.totalorder %s355, %s356
    %p365 = scmp.eq.s32.totalorder %s78, 0
    %p366 = por %p364, %p365
    %p367 = scmp.ne.s32.totalorder %s355, %s356
    %p368 = scmp.eq.s32.totalorder %s79, 1
    %p369 = por %p367, %p368
    %p371 = scmp.ne.s32.totalorder %s356, %s370
    %p372 = scmp.eq.s32.totalorder %s79, 0
    %p373 = por %p371, %p372
    %s375 = sadd.s32 %s374, 1
    %p378 = scmp.eq.s32.totalorder %s73, 1
    %p379 = scmp.ne.s32.totalorder %s374, %s376
    %p380 = scmp.eq.s32.totalorder %s73, 0
    %p381 = por %p379, %p380
    %p382 = scmp.ne.s32.totalorder %s374, %s376
    %p383 = scmp.eq.s32.totalorder %s78, 1
    %p384 = por %p382, %p383
    %p385 = scmp.ne.s32.totalorder %s376, %s377
    %p386 = scmp.eq.s32.totalorder %s78, 0
    %p387 = por %p385, %p386
    %p388 = scmp.ne.s32.totalorder %s376, %s377
    %p389 = scmp.eq.s32.totalorder %s79, 1
    %p390 = por %p388, %p389
    %p392 = scmp.ne.s32.totalorder %s377, %s391
    %p393 = scmp.eq.s32.totalorder %s79, 0
    %p394 = por %p392, %p393
    %s396 = sadd.s32 %s395, 1
    %p399 = scmp.eq.s32.totalorder %s73, 1
    %p400 = scmp.ne.s32.totalorder %s395, %s397
    %p401 = scmp.eq.s32.totalorder %s73, 0
    %p402 = por %p400, %p401
    %p403 = scmp.ne.s32.totalorder %s395, %s397
    %p404 = scmp.eq.s32.totalorder %s78, 1
    %p405 = por %p403, %p404
    %p406 = scmp.ne.s32.totalorder %s397, %s398
    %p407 = scmp.eq.s32.totalorder %s78, 0
    %p408 = por %p406, %p407
    %p409 = scmp.ne.s32.totalorder %s397, %s398
    %p410 = scmp.eq.s32.totalorder %s79, 1
    %p411 = por %p409, %p410
    %p413 = scmp.ne.s32.totalorder %s398, %s412
    %p414 = scmp.eq.s32.totalorder %s79, 0
    %p415 = por %p413, %p414
    %s417 = sadd.s32 %s416, 1
    %p420 = scmp.eq.s32.totalorder %s73, 1
    %p421 = scmp.ne.s32.totalorder %s416, %s418
    %p422 = scmp.eq.s32.totalorder %s73, 0
    %p423 = por %p421, %p422
    %p424 = scmp.ne.s32.totalorder %s416, %s418
    %p425 = scmp.eq.s32.totalorder %s78, 1
    %p426 = por %p424, %p425
    %p427 = scmp.ne.s32.totalorder %s418, %s419
    %p428 = scmp.eq.s32.totalorder %s78, 0
    %p429 = por %p427, %p428
    %p430 = scmp.ne.s32.totalorder %s418, %s419
    %p431 = scmp.eq.s32.totalorder %s79, 1
    %p432 = por %p430, %p431
    %p434 = scmp.ne.s32.totalorder %s419, %s433
    %p435 = scmp.eq.s32.totalorder %s79, 0
    %p436 = por %p434, %p435
    %s438 = sadd.s32 %s437, 1
    %p441 = scmp.eq.s32.totalorder %s73, 1
    %p442 = scmp.ne.s32.totalorder %s437, %s439
    %p443 = scmp.eq.s32.totalorder %s73, 0
    %p444 = por %p442, %p443
    %p445 = scmp.ne.s32.totalorder %s437, %s439
    %p446 = scmp.eq.s32.totalorder %s78, 1
    %p447 = por %p445, %p446
    %p448 = scmp.ne.s32.totalorder %s439, %s440
    %p449 = scmp.eq.s32.totalorder %s78, 0
    %p450 = por %p448, %p449
    %p451 = scmp.ne.s32.totalorder %s439, %s440
    %p452 = scmp.eq.s32.totalorder %s79, 1
    %p453 = por %p451, %p452
    %p455 = scmp.ne.s32.totalorder %s440, %s454
    %p456 = scmp.eq.s32.totalorder %s79, 0
    %p457 = por %p455, %p456
    %s459 = sadd.s32 %s458, 1
    %p462 = scmp.eq.s32.totalorder %s73, 1
    %p463 = scmp.ne.s32.totalorder %s458, %s460
    %p464 = scmp.eq.s32.totalorder %s73, 0
    %p465 = por %p463, %p464
    %p466 = scmp.ne.s32.totalorder %s458, %s460
    %p467 = scmp.eq.s32.totalorder %s78, 1
    %p468 = por %p466, %p467
    %p469 = scmp.ne.s32.totalorder %s460, %s461
    %p470 = scmp.eq.s32.totalorder %s78, 0
    %p471 = por %p469, %p470
    %p472 = scmp.ne.s32.totalorder %s460, %s461
    %p473 = scmp.eq.s32.totalorder %s79, 1
    %p474 = por %p472, %p473
    %p476 = scmp.ne.s32.totalorder %s461, %s475
    %p477 = scmp.eq.s32.totalorder %s79, 0
    %p478 = por %p476, %p477
    %s480 = sadd.s32 %s479, 1
    %p483 = scmp.eq.s32.totalorder %s73, 1
    %p484 = scmp.ne.s32.totalorder %s479, %s481
    %p485 = scmp.eq.s32.totalorder %s73, 0
    %p486 = por %p484, %p485
    %p487 = scmp.ne.s32.totalorder %s479, %s481
    %p488 = scmp.eq.s32.totalorder %s78, 1
    %p489 = por %p487, %p488
    %p490 = scmp.ne.s32.totalorder %s481, %s482
    %p491 = scmp.eq.s32.totalorder %s78, 0
    %p492 = por %p490, %p491
    %p493 = scmp.ne.s32.totalorder %s481, %s482
    %p494 = scmp.eq.s32.totalorder %s79, 1
    %p495 = por %p493, %p494
    %p497 = scmp.ne.s32.totalorder %s482, %s496
    %p498 = scmp.eq.s32.totalorder %s79, 0
    %p499 = por %p497, %p498
    %s501 = sadd.s32 %s500, 1
    %p504 = scmp.eq.s32.totalorder %s73, 1
    %p505 = scmp.ne.s32.totalorder %s500, %s502
    %p506 = scmp.eq.s32.totalorder %s73, 0
    %p507 = por %p505, %p506
    %p508 = scmp.ne.s32.totalorder %s500, %s502
    %p509 = scmp.eq.s32.totalorder %s78, 1
    %p510 = por %p508, %p509
    %p511 = scmp.ne.s32.totalorder %s502, %s503
    %p512 = scmp.eq.s32.totalorder %s78, 0
    %p513 = por %p511, %p512
    %p514 = scmp.ne.s32.totalorder %s502, %s503
    %p515 = scmp.eq.s32.totalorder %s79, 1
    %p516 = por %p514, %p515
    %p518 = scmp.ne.s32.totalorder %s503, %s517
    %p519 = scmp.eq.s32.totalorder %s79, 0
    %p520 = por %p518, %p519
    %s522 = sadd.s32 %s521, 1
    %p525 = scmp.eq.s32.totalorder %s73, 1
    %p526 = scmp.ne.s32.totalorder %s521, %s523
    %p527 = scmp.eq.s32.totalorder %s73, 0
    %p528 = por %p526, %p527
    %p529 = scmp.ne.s32.totalorder %s521, %s523
    %p530 = scmp.eq.s32.totalorder %s78, 1
    %p531 = por %p529, %p530
    %p532 = scmp.ne.s32.totalorder %s523, %s524
    %p533 = scmp.eq.s32.totalorder %s78, 0
    %p534 = por %p532, %p533
    %p535 = scmp.ne.s32.totalorder %s523, %s524
    %p536 = scmp.eq.s32.totalorder %s79, 1
    %p537 = por %p535, %p536
    %p539 = scmp.ne.s32.totalorder %s524, %s538
    %p540 = scmp.eq.s32.totalorder %s79, 0
    %p541 = por %p539, %p540
    %s543 = sadd.s32 %s542, 1
    %p546 = scmp.eq.s32.totalorder %s73, 1
    %p547 = scmp.ne.s32.totalorder %s542, %s544
    %p548 = scmp.eq.s32.totalorder %s73, 0
    %p549 = por %p547, %p548
    %p550 = scmp.ne.s32.totalorder %s542, %s544
    %p551 = scmp.eq.s32.totalorder %s78, 1
    %p552 = por %p550, %p551
    %p553 = scmp.ne.s32.totalorder %s544, %s545
    %p554 = scmp.eq.s32.totalorder %s78, 0
    %p555 = por %p553, %p554
    %p556 = scmp.ne.s32.totalorder %s544, %s545
    %p557 = scmp.eq.s32.totalorder %s79, 1
    %p558 = por %p556, %p557
    %p560 = scmp.ne.s32.totalorder %s545, %s559
    %p561 = scmp.eq.s32.totalorder %s79, 0
    %p562 = por %p560, %p561
    %s564 = sadd.s32 %s563, 1
    %p567 = scmp.eq.s32.totalorder %s73, 1
    %p568 = scmp.ne.s32.totalorder %s563, %s565
    %p569 = scmp.eq.s32.totalorder %s73, 0
    %p570 = por %p568, %p569
    %p571 = scmp.ne.s32.totalorder %s563, %s565
    %p572 = scmp.eq.s32.totalorder %s78, 1
    %p573 = por %p571, %p572
    %p574 = scmp.ne.s32.totalorder %s565, %s566
    %p575 = scmp.eq.s32.totalorder %s78, 0
    %p576 = por %p574, %p575
    %p577 = scmp.ne.s32.totalorder %s565, %s566
    %p578 = scmp.eq.s32.totalorder %s79, 1
    %p579 = por %p577, %p578
    %p581 = scmp.ne.s32.totalorder %s566, %s580
    %p582 = scmp.eq.s32.totalorder %s79, 0
    %p583 = por %p581, %p582
    %s585 = sadd.s32 %s584, 1
    %p588 = scmp.eq.s32.totalorder %s73, 1
    %p589 = scmp.ne.s32.totalorder %s584, %s586
    %p590 = scmp.eq.s32.totalorder %s73, 0
    %p591 = por %p589, %p590
    %p592 = scmp.ne.s32.totalorder %s584, %s586
    %p593 = scmp.eq.s32.totalorder %s78, 1
    %p594 = por %p592, %p593
    %p595 = scmp.ne.s32.totalorder %s586, %s587
    %p596 = scmp.eq.s32.totalorder %s78, 0
    %p597 = por %p595, %p596
    %p598 = scmp.ne.s32.totalorder %s586, %s587
    %p599 = scmp.eq.s32.totalorder %s79, 1
    %p600 = por %p598, %p599
    %p602 = scmp.ne.s32.totalorder %s587, %s601
    %p603 = scmp.eq.s32.totalorder %s79, 0
    %p604 = por %p602, %p603
    %s606 = sadd.s32 %s605, 1
    %p609 = scmp.eq.s32.totalorder %s73, 1
    %p610 = scmp.ne.s32.totalorder %s605, %s607
    %p611 = scmp.eq.s32.totalorder %s73, 0
    %p612 = por %p610, %p611
    %p613 = scmp.ne.s32.totalorder %s605, %s607
    %p614 = scmp.eq.s32.totalorder %s78, 1
    %p615 = por %p613, %p614
    %p616 = scmp.ne.s32.totalorder %s607, %s608
    %p617 = scmp.eq.s32.totalorder %s78, 0
    %p618 = por %p616, %p617
    %p619 = scmp.ne.s32.totalorder %s607, %s608
    %p620 = scmp.eq.s32.totalorder %s79, 1
    %p621 = por %p619, %p620
    %p623 = scmp.ne.s32.totalorder %s608, %s622
    %p624 = scmp.eq.s32.totalorder %s79, 0
    %p625 = por %p623, %p624
    %s627 = sadd.s32 %s626, 1
    %p630 = scmp.eq.s32.totalorder %s73, 1
    %p631 = scmp.ne.s32.totalorder %s626, %s628
    %p632 = scmp.eq.s32.totalorder %s73, 0
    %p633 = por %p631, %p632
    %p634 = scmp.ne.s32.totalorder %s626, %s628
    %p635 = scmp.eq.s32.totalorder %s78, 1
    %p636 = por %p634, %p635
    %p637 = scmp.ne.s32.totalorder %s628, %s629
    %p638 = scmp.eq.s32.totalorder %s78, 0
    %p639 = por %p637, %p638
    %p640 = scmp.ne.s32.totalorder %s628, %s629
    %p641 = scmp.eq.s32.totalorder %s79, 1
    %p642 = por %p640, %p641
    %p644 = scmp.ne.s32.totalorder %s629, %s643
    %p645 = scmp.eq.s32.totalorder %s79, 0
    %p646 = por %p644, %p645
    %s648 = sadd.s32 %s647, 1
    %p651 = scmp.eq.s32.totalorder %s73, 1
    %p652 = scmp.ne.s32.totalorder %s647, %s649
    %p653 = scmp.eq.s32.totalorder %s73, 0
    %p654 = por %p652, %p653
    %p655 = scmp.ne.s32.totalorder %s647, %s649
    %p656 = scmp.eq.s32.totalorder %s78, 1
    %p657 = por %p655, %p656
    %p658 = scmp.ne.s32.totalorder %s649, %s650
    %p659 = scmp.eq.s32.totalorder %s78, 0
    %p660 = por %p658, %p659
    %p661 = scmp.ne.s32.totalorder %s649, %s650
    %p662 = scmp.eq.s32.totalorder %s79, 1
    %p663 = por %p661, %p662
    %p665 = scmp.ne.s32.totalorder %s650, %s664
    %p666 = scmp.eq.s32.totalorder %s79, 0
    %p667 = por %p665, %p666
    %s669 = sadd.s32 %s668, 1
    %p672 = scmp.eq.s32.totalorder %s73, 1
    %p673 = scmp.ne.s32.totalorder %s668, %s670
    %p674 = scmp.eq.s32.totalorder %s73, 0
    %p675 = por %p673, %p674
    %p676 = scmp.ne.s32.totalorder %s668, %s670
    %p677 = scmp.eq.s32.totalorder %s78, 1
    %p678 = por %p676, %p677
    %p679 = scmp.ne.s32.totalorder %s670, %s671
    %p680 = scmp.eq.s32.totalorder %s78, 0
    %p681 = por %p679, %p680
    %p682 = scmp.ne.s32.totalorder %s670, %s671
    %p683 = scmp.eq.s32.totalorder %s79, 1
    %p684 = por %p682, %p683
    %p686 = scmp.ne.s32.totalorder %s671, %s685
    %p687 = scmp.eq.s32.totalorder %s79, 0
    %p688 = por %p686, %p687
    %s690 = sadd.s32 %s689, 1
    %p693 = scmp.eq.s32.totalorder %s73, 1
    %p694 = scmp.ne.s32.totalorder %s689, %s691
    %p695 = scmp.eq.s32.totalorder %s73, 0
    %p696 = por %p694, %p695
    %p697 = scmp.ne.s32.totalorder %s689, %s691
    %p698 = scmp.eq.s32.totalorder %s78, 1
    %p699 = por %p697, %p698
    %p700 = scmp.ne.s32.totalorder %s691, %s692
    %p701 = scmp.eq.s32.totalorder %s78, 0
    %p702 = por %p700, %p701
    %p703 = scmp.ne.s32.totalorder %s691, %s692
    %p704 = scmp.eq.s32.totalorder %s79, 1
    %p705 = por %p703, %p704
    %p707 = scmp.ne.s32.totalorder %s692, %s706
    %p708 = scmp.eq.s32.totalorder %s79, 0
    %p709 = por %p707, %p708
    %s711 = sadd.s32 %s710, 1
    %p714 = scmp.eq.s32.totalorder %s73, 1
    %p715 = scmp.ne.s32.totalorder %s710, %s712
    %p716 = scmp.eq.s32.totalorder %s73, 0
    %p717 = por %p715, %p716
    %p718 = scmp.ne.s32.totalorder %s710, %s712
    %p719 = scmp.eq.s32.totalorder %s78, 1
    %p720 = por %p718, %p719
    %p721 = scmp.ne.s32.totalorder %s712, %s713
    %p722 = scmp.eq.s32.totalorder %s78, 0
    %p723 = por %p721, %p722
    %p724 = scmp.ne.s32.totalorder %s712, %s713
    %p725 = scmp.eq.s32.totalorder %s79, 1
    %p726 = por %p724, %p725
    %p728 = scmp.ne.s32.totalorder %s713, %s727
    %p729 = scmp.eq.s32.totalorder %s79, 0
    %p730 = por %p728, %p729
    %s732 = sadd.s32 %s731, 1
    %p735 = scmp.eq.s32.totalorder %s73, 1
    %p736 = scmp.ne.s32.totalorder %s731, %s733
    %p737 = scmp.eq.s32.totalorder %s73, 0
    %p738 = por %p736, %p737
    %p739 = scmp.ne.s32.totalorder %s731, %s733
    %p740 = scmp.eq.s32.totalorder %s78, 1
    %p741 = por %p739, %p740
    %p742 = scmp.ne.s32.totalorder %s733, %s734
    %p743 = scmp.eq.s32.totalorder %s78, 0
    %p744 = por %p742, %p743
    %p745 = scmp.ne.s32.totalorder %s733, %s734
    %p746 = scmp.eq.s32.totalorder %s79, 1
    %p747 = por %p745, %p746
    %p749 = scmp.ne.s32.totalorder %s734, %s748
    %p750 = scmp.eq.s32.totalorder %s79, 0
    %p751 = por %p749, %p750
    %s753 = sadd.s32 %s752, 1
    %p756 = scmp.eq.s32.totalorder %s73, 1
    %p757 = scmp.ne.s32.totalorder %s752, %s754
    %p758 = scmp.eq.s32.totalorder %s73, 0
    %p759 = por %p757, %p758
    %p760 = scmp.ne.s32.totalorder %s752, %s754
    %p761 = scmp.eq.s32.totalorder %s78, 1
    %p762 = por %p760, %p761
    %p763 = scmp.ne.s32.totalorder %s754, %s755
    %p764 = scmp.eq.s32.totalorder %s78, 0
    %p765 = por %p763, %p764
    %p766 = scmp.ne.s32.totalorder %s754, %s755
    %p767 = scmp.eq.s32.totalorder %s79, 1
    %p768 = por %p766, %p767
    %p770 = scmp.ne.s32.totalorder %s755, %s769
    %p771 = scmp.eq.s32.totalorder %s79, 0
    %p772 = por %p770, %p771
    %s774 = sadd.s32 %s773, 1
    %p777 = scmp.eq.s32.totalorder %s73, 1
    %p778 = scmp.ne.s32.totalorder %s773, %s775
    %p779 = scmp.eq.s32.totalorder %s73, 0
    %p780 = por %p778, %p779
    %p781 = scmp.ne.s32.totalorder %s773, %s775
    %p782 = scmp.eq.s32.totalorder %s78, 1
    %p783 = por %p781, %p782
    %p784 = scmp.ne.s32.totalorder %s775, %s776
    %p785 = scmp.eq.s32.totalorder %s78, 0
    %p786 = por %p784, %p785
    %p787 = scmp.ne.s32.totalorder %s775, %s776
    %p788 = scmp.eq.s32.totalorder %s79, 1
    %p789 = por %p787, %p788
    %p791 = scmp.ne.s32.totalorder %s776, %s790
    %p792 = scmp.eq.s32.totalorder %s79, 0
    %p793 = por %p791, %p792
    %s794 = ssub.s32 %s73, %s80
    %p795 = scmp.eq.s32.totalorder %s794, 0
    %s797 = sadd.s32 %s796, 1
    %s798 = scalar_select %p795, %s796, %s797
    %p801 = pneg %p795
    %p802 = scmp.eq.s32.totalorder %s73, 1
    %p803 = por %p801, %p802
    %p804 = scmp.ne.s32.totalorder %s796, %s799
    %p805 = scmp.eq.s32.totalorder %s73, 0
    %p806 = por %p804, %p805
    %p807 = scmp.ne.s32.totalorder %s796, %s799
    %p808 = scmp.eq.s32.totalorder %s78, 1
    %p809 = por %p807, %p808
    %p810 = scmp.ne.s32.totalorder %s799, %s800
    %p811 = scmp.eq.s32.totalorder %s78, 0
    %p812 = por %p810, %p811
    %p813 = scmp.ne.s32.totalorder %s799, %s800
    %p814 = scmp.eq.s32.totalorder %s79, 1
    %p815 = por %p813, %p814
    %p817 = scmp.ne.s32.totalorder %s800, %s816
    %p818 = scmp.eq.s32.totalorder %s79, 0
    %p819 = por %p817, %p818
    %p820 = scmp.le.s32.totalorder 1, %s73
    %p821 = scmp.lt.s32.totalorder %s73, 3
    %p822 = pnand %p820, %p821
    %p823 = pneg %p822
    // Predicated region
    $region9: #{skhead_apply.1} parent=5 // pred_check
      _
    $region10: #{skhead_apply.1} parent=5 // pred_check_branch
      %825 = sbr.rel (%p822) target = $region12
    $region11: #{skhead_apply.1} parent=5 // pred_region
      %s826 = ssub.s32 %s73, 1
      // Predicated region
      $region13: #{skhead_apply.1} parent=11 // pred_check
        %p827 = pneg %p198
      $region14: #{skhead_apply.1} parent=11 // pred_check_branch
        %829 = sbr.rel (%p827) target = $region16
      $region15: #{skhead_apply.1} parent=11 // pred_region
        _
      $region16: #{skhead_apply.1} parent=11 // pred_fallthru
        _
      // Predicated region
      $region17: #{skhead_apply.1} parent=11 // pred_check
        %p830 = pneg %p219
      $region18: #{skhead_apply.1} parent=11 // pred_check_branch
        %832 = sbr.rel (%p830) target = $region20
      $region19: #{skhead_apply.1} parent=11 // pred_region
        _
      $region20: #{skhead_apply.1} parent=11 // pred_fallthru
        _
      // Predicated region
      $region21: #{skhead_apply.1} parent=11 // pred_check
        %p833 = pneg %p240
      $region22: #{skhead_apply.1} parent=11 // pred_check_branch
        %835 = sbr.rel (%p833) target = $region24
      $region23: #{skhead_apply.1} parent=11 // pred_region
        _
      $region24: #{skhead_apply.1} parent=11 // pred_fallthru
        _
      // Predicated region
      $region25: #{skhead_apply.1} parent=11 // pred_check
        %p836 = pneg %p261
      $region26: #{skhead_apply.1} parent=11 // pred_check_branch
        %838 = sbr.rel (%p836) target = $region28
      $region27: #{skhead_apply.1} parent=11 // pred_region
        _
      $region28: #{skhead_apply.1} parent=11 // pred_fallthru
        _
      // Predicated region
      $region29: #{skhead_apply.1} parent=11 // pred_check
        %p839 = pneg %p282
      $region30: #{skhead_apply.1} parent=11 // pred_check_branch
        %841 = sbr.rel (%p839) target = $region32
      $region31: #{skhead_apply.1} parent=11 // pred_region
        _
      $region32: #{skhead_apply.1} parent=11 // pred_fallthru
        _
      // Predicated region
      $region33: #{skhead_apply.1} parent=11 // pred_check
        %p842 = pneg %p303
      $region34: #{skhead_apply.1} parent=11 // pred_check_branch
        %844 = sbr.rel (%p842) target = $region36
      $region35: #{skhead_apply.1} parent=11 // pred_region
        _
      $region36: #{skhead_apply.1} parent=11 // pred_fallthru
        _
      // Predicated region
      $region37: #{skhead_apply.1} parent=11 // pred_check
        %p845 = pneg %p324
      $region38: #{skhead_apply.1} parent=11 // pred_check_branch
        %847 = sbr.rel (%p845) target = $region40
      $region39: #{skhead_apply.1} parent=11 // pred_region
        _
      $region40: #{skhead_apply.1} parent=11 // pred_fallthru
        _
      // Predicated region
      $region41: #{skhead_apply.1} parent=11 // pred_check
        %p848 = pneg %p345
      $region42: #{skhead_apply.1} parent=11 // pred_check_branch
        %850 = sbr.rel (%p848) target = $region44
      $region43: #{skhead_apply.1} parent=11 // pred_region
        _
      $region44: #{skhead_apply.1} parent=11 // pred_fallthru
        _
      // Predicated region
      $region45: #{skhead_apply.1} parent=11 // pred_check
        %p851 = pneg %p366
      $region46: #{skhead_apply.1} parent=11 // pred_check_branch
        %853 = sbr.rel (%p851) target = $region48
      $region47: #{skhead_apply.1} parent=11 // pred_region
        _
      $region48: #{skhead_apply.1} parent=11 // pred_fallthru
        _
      // Predicated region
      $region49: #{skhead_apply.1} parent=11 // pred_check
        %p854 = pneg %p387
      $region50: #{skhead_apply.1} parent=11 // pred_check_branch
        %856 = sbr.rel (%p854) target = $region52
      $region51: #{skhead_apply.1} parent=11 // pred_region
        _
      $region52: #{skhead_apply.1} parent=11 // pred_fallthru
        _
      // Predicated region
      $region53: #{skhead_apply.1} parent=11 // pred_check
        %p857 = pneg %p408
      $region54: #{skhead_apply.1} parent=11 // pred_check_branch
        %859 = sbr.rel (%p857) target = $region56
      $region55: #{skhead_apply.1} parent=11 // pred_region
        _
      $region56: #{skhead_apply.1} parent=11 // pred_fallthru
        _
      // Predicated region
      $region57: #{skhead_apply.1} parent=11 // pred_check
        %p860 = pneg %p429
      $region58: #{skhead_apply.1} parent=11 // pred_check_branch
        %862 = sbr.rel (%p860) target = $region60
      $region59: #{skhead_apply.1} parent=11 // pred_region
        _
      $region60: #{skhead_apply.1} parent=11 // pred_fallthru
        _
      // Predicated region
      $region61: #{skhead_apply.1} parent=11 // pred_check
        %p863 = pneg %p450
      $region62: #{skhead_apply.1} parent=11 // pred_check_branch
        %865 = sbr.rel (%p863) target = $region64
      $region63: #{skhead_apply.1} parent=11 // pred_region
        _
      $region64: #{skhead_apply.1} parent=11 // pred_fallthru
        _
      // Predicated region
      $region65: #{skhead_apply.1} parent=11 // pred_check
        %p866 = pneg %p471
      $region66: #{skhead_apply.1} parent=11 // pred_check_branch
        %868 = sbr.rel (%p866) target = $region68
      $region67: #{skhead_apply.1} parent=11 // pred_region
        _
      $region68: #{skhead_apply.1} parent=11 // pred_fallthru
        _
      // Predicated region
      $region69: #{skhead_apply.1} parent=11 // pred_check
        %p869 = pneg %p492
      $region70: #{skhead_apply.1} parent=11 // pred_check_branch
        %871 = sbr.rel (%p869) target = $region72
      $region71: #{skhead_apply.1} parent=11 // pred_region
        _
      $region72: #{skhead_apply.1} parent=11 // pred_fallthru
        _
      // Predicated region
      $region73: #{skhead_apply.1} parent=11 // pred_check
        %p872 = pneg %p513
      $region74: #{skhead_apply.1} parent=11 // pred_check_branch
        %874 = sbr.rel (%p872) target = $region76
      $region75: #{skhead_apply.1} parent=11 // pred_region
        _
      $region76: #{skhead_apply.1} parent=11 // pred_fallthru
        _
      // Predicated region
      $region77: #{skhead_apply.1} parent=11 // pred_check
        %p875 = pneg %p534
      $region78: #{skhead_apply.1} parent=11 // pred_check_branch
        %877 = sbr.rel (%p875) target = $region80
      $region79: #{skhead_apply.1} parent=11 // pred_region
        _
      $region80: #{skhead_apply.1} parent=11 // pred_fallthru
        _
      // Predicated region
      $region81: #{skhead_apply.1} parent=11 // pred_check
        %p878 = pneg %p555
      $region82: #{skhead_apply.1} parent=11 // pred_check_branch
        %880 = sbr.rel (%p878) target = $region84
      $region83: #{skhead_apply.1} parent=11 // pred_region
        _
      $region84: #{skhead_apply.1} parent=11 // pred_fallthru
        _
      // Predicated region
      $region85: #{skhead_apply.1} parent=11 // pred_check
        %p881 = pneg %p576
      $region86: #{skhead_apply.1} parent=11 // pred_check_branch
        %883 = sbr.rel (%p881) target = $region88
      $region87: #{skhead_apply.1} parent=11 // pred_region
        _
      $region88: #{skhead_apply.1} parent=11 // pred_fallthru
        _
      // Predicated region
      $region89: #{skhead_apply.1} parent=11 // pred_check
        %p884 = pneg %p597
      $region90: #{skhead_apply.1} parent=11 // pred_check_branch
        %886 = sbr.rel (%p884) target = $region92
      $region91: #{skhead_apply.1} parent=11 // pred_region
        _
      $region92: #{skhead_apply.1} parent=11 // pred_fallthru
        _
      // Predicated region
      $region93: #{skhead_apply.1} parent=11 // pred_check
        %p887 = pneg %p618
      $region94: #{skhead_apply.1} parent=11 // pred_check_branch
        %889 = sbr.rel (%p887) target = $region96
      $region95: #{skhead_apply.1} parent=11 // pred_region
        _
      $region96: #{skhead_apply.1} parent=11 // pred_fallthru
        _
      // Predicated region
      $region97: #{skhead_apply.1} parent=11 // pred_check
        %p890 = pneg %p639
      $region98: #{skhead_apply.1} parent=11 // pred_check_branch
        %892 = sbr.rel (%p890) target = $region100
      $region99: #{skhead_apply.1} parent=11 // pred_region
        _
      $region100: #{skhead_apply.1} parent=11 // pred_fallthru
        _
      // Predicated region
      $region101: #{skhead_apply.1} parent=11 // pred_check
        %p893 = pneg %p660
      $region102: #{skhead_apply.1} parent=11 // pred_check_branch
        %895 = sbr.rel (%p893) target = $region104
      $region103: #{skhead_apply.1} parent=11 // pred_region
        _
      $region104: #{skhead_apply.1} parent=11 // pred_fallthru
        _
      // Predicated region
      $region105: #{skhead_apply.1} parent=11 // pred_check
        %p896 = pneg %p681
      $region106: #{skhead_apply.1} parent=11 // pred_check_branch
        %898 = sbr.rel (%p896) target = $region108
      $region107: #{skhead_apply.1} parent=11 // pred_region
        _
      $region108: #{skhead_apply.1} parent=11 // pred_fallthru
        _
      // Predicated region
      $region109: #{skhead_apply.1} parent=11 // pred_check
        %p899 = pneg %p702
      $region110: #{skhead_apply.1} parent=11 // pred_check_branch
        %901 = sbr.rel (%p899) target = $region112
      $region111: #{skhead_apply.1} parent=11 // pred_region
        _
      $region112: #{skhead_apply.1} parent=11 // pred_fallthru
        _
      // Predicated region
      $region113: #{skhead_apply.1} parent=11 // pred_check
        %p902 = pneg %p723
      $region114: #{skhead_apply.1} parent=11 // pred_check_branch
        %904 = sbr.rel (%p902) target = $region116
      $region115: #{skhead_apply.1} parent=11 // pred_region
        _
      $region116: #{skhead_apply.1} parent=11 // pred_fallthru
        _
      // Predicated region
      $region117: #{skhead_apply.1} parent=11 // pred_check
        %p905 = pneg %p744
      $region118: #{skhead_apply.1} parent=11 // pred_check_branch
        %907 = sbr.rel (%p905) target = $region120
      $region119: #{skhead_apply.1} parent=11 // pred_region
        _
      $region120: #{skhead_apply.1} parent=11 // pred_fallthru
        _
      // Predicated region
      $region121: #{skhead_apply.1} parent=11 // pred_check
        %p908 = pneg %p765
      $region122: #{skhead_apply.1} parent=11 // pred_check_branch
        %910 = sbr.rel (%p908) target = $region124
      $region123: #{skhead_apply.1} parent=11 // pred_region
        _
      $region124: #{skhead_apply.1} parent=11 // pred_fallthru
        _
      // Predicated region
      $region125: #{skhead_apply.1} parent=11 // pred_check
        %p911 = pneg %p786
      $region126: #{skhead_apply.1} parent=11 // pred_check_branch
        %913 = sbr.rel (%p911) target = $region128
      $region127: #{skhead_apply.1} parent=11 // pred_region
        _
      $region128: #{skhead_apply.1} parent=11 // pred_fallthru
        _
    $region12: #{skhead_apply.1} parent=5 // pred_fallthru
      _
    %p914 = scmp.lt.s32.totalorder %s73, 2
    // Predicated region
    $region129: #{skhead_apply.1} parent=5 // pred_check
      %p915 = pneg %p914
    $region130: #{skhead_apply.1} parent=5 // pred_check_branch
      %917 = sbr.rel (%p915) target = $region132
    $region131: #{skhead_apply.1} parent=5 // pred_region
      // Predicated region
      $region133: #{skhead_apply.1} parent=131 // pred_check
        %p918 = pneg %p93
      $region134: #{skhead_apply.1} parent=131 // pred_check_branch
        %920 = sbr.rel (%p918) target = $region136
      $region135: #{skhead_apply.1} parent=131 // pred_region
        %p921 = scmp.lt.s32.totalorder %s73, 1
        %s922 = scalar_select %p921, %s73, 1
        %s923 = smul.addr %s922, 6
        %s924 = smul.addr %s923, 4
        %s925 = scalar_lea.vmem %s1, %s924
      $region136: #{skhead_apply.1} parent=131 // pred_fallthru
        _
      // Predicated region
      $region137: #{skhead_apply.1} parent=131 // pred_check
        %p926 = pneg %p119
      $region138: #{skhead_apply.1} parent=131 // pred_check_branch
        %928 = sbr.rel (%p926) target = $region140
      $region139: #{skhead_apply.1} parent=131 // pred_region
        %p929 = scmp.lt.s32.totalorder %s73, 1
        %s930 = scalar_select %p929, %s73, 1
        %s931 = smul.addr %s930, 4
        %s932 = smul.addr %s931, 4
        %s933 = scalar_lea.vmem %s3, %s932
      $region140: #{skhead_apply.1} parent=131 // pred_fallthru
        _
      // Predicated region
      $region141: #{skhead_apply.1} parent=131 // pred_check
        %p934 = pneg %p145
      $region142: #{skhead_apply.1} parent=131 // pred_check_branch
        %936 = sbr.rel (%p934) target = $region144
      $region143: #{skhead_apply.1} parent=131 // pred_region
        %p937 = scmp.lt.s32.totalorder %s73, 1
        %s938 = scalar_select %p937, %s73, 1
        %s939 = smul.addr %s938, 4
        %s940 = smul.addr %s939, 4
        %s941 = scalar_lea.vmem %s5, %s940
      $region144: #{skhead_apply.1} parent=131 // pred_fallthru
        _
      // Predicated region
      $region145: #{skhead_apply.1} parent=131 // pred_check
        %p942 = pneg %p171
      $region146: #{skhead_apply.1} parent=131 // pred_check_branch
        %944 = sbr.rel (%p942) target = $region148
      $region147: #{skhead_apply.1} parent=131 // pred_region
        %p945 = scmp.lt.s32.totalorder %s73, 1
        %s946 = scalar_select %p945, %s73, 1
        %s947 = smul.addr %s946, 6
        %s948 = smul.addr %s947, 4
        %s949 = scalar_lea.vmem %s7, %s948
      $region148: #{skhead_apply.1} parent=131 // pred_fallthru
        _
    $region132: #{skhead_apply.1} parent=5 // pred_fallthru
      _
    %p950 = scmp.le.s32.totalorder 1, %s73
    %p951 = scmp.lt.s32.totalorder %s73, 3
    %p952 = pnand %p950, %p951
    %p953 = pneg %p952
    // Predicated region
    $region149: #{skhead_apply.1} parent=5 // pred_check
      _
    $region150: #{skhead_apply.1} parent=5 // pred_check_branch
      %955 = sbr.rel (%p952) target = $region152
    $region151: #{skhead_apply.1} parent=5 // pred_region
      %s956 = ssub.s32 %s73, 1
      %p957 = scmp.lt.s32.totalorder %s78, 1
      %s958 = scalar_select %p957, %s78, 1
      %s959 = smul.addr %s958, 6
      %s960 = smul.addr %s959, 4
      %s961 = scalar_lea.vmem %s1, %s960
      %p962 = pneg %p99
      %p963 = pneg %p96
      %p964 = scmp.lt.s32.totalorder %s78, 1
      %s965 = scalar_select %p964, %s78, 1
      %s966 = smul.addr %s965, 4
      %s967 = smul.addr %s966, 4
      %s968 = scalar_lea.vmem %s3, %s967
      %p969 = pneg %p125
      %p970 = pneg %p122
      %p971 = scmp.lt.s32.totalorder %s78, 1
      %s972 = scalar_select %p971, %s78, 1
      %s973 = smul.addr %s972, 4
      %s974 = smul.addr %s973, 4
      %s975 = scalar_lea.vmem %s5, %s974
      %p976 = pneg %p151
      %p977 = pneg %p148
      %p978 = scmp.lt.s32.totalorder %s78, 1
      %s979 = scalar_select %p978, %s78, 1
      %s980 = smul.addr %s979, 6
      %s981 = smul.addr %s980, 4
      %s982 = scalar_lea.vmem %s7, %s981
      %p983 = pneg %p177
      %p984 = pneg %p174
      %p985 = pneg %p198
      %p986 = pneg %p195
      %p987 = pneg %p219
      %p988 = pneg %p216
      %p989 = pneg %p240
      %p990 = pneg %p237
      %p991 = pneg %p261
      %p992 = pneg %p258
      %p993 = pneg %p282
      %p994 = pneg %p279
      %p995 = pneg %p303
      %p996 = pneg %p300
      %p997 = pneg %p324
      %p998 = pneg %p321
      %p999 = pneg %p345
      %p1000 = pneg %p342
      %p1001 = pneg %p366
      %p1002 = pneg %p363
      %p1003 = pneg %p387
      %p1004 = pneg %p384
      %p1005 = pneg %p408
      %p1006 = pneg %p405
      %p1007 = pneg %p429
      %p1008 = pneg %p426
      %p1009 = pneg %p450
      %p1010 = pneg %p447
      %p1011 = pneg %p471
      %p1012 = pneg %p468
      %p1013 = pneg %p492
      %p1014 = pneg %p489
      %p1015 = pneg %p513
      %p1016 = pneg %p510
      %p1017 = pneg %p534
      %p1018 = pneg %p531
      %p1019 = pneg %p555
      %p1020 = pneg %p552
      %p1021 = pneg %p576
      %p1022 = pneg %p573
      %p1023 = pneg %p597
      %p1024 = pneg %p594
      %p1025 = pneg %p618
      %p1026 = pneg %p615
      %p1027 = pneg %p639
      %p1028 = pneg %p636
      %p1029 = pneg %p660
      %p1030 = pneg %p657
      %p1031 = pneg %p681
      %p1032 = pneg %p678
      %p1033 = pneg %p702
      %p1034 = pneg %p699
      %p1035 = pneg %p723
      %p1036 = pneg %p720
      %p1037 = pneg %p744
      %p1038 = pneg %p741
      %p1039 = pneg %p765
      %p1040 = pneg %p762
      %p1041 = pneg %p786
      %p1042 = pneg %p783
      %p1043 = pneg %p812
      %p1044 = pneg %p809
      %p1045 = scmp.lt.s32.totalorder %s78, 1
      %s1046 = scalar_select %p1045, %s78, 1
      %s1047 = smul.addr %s1046, 8
      %s1048 = smul.addr %s1047, 8
      %s1049 = scalar_lea.vmem %s67, %s1048
      %p1050 = scmp.lt.s32.totalorder %s78, 1
      %s1051 = scalar_select %p1050, %s78, 1
      %s1052 = smul.addr %s1051, 6
      %s1053 = smul.addr %s1052, 4
      %s1054 = scalar_lea.vmem %s1, %s1053
      %p1055 = scmp.lt.s32.totalorder %s78, 1
      %s1056 = scalar_select %p1055, %s78, 1
      %s1057 = smul.addr %s1056, 4
      %s1058 = smul.addr %s1057, 4
      %s1059 = scalar_lea.vmem %s3, %s1058
      %p1060 = scmp.lt.s32.totalorder %s78, 1
      %s1061 = scalar_select %p1060, %s78, 1
      %s1062 = smul.addr %s1061, 4
      %s1063 = smul.addr %s1062, 4
      %s1064 = scalar_lea.vmem %s5, %s1063
      %p1065 = scmp.lt.s32.totalorder %s78, 1
      %s1066 = scalar_select %p1065, %s78, 1
      %s1067 = smul.addr %s1066, 6
      %s1068 = smul.addr %s1067, 4
      %s1069 = scalar_lea.vmem %s7, %s1068
      %p1070 = scmp.lt.s32.totalorder %s78, 1
      %s1071 = scalar_select %p1070, %s78, 1
      %s1072 = smul.addr %s1071, 8
      %s1073 = smul.addr %s1072, 8
      %s1074 = scalar_lea.vmem %s67, %s1073
      %v1076 = vld [vmem:[%s9] sm:$0xf]
      %v1077 = vld [vmem:[%s9 + $0x4] sm:$0xf]
      %v1078 = vld [vmem:[%s9 + $0x8] sm:$0xf]
      %v1079 = vld [vmem:[%s9 + $0xc] sm:$0xf]
      %v1080 = vld [vmem:[%s9 + $0x10] sm:$0xf]
      %v1081 = vld [vmem:[%s9 + $0x14] sm:$0xf]
      %v1082 = vld [vmem:[%s1054] sm:$0xf]
      %v1083 = vld [vmem:[%s1054 + $0x4] sm:$0xf]
      %v1084 = vld [vmem:[%s1054 + $0x8] sm:$0xf]
      %v1085 = vld [vmem:[%s1054 + $0xc] sm:$0xf]
      %v1086 = vld [vmem:[%s1054 + $0x10] sm:$0xf]
      %v1087 = vld [vmem:[%s1054 + $0x14] sm:$0xf]
      %v1088 = vld [vmem:[%s11] sm:$0xf]
      %v1089 = vld [vmem:[%s11 + $0x4] sm:$0xf]
      %v1090 = vld [vmem:[%s11 + $0x8] sm:$0xf]
      %v1091 = vld [vmem:[%s11 + $0xc] sm:$0xf]
      %v1092 = vld [vmem:[%s11 + $0x10] sm:$0xf]
      %v1093 = vld [vmem:[%s11 + $0x14] sm:$0xf]
      %v1094 = vld [vmem:[%s1059] sm:$0xf]
      %v1095 = vld [vmem:[%s1059 + $0x4] sm:$0xf]
      %v1096 = vld [vmem:[%s1059 + $0x8] sm:$0xf]
      %v1097 = vld [vmem:[%s1059 + $0xc] sm:$0xf]
      %v1104 = vunpack.c.l.b16 %v1088
      %v1105 = vunpack.c.l.b16 %v1089
      %v1106 = vunpack.c.l.b16 %v1090
      %v1107 = vunpack.c.l.b16 %v1091
      %v1108 = vunpack.c.l.b16 %v1092
      %v1109 = vunpack.c.l.b16 %v1093
      %v1110 = vpack.c.b16 %v1105, %v1104
      %v1111 = vpack.c.b16 %v1107, %v1106
      %v1112 = vpack.c.b16 %v1109, %v1108
      %v1117 = vunpack.c.l.b16 %v1094
      %v1118 = vunpack.c.l.b16 %v1095
      %v1119 = vunpack.c.l.b16 %v1096
      %v1120 = vunpack.c.l.b16 %v1097
      %v1121 = vpack.c.b16 %v1118, %v1117
      %v1122 = vpack.c.b16 %v1120, %v1119
      %vm1125 = vcmask 261120
      %v1127 = vsel %vm1125, %v1110, 0
      %v1130 = vsel %vm1125, %v1111, 0
      %v1133 = vsel %vm1125, %v1112, 0
      %1135 = vmatprep.subr.bf16.mxu0 0
      %1136 = vmatpush1.bf16.msra.mxu0 %v1121
      %1137 = vmatprep.subr.bf16.mxu0 0
      %1138 = vmatpush1.bf16.msra.mxu0 %v1122
      %1139 = vmatprep.subr.bf16.mxu0 0
      %1140 = vmatpush1.bf16.msra.mxu0 0
      %1141 = vmatprep.subr.bf16.mxu0 0
      %1142 = vmatpush1.bf16.msra.mxu0 0
      %1143 = vmatprep.subr.bf16.mxu0 0
      %1144 = vmatpush1.bf16.msra.mxu0 0
      %1145 = vmatprep.subr.bf16.mxu0 0
      %1146 = vmatpush1.bf16.msra.mxu0 0
      %1147 = vmatprep.subr.bf16.mxu0 0
      %1148 = vmatpush1.bf16.msra.mxu0 0
      %1149 = vmatprep.subr.bf16.mxu0 0
      %1150 = vmatpush1.bf16.msra.mxu0 0
      %1151 = vmatprep.subr.bf16.mxu0 0
      %1152 = vmatpush1.bf16.msra.mxu0 0
      %1153 = vmatprep.subr.bf16.mxu0 0
      %1154 = vmatpush1.bf16.msra.mxu0 0
      %1155 = vmatprep.subr.bf16.mxu0 0
      %1156 = vmatpush1.bf16.msra.mxu0 0
      %1157 = vmatprep.subr.bf16.mxu0 0
      %1158 = vmatpush1.bf16.msra.mxu0 0
      %1159 = vmatprep.subr.bf16.mxu0 0
      %1160 = vmatpush1.bf16.msra.mxu0 0
      %1161 = vmatprep.subr.bf16.mxu0 0
      %1162 = vmatpush1.bf16.msra.mxu0 0
      %1163 = vmatprep.subr.bf16.mxu0 0
      %1164 = vmatpush1.bf16.msra.mxu0 0
      %1165 = vmatprep.subr.bf16.mxu0 0
      %1166 = vmatpush1.bf16.msra.mxu0 0
      %1167 = vmatprep.mubr.bf16.mxu0 0
      %1168 = vmatmul.mubr.bf16.gmra.mrb[0].mxu0 %v1127
      %v1169 = vpop.f32.mrb[0].mxu0
      %v1170 = vadd.f32 0.0, %v1169
      %v1171 = vpop.f32.mrb[0].mxu0
      %v1172 = vpop.f32.mrb[0].mxu0
      %v1173 = vadd.f32 0.0, %v1172
      %v1174 = vpop.f32.mrb[0].mxu0
      %1175 = vmatprep.mubr.bf16.mxu0 0
      %1176 = vmatmul.mubr.bf16.gmra.mrb[0].mxu0 %v1130
      %v1177 = vpop.f32.mrb[0].mxu0
      %v1178 = vadd.f32 0.0, %v1177
      %v1179 = vpop.f32.mrb[0].mxu0
      %v1180 = vpop.f32.mrb[0].mxu0
      %v1181 = vadd.f32 0.0, %v1180
      %v1182 = vpop.f32.mrb[0].mxu0
      %1183 = vmatprep.mubr.bf16.mxu0 0
      %1184 = vmatmul.mubr.bf16.gmra.mrb[0].mxu0 %v1133
      %v1185 = vpop.f32.mrb[0].mxu0
      %v1186 = vadd.f32 0.0, %v1185
      %v1187 = vpop.f32.mrb[0].mxu0
      %v1188 = vpop.f32.mrb[0].mxu0
      %v1189 = vadd.f32 0.0, %v1188
      %v1190 = vpop.f32.mrb[0].mxu0
      %1191 = vdwg.mxu0
      %v1198 = vunpack.c.l.b16 %v1076
      %v1199 = vunpack.c.l.b16 %v1077
      %v1200 = vunpack.c.l.b16 %v1078
      %v1201 = vunpack.c.l.b16 %v1079
      %v1202 = vunpack.c.l.b16 %v1080
      %v1203 = vunpack.c.l.b16 %v1081
      %v1204 = vpack.c.b16 %v1199, %v1198
      %v1205 = vpack.c.b16 %v1201, %v1200
      %v1206 = vpack.c.b16 %v1203, %v1202
      %v1213 = vunpack.c.l.b16 %v1082
      %v1214 = vunpack.c.l.b16 %v1083
      %v1215 = vunpack.c.l.b16 %v1084
      %v1216 = vunpack.c.l.b16 %v1085
      %v1217 = vunpack.c.l.b16 %v1086
      %v1218 = vunpack.c.l.b16 %v1087
      %v1219 = vpack.c.b16 %v1214, %v1213
      %v1220 = vpack.c.b16 %v1216, %v1215
      %v1221 = vpack.c.b16 %v1218, %v1217
      %vm1225 = vcmask 392192
      %v1227 = vsel %vm1225, %v1204, 0
      %v1230 = vsel %vm1225, %v1205, 0
      %v1233 = vsel %vm1225, %v1206, 0
      %1235 = vmatprep.subr.bf16.mxu0 0
      %1236 = vmatpush1.bf16.msra.mxu0 %v1219
      %1237 = vmatprep.subr.bf16.mxu0 0
      %1238 = vmatpush1.bf16.msra.mxu0 %v1220
      %1239 = vmatprep.subr.bf16.mxu0 0
      %1240 = vmatpush1.bf16.msra.mxu0 %v1221
      %1241 = vmatprep.subr.bf16.mxu0 0
      %1242 = vmatpush1.bf16.msra.mxu0 0
      %1243 = vmatprep.subr.bf16.mxu0 0
      %1244 = vmatpush1.bf16.msra.mxu0 0
      %1245 = vmatprep.subr.bf16.mxu0 0
      %1246 = vmatpush1.bf16.msra.mxu0 0
      %1247 = vmatprep.subr.bf16.mxu0 0
      %1248 = vmatpush1.bf16.msra.mxu0 0
      %1249 = vmatprep.subr.bf16.mxu0 0
      %1250 = vmatpush1.bf16.msra.mxu0 0
      %1251 = vmatprep.subr.bf16.mxu0 0
      %1252 = vmatpush1.bf16.msra.mxu0 0
      %1253 = vmatprep.subr.bf16.mxu0 0
      %1254 = vmatpush1.bf16.msra.mxu0 0
      %1255 = vmatprep.subr.bf16.mxu0 0
      %1256 = vmatpush1.bf16.msra.mxu0 0
      %1257 = vmatprep.subr.bf16.mxu0 0
      %1258 = vmatpush1.bf16.msra.mxu0 0
      %1259 = vmatprep.subr.bf16.mxu0 0
      %1260 = vmatpush1.bf16.msra.mxu0 0
      %1261 = vmatprep.subr.bf16.mxu0 0
      %1262 = vmatpush1.bf16.msra.mxu0 0
      %1263 = vmatprep.subr.bf16.mxu0 0
      %1264 = vmatpush1.bf16.msra.mxu0 0
      %1265 = vmatprep.subr.bf16.mxu0 0
      %1266 = vmatpush1.bf16.msra.mxu0 0
      %1267 = vmatprep.mubr.bf16.mxu0 0
      %1268 = vmatmul.mubr.bf16.gmra.mrb[0].mxu0 %v1227
      %v1269 = vpop.f32.mrb[0].mxu0
      %v1270 = vadd.f32 %v1170, %v1269
      %v1271 = vpop.f32.mrb[0].mxu0
      %v1272 = vpop.f32.mrb[0].mxu0
      %v1273 = vadd.f32 %v1173, %v1272
      %v1274 = vpop.f32.mrb[0].mxu0
      %1275 = vmatprep.mubr.bf16.mxu0 0
      %1276 = vmatmul.mubr.bf16.gmra.mrb[0].mxu0 %v1230
      %v1277 = vpop.f32.mrb[0].mxu0
      %v1278 = vadd.f32 %v1178, %v1277
      %v1279 = vpop.f32.mrb[0].mxu0
      %v1280 = vpop.f32.mrb[0].mxu0
      %v1281 = vadd.f32 %v1181, %v1280
      %v1282 = vpop.f32.mrb[0].mxu0
      %1283 = vmatprep.mubr.bf16.mxu0 0
      %1284 = vmatmul.mubr.bf16.gmra.mrb[0].mxu0 %v1233
      %v1285 = vpop.f32.mrb[0].mxu0
      %v1286 = vadd.f32 %v1186, %v1285
      %v1287 = vpop.f32.mrb[0].mxu0
      %v1288 = vpop.f32.mrb[0].mxu0
      %v1289 = vadd.f32 %v1189, %v1288
      %v1290 = vpop.f32.mrb[0].mxu0
      %1291 = vdwg.mxu0
      %v1292 = vld [vmem:[%s13] sm:$0xff]
      %v1293 = vld [vmem:[%s13 + $0x8] sm:$0xff]
      %v1294 = vld [vmem:[%s13 + $0x10] sm:$0xff]
      %v1295 = vld [vmem:[%s13 + $0x18] sm:$0xff]
      %v1296 = vld [vmem:[%s13 + $0x20] sm:$0xff]
      %v1297 = vld [vmem:[%s13 + $0x28] sm:$0xff]
      %1299 = vset.pattern.permute.xlu0 0
      %1300 = vperm.xlu0 %1299, %v1292
      %v1301 = vpop.permute.xlu0 %1300
      %1304 = vset.pattern.permute.xlu0 0
      %1305 = vperm.xlu0 %1304, %v1293
      %v1306 = vpop.permute.xlu0 %1305
      %1309 = vset.pattern.permute.xlu0 0
      %1310 = vperm.xlu0 %1309, %v1294
      %v1311 = vpop.permute.xlu0 %1310
      %1314 = vset.pattern.permute.xlu0 0
      %1315 = vperm.xlu0 %1314, %v1295
      %v1316 = vpop.permute.xlu0 %1315
      %1319 = vset.pattern.permute.xlu0 0
      %1320 = vperm.xlu0 %1319, %v1296
      %v1321 = vpop.permute.xlu0 %1320
      %1324 = vset.pattern.permute.xlu0 0
      %1325 = vperm.xlu0 %1324, %v1297
      %v1326 = vpop.permute.xlu0 %1325
      %v1328 = vadd.f32 %v1270, %v1301
      %v1329 = vadd.f32 %v1273, %v1306
      %v1330 = vadd.f32 %v1278, %v1311
      %v1331 = vadd.f32 %v1281, %v1316
      %v1332 = vadd.f32 %v1286, %v1321
      %v1333 = vadd.f32 %v1289, %v1326
      %v1334 = vld [vmem:[%s15] sm:$0xff]
      %v1335 = vld [vmem:[%s15 + $0x8] sm:$0xff]
      %v1336 = vld [vmem:[%s15 + $0x10] sm:$0xff]
      %v1337 = vld [vmem:[%s15 + $0x18] sm:$0xff]
      %v1338 = vld [vmem:[%s15 + $0x20] sm:$0xff]
      %v1339 = vld [vmem:[%s15 + $0x28] sm:$0xff]
      %vm1340 = vcmp.gt.f32.partialorder %v1328, 0.0
      %vm1341 = vcmp.gt.f32.partialorder %v1329, 0.0
      %vm1342 = vcmp.gt.f32.partialorder %v1330, 0.0
      %vm1343 = vcmp.gt.f32.partialorder %v1331, 0.0
      %vm1344 = vcmp.gt.f32.partialorder %v1332, 0.0
      %vm1345 = vcmp.gt.f32.partialorder %v1333, 0.0
      %1347 = vset.pattern.permute.xlu0 0
      %1348 = vperm.xlu0 %1347, %v1334
      %v1349 = vpop.permute.xlu0 %1348
      %1352 = vset.pattern.permute.xlu0 0
      %1353 = vperm.xlu0 %1352, %v1335
      %v1354 = vpop.permute.xlu0 %1353
      %1357 = vset.pattern.permute.xlu0 0
      %1358 = vperm.xlu0 %1357, %v1336
      %v1359 = vpop.permute.xlu0 %1358
      %1362 = vset.pattern.permute.xlu0 0
      %1363 = vperm.xlu0 %1362, %v1337
      %v1364 = vpop.permute.xlu0 %1363
      %1367 = vset.pattern.permute.xlu0 0
      %1368 = vperm.xlu0 %1367, %v1338
      %v1369 = vpop.permute.xlu0 %1368
      %1372 = vset.pattern.permute.xlu0 0
      %1373 = vperm.xlu0 %1372, %v1339
      %v1374 = vpop.permute.xlu0 %1373
      %v1376 = vmul.f32 %v1349, %v1328
      %v1377 = vmul.f32 %v1354, %v1329
      %v1378 = vmul.f32 %v1359, %v1330
      %v1379 = vmul.f32 %v1364, %v1331
      %v1380 = vmul.f32 %v1369, %v1332
      %v1381 = vmul.f32 %v1374, %v1333
      %v1382 = vsel %vm1340, %v1328, %v1376
      %v1383 = vsel %vm1341, %v1329, %v1377
      %v1384 = vsel %vm1342, %v1330, %v1378
      %v1385 = vsel %vm1343, %v1331, %v1379
      %v1386 = vsel %vm1344, %v1332, %v1380
      %v1387 = vsel %vm1345, %v1333, %v1381
      %1394 = vrot.lane.b32.xlu0 %v1382, 117
      %v1395 = vpop.permute.xlu0 %1394
      %1396 = vrot.lane.b32.xlu0 %v1383, 117
      %v1397 = vpop.permute.xlu0 %1396
      %1398 = vrot.lane.b32.xlu0 %v1384, 117
      %v1399 = vpop.permute.xlu0 %1398
      %1400 = vrot.lane.b32.xlu0 %v1385, 117
      %v1401 = vpop.permute.xlu0 %1400
      %1402 = vrot.lane.b32.xlu0 %v1386, 117
      %v1403 = vpop.permute.xlu0 %1402
      %1404 = vrot.lane.b32.xlu0 %v1387, 117
      %v1405 = vpop.permute.xlu0 %1404
      %1412 = vrot.lane.b32.xlu0 %v1382, 5
      %v1413 = vpop.permute.xlu0 %1412
      %1414 = vrot.lane.b32.xlu0 %v1383, 5
      %v1415 = vpop.permute.xlu0 %1414
      %1416 = vrot.lane.b32.xlu0 %v1384, 5
      %v1417 = vpop.permute.xlu0 %1416
      %1418 = vrot.lane.b32.xlu0 %v1385, 5
      %v1419 = vpop.permute.xlu0 %1418
      %1420 = vrot.lane.b32.xlu0 %v1386, 5
      %v1421 = vpop.permute.xlu0 %1420
      %1422 = vrot.lane.b32.xlu0 %v1387, 5
      %v1423 = vpop.permute.xlu0 %1422
      %vm1430 = vcmask 39936
      %v1431 = vsel %vm1430, %v1395, %v1413
      %v1432 = vsel %vm1430, %v1397, %v1415
      %v1433 = vsel %vm1430, %v1399, %v1417
      %v1434 = vsel %vm1430, %v1401, %v1419
      %v1435 = vsel %vm1430, %v1403, %v1421
      %v1436 = vsel %vm1430, %v1405, %v1423
      %v1437 = vld [vmem:[%s23] sm:$0x1]
      %v1439 = vlaneseq
      %v1440 = vshrl.u32 %v1439, 7
      %v1441 = vsub.s32 0, %v1440
      %v1442 = vrot.slane %v1437, %v1441
      %v1444 = vmul.f32 %v1431, %v1442
      %v1445 = vmul.f32 %v1432, %v1442
      %v1446 = vmul.f32 %v1433, %v1442
      %v1447 = vmul.f32 %v1434, %v1442
      %v1448 = vmul.f32 %v1435, %v1442
      %v1449 = vmul.f32 %v1436, %v1442
      %1450 = vrot.lane.b32.xlu0 %v1382, 116
      %v1451 = vpop.permute.xlu0 %1450
      %1452 = vrot.lane.b32.xlu0 %v1383, 116
      %v1453 = vpop.permute.xlu0 %1452
      %1454 = vrot.lane.b32.xlu0 %v1384, 116
      %v1455 = vpop.permute.xlu0 %1454
      %1456 = vrot.lane.b32.xlu0 %v1385, 116
      %v1457 = vpop.permute.xlu0 %1456
      %1458 = vrot.lane.b32.xlu0 %v1386, 116
      %v1459 = vpop.permute.xlu0 %1458
      %1460 = vrot.lane.b32.xlu0 %v1387, 116
      %v1461 = vpop.permute.xlu0 %1460
      %1468 = vrot.lane.b32.xlu0 %v1382, 4
      %v1469 = vpop.permute.xlu0 %1468
      %1470 = vrot.lane.b32.xlu0 %v1383, 4
      %v1471 = vpop.permute.xlu0 %1470
      %1472 = vrot.lane.b32.xlu0 %v1384, 4
      %v1473 = vpop.permute.xlu0 %1472
      %1474 = vrot.lane.b32.xlu0 %v1385, 4
      %v1475 = vpop.permute.xlu0 %1474
      %1476 = vrot.lane.b32.xlu0 %v1386, 4
      %v1477 = vpop.permute.xlu0 %1476
      %1478 = vrot.lane.b32.xlu0 %v1387, 4
      %v1479 = vpop.permute.xlu0 %1478
      %vm1486 = vcmask 31744
      %v1487 = vsel %vm1486, %v1451, %v1469
      %v1488 = vsel %vm1486, %v1453, %v1471
      %v1489 = vsel %vm1486, %v1455, %v1473
      %v1490 = vsel %vm1486, %v1457, %v1475
      %v1491 = vsel %vm1486, %v1459, %v1477
      %v1492 = vsel %vm1486, %v1461, %v1479
      %s1493 = scalar_lea.vmem %s23, 1
      %v1494 = vld [vmem:[%s1493] sm:$0x1]
      %v1496 = vlaneseq
      %v1497 = vshrl.u32 %v1496, 7
      %v1498 = vsub.s32 0, %v1497
      %v1499 = vrot.slane %v1494, %v1498
      %v1501 = vmul.f32 %v1487, %v1499
      %v1502 = vmul.f32 %v1488, %v1499
      %v1503 = vmul.f32 %v1489, %v1499
      %v1504 = vmul.f32 %v1490, %v1499
      %v1505 = vmul.f32 %v1491, %v1499
      %v1506 = vmul.f32 %v1492, %v1499
      %1507 = vrot.lane.b32.xlu0 %v1382, 115
      %v1508 = vpop.permute.xlu0 %1507
      %1509 = vrot.lane.b32.xlu0 %v1383, 115
      %v1510 = vpop.permute.xlu0 %1509
      %1511 = vrot.lane.b32.xlu0 %v1384, 115
      %v1512 = vpop.permute.xlu0 %1511
      %1513 = vrot.lane.b32.xlu0 %v1385, 115
      %v1514 = vpop.permute.xlu0 %1513
      %1515 = vrot.lane.b32.xlu0 %v1386, 115
      %v1516 = vpop.permute.xlu0 %1515
      %1517 = vrot.lane.b32.xlu0 %v1387, 115
      %v1518 = vpop.permute.xlu0 %1517
      %1525 = vrot.lane.b32.xlu0 %v1382, 3
      %v1526 = vpop.permute.xlu0 %1525
      %1527 = vrot.lane.b32.xlu0 %v1383, 3
      %v1528 = vpop.permute.xlu0 %1527
      %1529 = vrot.lane.b32.xlu0 %v1384, 3
      %v1530 = vpop.permute.xlu0 %1529
      %1531 = vrot.lane.b32.xlu0 %v1385, 3
      %v1532 = vpop.permute.xlu0 %1531
      %1533 = vrot.lane.b32.xlu0 %v1386, 3
      %v1534 = vpop.permute.xlu0 %1533
      %1535 = vrot.lane.b32.xlu0 %v1387, 3
      %v1536 = vpop.permute.xlu0 %1535
      %vm1543 = vcmask 23552
      %v1544 = vsel %vm1543, %v1508, %v1526
      %v1545 = vsel %vm1543, %v1510, %v1528
      %v1546 = vsel %vm1543, %v1512, %v1530
      %v1547 = vsel %vm1543, %v1514, %v1532
      %v1548 = vsel %vm1543, %v1516, %v1534
      %v1549 = vsel %vm1543, %v1518, %v1536
      %s1550 = scalar_lea.vmem %s23, 2
      %v1551 = vld [vmem:[%s1550] sm:$0x1]
      %v1553 = vlaneseq
      %v1554 = vshrl.u32 %v1553, 7
      %v1555 = vsub.s32 0, %v1554
      %v1556 = vrot.slane %v1551, %v1555
      %v1558 = vmul.f32 %v1544, %v1556
      %v1559 = vmul.f32 %v1545, %v1556
      %v1560 = vmul.f32 %v1546, %v1556
      %v1561 = vmul.f32 %v1547, %v1556
      %v1562 = vmul.f32 %v1548, %v1556
      %v1563 = vmul.f32 %v1549, %v1556
      %1564 = vrot.lane.b32.xlu0 %v1382, 113
      %v1565 = vpop.permute.xlu0 %1564
      %1566 = vrot.lane.b32.xlu0 %v1383, 113
      %v1567 = vpop.permute.xlu0 %1566
      %1568 = vrot.lane.b32.xlu0 %v1384, 113
      %v1569 = vpop.permute.xlu0 %1568
      %1570 = vrot.lane.b32.xlu0 %v1385, 113
      %v1571 = vpop.permute.xlu0 %1570
      %1572 = vrot.lane.b32.xlu0 %v1386, 113
      %v1573 = vpop.permute.xlu0 %1572
      %1574 = vrot.lane.b32.xlu0 %v1387, 113
      %v1575 = vpop.permute.xlu0 %1574
      %1582 = vrot.lane.b32.xlu0 %v1382, 1
      %v1583 = vpop.permute.xlu0 %1582
      %1584 = vrot.lane.b32.xlu0 %v1383, 1
      %v1585 = vpop.permute.xlu0 %1584
      %1586 = vrot.lane.b32.xlu0 %v1384, 1
      %v1587 = vpop.permute.xlu0 %1586
      %1588 = vrot.lane.b32.xlu0 %v1385, 1
      %v1589 = vpop.permute.xlu0 %1588
      %1590 = vrot.lane.b32.xlu0 %v1386, 1
      %v1591 = vpop.permute.xlu0 %1590
      %1592 = vrot.lane.b32.xlu0 %v1387, 1
      %v1593 = vpop.permute.xlu0 %1592
      %vm1600 = vcmask 7168
      %v1601 = vsel %vm1600, %v1565, %v1583
      %v1602 = vsel %vm1600, %v1567, %v1585
      %v1603 = vsel %vm1600, %v1569, %v1587
      %v1604 = vsel %vm1600, %v1571, %v1589
      %v1605 = vsel %vm1600, %v1573, %v1591
      %v1606 = vsel %vm1600, %v1575, %v1593
      %s1607 = scalar_lea.vmem %s23, 3
      %v1608 = vld [vmem:[%s1607] sm:$0x1]
      %v1610 = vlaneseq
      %v1611 = vshrl.u32 %v1610, 7
      %v1612 = vsub.s32 0, %v1611
      %v1613 = vrot.slane %v1608, %v1612
      %v1615 = vmul.f32 %v1601, %v1613
      %v1616 = vmul.f32 %v1602, %v1613
      %v1617 = vmul.f32 %v1603, %v1613
      %v1618 = vmul.f32 %v1604, %v1613
      %v1619 = vmul.f32 %v1605, %v1613
      %v1620 = vmul.f32 %v1606, %v1613
      %1621 = vrot.lane.b32.xlu0 %v1382, 127
      %v1622 = vpop.permute.xlu0 %1621
      %1623 = vrot.lane.b32.xlu0 %v1383, 127
      %v1624 = vpop.permute.xlu0 %1623
      %1625 = vrot.lane.b32.xlu0 %v1384, 127
      %v1626 = vpop.permute.xlu0 %1625
      %1627 = vrot.lane.b32.xlu0 %v1385, 127
      %v1628 = vpop.permute.xlu0 %1627
      %1629 = vrot.lane.b32.xlu0 %v1386, 127
      %v1630 = vpop.permute.xlu0 %1629
      %1631 = vrot.lane.b32.xlu0 %v1387, 127
      %v1632 = vpop.permute.xlu0 %1631
      %1639 = vrot.lane.b32.xlu0 %v1382, 15
      %v1640 = vpop.permute.xlu0 %1639
      %1641 = vrot.lane.b32.xlu0 %v1383, 15
      %v1642 = vpop.permute.xlu0 %1641
      %1643 = vrot.lane.b32.xlu0 %v1384, 15
      %v1644 = vpop.permute.xlu0 %1643
      %1645 = vrot.lane.b32.xlu0 %v1385, 15
      %v1646 = vpop.permute.xlu0 %1645
      %1647 = vrot.lane.b32.xlu0 %v1386, 15
      %v1648 = vpop.permute.xlu0 %1647
      %1649 = vrot.lane.b32.xlu0 %v1387, 15
      %v1650 = vpop.permute.xlu0 %1649
      %vm1657 = vcmask 121856
      %v1658 = vsel %vm1657, %v1622, %v1640
      %v1659 = vsel %vm1657, %v1624, %v1642
      %v1660 = vsel %vm1657, %v1626, %v1644
      %v1661 = vsel %vm1657, %v1628, %v1646
      %v1662 = vsel %vm1657, %v1630, %v1648
      %v1663 = vsel %vm1657, %v1632, %v1650
      %s1664 = scalar_lea.vmem %s23, 5
      %v1665 = vld [vmem:[%s1664] sm:$0x1]
      %v1667 = vlaneseq
      %v1668 = vshrl.u32 %v1667, 7
      %v1669 = vsub.s32 0, %v1668
      %v1670 = vrot.slane %v1665, %v1669
      %v1672 = vmul.f32 %v1658, %v1670
      %v1673 = vmul.f32 %v1659, %v1670
      %v1674 = vmul.f32 %v1660, %v1670
      %v1675 = vmul.f32 %v1661, %v1670
      %v1676 = vmul.f32 %v1662, %v1670
      %v1677 = vmul.f32 %v1663, %v1670
      %1678 = vrot.lane.b32.xlu0 %v1382, 125
      %v1679 = vpop.permute.xlu0 %1678
      %1680 = vrot.lane.b32.xlu0 %v1383, 125
      %v1681 = vpop.permute.xlu0 %1680
      %1682 = vrot.lane.b32.xlu0 %v1384, 125
      %v1683 = vpop.permute.xlu0 %1682
      %1684 = vrot.lane.b32.xlu0 %v1385, 125
      %v1685 = vpop.permute.xlu0 %1684
      %1686 = vrot.lane.b32.xlu0 %v1386, 125
      %v1687 = vpop.permute.xlu0 %1686
      %1688 = vrot.lane.b32.xlu0 %v1387, 125
      %v1689 = vpop.permute.xlu0 %1688
      %1696 = vrot.lane.b32.xlu0 %v1382, 13
      %v1697 = vpop.permute.xlu0 %1696
      %1698 = vrot.lane.b32.xlu0 %v1383, 13
      %v1699 = vpop.permute.xlu0 %1698
      %1700 = vrot.lane.b32.xlu0 %v1384, 13
      %v1701 = vpop.permute.xlu0 %1700
      %1702 = vrot.lane.b32.xlu0 %v1385, 13
      %v1703 = vpop.permute.xlu0 %1702
      %1704 = vrot.lane.b32.xlu0 %v1386, 13
      %v1705 = vpop.permute.xlu0 %1704
      %1706 = vrot.lane.b32.xlu0 %v1387, 13
      %v1707 = vpop.permute.xlu0 %1706
      %vm1714 = vcmask 105472
      %v1715 = vsel %vm1714, %v1679, %v1697
      %v1716 = vsel %vm1714, %v1681, %v1699
      %v1717 = vsel %vm1714, %v1683, %v1701
      %v1718 = vsel %vm1714, %v1685, %v1703
      %v1719 = vsel %vm1714, %v1687, %v1705
      %v1720 = vsel %vm1714, %v1689, %v1707
      %s1721 = scalar_lea.vmem %s23, 6
      %v1722 = vld [vmem:[%s1721] sm:$0x1]
      %v1724 = vlaneseq
      %v1725 = vshrl.u32 %v1724, 7
      %v1726 = vsub.s32 0, %v1725
      %v1727 = vrot.slane %v1722, %v1726
      %v1729 = vmul.f32 %v1715, %v1727
      %v1730 = vmul.f32 %v1716, %v1727
      %v1731 = vmul.f32 %v1717, %v1727
      %v1732 = vmul.f32 %v1718, %v1727
      %v1733 = vmul.f32 %v1719, %v1727
      %v1734 = vmul.f32 %v1720, %v1727
      %1735 = vrot.lane.b32.xlu0 %v1382, 124
      %v1736 = vpop.permute.xlu0 %1735
      %1737 = vrot.lane.b32.xlu0 %v1383, 124
      %v1738 = vpop.permute.xlu0 %1737
      %1739 = vrot.lane.b32.xlu0 %v1384, 124
      %v1740 = vpop.permute.xlu0 %1739
      %1741 = vrot.lane.b32.xlu0 %v1385, 124
      %v1742 = vpop.permute.xlu0 %1741
      %1743 = vrot.lane.b32.xlu0 %v1386, 124
      %v1744 = vpop.permute.xlu0 %1743
      %1745 = vrot.lane.b32.xlu0 %v1387, 124
      %v1746 = vpop.permute.xlu0 %1745
      %1753 = vrot.lane.b32.xlu0 %v1382, 12
      %v1754 = vpop.permute.xlu0 %1753
      %1755 = vrot.lane.b32.xlu0 %v1383, 12
      %v1756 = vpop.permute.xlu0 %1755
      %1757 = vrot.lane.b32.xlu0 %v1384, 12
      %v1758 = vpop.permute.xlu0 %1757
      %1759 = vrot.lane.b32.xlu0 %v1385, 12
      %v1760 = vpop.permute.xlu0 %1759
      %1761 = vrot.lane.b32.xlu0 %v1386, 12
      %v1762 = vpop.permute.xlu0 %1761
      %1763 = vrot.lane.b32.xlu0 %v1387, 12
      %v1764 = vpop.permute.xlu0 %1763
      %vm1771 = vcmask 97280
      %v1772 = vsel %vm1771, %v1736, %v1754
      %v1773 = vsel %vm1771, %v1738, %v1756
      %v1774 = vsel %vm1771, %v1740, %v1758
      %v1775 = vsel %vm1771, %v1742, %v1760
      %v1776 = vsel %vm1771, %v1744, %v1762
      %v1777 = vsel %vm1771, %v1746, %v1764
      %s1778 = scalar_lea.vmem %s23, 7
      %v1779 = vld [vmem:[%s1778] sm:$0x1]
      %v1781 = vlaneseq
      %v1782 = vshrl.u32 %v1781, 7
      %v1783 = vsub.s32 0, %v1782
      %v1784 = vrot.slane %v1779, %v1783
      %v1786 = vmul.f32 %v1772, %v1784
      %v1787 = vmul.f32 %v1773, %v1784
      %v1788 = vmul.f32 %v1774, %v1784
      %v1789 = vmul.f32 %v1775, %v1784
      %v1790 = vmul.f32 %v1776, %v1784
      %v1791 = vmul.f32 %v1777, %v1784
      %1792 = vrot.lane.b32.xlu0 %v1382, 123
      %v1793 = vpop.permute.xlu0 %1792
      %1794 = vrot.lane.b32.xlu0 %v1383, 123
      %v1795 = vpop.permute.xlu0 %1794
      %1796 = vrot.lane.b32.xlu0 %v1384, 123
      %v1797 = vpop.permute.xlu0 %1796
      %1798 = vrot.lane.b32.xlu0 %v1385, 123
      %v1799 = vpop.permute.xlu0 %1798
      %1800 = vrot.lane.b32.xlu0 %v1386, 123
      %v1801 = vpop.permute.xlu0 %1800
      %1802 = vrot.lane.b32.xlu0 %v1387, 123
      %v1803 = vpop.permute.xlu0 %1802
      %1810 = vrot.lane.b32.xlu0 %v1382, 11
      %v1811 = vpop.permute.xlu0 %1810
      %1812 = vrot.lane.b32.xlu0 %v1383, 11
      %v1813 = vpop.permute.xlu0 %1812
      %1814 = vrot.lane.b32.xlu0 %v1384, 11
      %v1815 = vpop.permute.xlu0 %1814
      %1816 = vrot.lane.b32.xlu0 %v1385, 11
      %v1817 = vpop.permute.xlu0 %1816
      %1818 = vrot.lane.b32.xlu0 %v1386, 11
      %v1819 = vpop.permute.xlu0 %1818
      %1820 = vrot.lane.b32.xlu0 %v1387, 11
      %v1821 = vpop.permute.xlu0 %1820
      %vm1828 = vcmask 89088
      %v1829 = vsel %vm1828, %v1793, %v1811
      %v1830 = vsel %vm1828, %v1795, %v1813
      %v1831 = vsel %vm1828, %v1797, %v1815
      %v1832 = vsel %vm1828, %v1799, %v1817
      %v1833 = vsel %vm1828, %v1801, %v1819
      %v1834 = vsel %vm1828, %v1803, %v1821
      %s1835 = scalar_lea.vmem %s23, 8
      %v1836 = vld [vmem:[%s1835] sm:$0x1]
      %v1838 = vlaneseq
      %v1839 = vshrl.u32 %v1838, 7
      %v1840 = vsub.s32 0, %v1839
      %v1841 = vrot.slane %v1836, %v1840
      %v1843 = vmul.f32 %v1829, %v1841
      %v1844 = vmul.f32 %v1830, %v1841
      %v1845 = vmul.f32 %v1831, %v1841
      %v1846 = vmul.f32 %v1832, %v1841
      %v1847 = vmul.f32 %v1833, %v1841
      %v1848 = vmul.f32 %v1834, %v1841
      %v1849 = vpack.c.bf16 %v1445, %v1444
      %v1850 = vpack.c.bf16 %v1447, %v1446
      %v1851 = vpack.c.bf16 %v1449, %v1448
      %v1852 = vpack.c.bf16 %v1502, %v1501
      %v1853 = vpack.c.bf16 %v1504, %v1503
      %v1854 = vpack.c.bf16 %v1506, %v1505
      %v1855 = vpack.c.bf16 %v1559, %v1558
      %v1856 = vpack.c.bf16 %v1561, %v1560
      %v1857 = vpack.c.bf16 %v1563, %v1562
      %v1858 = vpack.c.bf16 %v1616, %v1615
      %v1859 = vpack.c.bf16 %v1618, %v1617
      %v1860 = vpack.c.bf16 %v1620, %v1619
      %v1861 = vpack.c.bf16 %v1383, %v1382
      %v1862 = vpack.c.bf16 %v1385, %v1384
      %v1863 = vpack.c.bf16 %v1387, %v1386
      %v1864 = vpack.c.bf16 %v1673, %v1672
      %v1865 = vpack.c.bf16 %v1675, %v1674
      %v1866 = vpack.c.bf16 %v1677, %v1676
      %v1867 = vpack.c.bf16 %v1730, %v1729
      %v1868 = vpack.c.bf16 %v1732, %v1731
      %v1869 = vpack.c.bf16 %v1734, %v1733
      %v1870 = vpack.c.bf16 %v1787, %v1786
      %v1871 = vpack.c.bf16 %v1789, %v1788
      %v1872 = vpack.c.bf16 %v1791, %v1790
      %v1873 = vpack.c.bf16 %v1844, %v1843
      %v1874 = vpack.c.bf16 %v1846, %v1845
      %v1875 = vpack.c.bf16 %v1848, %v1847
      %v1876 = vld [vmem:[%s17] sm:$0xff]
      %v1877 = vld [vmem:[%s17 + $0x8] sm:$0xff]
      %v1878 = vld [vmem:[%s17 + $0x10] sm:$0xff]
      %v1879 = vld [vmem:[%s17 + $0x18] sm:$0xff]
      %v1880 = vld [vmem:[%s17 + $0x20] sm:$0xff]
      %v1881 = vld [vmem:[%s17 + $0x28] sm:$0xff]
      %v1882 = vld [vmem:[%s17 + $0x30] sm:$0xff]
      %v1883 = vld [vmem:[%s17 + $0x38] sm:$0xff]
      %v1884 = vld [vmem:[%s17 + $0x40] sm:$0xff]
      %v1885 = vld [vmem:[%s17 + $0x48] sm:$0xff]
      %v1886 = vld [vmem:[%s17 + $0x50] sm:$0xff]
      %v1887 = vld [vmem:[%s17 + $0x58] sm:$0xff]
      %v1888 = vld [vmem:[%s17 + $0x60] sm:$0xff]
      %v1889 = vld [vmem:[%s17 + $0x68] sm:$0xff]
      %v1890 = vld [vmem:[%s17 + $0x70] sm:$0xff]
      %v1891 = vld [vmem:[%s17 + $0x78] sm:$0xff]
      %v1892 = vld [vmem:[%s17 + $0x80] sm:$0xff]
      %v1893 = vld [vmem:[%s17 + $0x88] sm:$0xff]
      %v1894 = vld [vmem:[%s17 + $0x90] sm:$0xff]
      %v1895 = vld [vmem:[%s17 + $0x98] sm:$0xff]
      %v1896 = vld [vmem:[%s17 + $0xa0] sm:$0xff]
      %v1897 = vld [vmem:[%s17 + $0xa8] sm:$0xff]
      %v1898 = vld [vmem:[%s17 + $0xb0] sm:$0xff]
      %v1899 = vld [vmem:[%s17 + $0xb8] sm:$0xff]
      %v1900 = vld [vmem:[%s17 + $0xc0] sm:$0xff]
      %v1901 = vld [vmem:[%s17 + $0xc8] sm:$0xff]
      %v1902 = vld [vmem:[%s17 + $0xd0] sm:$0xff]
      %v1903 = vld [vmem:[%s17 + $0xd8] sm:$0xff]
      %v1904 = vld [vmem:[%s17 + $0xe0] sm:$0xff]
      %v1905 = vld [vmem:[%s17 + $0xe8] sm:$0xff]
      %v1906 = vld [vmem:[%s17 + $0xf0] sm:$0xff]
      %v1907 = vld [vmem:[%s17 + $0xf8] sm:$0xff]
      %v1908 = vld [vmem:[%s17 + $0x100] sm:$0xff]
      %v1909 = vld [vmem:[%s17 + $0x108] sm:$0xff]
      %v1910 = vld [vmem:[%s17 + $0x110] sm:$0xff]
      %v1911 = vld [vmem:[%s17 + $0x118] sm:$0xff]
      %v1912 = vld [vmem:[%s17 + $0x120] sm:$0xff]
      %v1913 = vld [vmem:[%s17 + $0x128] sm:$0xff]
      %v1914 = vld [vmem:[%s17 + $0x130] sm:$0xff]
      %v1915 = vld [vmem:[%s17 + $0x138] sm:$0xff]
      %v1916 = vld [vmem:[%s17 + $0x140] sm:$0xff]
      %v1917 = vld [vmem:[%s17 + $0x148] sm:$0xff]
      %v1918 = vld [vmem:[%s17 + $0x150] sm:$0xff]
      %v1919 = vld [vmem:[%s17 + $0x158] sm:$0xff]
      %v1920 = vld [vmem:[%s17 + $0x160] sm:$0xff]
      %v1921 = vld [vmem:[%s17 + $0x168] sm:$0xff]
      %v1922 = vld [vmem:[%s17 + $0x170] sm:$0xff]
      %v1923 = vld [vmem:[%s17 + $0x178] sm:$0xff]
      %v1924 = vld [vmem:[%s17 + $0x180] sm:$0xff]
      %v1925 = vld [vmem:[%s17 + $0x188] sm:$0xff]
      %v1926 = vld [vmem:[%s17 + $0x190] sm:$0xff]
      %v1927 = vld [vmem:[%s17 + $0x198] sm:$0xff]
      %v1928 = vld [vmem:[%s17 + $0x1a0] sm:$0xff]
      %v1929 = vld [vmem:[%s17 + $0x1a8] sm:$0xff]
      %v1930 = vld [vmem:[%s17 + $0x1b0] sm:$0xff]
      %v1931 = vld [vmem:[%s17 + $0x1b8] sm:$0xff]
      %v1932 = vld [vmem:[%s17 + $0x1c0] sm:$0xff]
      %v1933 = vld [vmem:[%s17 + $0x1c8] sm:$0xff]
      %v1934 = vld [vmem:[%s17 + $0x1d0] sm:$0xff]
      %v1935 = vld [vmem:[%s17 + $0x1d8] sm:$0xff]
      %v1936 = vld [vmem:[%s17 + $0x1e0] sm:$0xff]
      %v1937 = vld [vmem:[%s17 + $0x1e8] sm:$0xff]
      %v1938 = vld [vmem:[%s17 + $0x1f0] sm:$0xff]
      %v1939 = vld [vmem:[%s17 + $0x1f8] sm:$0xff]
      %v1940 = vld [vmem:[%s19] sm:$0xff]
      %v1941 = vld [vmem:[%s19 + $0x8] sm:$0xff]
      %v1942 = vld [vmem:[%s19 + $0x10] sm:$0xff]
      %v1943 = vld [vmem:[%s19 + $0x18] sm:$0xff]
      %v1944 = vld [vmem:[%s19 + $0x20] sm:$0xff]
      %v1945 = vld [vmem:[%s19 + $0x28] sm:$0xff]
      %v1946 = vld [vmem:[%s19 + $0x30] sm:$0xff]
      %v1947 = vld [vmem:[%s19 + $0x38] sm:$0xff]
      %v1948 = vld [vmem:[%s19 + $0x40] sm:$0xff]
      %v1949 = vld [vmem:[%s19 + $0x48] sm:$0xff]
      %v1950 = vld [vmem:[%s19 + $0x50] sm:$0xff]
      %v1951 = vld [vmem:[%s19 + $0x58] sm:$0xff]
      %v1952 = vld [vmem:[%s19 + $0x60] sm:$0xff]
      %v1953 = vld [vmem:[%s19 + $0x68] sm:$0xff]
      %v1954 = vld [vmem:[%s19 + $0x70] sm:$0xff]
      %v1955 = vld [vmem:[%s19 + $0x78] sm:$0xff]
      %v1956 = vld [vmem:[%s19 + $0x80] sm:$0xff]
      %v1957 = vld [vmem:[%s19 + $0x88] sm:$0xff]
      %v1958 = vld [vmem:[%s19 + $0x90] sm:$0xff]
      %v1959 = vld [vmem:[%s19 + $0x98] sm:$0xff]
      %v1960 = vld [vmem:[%s19 + $0xa0] sm:$0xff]
      %v1961 = vld [vmem:[%s19 + $0xa8] sm:$0xff]
      %v1962 = vld [vmem:[%s19 + $0xb0] sm:$0xff]
      %v1963 = vld [vmem:[%s19 + $0xb8] sm:$0xff]
      %v1964 = vld [vmem:[%s19 + $0xc0] sm:$0xff]
      %v1965 = vld [vmem:[%s19 + $0xc8] sm:$0xff]
      %v1966 = vld [vmem:[%s19 + $0xd0] sm:$0xff]
      %v1967 = vld [vmem:[%s19 + $0xd8] sm:$0xff]
      %v1968 = vld [vmem:[%s19 + $0xe0] sm:$0xff]
      %v1969 = vld [vmem:[%s19 + $0xe8] sm:$0xff]
      %v1970 = vld [vmem:[%s19 + $0xf0] sm:$0xff]
      %v1971 = vld [vmem:[%s19 + $0xf8] sm:$0xff]
      %1973 = vset.pattern.permute.xlu0 0
      %1974 = vperm.xlu0 %1973, %v1940
      %v1975 = vpop.permute.xlu0 %1974
      %1978 = vset.pattern.permute.xlu0 0
      %1979 = vperm.xlu0 %1978, %v1941
      %v1980 = vpop.permute.xlu0 %1979
      %1983 = vset.pattern.permute.xlu0 0
      %1984 = vperm.xlu0 %1983, %v1942
      %v1985 = vpop.permute.xlu0 %1984
      %1988 = vset.pattern.permute.xlu0 0
      %1989 = vperm.xlu0 %1988, %v1943
      %v1990 = vpop.permute.xlu0 %1989
      %1993 = vset.pattern.permute.xlu0 0
      %1994 = vperm.xlu0 %1993, %v1944
      %v1995 = vpop.permute.xlu0 %1994
      %1998 = vset.pattern.permute.xlu0 0
      %1999 = vperm.xlu0 %1998, %v1945
      %v2000 = vpop.permute.xlu0 %1999
      %2003 = vset.pattern.permute.xlu0 0
      %2004 = vperm.xlu0 %2003, %v1946
      %v2005 = vpop.permute.xlu0 %2004
      %2008 = vset.pattern.permute.xlu0 0
      %2009 = vperm.xlu0 %2008, %v1947
      %v2010 = vpop.permute.xlu0 %2009
      %2013 = vset.pattern.permute.xlu0 0
      %2014 = vperm.xlu0 %2013, %v1948
      %v2015 = vpop.permute.xlu0 %2014
      %2018 = vset.pattern.permute.xlu0 0
      %2019 = vperm.xlu0 %2018, %v1949
      %v2020 = vpop.permute.xlu0 %2019
      %2023 = vset.pattern.permute.xlu0 0
      %2024 = vperm.xlu0 %2023, %v1950
      %v2025 = vpop.permute.xlu0 %2024
      %2028 = vset.pattern.permute.xlu0 0
      %2029 = vperm.xlu0 %2028, %v1951
      %v2030 = vpop.permute.xlu0 %2029
      %2033 = vset.pattern.permute.xlu0 0
      %2034 = vperm.xlu0 %2033, %v1952
      %v2035 = vpop.permute.xlu0 %2034
      %2038 = vset.pattern.permute.xlu0 0
      %2039 = vperm.xlu0 %2038, %v1953
      %v2040 = vpop.permute.xlu0 %2039
      %2043 = vset.pattern.permute.xlu0 0
      %2044 = vperm.xlu0 %2043, %v1954
      %v2045 = vpop.permute.xlu0 %2044
      %2048 = vset.pattern.permute.xlu0 0
      %2049 = vperm.xlu0 %2048, %v1955
      %v2050 = vpop.permute.xlu0 %2049
      %2053 = vset.pattern.permute.xlu0 0
      %2054 = vperm.xlu0 %2053, %v1956
      %v2055 = vpop.permute.xlu0 %2054
      %2058 = vset.pattern.permute.xlu0 0
      %2059 = vperm.xlu0 %2058, %v1957
      %v2060 = vpop.permute.xlu0 %2059
      %2063 = vset.pattern.permute.xlu0 0
      %2064 = vperm.xlu0 %2063, %v1958
      %v2065 = vpop.permute.xlu0 %2064
      %2068 = vset.pattern.permute.xlu0 0
      %2069 = vperm.xlu0 %2068, %v1959
      %v2070 = vpop.permute.xlu0 %2069
      %2073 = vset.pattern.permute.xlu0 0
      %2074 = vperm.xlu0 %2073, %v1960
      %v2075 = vpop.permute.xlu0 %2074
      %2078 = vset.pattern.permute.xlu0 0
      %2079 = vperm.xlu0 %2078, %v1961
      %v2080 = vpop.permute.xlu0 %2079
      %2083 = vset.pattern.permute.xlu0 0
      %2084 = vperm.xlu0 %2083, %v1962
      %v2085 = vpop.permute.xlu0 %2084
      %2088 = vset.pattern.permute.xlu0 0
      %2089 = vperm.xlu0 %2088, %v1963
      %v2090 = vpop.permute.xlu0 %2089
      %2093 = vset.pattern.permute.xlu0 0
      %2094 = vperm.xlu0 %2093, %v1964
      %v2095 = vpop.permute.xlu0 %2094
      %2098 = vset.pattern.permute.xlu0 0
      %2099 = vperm.xlu0 %2098, %v1965
      %v2100 = vpop.permute.xlu0 %2099
      %2103 = vset.pattern.permute.xlu0 0
      %2104 = vperm.xlu0 %2103, %v1966
      %v2105 = vpop.permute.xlu0 %2104
      %2108 = vset.pattern.permute.xlu0 0
      %2109 = vperm.xlu0 %2108, %v1967
      %v2110 = vpop.permute.xlu0 %2109
      %2113 = vset.pattern.permute.xlu0 0
      %2114 = vperm.xlu0 %2113, %v1968
      %v2115 = vpop.permute.xlu0 %2114
      %2118 = vset.pattern.permute.xlu0 0
      %2119 = vperm.xlu0 %2118, %v1969
      %v2120 = vpop.permute.xlu0 %2119
      %2123 = vset.pattern.permute.xlu0 0
      %2124 = vperm.xlu0 %2123, %v1970
      %v2125 = vpop.permute.xlu0 %2124
      %2128 = vset.pattern.permute.xlu0 0
      %2129 = vperm.xlu0 %2128, %v1971
      %v2130 = vpop.permute.xlu0 %2129
      %v2196 = vunpack.c.l.b16 %v1876
      %v2197 = vunpack.c.h.b16 %v1876
      %v2198 = vunpack.c.l.b16 %v1877
      %v2199 = vunpack.c.h.b16 %v1877
      %v2200 = vunpack.c.l.b16 %v1878
      %v2201 = vunpack.c.h.b16 %v1878
      %v2202 = vunpack.c.l.b16 %v1879
      %v2203 = vunpack.c.h.b16 %v1879
      %v2204 = vunpack.c.l.b16 %v1880
      %v2205 = vunpack.c.h.b16 %v1880
      %v2206 = vunpack.c.l.b16 %v1881
      %v2207 = vunpack.c.h.b16 %v1881
      %v2208 = vunpack.c.l.b16 %v1882
      %v2209 = vunpack.c.h.b16 %v1882
      %v2210 = vunpack.c.l.b16 %v1883
      %v2211 = vunpack.c.h.b16 %v1883
      %v2212 = vunpack.c.l.b16 %v1884
      %v2213 = vunpack.c.h.b16 %v1884
      %v2214 = vunpack.c.l.b16 %v1885
      %v2215 = vunpack.c.h.b16 %v1885
      %v2216 = vunpack.c.l.b16 %v1886
      %v2217 = vunpack.c.h.b16 %v1886
      %v2218 = vunpack.c.l.b16 %v1887
      %v2219 = vunpack.c.h.b16 %v1887
      %v2220 = vunpack.c.l.b16 %v1888
      %v2221 = vunpack.c.h.b16 %v1888
      %v2222 = vunpack.c.l.b16 %v1889
      %v2223 = vunpack.c.h.b16 %v1889
      %v2224 = vunpack.c.l.b16 %v1890
      %v2225 = vunpack.c.h.b16 %v1890
      %v2226 = vunpack.c.l.b16 %v1891
      %v2227 = vunpack.c.h.b16 %v1891
      %v2228 = vunpack.c.l.b16 %v1892
      %v2229 = vunpack.c.h.b16 %v1892
      %v2230 = vunpack.c.l.b16 %v1893
      %v2231 = vunpack.c.h.b16 %v1893
      %v2232 = vunpack.c.l.b16 %v1894
      %v2233 = vunpack.c.h.b16 %v1894
      %v2234 = vunpack.c.l.b16 %v1895
      %v2235 = vunpack.c.h.b16 %v1895
      %v2236 = vunpack.c.l.b16 %v1896
      %v2237 = vunpack.c.h.b16 %v1896
      %v2238 = vunpack.c.l.b16 %v1897
      %v2239 = vunpack.c.h.b16 %v1897
      %v2240 = vunpack.c.l.b16 %v1898
      %v2241 = vunpack.c.h.b16 %v1898
      %v2242 = vunpack.c.l.b16 %v1899
      %v2243 = vunpack.c.h.b16 %v1899
      %v2244 = vunpack.c.l.b16 %v1900
      %v2245 = vunpack.c.h.b16 %v1900
      %v2246 = vunpack.c.l.b16 %v1901
      %v2247 = vunpack.c.h.b16 %v1901
      %v2248 = vunpack.c.l.b16 %v1902
      %v2249 = vunpack.c.h.b16 %v1902
      %v2250 = vunpack.c.l.b16 %v1903
      %v2251 = vunpack.c.h.b16 %v1903
      %v2252 = vunpack.c.l.b16 %v1904
      %v2253 = vunpack.c.h.b16 %v1904
      %v2254 = vunpack.c.l.b16 %v1905
      %v2255 = vunpack.c.h.b16 %v1905
      %v2256 = vunpack.c.l.b16 %v1906
      %v2257 = vunpack.c.h.b16 %v1906
      %v2258 = vunpack.c.l.b16 %v1907
      %v2259 = vunpack.c.h.b16 %v1907
      %v2260 = vunpack.c.l.b16 %v1908
      %v2261 = vunpack.c.h.b16 %v1908
      %v2262 = vunpack.c.l.b16 %v1909
      %v2263 = vunpack.c.h.b16 %v1909
      %v2264 = vunpack.c.l.b16 %v1910
      %v2265 = vunpack.c.h.b16 %v1910
      %v2266 = vunpack.c.l.b16 %v1911
      %v2267 = vunpack.c.h.b16 %v1911
      %v2268 = vunpack.c.l.b16 %v1912
      %v2269 = vunpack.c.h.b16 %v1912
      %v2270 = vunpack.c.l.b16 %v1913
      %v2271 = vunpack.c.h.b16 %v1913
      %v2272 = vunpack.c.l.b16 %v1914
      %v2273 = vunpack.c.h.b16 %v1914
      %v2274 = vunpack.c.l.b16 %v1915
      %v2275 = vunpack.c.h.b16 %v1915
      %v2276 = vunpack.c.l.b16 %v1916
      %v2277 = vunpack.c.h.b16 %v1916
      %v2278 = vunpack.c.l.b16 %v1917
      %v2279 = vunpack.c.h.b16 %v1917
      %v2280 = vunpack.c.l.b16 %v1918
      %v2281 = vunpack.c.h.b16 %v1918
      %v2282 = vunpack.c.l.b16 %v1919
      %v2283 = vunpack.c.h.b16 %v1919
      %v2284 = vunpack.c.l.b16 %v1920
      %v2285 = vunpack.c.h.b16 %v1920
      %v2286 = vunpack.c.l.b16 %v1921
      %v2287 = vunpack.c.h.b16 %v1921
      %v2288 = vunpack.c.l.b16 %v1922
      %v2289 = vunpack.c.h.b16 %v1922
      %v2290 = vunpack.c.l.b16 %v1923
      %v2291 = vunpack.c.h.b16 %v1923
      %v2292 = vunpack.c.l.b16 %v1924
      %v2293 = vunpack.c.h.b16 %v1924
      %v2294 = vunpack.c.l.b16 %v1925
      %v2295 = vunpack.c.h.b16 %v1925
      %v2296 = vunpack.c.l.b16 %v1926
      %v2297 = vunpack.c.h.b16 %v1926
      %v2298 = vunpack.c.l.b16 %v1927
      %v2299 = vunpack.c.h.b16 %v1927
      %v2300 = vunpack.c.l.b16 %v1928
      %v2301 = vunpack.c.h.b16 %v1928
      %v2302 = vunpack.c.l.b16 %v1929
      %v2303 = vunpack.c.h.b16 %v1929
      %v2304 = vunpack.c.l.b16 %v1930
      %v2305 = vunpack.c.h.b16 %v1930
      %v2306 = vunpack.c.l.b16 %v1931
      %v2307 = vunpack.c.h.b16 %v1931
      %v2308 = vunpack.c.l.b16 %v1932
      %v2309 = vunpack.c.h.b16 %v1932
      %v2310 = vunpack.c.l.b16 %v1933
      %v2311 = vunpack.c.h.b16 %v1933
      %v2312 = vunpack.c.l.b16 %v1934
      %v2313 = vunpack.c.h.b16 %v1934
      %v2314 = vunpack.c.l.b16 %v1935
      %v2315 = vunpack.c.h.b16 %v1935
      %v2316 = vunpack.c.l.b16 %v1936
      %v2317 = vunpack.c.h.b16 %v1936
      %v2318 = vunpack.c.l.b16 %v1937
      %v2319 = vunpack.c.h.b16 %v1937
      %v2320 = vunpack.c.l.b16 %v1938
      %v2321 = vunpack.c.h.b16 %v1938
      %v2322 = vunpack.c.l.b16 %v1939
      %v2323 = vunpack.c.h.b16 %v1939
      %v2324 = vpack.c.b16 %v2200, %v2196
      %v2325 = vpack.c.b16 %v2201, %v2197
      %v2326 = vpack.c.b16 %v2202, %v2198
      %v2327 = vpack.c.b16 %v2203, %v2199
      %v2328 = vpack.c.b16 %v2208, %v2204
      %v2329 = vpack.c.b16 %v2209, %v2205
      %v2330 = vpack.c.b16 %v2210, %v2206
      %v2331 = vpack.c.b16 %v2211, %v2207
      %v2332 = vpack.c.b16 %v2216, %v2212
      %v2333 = vpack.c.b16 %v2217, %v2213
      %v2334 = vpack.c.b16 %v2218, %v2214
      %v2335 = vpack.c.b16 %v2219, %v2215
      %v2336 = vpack.c.b16 %v2224, %v2220
      %v2337 = vpack.c.b16 %v2225, %v2221
      %v2338 = vpack.c.b16 %v2226, %v2222
      %v2339 = vpack.c.b16 %v2227, %v2223
      %v2340 = vpack.c.b16 %v2232, %v2228
      %v2341 = vpack.c.b16 %v2233, %v2229
      %v2342 = vpack.c.b16 %v2234, %v2230
      %v2343 = vpack.c.b16 %v2235, %v2231
      %v2344 = vpack.c.b16 %v2240, %v2236
      %v2345 = vpack.c.b16 %v2241, %v2237
      %v2346 = vpack.c.b16 %v2242, %v2238
      %v2347 = vpack.c.b16 %v2243, %v2239
      %v2348 = vpack.c.b16 %v2248, %v2244
      %v2349 = vpack.c.b16 %v2249, %v2245
      %v2350 = vpack.c.b16 %v2250, %v2246
      %v2351 = vpack.c.b16 %v2251, %v2247
      %v2352 = vpack.c.b16 %v2256, %v2252
      %v2353 = vpack.c.b16 %v2257, %v2253
      %v2354 = vpack.c.b16 %v2258, %v2254
      %v2355 = vpack.c.b16 %v2259, %v2255
      %v2356 = vpack.c.b16 %v2264, %v2260
      %v2357 = vpack.c.b16 %v2265, %v2261
      %v2358 = vpack.c.b16 %v2266, %v2262
      %v2359 = vpack.c.b16 %v2267, %v2263
      %v2360 = vpack.c.b16 %v2272, %v2268
      %v2361 = vpack.c.b16 %v2273, %v2269
      %v2362 = vpack.c.b16 %v2274, %v2270
      %v2363 = vpack.c.b16 %v2275, %v2271
      %v2364 = vpack.c.b16 %v2280, %v2276
      %v2365 = vpack.c.b16 %v2281, %v2277
      %v2366 = vpack.c.b16 %v2282, %v2278
      %v2367 = vpack.c.b16 %v2283, %v2279
      %v2368 = vpack.c.b16 %v2288, %v2284
      %v2369 = vpack.c.b16 %v2289, %v2285
      %v2370 = vpack.c.b16 %v2290, %v2286
      %v2371 = vpack.c.b16 %v2291, %v2287
      %v2372 = vpack.c.b16 %v2296, %v2292
      %v2373 = vpack.c.b16 %v2297, %v2293
      %v2374 = vpack.c.b16 %v2298, %v2294
      %v2375 = vpack.c.b16 %v2299, %v2295
      %v2376 = vpack.c.b16 %v2304, %v2300
      %v2377 = vpack.c.b16 %v2305, %v2301
      %v2378 = vpack.c.b16 %v2306, %v2302
      %v2379 = vpack.c.b16 %v2307, %v2303
      %v2380 = vpack.c.b16 %v2312, %v2308
      %v2381 = vpack.c.b16 %v2313, %v2309
      %v2382 = vpack.c.b16 %v2314, %v2310
      %v2383 = vpack.c.b16 %v2315, %v2311
      %v2384 = vpack.c.b16 %v2320, %v2316
      %v2385 = vpack.c.b16 %v2321, %v2317
      %v2386 = vpack.c.b16 %v2322, %v2318
      %v2387 = vpack.c.b16 %v2323, %v2319
      %v2437 = vsel %vm1225, %v2327, 0
      %v2440 = vsel %vm1225, %v2331, 0
      %v2443 = vsel %vm1225, %v2335, 0
      %v2446 = vsel %vm1225, %v2339, 0
      %v2449 = vsel %vm1225, %v2343, 0
      %v2452 = vsel %vm1225, %v2347, 0
      %v2455 = vsel %vm1225, %v2351, 0
      %v2458 = vsel %vm1225, %v2355, 0
      %v2461 = vsel %vm1225, %v2359, 0
      %v2464 = vsel %vm1225, %v2363, 0
      %v2467 = vsel %vm1225, %v2367, 0
      %v2470 = vsel %vm1225, %v2371, 0
      %v2473 = vsel %vm1225, %v2375, 0
      %v2476 = vsel %vm1225, %v2379, 0
      %v2479 = vsel %vm1225, %v2383, 0
      %v2482 = vsel %vm1225, %v2387, 0
      %2484 = vmatprep.subr.bf16.mxu0 0
      %2485 = vmatpush1.bf16.msra.mxu0 %v1849
      %2486 = vmatprep.subr.bf16.mxu0 0
      %2487 = vmatpush1.bf16.msra.mxu0 %v1850
      %2488 = vmatprep.subr.bf16.mxu0 0
      %2489 = vmatpush1.bf16.msra.mxu0 %v1851
      %2490 = vmatprep.subr.bf16.mxu0 0
      %2491 = vmatpush1.bf16.msra.mxu0 %v1852
      %2492 = vmatprep.subr.bf16.mxu0 0
      %2493 = vmatpush1.bf16.msra.mxu0 %v1853
      %2494 = vmatprep.subr.bf16.mxu0 0
      %2495 = vmatpush1.bf16.msra.mxu0 %v1854
      %2496 = vmatprep.subr.bf16.mxu0 0
      %2497 = vmatpush1.bf16.msra.mxu0 %v1855
      %2498 = vmatprep.subr.bf16.mxu0 0
      %2499 = vmatpush1.bf16.msra.mxu0 %v1856
      %2500 = vmatprep.subr.bf16.mxu0 0
      %2501 = vmatpush1.bf16.msra.mxu0 %v1857
      %2502 = vmatprep.subr.bf16.mxu0 0
      %2503 = vmatpush1.bf16.msra.mxu0 %v1858
      %2504 = vmatprep.subr.bf16.mxu0 0
      %2505 = vmatpush1.bf16.msra.mxu0 %v1859
      %2506 = vmatprep.subr.bf16.mxu0 0
      %2507 = vmatpush1.bf16.msra.mxu0 %v1860
      %2508 = vmatprep.subr.bf16.mxu0 0
      %2509 = vmatpush1.bf16.msra.mxu0 %v1861
      %2510 = vmatprep.subr.bf16.mxu0 0
      %2511 = vmatpush1.bf16.msra.mxu0 %v1862
      %2512 = vmatprep.subr.bf16.mxu0 0
      %2513 = vmatpush1.bf16.msra.mxu0 %v1863
      %2514 = vmatprep.subr.bf16.mxu0 0
      %2515 = vmatpush1.bf16.msra.mxu0 %v1864
      %2516 = vmatprep.mubr.bf16.mxu0 %v2325
      %2517 = vmatmul.mubr.bf16.gmra.mrb[0].mxu0 %v2324
      %v2518 = vpop.f32.mrb[0].mxu0
      %v2519 = vadd.f32 %v1975, %v2518
      %v2520 = vpop.f32.mrb[0].mxu0
      %v2521 = vpop.f32.mrb[0].mxu0
      %v2522 = vadd.f32 %v1980, %v2521
      %v2523 = vpop.f32.mrb[0].mxu0
      %2524 = vmatprep.mubr.bf16.mxu0 %v2329
      %2525 = vmatmul.mubr.bf16.gmra.mrb[0].mxu0 %v2328
      %v2526 = vpop.f32.mrb[0].mxu0
      %v2527 = vadd.f32 %v1985, %v2526
      %v2528 = vpop.f32.mrb[0].mxu0
      %v2529 = vpop.f32.mrb[0].mxu0
      %v2530 = vadd.f32 %v1990, %v2529
      %v2531 = vpop.f32.mrb[0].mxu0
      %2532 = vmatprep.mubr.bf16.mxu0 %v2333
      %2533 = vmatmul.mubr.bf16.gmra.mrb[0].mxu0 %v2332
      %v2534 = vpop.f32.mrb[0].mxu0
      %v2535 = vadd.f32 %v1995, %v2534
      %v2536 = vpop.f32.mrb[0].mxu0
      %v2537 = vpop.f32.mrb[0].mxu0
      %v2538 = vadd.f32 %v2000, %v2537
      %v2539 = vpop.f32.mrb[0].mxu0
      %2540 = vmatprep.mubr.bf16.mxu0 %v2337
      %2541 = vmatmul.mubr.bf16.gmra.mrb[0].mxu0 %v2336
      %v2542 = vpop.f32.mrb[0].mxu0
      %v2543 = vadd.f32 %v2005, %v2542
      %v2544 = vpop.f32.mrb[0].mxu0
      %v2545 = vpop.f32.mrb[0].mxu0
      %v2546 = vadd.f32 %v2010, %v2545
      %v2547 = vpop.f32.mrb[0].mxu0
      %2548 = vmatprep.mubr.bf16.mxu0 %v2341
      %2549 = vmatmul.mubr.bf16.gmra.mrb[0].mxu0 %v2340
      %v2550 = vpop.f32.mrb[0].mxu0
      %v2551 = vadd.f32 %v2015, %v2550
      %v2552 = vpop.f32.mrb[0].mxu0
      %v2553 = vpop.f32.mrb[0].mxu0
      %v2554 = vadd.f32 %v2020, %v2553
      %v2555 = vpop.f32.mrb[0].mxu0
      %2556 = vmatprep.mubr.bf16.mxu0 %v2345
      %2557 = vmatmul.mubr.bf16.gmra.mrb[0].mxu0 %v2344
      %v2558 = vpop.f32.mrb[0].mxu0
      %v2559 = vadd.f32 %v2025, %v2558
      %v2560 = vpop.f32.mrb[0].mxu0
      %v2561 = vpop.f32.mrb[0].mxu0
      %v2562 = vadd.f32 %v2030, %v2561
      %v2563 = vpop.f32.mrb[0].mxu0
      %2564 = vmatprep.mubr.bf16.mxu0 %v2349
      %2565 = vmatmul.mubr.bf16.gmra.mrb[0].mxu0 %v2348
      %v2566 = vpop.f32.mrb[0].mxu0
      %v2567 = vadd.f32 %v2035, %v2566
      %v2568 = vpop.f32.mrb[0].mxu0
      %v2569 = vpop.f32.mrb[0].mxu0
      %v2570 = vadd.f32 %v2040, %v2569
      %v2571 = vpop.f32.mrb[0].mxu0
      %2572 = vmatprep.mubr.bf16.mxu0 %v2353
      %2573 = vmatmul.mubr.bf16.gmra.mrb[0].mxu0 %v2352
      %v2574 = vpop.f32.mrb[0].mxu0
      %v2575 = vadd.f32 %v2045, %v2574
      %v2576 = vpop.f32.mrb[0].mxu0
      %v2577 = vpop.f32.mrb[0].mxu0
      %v2578 = vadd.f32 %v2050, %v2577
      %v2579 = vpop.f32.mrb[0].mxu0
      %2580 = vmatprep.mubr.bf16.mxu0 %v2357
      %2581 = vmatmul.mubr.bf16.gmra.mrb[0].mxu0 %v2356
      %v2582 = vpop.f32.mrb[0].mxu0
      %v2583 = vadd.f32 %v2055, %v2582
      %v2584 = vpop.f32.mrb[0].mxu0
      %v2585 = vpop.f32.mrb[0].mxu0
      %v2586 = vadd.f32 %v2060, %v2585
      %v2587 = vpop.f32.mrb[0].mxu0
      %2588 = vmatprep.mubr.bf16.mxu0 %v2361
      %2589 = vmatmul.mubr.bf16.gmra.mrb[0].mxu0 %v2360
      %v2590 = vpop.f32.mrb[0].mxu0
      %v2591 = vadd.f32 %v2065, %v2590
      %v2592 = vpop.f32.mrb[0].mxu0
      %v2593 = vpop.f32.mrb[0].mxu0
      %v2594 = vadd.f32 %v2070, %v2593
      %v2595 = vpop.f32.mrb[0].mxu0
      %2596 = vmatprep.mubr.bf16.mxu0 %v2365
      %2597 = vmatmul.mubr.bf16.gmra.mrb[0].mxu0 %v2364
      %v2598 = vpop.f32.mrb[0].mxu0
      %v2599 = vadd.f32 %v2075, %v2598
      %v2600 = vpop.f32.mrb[0].mxu0
      %v2601 = vpop.f32.mrb[0].mxu0
      %v2602 = vadd.f32 %v2080, %v2601
      %v2603 = vpop.f32.mrb[0].mxu0
      %2604 = vmatprep.mubr.bf16.mxu0 %v2369
      %2605 = vmatmul.mubr.bf16.gmra.mrb[0].mxu0 %v2368
      %v2606 = vpop.f32.mrb[0].mxu0
      %v2607 = vadd.f32 %v2085, %v2606
      %v2608 = vpop.f32.mrb[0].mxu0
      %v2609 = vpop.f32.mrb[0].mxu0
      %v2610 = vadd.f32 %v2090, %v2609
      %v2611 = vpop.f32.mrb[0].mxu0
      %2612 = vmatprep.mubr.bf16.mxu0 %v2373
      %2613 = vmatmul.mubr.bf16.gmra.mrb[0].mxu0 %v2372
      %v2614 = vpop.f32.mrb[0].mxu0
      %v2615 = vadd.f32 %v2095, %v2614
      %v2616 = vpop.f32.mrb[0].mxu0
      %v2617 = vpop.f32.mrb[0].mxu0
      %v2618 = vadd.f32 %v2100, %v2617
      %v2619 = vpop.f32.mrb[0].mxu0
      %2620 = vmatprep.mubr.bf16.mxu0 %v2377
      %2621 = vmatmul.mubr.bf16.gmra.mrb[0].mxu0 %v2376
      %v2622 = vpop.f32.mrb[0].mxu0
      %v2623 = vadd.f32 %v2105, %v2622
      %v2624 = vpop.f32.mrb[0].mxu0
      %v2625 = vpop.f32.mrb[0].mxu0
      %v2626 = vadd.f32 %v2110, %v2625
      %v2627 = vpop.f32.mrb[0].mxu0
      %2628 = vmatprep.mubr.bf16.mxu0 %v2381
      %2629 = vmatmul.mubr.bf16.gmra.mrb[0].mxu0 %v2380
      %v2630 = vpop.f32.mrb[0].mxu0
      %v2631 = vadd.f32 %v2115, %v2630
      %v2632 = vpop.f32.mrb[0].mxu0
      %v2633 = vpop.f32.mrb[0].mxu0
      %v2634 = vadd.f32 %v2120, %v2633
      %v2635 = vpop.f32.mrb[0].mxu0
      %2636 = vmatprep.mubr.bf16.mxu0 %v2385
      %2637 = vmatmul.mubr.bf16.gmra.mrb[0].mxu0 %v2384
      %v2638 = vpop.f32.mrb[0].mxu0
      %v2639 = vadd.f32 %v2125, %v2638
      %v2640 = vpop.f32.mrb[0].mxu0
      %v2641 = vpop.f32.mrb[0].mxu0
      %v2642 = vadd.f32 %v2130, %v2641
      %v2643 = vpop.f32.mrb[0].mxu0
      %2644 = vdwg.mxu0
      %2645 = vmatprep.subr.bf16.mxu0 0
      %2646 = vmatpush1.bf16.msra.mxu0 %v1865
      %2647 = vmatprep.subr.bf16.mxu0 0
      %2648 = vmatpush1.bf16.msra.mxu0 %v1866
      %2649 = vmatprep.subr.bf16.mxu0 0
      %2650 = vmatpush1.bf16.msra.mxu0 %v1867
      %2651 = vmatprep.subr.bf16.mxu0 0
      %2652 = vmatpush1.bf16.msra.mxu0 %v1868
      %2653 = vmatprep.subr.bf16.mxu0 0
      %2654 = vmatpush1.bf16.msra.mxu0 %v1869
      %2655 = vmatprep.subr.bf16.mxu0 0
      %2656 = vmatpush1.bf16.msra.mxu0 %v1870
      %2657 = vmatprep.subr.bf16.mxu0 0
      %2658 = vmatpush1.bf16.msra.mxu0 %v1871
      %2659 = vmatprep.subr.bf16.mxu0 0
      %2660 = vmatpush1.bf16.msra.mxu0 %v1872
      %2661 = vmatprep.subr.bf16.mxu0 0
      %2662 = vmatpush1.bf16.msra.mxu0 %v1873
      %2663 = vmatprep.subr.bf16.mxu0 0
      %2664 = vmatpush1.bf16.msra.mxu0 %v1874
      %2665 = vmatprep.subr.bf16.mxu0 0
      %2666 = vmatpush1.bf16.msra.mxu0 %v1875
      %2667 = vmatprep.subr.bf16.mxu0 0
      %2668 = vmatpush1.bf16.msra.mxu0 0
      %2669 = vmatprep.subr.bf16.mxu0 0
      %2670 = vmatpush1.bf16.msra.mxu0 0
      %2671 = vmatprep.subr.bf16.mxu0 0
      %2672 = vmatpush1.bf16.msra.mxu0 0
      %2673 = vmatprep.subr.bf16.mxu0 0
      %2674 = vmatpush1.bf16.msra.mxu0 0
      %2675 = vmatprep.subr.bf16.mxu0 0
      %2676 = vmatpush1.bf16.msra.mxu0 0
      %2677 = vmatprep.mubr.bf16.mxu0 %v2437
      %2678 = vmatmul.mubr.bf16.gmra.mrb[0].mxu0 %v2326
      %v2679 = vpop.f32.mrb[0].mxu0
      %v2680 = vadd.f32 %v2519, %v2679
      %v2681 = vpop.f32.mrb[0].mxu0
      %v2682 = vpop.f32.mrb[0].mxu0
      %v2683 = vadd.f32 %v2522, %v2682
      %v2684 = vpop.f32.mrb[0].mxu0
      %2685 = vmatprep.mubr.bf16.mxu0 %v2440
      %2686 = vmatmul.mubr.bf16.gmra.mrb[0].mxu0 %v2330
      %v2687 = vpop.f32.mrb[0].mxu0
      %v2688 = vadd.f32 %v2527, %v2687
      %v2689 = vpop.f32.mrb[0].mxu0
      %v2690 = vpop.f32.mrb[0].mxu0
      %v2691 = vadd.f32 %v2530, %v2690
      %v2692 = vpop.f32.mrb[0].mxu0
      %2693 = vmatprep.mubr.bf16.mxu0 %v2443
      %2694 = vmatmul.mubr.bf16.gmra.mrb[0].mxu0 %v2334
      %v2695 = vpop.f32.mrb[0].mxu0
      %v2696 = vadd.f32 %v2535, %v2695
      %v2697 = vpop.f32.mrb[0].mxu0
      %v2698 = vpop.f32.mrb[0].mxu0
      %v2699 = vadd.f32 %v2538, %v2698
      %v2700 = vpop.f32.mrb[0].mxu0
      %2701 = vmatprep.mubr.bf16.mxu0 %v2446
      %2702 = vmatmul.mubr.bf16.gmra.mrb[0].mxu0 %v2338
      %v2703 = vpop.f32.mrb[0].mxu0
      %v2704 = vadd.f32 %v2543, %v2703
      %v2705 = vpop.f32.mrb[0].mxu0
      %v2706 = vpop.f32.mrb[0].mxu0
      %v2707 = vadd.f32 %v2546, %v2706
      %v2708 = vpop.f32.mrb[0].mxu0
      %2709 = vmatprep.mubr.bf16.mxu0 %v2449
      %2710 = vmatmul.mubr.bf16.gmra.mrb[0].mxu0 %v2342
      %v2711 = vpop.f32.mrb[0].mxu0
      %v2712 = vadd.f32 %v2551, %v2711
      %v2713 = vpop.f32.mrb[0].mxu0
      %v2714 = vpop.f32.mrb[0].mxu0
      %v2715 = vadd.f32 %v2554, %v2714
      %v2716 = vpop.f32.mrb[0].mxu0
      %2717 = vmatprep.mubr.bf16.mxu0 %v2452
      %2718 = vmatmul.mubr.bf16.gmra.mrb[0].mxu0 %v2346
      %v2719 = vpop.f32.mrb[0].mxu0
      %v2720 = vadd.f32 %v2559, %v2719
      %v2721 = vpop.f32.mrb[0].mxu0
      %v2722 = vpop.f32.mrb[0].mxu0
      %v2723 = vadd.f32 %v2562, %v2722
      %v2724 = vpop.f32.mrb[0].mxu0
      %2725 = vmatprep.mubr.bf16.mxu0 %v2455
      %2726 = vmatmul.mubr.bf16.gmra.mrb[0].mxu0 %v2350
      %v2727 = vpop.f32.mrb[0].mxu0
      %v2728 = vadd.f32 %v2567, %v2727
      %v2729 = vpop.f32.mrb[0].mxu0
      %v2730 = vpop.f32.mrb[0].mxu0
      %v2731 = vadd.f32 %v2570, %v2730
      %v2732 = vpop.f32.mrb[0].mxu0
      %2733 = vmatprep.mubr.bf16.mxu0 %v2458
      %2734 = vmatmul.mubr.bf16.gmra.mrb[0].mxu0 %v2354
      %v2735 = vpop.f32.mrb[0].mxu0
      %v2736 = vadd.f32 %v2575, %v2735
      %v2737 = vpop.f32.mrb[0].mxu0
      %v2738 = vpop.f32.mrb[0].mxu0
      %v2739 = vadd.f32 %v2578, %v2738
      %v2740 = vpop.f32.mrb[0].mxu0
      %2741 = vmatprep.mubr.bf16.mxu0 %v2461
      %2742 = vmatmul.mubr.bf16.gmra.mrb[0].mxu0 %v2358
      %v2743 = vpop.f32.mrb[0].mxu0
      %v2744 = vadd.f32 %v2583, %v2743
      %v2745 = vpop.f32.mrb[0].mxu0
      %v2746 = vpop.f32.mrb[0].mxu0
      %v2747 = vadd.f32 %v2586, %v2746
      %v2748 = vpop.f32.mrb[0].mxu0
      %2749 = vmatprep.mubr.bf16.mxu0 %v2464
      %2750 = vmatmul.mubr.bf16.gmra.mrb[0].mxu0 %v2362
      %v2751 = vpop.f32.mrb[0].mxu0
      %v2752 = vadd.f32 %v2591, %v2751
      %v2753 = vpop.f32.mrb[0].mxu0
      %v2754 = vpop.f32.mrb[0].mxu0
      %v2755 = vadd.f32 %v2594, %v2754
      %v2756 = vpop.f32.mrb[0].mxu0
      %2757 = vmatprep.mubr.bf16.mxu0 %v2467
      %2758 = vmatmul.mubr.bf16.gmra.mrb[0].mxu0 %v2366
      %v2759 = vpop.f32.mrb[0].mxu0
      %v2760 = vadd.f32 %v2599, %v2759
      %v2761 = vpop.f32.mrb[0].mxu0
      %v2762 = vpop.f32.mrb[0].mxu0
      %v2763 = vadd.f32 %v2602, %v2762
      %v2764 = vpop.f32.mrb[0].mxu0
      %2765 = vmatprep.mubr.bf16.mxu0 %v2470
      %2766 = vmatmul.mubr.bf16.gmra.mrb[0].mxu0 %v2370
      %v2767 = vpop.f32.mrb[0].mxu0
      %v2768 = vadd.f32 %v2607, %v2767
      %v2769 = vpop.f32.mrb[0].mxu0
      %v2770 = vpop.f32.mrb[0].mxu0
      %v2771 = vadd.f32 %v2610, %v2770
      %v2772 = vpop.f32.mrb[0].mxu0
      %2773 = vmatprep.mubr.bf16.mxu0 %v2473
      %2774 = vmatmul.mubr.bf16.gmra.mrb[0].mxu0 %v2374
      %v2775 = vpop.f32.mrb[0].mxu0
      %v2776 = vadd.f32 %v2615, %v2775
      %v2777 = vpop.f32.mrb[0].mxu0
      %v2778 = vpop.f32.mrb[0].mxu0
      %v2779 = vadd.f32 %v2618, %v2778
      %v2780 = vpop.f32.mrb[0].mxu0
      %2781 = vmatprep.mubr.bf16.mxu0 %v2476
      %2782 = vmatmul.mubr.bf16.gmra.mrb[0].mxu0 %v2378
      %v2783 = vpop.f32.mrb[0].mxu0
      %v2784 = vadd.f32 %v2623, %v2783
      %v2785 = vpop.f32.mrb[0].mxu0
      %v2786 = vpop.f32.mrb[0].mxu0
      %v2787 = vadd.f32 %v2626, %v2786
      %v2788 = vpop.f32.mrb[0].mxu0
      %2789 = vmatprep.mubr.bf16.mxu0 %v2479
      %2790 = vmatmul.mubr.bf16.gmra.mrb[0].mxu0 %v2382
      %v2791 = vpop.f32.mrb[0].mxu0
      %v2792 = vadd.f32 %v2631, %v2791
      %v2793 = vpop.f32.mrb[0].mxu0
      %v2794 = vpop.f32.mrb[0].mxu0
      %v2795 = vadd.f32 %v2634, %v2794
      %v2796 = vpop.f32.mrb[0].mxu0
      %2797 = vmatprep.mubr.bf16.mxu0 %v2482
      %2798 = vmatmul.mubr.bf16.gmra.mrb[0].mxu0 %v2386
      %v2799 = vpop.f32.mrb[0].mxu0
      %v2800 = vadd.f32 %v2639, %v2799
      %v2801 = vpop.f32.mrb[0].mxu0
      %v2802 = vpop.f32.mrb[0].mxu0
      %v2803 = vadd.f32 %v2642, %v2802
      %v2804 = vpop.f32.mrb[0].mxu0
      %2805 = vdwg.mxu0
      %v2806 = vld [vmem:[%s21] sm:$0xff]
      %v2807 = vld [vmem:[%s21 + $0x8] sm:$0xff]
      %v2808 = vld [vmem:[%s21 + $0x10] sm:$0xff]
      %v2809 = vld [vmem:[%s21 + $0x18] sm:$0xff]
      %v2810 = vld [vmem:[%s21 + $0x20] sm:$0xff]
      %v2811 = vld [vmem:[%s21 + $0x28] sm:$0xff]
      %v2812 = vld [vmem:[%s21 + $0x30] sm:$0xff]
      %v2813 = vld [vmem:[%s21 + $0x38] sm:$0xff]
      %v2814 = vld [vmem:[%s21 + $0x40] sm:$0xff]
      %v2815 = vld [vmem:[%s21 + $0x48] sm:$0xff]
      %v2816 = vld [vmem:[%s21 + $0x50] sm:$0xff]
      %v2817 = vld [vmem:[%s21 + $0x58] sm:$0xff]
      %v2818 = vld [vmem:[%s21 + $0x60] sm:$0xff]
      %v2819 = vld [vmem:[%s21 + $0x68] sm:$0xff]
      %v2820 = vld [vmem:[%s21 + $0x70] sm:$0xff]
      %v2821 = vld [vmem:[%s21 + $0x78] sm:$0xff]
      %v2822 = vld [vmem:[%s21 + $0x80] sm:$0xff]
      %v2823 = vld [vmem:[%s21 + $0x88] sm:$0xff]
      %v2824 = vld [vmem:[%s21 + $0x90] sm:$0xff]
      %v2825 = vld [vmem:[%s21 + $0x98] sm:$0xff]
      %v2826 = vld [vmem:[%s21 + $0xa0] sm:$0xff]
      %v2827 = vld [vmem:[%s21 + $0xa8] sm:$0xff]
      %v2828 = vld [vmem:[%s21 + $0xb0] sm:$0xff]
      %v2829 = vld [vmem:[%s21 + $0xb8] sm:$0xff]
      %v2830 = vld [vmem:[%s21 + $0xc0] sm:$0xff]
      %v2831 = vld [vmem:[%s21 + $0xc8] sm:$0xff]
      %v2832 = vld [vmem:[%s21 + $0xd0] sm:$0xff]
      %v2833 = vld [vmem:[%s21 + $0xd8] sm:$0xff]
      %v2834 = vld [vmem:[%s21 + $0xe0] sm:$0xff]
      %v2835 = vld [vmem:[%s21 + $0xe8] sm:$0xff]
      %v2836 = vld [vmem:[%s21 + $0xf0] sm:$0xff]
      %v2837 = vld [vmem:[%s21 + $0xf8] sm:$0xff]
      %vm2838 = vcmp.gt.f32.partialorder %v2680, 0.0
      %vm2839 = vcmp.gt.f32.partialorder %v2683, 0.0
      %vm2840 = vcmp.gt.f32.partialorder %v2688, 0.0
      %vm2841 = vcmp.gt.f32.partialorder %v2691, 0.0
      %vm2842 = vcmp.gt.f32.partialorder %v2696, 0.0
      %vm2843 = vcmp.gt.f32.partialorder %v2699, 0.0
      %vm2844 = vcmp.gt.f32.partialorder %v2704, 0.0
      %vm2845 = vcmp.gt.f32.partialorder %v2707, 0.0
      %vm2846 = vcmp.gt.f32.partialorder %v2712, 0.0
      %vm2847 = vcmp.gt.f32.partialorder %v2715, 0.0
      %vm2848 = vcmp.gt.f32.partialorder %v2720, 0.0
      %vm2849 = vcmp.gt.f32.partialorder %v2723, 0.0
      %vm2850 = vcmp.gt.f32.partialorder %v2728, 0.0
      %vm2851 = vcmp.gt.f32.partialorder %v2731, 0.0
      %vm2852 = vcmp.gt.f32.partialorder %v2736, 0.0
      %vm2853 = vcmp.gt.f32.partialorder %v2739, 0.0
      %vm2854 = vcmp.gt.f32.partialorder %v2744, 0.0
      %vm2855 = vcmp.gt.f32.partialorder %v2747, 0.0
      %vm2856 = vcmp.gt.f32.partialorder %v2752, 0.0
      %vm2857 = vcmp.gt.f32.partialorder %v2755, 0.0
      %vm2858 = vcmp.gt.f32.partialorder %v2760, 0.0
      %vm2859 = vcmp.gt.f32.partialorder %v2763, 0.0
      %vm2860 = vcmp.gt.f32.partialorder %v2768, 0.0
      %vm2861 = vcmp.gt.f32.partialorder %v2771, 0.0
      %vm2862 = vcmp.gt.f32.partialorder %v2776, 0.0
      %vm2863 = vcmp.gt.f32.partialorder %v2779, 0.0
      %vm2864 = vcmp.gt.f32.partialorder %v2784, 0.0
      %vm2865 = vcmp.gt.f32.partialorder %v2787, 0.0
      %vm2866 = vcmp.gt.f32.partialorder %v2792, 0.0
      %vm2867 = vcmp.gt.f32.partialorder %v2795, 0.0
      %vm2868 = vcmp.gt.f32.partialorder %v2800, 0.0
      %vm2869 = vcmp.gt.f32.partialorder %v2803, 0.0
      %2871 = vset.pattern.permute.xlu0 0
      %2872 = vperm.xlu0 %2871, %v2806
      %v2873 = vpop.permute.xlu0 %2872
      %2876 = vset.pattern.permute.xlu0 0
      %2877 = vperm.xlu0 %2876, %v2807
      %v2878 = vpop.permute.xlu0 %2877
      %2881 = vset.pattern.permute.xlu0 0
      %2882 = vperm.xlu0 %2881, %v2808
      %v2883 = vpop.permute.xlu0 %2882
      %2886 = vset.pattern.permute.xlu0 0
      %2887 = vperm.xlu0 %2886, %v2809
      %v2888 = vpop.permute.xlu0 %2887
      %2891 = vset.pattern.permute.xlu0 0
      %2892 = vperm.xlu0 %2891, %v2810
      %v2893 = vpop.permute.xlu0 %2892
      %2896 = vset.pattern.permute.xlu0 0
      %2897 = vperm.xlu0 %2896, %v2811
      %v2898 = vpop.permute.xlu0 %2897
      %2901 = vset.pattern.permute.xlu0 0
      %2902 = vperm.xlu0 %2901, %v2812
      %v2903 = vpop.permute.xlu0 %2902
      %2906 = vset.pattern.permute.xlu0 0
      %2907 = vperm.xlu0 %2906, %v2813
      %v2908 = vpop.permute.xlu0 %2907
      %2911 = vset.pattern.permute.xlu0 0
      %2912 = vperm.xlu0 %2911, %v2814
      %v2913 = vpop.permute.xlu0 %2912
      %2916 = vset.pattern.permute.xlu0 0
      %2917 = vperm.xlu0 %2916, %v2815
      %v2918 = vpop.permute.xlu0 %2917
      %2921 = vset.pattern.permute.xlu0 0
      %2922 = vperm.xlu0 %2921, %v2816
      %v2923 = vpop.permute.xlu0 %2922
      %2926 = vset.pattern.permute.xlu0 0
      %2927 = vperm.xlu0 %2926, %v2817
      %v2928 = vpop.permute.xlu0 %2927
      %2931 = vset.pattern.permute.xlu0 0
      %2932 = vperm.xlu0 %2931, %v2818
      %v2933 = vpop.permute.xlu0 %2932
      %2936 = vset.pattern.permute.xlu0 0
      %2937 = vperm.xlu0 %2936, %v2819
      %v2938 = vpop.permute.xlu0 %2937
      %2941 = vset.pattern.permute.xlu0 0
      %2942 = vperm.xlu0 %2941, %v2820
      %v2943 = vpop.permute.xlu0 %2942
      %2946 = vset.pattern.permute.xlu0 0
      %2947 = vperm.xlu0 %2946, %v2821
      %v2948 = vpop.permute.xlu0 %2947
      %2951 = vset.pattern.permute.xlu0 0
      %2952 = vperm.xlu0 %2951, %v2822
      %v2953 = vpop.permute.xlu0 %2952
      %2956 = vset.pattern.permute.xlu0 0
      %2957 = vperm.xlu0 %2956, %v2823
      %v2958 = vpop.permute.xlu0 %2957
      %2961 = vset.pattern.permute.xlu0 0
      %2962 = vperm.xlu0 %2961, %v2824
      %v2963 = vpop.permute.xlu0 %2962
      %2966 = vset.pattern.permute.xlu0 0
      %2967 = vperm.xlu0 %2966, %v2825
      %v2968 = vpop.permute.xlu0 %2967
      %2971 = vset.pattern.permute.xlu0 0
      %2972 = vperm.xlu0 %2971, %v2826
      %v2973 = vpop.permute.xlu0 %2972
      %2976 = vset.pattern.permute.xlu0 0
      %2977 = vperm.xlu0 %2976, %v2827
      %v2978 = vpop.permute.xlu0 %2977
      %2981 = vset.pattern.permute.xlu0 0
      %2982 = vperm.xlu0 %2981, %v2828
      %v2983 = vpop.permute.xlu0 %2982
      %2986 = vset.pattern.permute.xlu0 0
      %2987 = vperm.xlu0 %2986, %v2829
      %v2988 = vpop.permute.xlu0 %2987
      %2991 = vset.pattern.permute.xlu0 0
      %2992 = vperm.xlu0 %2991, %v2830
      %v2993 = vpop.permute.xlu0 %2992
      %2996 = vset.pattern.permute.xlu0 0
      %2997 = vperm.xlu0 %2996, %v2831
      %v2998 = vpop.permute.xlu0 %2997
      %3001 = vset.pattern.permute.xlu0 0
      %3002 = vperm.xlu0 %3001, %v2832
      %v3003 = vpop.permute.xlu0 %3002
      %3006 = vset.pattern.permute.xlu0 0
      %3007 = vperm.xlu0 %3006, %v2833
      %v3008 = vpop.permute.xlu0 %3007
      %3011 = vset.pattern.permute.xlu0 0
      %3012 = vperm.xlu0 %3011, %v2834
      %v3013 = vpop.permute.xlu0 %3012
      %3016 = vset.pattern.permute.xlu0 0
      %3017 = vperm.xlu0 %3016, %v2835
      %v3018 = vpop.permute.xlu0 %3017
      %3021 = vset.pattern.permute.xlu0 0
      %3022 = vperm.xlu0 %3021, %v2836
      %v3023 = vpop.permute.xlu0 %3022
      %3026 = vset.pattern.permute.xlu0 0
      %3027 = vperm.xlu0 %3026, %v2837
      %v3028 = vpop.permute.xlu0 %3027
      %v3030 = vmul.f32 %v2873, %v2680
      %v3031 = vmul.f32 %v2878, %v2683
      %v3032 = vmul.f32 %v2883, %v2688
      %v3033 = vmul.f32 %v2888, %v2691
      %v3034 = vmul.f32 %v2893, %v2696
      %v3035 = vmul.f32 %v2898, %v2699
      %v3036 = vmul.f32 %v2903, %v2704
      %v3037 = vmul.f32 %v2908, %v2707
      %v3038 = vmul.f32 %v2913, %v2712
      %v3039 = vmul.f32 %v2918, %v2715
      %v3040 = vmul.f32 %v2923, %v2720
      %v3041 = vmul.f32 %v2928, %v2723
      %v3042 = vmul.f32 %v2933, %v2728
      %v3043 = vmul.f32 %v2938, %v2731
      %v3044 = vmul.f32 %v2943, %v2736
      %v3045 = vmul.f32 %v2948, %v2739
      %v3046 = vmul.f32 %v2953, %v2744
      %v3047 = vmul.f32 %v2958, %v2747
      %v3048 = vmul.f32 %v2963, %v2752
      %v3049 = vmul.f32 %v2968, %v2755
      %v3050 = vmul.f32 %v2973, %v2760
      %v3051 = vmul.f32 %v2978, %v2763
      %v3052 = vmul.f32 %v2983, %v2768
      %v3053 = vmul.f32 %v2988, %v2771
      %v3054 = vmul.f32 %v2993, %v2776
      %v3055 = vmul.f32 %v2998, %v2779
      %v3056 = vmul.f32 %v3003, %v2784
      %v3057 = vmul.f32 %v3008, %v2787
      %v3058 = vmul.f32 %v3013, %v2792
      %v3059 = vmul.f32 %v3018, %v2795
      %v3060 = vmul.f32 %v3023, %v2800
      %v3061 = vmul.f32 %v3028, %v2803
      %v3062 = vsel %vm2838, %v2680, %v3030
      %v3063 = vsel %vm2839, %v2683, %v3031
      %v3064 = vsel %vm2840, %v2688, %v3032
      %v3065 = vsel %vm2841, %v2691, %v3033
      %v3066 = vsel %vm2842, %v2696, %v3034
      %v3067 = vsel %vm2843, %v2699, %v3035
      %v3068 = vsel %vm2844, %v2704, %v3036
      %v3069 = vsel %vm2845, %v2707, %v3037
      %v3070 = vsel %vm2846, %v2712, %v3038
      %v3071 = vsel %vm2847, %v2715, %v3039
      %v3072 = vsel %vm2848, %v2720, %v3040
      %v3073 = vsel %vm2849, %v2723, %v3041
      %v3074 = vsel %vm2850, %v2728, %v3042
      %v3075 = vsel %vm2851, %v2731, %v3043
      %v3076 = vsel %vm2852, %v2736, %v3044
      %v3077 = vsel %vm2853, %v2739, %v3045
      %v3078 = vsel %vm2854, %v2744, %v3046
      %v3079 = vsel %vm2855, %v2747, %v3047
      %v3080 = vsel %vm2856, %v2752, %v3048
      %v3081 = vsel %vm2857, %v2755, %v3049
      %v3082 = vsel %vm2858, %v2760, %v3050
      %v3083 = vsel %vm2859, %v2763, %v3051
      %v3084 = vsel %vm2860, %v2768, %v3052
      %v3085 = vsel %vm2861, %v2771, %v3053
      %v3086 = vsel %vm2862, %v2776, %v3054
      %v3087 = vsel %vm2863, %v2779, %v3055
      %v3088 = vsel %vm2864, %v2784, %v3056
      %v3089 = vsel %vm2865, %v2787, %v3057
      %v3090 = vsel %vm2866, %v2792, %v3058
      %v3091 = vsel %vm2867, %v2795, %v3059
      %v3092 = vsel %vm2868, %v2800, %v3060
      %v3093 = vsel %vm2869, %v2803, %v3061
      %v3094 = vld [vmem:[%s27] sm:$0xff]
      %v3095 = vld [vmem:[%s27 + $0x8] sm:$0xff]
      %v3096 = vld [vmem:[%s27 + $0x10] sm:$0xff]
      %v3097 = vld [vmem:[%s27 + $0x18] sm:$0xff]
      %v3098 = vpack.c.bf16 %v3063, %v3062
      %v3099 = vpack.c.bf16 %v3065, %v3064
      %v3100 = vpack.c.bf16 %v3067, %v3066
      %v3101 = vpack.c.bf16 %v3069, %v3068
      %v3102 = vpack.c.bf16 %v3071, %v3070
      %v3103 = vpack.c.bf16 %v3073, %v3072
      %v3104 = vpack.c.bf16 %v3075, %v3074
      %v3105 = vpack.c.bf16 %v3077, %v3076
      %v3106 = vpack.c.bf16 %v3079, %v3078
      %v3107 = vpack.c.bf16 %v3081, %v3080
      %v3108 = vpack.c.bf16 %v3083, %v3082
      %v3109 = vpack.c.bf16 %v3085, %v3084
      %v3110 = vpack.c.bf16 %v3087, %v3086
      %v3111 = vpack.c.bf16 %v3089, %v3088
      %v3112 = vpack.c.bf16 %v3091, %v3090
      %v3113 = vpack.c.bf16 %v3093, %v3092
      %v3118 = vunpack.c.l.b16 %v3094
      %v3119 = vunpack.c.h.b16 %v3094
      %v3120 = vunpack.c.l.b16 %v3095
      %v3121 = vunpack.c.h.b16 %v3095
      %v3122 = vunpack.c.l.b16 %v3096
      %v3123 = vunpack.c.h.b16 %v3096
      %v3124 = vunpack.c.l.b16 %v3097
      %v3125 = vunpack.c.h.b16 %v3097
      %v3126 = vpack.c.b16 %v3120, %v3118
      %v3127 = vpack.c.b16 %v3121, %v3119
      %v3128 = vpack.c.b16 %v3124, %v3122
      %v3129 = vpack.c.b16 %v3125, %v3123
      %3134 = vmatprep.subr.bf16.mxu0 0
      %3135 = vmatpush1.bf16.msra.mxu0 %v3098
      %3136 = vmatprep.subr.bf16.mxu0 0
      %3137 = vmatpush1.bf16.msra.mxu0 %v3099
      %3138 = vmatprep.subr.bf16.mxu0 0
      %3139 = vmatpush1.bf16.msra.mxu0 %v3100
      %3140 = vmatprep.subr.bf16.mxu0 0
      %3141 = vmatpush1.bf16.msra.mxu0 %v3101
      %3142 = vmatprep.subr.bf16.mxu0 0
      %3143 = vmatpush1.bf16.msra.mxu0 %v3102
      %3144 = vmatprep.subr.bf16.mxu0 0
      %3145 = vmatpush1.bf16.msra.mxu0 %v3103
      %3146 = vmatprep.subr.bf16.mxu0 0
      %3147 = vmatpush1.bf16.msra.mxu0 %v3104
      %3148 = vmatprep.subr.bf16.mxu0 0
      %3149 = vmatpush1.bf16.msra.mxu0 %v3105
      %3150 = vmatprep.subr.bf16.mxu0 0
      %3151 = vmatpush1.bf16.msra.mxu0 %v3106
      %3152 = vmatprep.subr.bf16.mxu0 0
      %3153 = vmatpush1.bf16.msra.mxu0 %v3107
      %3154 = vmatprep.subr.bf16.mxu0 0
      %3155 = vmatpush1.bf16.msra.mxu0 %v3108
      %3156 = vmatprep.subr.bf16.mxu0 0
      %3157 = vmatpush1.bf16.msra.mxu0 %v3109
      %3158 = vmatprep.subr.bf16.mxu0 0
      %3159 = vmatpush1.bf16.msra.mxu0 %v3110
      %3160 = vmatprep.subr.bf16.mxu0 0
      %3161 = vmatpush1.bf16.msra.mxu0 %v3111
      %3162 = vmatprep.subr.bf16.mxu0 0
      %3163 = vmatpush1.bf16.msra.mxu0 %v3112
      %3164 = vmatprep.subr.bf16.mxu0 0
      %3165 = vmatpush1.bf16.msra.mxu0 %v3113
      %3166 = vmatprep.mubr.bf16.mxu0 %v3127
      %3167 = vmatmul.mubr.bf16.gmra.mrb[0].mxu0 %v3126
      %v3168 = vpop.f32.mrb[0].mxu0
      %v3169 = vadd.f32 0.0, %v3168
      %v3170 = vpop.f32.mrb[0].mxu0
      %v3171 = vpop.f32.mrb[0].mxu0
      %v3172 = vadd.f32 0.0, %v3171
      %v3173 = vpop.f32.mrb[0].mxu0
      %3174 = vmatprep.mubr.bf16.mxu0 %v3129
      %3175 = vmatmul.mubr.bf16.gmra.mrb[0].mxu0 %v3128
      %v3176 = vpop.f32.mrb[0].mxu0
      %v3177 = vadd.f32 0.0, %v3176
      %v3178 = vpop.f32.mrb[0].mxu0
      %v3179 = vpop.f32.mrb[0].mxu0
      %v3180 = vadd.f32 0.0, %v3179
      %v3181 = vpop.f32.mrb[0].mxu0
      %3182 = vdwg.mxu0
      %v3183 = vpack.c.bf16 %v3172, %v3169
      %v3184 = vpack.c.bf16 %v3180, %v3177
      %v3185 = vld [vmem:[%s41] sm:$0xf]
      %v3186 = vld [vmem:[%s41 + $0x4] sm:$0xf]
      %v3189 = vunpack.c.l.b16 %v3185
      %v3190 = vunpack.c.l.b16 %v3186
      %v3191 = vpack.c.b16 %v3190, %v3189
      %vm3193 = vcmask 130048
      %v3195 = vsel %vm3193, %v3183, 0
      %v3198 = vsel %vm3193, %v3184, 0
      %3200 = vmatprep.subr.bf16.mxu0 0
      %3201 = vmatpush1.bf16.msra.mxu0 %v3191
      %3202 = vmatprep.subr.bf16.mxu0 0
      %3203 = vmatpush1.bf16.msra.mxu0 0
      %3204 = vmatprep.subr.bf16.mxu0 0
      %3205 = vmatpush1.bf16.msra.mxu0 0
      %3206 = vmatprep.subr.bf16.mxu0 0
      %3207 = vmatpush1.bf16.msra.mxu0 0
      %3208 = vmatprep.subr.bf16.mxu0 0
      %3209 = vmatpush1.bf16.msra.mxu0 0
      %3210 = vmatprep.subr.bf16.mxu0 0
      %3211 = vmatpush1.bf16.msra.mxu0 0
      %3212 = vmatprep.subr.bf16.mxu0 0
      %3213 = vmatpush1.bf16.msra.mxu0 0
      %3214 = vmatprep.subr.bf16.mxu0 0
      %3215 = vmatpush1.bf16.msra.mxu0 0
      %3216 = vmatprep.subr.bf16.mxu0 0
      %3217 = vmatpush1.bf16.msra.mxu0 0
      %3218 = vmatprep.subr.bf16.mxu0 0
      %3219 = vmatpush1.bf16.msra.mxu0 0
      %3220 = vmatprep.subr.bf16.mxu0 0
      %3221 = vmatpush1.bf16.msra.mxu0 0
      %3222 = vmatprep.subr.bf16.mxu0 0
      %3223 = vmatpush1.bf16.msra.mxu0 0
      %3224 = vmatprep.subr.bf16.mxu0 0
      %3225 = vmatpush1.bf16.msra.mxu0 0
      %3226 = vmatprep.subr.bf16.mxu0 0
      %3227 = vmatpush1.bf16.msra.mxu0 0
      %3228 = vmatprep.subr.bf16.mxu0 0
      %3229 = vmatpush1.bf16.msra.mxu0 0
      %3230 = vmatprep.subr.bf16.mxu0 0
      %3231 = vmatpush1.bf16.msra.mxu0 0
      %3232 = vmatprep.mubr.bf16.mxu0 0
      %3233 = vmatmul.mubr.bf16.gmra.mrb[0].mxu0 %v3195
      %v3234 = vpop.f32.mrb[0].mxu0
      %v3235 = vadd.f32 0.0, %v3234
      %v3236 = vpop.f32.mrb[0].mxu0
      %v3237 = vpop.f32.mrb[0].mxu0
      %v3238 = vadd.f32 0.0, %v3237
      %v3239 = vpop.f32.mrb[0].mxu0
      %3240 = vmatprep.mubr.bf16.mxu0 0
      %3241 = vmatmul.mubr.bf16.gmra.mrb[0].mxu0 %v3198
      %v3242 = vpop.f32.mrb[0].mxu0
      %v3243 = vadd.f32 0.0, %v3242
      %v3244 = vpop.f32.mrb[0].mxu0
      %v3245 = vpop.f32.mrb[0].mxu0
      %v3246 = vadd.f32 0.0, %v3245
      %v3247 = vpop.f32.mrb[0].mxu0
      %3248 = vdwg.mxu0
      %v3249 = vld [vmem:[%s25] sm:$0xf]
      %v3250 = vld [vmem:[%s25 + $0x4] sm:$0xf]
      %v3251 = vld [vmem:[%s25 + $0x8] sm:$0xf]
      %v3252 = vld [vmem:[%s25 + $0xc] sm:$0xf]
      %v3253 = vld [vmem:[%s1064] sm:$0xf]
      %v3254 = vld [vmem:[%s1064 + $0x4] sm:$0xf]
      %v3255 = vld [vmem:[%s1064 + $0x8] sm:$0xf]
      %v3256 = vld [vmem:[%s1064 + $0xc] sm:$0xf]
      %v3261 = vunpack.c.l.b16 %v3249
      %v3262 = vunpack.c.l.b16 %v3250
      %v3263 = vunpack.c.l.b16 %v3251
      %v3264 = vunpack.c.l.b16 %v3252
      %v3265 = vpack.c.b16 %v3262, %v3261
      %v3266 = vpack.c.b16 %v3264, %v3263
      %v3271 = vunpack.c.l.b16 %v3253
      %v3272 = vunpack.c.l.b16 %v3254
      %v3273 = vunpack.c.l.b16 %v3255
      %v3274 = vunpack.c.l.b16 %v3256
      %v3275 = vpack.c.b16 %v3272, %v3271
      %v3276 = vpack.c.b16 %v3274, %v3273
      %v3280 = vsel %vm1125, %v3265, 0
      %v3283 = vsel %vm1125, %v3266, 0
      %3285 = vmatprep.subr.bf16.mxu0 0
      %3286 = vmatpush1.bf16.msra.mxu0 %v3275
      %3287 = vmatprep.subr.bf16.mxu0 0
      %3288 = vmatpush1.bf16.msra.mxu0 %v3276
      %3289 = vmatprep.subr.bf16.mxu0 0
      %3290 = vmatpush1.bf16.msra.mxu0 0
      %3291 = vmatprep.subr.bf16.mxu0 0
      %3292 = vmatpush1.bf16.msra.mxu0 0
      %3293 = vmatprep.subr.bf16.mxu0 0
      %3294 = vmatpush1.bf16.msra.mxu0 0
      %3295 = vmatprep.subr.bf16.mxu0 0
      %3296 = vmatpush1.bf16.msra.mxu0 0
      %3297 = vmatprep.subr.bf16.mxu0 0
      %3298 = vmatpush1.bf16.msra.mxu0 0
      %3299 = vmatprep.subr.bf16.mxu0 0
      %3300 = vmatpush1.bf16.msra.mxu0 0
      %3301 = vmatprep.subr.bf16.mxu0 0
      %3302 = vmatpush1.bf16.msra.mxu0 0
      %3303 = vmatprep.subr.bf16.mxu0 0
      %3304 = vmatpush1.bf16.msra.mxu0 0
      %3305 = vmatprep.subr.bf16.mxu0 0
      %3306 = vmatpush1.bf16.msra.mxu0 0
      %3307 = vmatprep.subr.bf16.mxu0 0
      %3308 = vmatpush1.bf16.msra.mxu0 0
      %3309 = vmatprep.subr.bf16.mxu0 0
      %3310 = vmatpush1.bf16.msra.mxu0 0
      %3311 = vmatprep.subr.bf16.mxu0 0
      %3312 = vmatpush1.bf16.msra.mxu0 0
      %3313 = vmatprep.subr.bf16.mxu0 0
      %3314 = vmatpush1.bf16.msra.mxu0 0
      %3315 = vmatprep.subr.bf16.mxu0 0
      %3316 = vmatpush1.bf16.msra.mxu0 0
      %3317 = vmatprep.mubr.bf16.mxu0 0
      %3318 = vmatmul.mubr.bf16.gmra.mrb[0].mxu0 %v3280
      %v3319 = vpop.f32.mrb[0].mxu0
      %v3320 = vadd.f32 %v3235, %v3319
      %v3321 = vpop.f32.mrb[0].mxu0
      %v3322 = vpop.f32.mrb[0].mxu0
      %v3323 = vadd.f32 %v3238, %v3322
      %v3324 = vpop.f32.mrb[0].mxu0
      %3325 = vmatprep.mubr.bf16.mxu0 0
      %3326 = vmatmul.mubr.bf16.gmra.mrb[0].mxu0 %v3283
      %v3327 = vpop.f32.mrb[0].mxu0
      %v3328 = vadd.f32 %v3243, %v3327
      %v3329 = vpop.f32.mrb[0].mxu0
      %v3330 = vpop.f32.mrb[0].mxu0
      %v3331 = vadd.f32 %v3246, %v3330
      %v3332 = vpop.f32.mrb[0].mxu0
      %3333 = vdwg.mxu0
      %v3334 = vld [vmem:[%s29] sm:$0xff]
      %v3335 = vld [vmem:[%s29 + $0x8] sm:$0xff]
      %v3336 = vld [vmem:[%s29 + $0x10] sm:$0xff]
      %v3337 = vld [vmem:[%s29 + $0x18] sm:$0xff]
      %3339 = vset.pattern.permute.xlu0 0
      %3340 = vperm.xlu0 %3339, %v3334
      %v3341 = vpop.permute.xlu0 %3340
      %3344 = vset.pattern.permute.xlu0 0
      %3345 = vperm.xlu0 %3344, %v3335
      %v3346 = vpop.permute.xlu0 %3345
      %3349 = vset.pattern.permute.xlu0 0
      %3350 = vperm.xlu0 %3349, %v3336
      %v3351 = vpop.permute.xlu0 %3350
      %3354 = vset.pattern.permute.xlu0 0
      %3355 = vperm.xlu0 %3354, %v3337
      %v3356 = vpop.permute.xlu0 %3355
      %v3358 = vadd.f32 %v3320, %v3341
      %v3359 = vadd.f32 %v3323, %v3346
      %v3360 = vadd.f32 %v3328, %v3351
      %v3361 = vadd.f32 %v3331, %v3356
      %v3362 = vld [vmem:[%s31] sm:$0xff]
      %v3363 = vld [vmem:[%s31 + $0x8] sm:$0xff]
      %v3364 = vld [vmem:[%s31 + $0x10] sm:$0xff]
      %v3365 = vld [vmem:[%s31 + $0x18] sm:$0xff]
      %vm3366 = vcmp.gt.f32.partialorder %v3358, 0.0
      %vm3367 = vcmp.gt.f32.partialorder %v3359, 0.0
      %vm3368 = vcmp.gt.f32.partialorder %v3360, 0.0
      %vm3369 = vcmp.gt.f32.partialorder %v3361, 0.0
      %3371 = vset.pattern.permute.xlu0 0
      %3372 = vperm.xlu0 %3371, %v3362
      %v3373 = vpop.permute.xlu0 %3372
      %3376 = vset.pattern.permute.xlu0 0
      %3377 = vperm.xlu0 %3376, %v3363
      %v3378 = vpop.permute.xlu0 %3377
      %3381 = vset.pattern.permute.xlu0 0
      %3382 = vperm.xlu0 %3381, %v3364
      %v3383 = vpop.permute.xlu0 %3382
      %3386 = vset.pattern.permute.xlu0 0
      %3387 = vperm.xlu0 %3386, %v3365
      %v3388 = vpop.permute.xlu0 %3387
      %v3390 = vmul.f32 %v3373, %v3358
      %v3391 = vmul.f32 %v3378, %v3359
      %v3392 = vmul.f32 %v3383, %v3360
      %v3393 = vmul.f32 %v3388, %v3361
      %v3394 = vsel %vm3366, %v3358, %v3390
      %v3395 = vsel %vm3367, %v3359, %v3391
      %v3396 = vsel %vm3368, %v3360, %v3392
      %v3397 = vsel %vm3369, %v3361, %v3393
      %3402 = vrot.lane.b32.xlu0 %v3394, 73
      %v3403 = vpop.permute.xlu0 %3402
      %3404 = vrot.lane.b32.xlu0 %v3395, 73
      %v3405 = vpop.permute.xlu0 %3404
      %3406 = vrot.lane.b32.xlu0 %v3396, 73
      %v3407 = vpop.permute.xlu0 %3406
      %3408 = vrot.lane.b32.xlu0 %v3397, 73
      %v3409 = vpop.permute.xlu0 %3408
      %3414 = vrot.lane.b32.xlu0 %v3394, 9
      %v3415 = vpop.permute.xlu0 %3414
      %3416 = vrot.lane.b32.xlu0 %v3395, 9
      %v3417 = vpop.permute.xlu0 %3416
      %3418 = vrot.lane.b32.xlu0 %v3396, 9
      %v3419 = vpop.permute.xlu0 %3418
      %3420 = vrot.lane.b32.xlu0 %v3397, 9
      %v3421 = vpop.permute.xlu0 %3420
      %vm3426 = vcmask 72704
      %v3427 = vsel %vm3426, %v3403, %v3415
      %v3428 = vsel %vm3426, %v3405, %v3417
      %v3429 = vsel %vm3426, %v3407, %v3419
      %v3430 = vsel %vm3426, %v3409, %v3421
      %v3431 = vld [vmem:[%s39] sm:$0x1]
      %v3433 = vlaneseq
      %v3434 = vshrl.u32 %v3433, 7
      %v3435 = vsub.s32 0, %v3434
      %v3436 = vrot.slane %v3431, %v3435
      %v3438 = vmul.f32 %v3427, %v3436
      %v3439 = vmul.f32 %v3428, %v3436
      %v3440 = vmul.f32 %v3429, %v3436
      %v3441 = vmul.f32 %v3430, %v3436
      %3442 = vrot.lane.b32.xlu0 %v3394, 72
      %v3443 = vpop.permute.xlu0 %3442
      %3444 = vrot.lane.b32.xlu0 %v3395, 72
      %v3445 = vpop.permute.xlu0 %3444
      %3446 = vrot.lane.b32.xlu0 %v3396, 72
      %v3447 = vpop.permute.xlu0 %3446
      %3448 = vrot.lane.b32.xlu0 %v3397, 72
      %v3449 = vpop.permute.xlu0 %3448
      %3454 = vrot.lane.b32.xlu0 %v3394, 8
      %v3455 = vpop.permute.xlu0 %3454
      %3456 = vrot.lane.b32.xlu0 %v3395, 8
      %v3457 = vpop.permute.xlu0 %3456
      %3458 = vrot.lane.b32.xlu0 %v3396, 8
      %v3459 = vpop.permute.xlu0 %3458
      %3460 = vrot.lane.b32.xlu0 %v3397, 8
      %v3461 = vpop.permute.xlu0 %3460
      %vm3466 = vcmask 64512
      %v3467 = vsel %vm3466, %v3443, %v3455
      %v3468 = vsel %vm3466, %v3445, %v3457
      %v3469 = vsel %vm3466, %v3447, %v3459
      %v3470 = vsel %vm3466, %v3449, %v3461
      %s3471 = scalar_lea.vmem %s39, 1
      %v3472 = vld [vmem:[%s3471] sm:$0x1]
      %v3474 = vlaneseq
      %v3475 = vshrl.u32 %v3474, 7
      %v3476 = vsub.s32 0, %v3475
      %v3477 = vrot.slane %v3472, %v3476
      %v3479 = vmul.f32 %v3467, %v3477
      %v3480 = vmul.f32 %v3468, %v3477
      %v3481 = vmul.f32 %v3469, %v3477
      %v3482 = vmul.f32 %v3470, %v3477
      %3483 = vrot.lane.b32.xlu0 %v3394, 71
      %v3484 = vpop.permute.xlu0 %3483
      %3485 = vrot.lane.b32.xlu0 %v3395, 71
      %v3486 = vpop.permute.xlu0 %3485
      %3487 = vrot.lane.b32.xlu0 %v3396, 71
      %v3488 = vpop.permute.xlu0 %3487
      %3489 = vrot.lane.b32.xlu0 %v3397, 71
      %v3490 = vpop.permute.xlu0 %3489
      %3495 = vrot.lane.b32.xlu0 %v3394, 7
      %v3496 = vpop.permute.xlu0 %3495
      %3497 = vrot.lane.b32.xlu0 %v3395, 7
      %v3498 = vpop.permute.xlu0 %3497
      %3499 = vrot.lane.b32.xlu0 %v3396, 7
      %v3500 = vpop.permute.xlu0 %3499
      %3501 = vrot.lane.b32.xlu0 %v3397, 7
      %v3502 = vpop.permute.xlu0 %3501
      %vm3507 = vcmask 56320
      %v3508 = vsel %vm3507, %v3484, %v3496
      %v3509 = vsel %vm3507, %v3486, %v3498
      %v3510 = vsel %vm3507, %v3488, %v3500
      %v3511 = vsel %vm3507, %v3490, %v3502
      %s3512 = scalar_lea.vmem %s39, 2
      %v3513 = vld [vmem:[%s3512] sm:$0x1]
      %v3515 = vlaneseq
      %v3516 = vshrl.u32 %v3515, 7
      %v3517 = vsub.s32 0, %v3516
      %v3518 = vrot.slane %v3513, %v3517
      %v3520 = vmul.f32 %v3508, %v3518
      %v3521 = vmul.f32 %v3509, %v3518
      %v3522 = vmul.f32 %v3510, %v3518
      %v3523 = vmul.f32 %v3511, %v3518
      %3524 = vrot.lane.b32.xlu0 %v3394, 65
      %v3525 = vpop.permute.xlu0 %3524
      %3526 = vrot.lane.b32.xlu0 %v3395, 65
      %v3527 = vpop.permute.xlu0 %3526
      %3528 = vrot.lane.b32.xlu0 %v3396, 65
      %v3529 = vpop.permute.xlu0 %3528
      %3530 = vrot.lane.b32.xlu0 %v3397, 65
      %v3531 = vpop.permute.xlu0 %3530
      %3536 = vrot.lane.b32.xlu0 %v3394, 1
      %v3537 = vpop.permute.xlu0 %3536
      %3538 = vrot.lane.b32.xlu0 %v3395, 1
      %v3539 = vpop.permute.xlu0 %3538
      %3540 = vrot.lane.b32.xlu0 %v3396, 1
      %v3541 = vpop.permute.xlu0 %3540
      %3542 = vrot.lane.b32.xlu0 %v3397, 1
      %v3543 = vpop.permute.xlu0 %3542
      %v3548 = vsel %vm1600, %v3525, %v3537
      %v3549 = vsel %vm1600, %v3527, %v3539
      %v3550 = vsel %vm1600, %v3529, %v3541
      %v3551 = vsel %vm1600, %v3531, %v3543
      %s3552 = scalar_lea.vmem %s39, 3
      %v3553 = vld [vmem:[%s3552] sm:$0x1]
      %v3555 = vlaneseq
      %v3556 = vshrl.u32 %v3555, 7
      %v3557 = vsub.s32 0, %v3556
      %v3558 = vrot.slane %v3553, %v3557
      %v3560 = vmul.f32 %v3548, %v3558
      %v3561 = vmul.f32 %v3549, %v3558
      %v3562 = vmul.f32 %v3550, %v3558
      %v3563 = vmul.f32 %v3551, %v3558
      %3564 = vrot.lane.b32.xlu0 %v3394, 127
      %v3565 = vpop.permute.xlu0 %3564
      %3566 = vrot.lane.b32.xlu0 %v3395, 127
      %v3567 = vpop.permute.xlu0 %3566
      %3568 = vrot.lane.b32.xlu0 %v3396, 127
      %v3569 = vpop.permute.xlu0 %3568
      %3570 = vrot.lane.b32.xlu0 %v3397, 127
      %v3571 = vpop.permute.xlu0 %3570
      %3576 = vrot.lane.b32.xlu0 %v3394, 63
      %v3577 = vpop.permute.xlu0 %3576
      %3578 = vrot.lane.b32.xlu0 %v3395, 63
      %v3579 = vpop.permute.xlu0 %3578
      %3580 = vrot.lane.b32.xlu0 %v3396, 63
      %v3581 = vpop.permute.xlu0 %3580
      %3582 = vrot.lane.b32.xlu0 %v3397, 63
      %v3583 = vpop.permute.xlu0 %3582
      %vm3588 = vcmask 515072
      %v3589 = vsel %vm3588, %v3565, %v3577
      %v3590 = vsel %vm3588, %v3567, %v3579
      %v3591 = vsel %vm3588, %v3569, %v3581
      %v3592 = vsel %vm3588, %v3571, %v3583
      %s3593 = scalar_lea.vmem %s39, 5
      %v3594 = vld [vmem:[%s3593] sm:$0x1]
      %v3596 = vlaneseq
      %v3597 = vshrl.u32 %v3596, 7
      %v3598 = vsub.s32 0, %v3597
      %v3599 = vrot.slane %v3594, %v3598
      %v3601 = vmul.f32 %v3589, %v3599
      %v3602 = vmul.f32 %v3590, %v3599
      %v3603 = vmul.f32 %v3591, %v3599
      %v3604 = vmul.f32 %v3592, %v3599
      %3605 = vrot.lane.b32.xlu0 %v3394, 121
      %v3606 = vpop.permute.xlu0 %3605
      %3607 = vrot.lane.b32.xlu0 %v3395, 121
      %v3608 = vpop.permute.xlu0 %3607
      %3609 = vrot.lane.b32.xlu0 %v3396, 121
      %v3610 = vpop.permute.xlu0 %3609
      %3611 = vrot.lane.b32.xlu0 %v3397, 121
      %v3612 = vpop.permute.xlu0 %3611
      %3617 = vrot.lane.b32.xlu0 %v3394, 57
      %v3618 = vpop.permute.xlu0 %3617
      %3619 = vrot.lane.b32.xlu0 %v3395, 57
      %v3620 = vpop.permute.xlu0 %3619
      %3621 = vrot.lane.b32.xlu0 %v3396, 57
      %v3622 = vpop.permute.xlu0 %3621
      %3623 = vrot.lane.b32.xlu0 %v3397, 57
      %v3624 = vpop.permute.xlu0 %3623
      %vm3629 = vcmask 465920
      %v3630 = vsel %vm3629, %v3606, %v3618
      %v3631 = vsel %vm3629, %v3608, %v3620
      %v3632 = vsel %vm3629, %v3610, %v3622
      %v3633 = vsel %vm3629, %v3612, %v3624
      %s3634 = scalar_lea.vmem %s39, 6
      %v3635 = vld [vmem:[%s3634] sm:$0x1]
      %v3637 = vlaneseq
      %v3638 = vshrl.u32 %v3637, 7
      %v3639 = vsub.s32 0, %v3638
      %v3640 = vrot.slane %v3635, %v3639
      %v3642 = vmul.f32 %v3630, %v3640
      %v3643 = vmul.f32 %v3631, %v3640
      %v3644 = vmul.f32 %v3632, %v3640
      %v3645 = vmul.f32 %v3633, %v3640
      %3646 = vrot.lane.b32.xlu0 %v3394, 120
      %v3647 = vpop.permute.xlu0 %3646
      %3648 = vrot.lane.b32.xlu0 %v3395, 120
      %v3649 = vpop.permute.xlu0 %3648
      %3650 = vrot.lane.b32.xlu0 %v3396, 120
      %v3651 = vpop.permute.xlu0 %3650
      %3652 = vrot.lane.b32.xlu0 %v3397, 120
      %v3653 = vpop.permute.xlu0 %3652
      %3658 = vrot.lane.b32.xlu0 %v3394, 56
      %v3659 = vpop.permute.xlu0 %3658
      %3660 = vrot.lane.b32.xlu0 %v3395, 56
      %v3661 = vpop.permute.xlu0 %3660
      %3662 = vrot.lane.b32.xlu0 %v3396, 56
      %v3663 = vpop.permute.xlu0 %3662
      %3664 = vrot.lane.b32.xlu0 %v3397, 56
      %v3665 = vpop.permute.xlu0 %3664
      %vm3670 = vcmask 457728
      %v3671 = vsel %vm3670, %v3647, %v3659
      %v3672 = vsel %vm3670, %v3649, %v3661
      %v3673 = vsel %vm3670, %v3651, %v3663
      %v3674 = vsel %vm3670, %v3653, %v3665
      %s3675 = scalar_lea.vmem %s39, 7
      %v3676 = vld [vmem:[%s3675] sm:$0x1]
      %v3678 = vlaneseq
      %v3679 = vshrl.u32 %v3678, 7
      %v3680 = vsub.s32 0, %v3679
      %v3681 = vrot.slane %v3676, %v3680
      %v3683 = vmul.f32 %v3671, %v3681
      %v3684 = vmul.f32 %v3672, %v3681
      %v3685 = vmul.f32 %v3673, %v3681
      %v3686 = vmul.f32 %v3674, %v3681
      %3687 = vrot.lane.b32.xlu0 %v3394, 119
      %v3688 = vpop.permute.xlu0 %3687
      %3689 = vrot.lane.b32.xlu0 %v3395, 119
      %v3690 = vpop.permute.xlu0 %3689
      %3691 = vrot.lane.b32.xlu0 %v3396, 119
      %v3692 = vpop.permute.xlu0 %3691
      %3693 = vrot.lane.b32.xlu0 %v3397, 119
      %v3694 = vpop.permute.xlu0 %3693
      %3699 = vrot.lane.b32.xlu0 %v3394, 55
      %v3700 = vpop.permute.xlu0 %3699
      %3701 = vrot.lane.b32.xlu0 %v3395, 55
      %v3702 = vpop.permute.xlu0 %3701
      %3703 = vrot.lane.b32.xlu0 %v3396, 55
      %v3704 = vpop.permute.xlu0 %3703
      %3705 = vrot.lane.b32.xlu0 %v3397, 55
      %v3706 = vpop.permute.xlu0 %3705
      %vm3711 = vcmask 449536
      %v3712 = vsel %vm3711, %v3688, %v3700
      %v3713 = vsel %vm3711, %v3690, %v3702
      %v3714 = vsel %vm3711, %v3692, %v3704
      %v3715 = vsel %vm3711, %v3694, %v3706
      %s3716 = scalar_lea.vmem %s39, 8
      %v3717 = vld [vmem:[%s3716] sm:$0x1]
      %v3719 = vlaneseq
      %v3720 = vshrl.u32 %v3719, 7
      %v3721 = vsub.s32 0, %v3720
      %v3722 = vrot.slane %v3717, %v3721
      %v3724 = vmul.f32 %v3712, %v3722
      %v3725 = vmul.f32 %v3713, %v3722
      %v3726 = vmul.f32 %v3714, %v3722
      %v3727 = vmul.f32 %v3715, %v3722
      %v3728 = vpack.c.bf16 %v3439, %v3438
      %v3729 = vpack.c.bf16 %v3441, %v3440
      %v3730 = vpack.c.bf16 %v3480, %v3479
      %v3731 = vpack.c.bf16 %v3482, %v3481
      %v3732 = vpack.c.bf16 %v3521, %v3520
      %v3733 = vpack.c.bf16 %v3523, %v3522
      %v3734 = vpack.c.bf16 %v3561, %v3560
      %v3735 = vpack.c.bf16 %v3563, %v3562
      %v3736 = vpack.c.bf16 %v3395, %v3394
      %v3737 = vpack.c.bf16 %v3397, %v3396
      %v3738 = vpack.c.bf16 %v3602, %v3601
      %v3739 = vpack.c.bf16 %v3604, %v3603
      %v3740 = vpack.c.bf16 %v3643, %v3642
      %v3741 = vpack.c.bf16 %v3645, %v3644
      %v3742 = vpack.c.bf16 %v3684, %v3683
      %v3743 = vpack.c.bf16 %v3686, %v3685
      %v3744 = vpack.c.bf16 %v3725, %v3724
      %v3745 = vpack.c.bf16 %v3727, %v3726
      %v3746 = vld [vmem:[%s33] sm:$0xff]
      %v3747 = vld [vmem:[%s33 + $0x8] sm:$0xf]
      %v3748 = vld [vmem:[%s33 + $0xc] sm:$0xff]
      %v3749 = vld [vmem:[%s33 + $0x14] sm:$0xf]
      %v3750 = vld [vmem:[%s33 + $0x18] sm:$0xff]
      %v3751 = vld [vmem:[%s33 + $0x20] sm:$0xf]
      %v3752 = vld [vmem:[%s33 + $0x24] sm:$0xff]
      %v3753 = vld [vmem:[%s33 + $0x2c] sm:$0xf]
      %v3754 = vld [vmem:[%s33 + $0x30] sm:$0xff]
      %v3755 = vld [vmem:[%s33 + $0x38] sm:$0xf]
      %v3756 = vld [vmem:[%s33 + $0x3c] sm:$0xff]
      %v3757 = vld [vmem:[%s33 + $0x44] sm:$0xf]
      %v3758 = vld [vmem:[%s33 + $0x48] sm:$0xff]
      %v3759 = vld [vmem:[%s33 + $0x50] sm:$0xf]
      %v3760 = vld [vmem:[%s33 + $0x54] sm:$0xff]
      %v3761 = vld [vmem:[%s33 + $0x5c] sm:$0xf]
      %v3762 = vld [vmem:[%s33 + $0x60] sm:$0xff]
      %v3763 = vld [vmem:[%s33 + $0x68] sm:$0xf]
      %v3764 = vld [vmem:[%s33 + $0x6c] sm:$0xff]
      %v3765 = vld [vmem:[%s33 + $0x74] sm:$0xf]
      %v3766 = vld [vmem:[%s33 + $0x78] sm:$0xff]
      %v3767 = vld [vmem:[%s33 + $0x80] sm:$0xf]
      %v3768 = vld [vmem:[%s33 + $0x84] sm:$0xff]
      %v3769 = vld [vmem:[%s33 + $0x8c] sm:$0xf]
      %v3770 = vld [vmem:[%s33 + $0x90] sm:$0xff]
      %v3771 = vld [vmem:[%s33 + $0x98] sm:$0xf]
      %v3772 = vld [vmem:[%s33 + $0x9c] sm:$0xff]
      %v3773 = vld [vmem:[%s33 + $0xa4] sm:$0xf]
      %v3774 = vld [vmem:[%s33 + $0xa8] sm:$0xff]
      %v3775 = vld [vmem:[%s33 + $0xb0] sm:$0xf]
      %v3776 = vld [vmem:[%s33 + $0xb4] sm:$0xff]
      %v3777 = vld [vmem:[%s33 + $0xbc] sm:$0xf]
      %v3778 = vld [vmem:[%s33 + $0xc0] sm:$0xff]
      %v3779 = vld [vmem:[%s33 + $0xc8] sm:$0xf]
      %v3780 = vld [vmem:[%s33 + $0xcc] sm:$0xff]
      %v3781 = vld [vmem:[%s33 + $0xd4] sm:$0xf]
      %v3782 = vld [vmem:[%s33 + $0xd8] sm:$0xff]
      %v3783 = vld [vmem:[%s33 + $0xe0] sm:$0xf]
      %v3784 = vld [vmem:[%s33 + $0xe4] sm:$0xff]
      %v3785 = vld [vmem:[%s33 + $0xec] sm:$0xf]
      %v3786 = vld [vmem:[%s33 + $0xf0] sm:$0xff]
      %v3787 = vld [vmem:[%s33 + $0xf8] sm:$0xf]
      %v3788 = vld [vmem:[%s33 + $0xfc] sm:$0xff]
      %v3789 = vld [vmem:[%s33 + $0x104] sm:$0xf]
      %v3790 = vld [vmem:[%s33 + $0x108] sm:$0xff]
      %v3791 = vld [vmem:[%s33 + $0x110] sm:$0xf]
      %v3792 = vld [vmem:[%s33 + $0x114] sm:$0xff]
      %v3793 = vld [vmem:[%s33 + $0x11c] sm:$0xf]
      %v3794 = vld [vmem:[%s33 + $0x120] sm:$0xff]
      %v3795 = vld [vmem:[%s33 + $0x128] sm:$0xf]
      %v3796 = vld [vmem:[%s33 + $0x12c] sm:$0xff]
      %v3797 = vld [vmem:[%s33 + $0x134] sm:$0xf]
      %v3798 = vld [vmem:[%s33 + $0x138] sm:$0xff]
      %v3799 = vld [vmem:[%s33 + $0x140] sm:$0xf]
      %v3800 = vld [vmem:[%s33 + $0x144] sm:$0xff]
      %v3801 = vld [vmem:[%s33 + $0x14c] sm:$0xf]
      %v3802 = vld [vmem:[%s33 + $0x150] sm:$0xff]
      %v3803 = vld [vmem:[%s33 + $0x158] sm:$0xf]
      %v3804 = vld [vmem:[%s33 + $0x15c] sm:$0xff]
      %v3805 = vld [vmem:[%s33 + $0x164] sm:$0xf]
      %v3806 = vld [vmem:[%s33 + $0x168] sm:$0xff]
      %v3807 = vld [vmem:[%s33 + $0x170] sm:$0xf]
      %v3808 = vld [vmem:[%s33 + $0x174] sm:$0xff]
      %v3809 = vld [vmem:[%s33 + $0x17c] sm:$0xf]
      %v3810 = vld [vmem:[%s35] sm:$0xff]
      %v3811 = vld [vmem:[%s35 + $0x8] sm:$0xff]
      %v3812 = vld [vmem:[%s35 + $0x10] sm:$0xff]
      %v3813 = vld [vmem:[%s35 + $0x18] sm:$0xff]
      %v3814 = vld [vmem:[%s35 + $0x20] sm:$0xff]
      %v3815 = vld [vmem:[%s35 + $0x28] sm:$0xff]
      %v3816 = vld [vmem:[%s35 + $0x30] sm:$0xff]
      %v3817 = vld [vmem:[%s35 + $0x38] sm:$0xff]
      %v3818 = vld [vmem:[%s35 + $0x40] sm:$0xff]
      %v3819 = vld [vmem:[%s35 + $0x48] sm:$0xff]
      %v3820 = vld [vmem:[%s35 + $0x50] sm:$0xff]
      %v3821 = vld [vmem:[%s35 + $0x58] sm:$0xff]
      %v3822 = vld [vmem:[%s35 + $0x60] sm:$0xff]
      %v3823 = vld [vmem:[%s35 + $0x68] sm:$0xff]
      %v3824 = vld [vmem:[%s35 + $0x70] sm:$0xff]
      %v3825 = vld [vmem:[%s35 + $0x78] sm:$0xff]
      %v3826 = vld [vmem:[%s35 + $0x80] sm:$0xff]
      %v3827 = vld [vmem:[%s35 + $0x88] sm:$0xff]
      %v3828 = vld [vmem:[%s35 + $0x90] sm:$0xff]
      %v3829 = vld [vmem:[%s35 + $0x98] sm:$0xff]
      %v3830 = vld [vmem:[%s35 + $0xa0] sm:$0xff]
      %v3831 = vld [vmem:[%s35 + $0xa8] sm:$0xff]
      %v3832 = vld [vmem:[%s35 + $0xb0] sm:$0xff]
      %v3833 = vld [vmem:[%s35 + $0xb8] sm:$0xff]
      %v3834 = vld [vmem:[%s35 + $0xc0] sm:$0xff]
      %v3835 = vld [vmem:[%s35 + $0xc8] sm:$0xff]
      %v3836 = vld [vmem:[%s35 + $0xd0] sm:$0xff]
      %v3837 = vld [vmem:[%s35 + $0xd8] sm:$0xff]
      %v3838 = vld [vmem:[%s35 + $0xe0] sm:$0xff]
      %v3839 = vld [vmem:[%s35 + $0xe8] sm:$0xff]
      %v3840 = vld [vmem:[%s35 + $0xf0] sm:$0xff]
      %v3841 = vld [vmem:[%s35 + $0xf8] sm:$0xff]
      %3843 = vset.pattern.permute.xlu0 0
      %3844 = vperm.xlu0 %3843, %v3810
      %v3845 = vpop.permute.xlu0 %3844
      %3848 = vset.pattern.permute.xlu0 0
      %3849 = vperm.xlu0 %3848, %v3811
      %v3850 = vpop.permute.xlu0 %3849
      %3853 = vset.pattern.permute.xlu0 0
      %3854 = vperm.xlu0 %3853, %v3812
      %v3855 = vpop.permute.xlu0 %3854
      %3858 = vset.pattern.permute.xlu0 0
      %3859 = vperm.xlu0 %3858, %v3813
      %v3860 = vpop.permute.xlu0 %3859
      %3863 = vset.pattern.permute.xlu0 0
      %3864 = vperm.xlu0 %3863, %v3814
      %v3865 = vpop.permute.xlu0 %3864
      %3868 = vset.pattern.permute.xlu0 0
      %3869 = vperm.xlu0 %3868, %v3815
      %v3870 = vpop.permute.xlu0 %3869
      %3873 = vset.pattern.permute.xlu0 0
      %3874 = vperm.xlu0 %3873, %v3816
      %v3875 = vpop.permute.xlu0 %3874
      %3878 = vset.pattern.permute.xlu0 0
      %3879 = vperm.xlu0 %3878, %v3817
      %v3880 = vpop.permute.xlu0 %3879
      %3883 = vset.pattern.permute.xlu0 0
      %3884 = vperm.xlu0 %3883, %v3818
      %v3885 = vpop.permute.xlu0 %3884
      %3888 = vset.pattern.permute.xlu0 0
      %3889 = vperm.xlu0 %3888, %v3819
      %v3890 = vpop.permute.xlu0 %3889
      %3893 = vset.pattern.permute.xlu0 0
      %3894 = vperm.xlu0 %3893, %v3820
      %v3895 = vpop.permute.xlu0 %3894
      %3898 = vset.pattern.permute.xlu0 0
      %3899 = vperm.xlu0 %3898, %v3821
      %v3900 = vpop.permute.xlu0 %3899
      %3903 = vset.pattern.permute.xlu0 0
      %3904 = vperm.xlu0 %3903, %v3822
      %v3905 = vpop.permute.xlu0 %3904
      %3908 = vset.pattern.permute.xlu0 0
      %3909 = vperm.xlu0 %3908, %v3823
      %v3910 = vpop.permute.xlu0 %3909
      %3913 = vset.pattern.permute.xlu0 0
      %3914 = vperm.xlu0 %3913, %v3824
      %v3915 = vpop.permute.xlu0 %3914
      %3918 = vset.pattern.permute.xlu0 0
      %3919 = vperm.xlu0 %3918, %v3825
      %v3920 = vpop.permute.xlu0 %3919
      %3923 = vset.pattern.permute.xlu0 0
      %3924 = vperm.xlu0 %3923, %v3826
      %v3925 = vpop.permute.xlu0 %3924
      %3928 = vset.pattern.permute.xlu0 0
      %3929 = vperm.xlu0 %3928, %v3827
      %v3930 = vpop.permute.xlu0 %3929
      %3933 = vset.pattern.permute.xlu0 0
      %3934 = vperm.xlu0 %3933, %v3828
      %v3935 = vpop.permute.xlu0 %3934
      %3938 = vset.pattern.permute.xlu0 0
      %3939 = vperm.xlu0 %3938, %v3829
      %v3940 = vpop.permute.xlu0 %3939
      %3943 = vset.pattern.permute.xlu0 0
      %3944 = vperm.xlu0 %3943, %v3830
      %v3945 = vpop.permute.xlu0 %3944
      %3948 = vset.pattern.permute.xlu0 0
      %3949 = vperm.xlu0 %3948, %v3831
      %v3950 = vpop.permute.xlu0 %3949
      %3953 = vset.pattern.permute.xlu0 0
      %3954 = vperm.xlu0 %3953, %v3832
      %v3955 = vpop.permute.xlu0 %3954
      %3958 = vset.pattern.permute.xlu0 0
      %3959 = vperm.xlu0 %3958, %v3833
      %v3960 = vpop.permute.xlu0 %3959
      %3963 = vset.pattern.permute.xlu0 0
      %3964 = vperm.xlu0 %3963, %v3834
      %v3965 = vpop.permute.xlu0 %3964
      %3968 = vset.pattern.permute.xlu0 0
      %3969 = vperm.xlu0 %3968, %v3835
      %v3970 = vpop.permute.xlu0 %3969
      %3973 = vset.pattern.permute.xlu0 0
      %3974 = vperm.xlu0 %3973, %v3836
      %v3975 = vpop.permute.xlu0 %3974
      %3978 = vset.pattern.permute.xlu0 0
      %3979 = vperm.xlu0 %3978, %v3837
      %v3980 = vpop.permute.xlu0 %3979
      %3983 = vset.pattern.permute.xlu0 0
      %3984 = vperm.xlu0 %3983, %v3838
      %v3985 = vpop.permute.xlu0 %3984
      %3988 = vset.pattern.permute.xlu0 0
      %3989 = vperm.xlu0 %3988, %v3839
      %v3990 = vpop.permute.xlu0 %3989
      %3993 = vset.pattern.permute.xlu0 0
      %3994 = vperm.xlu0 %3993, %v3840
      %v3995 = vpop.permute.xlu0 %3994
      %3998 = vset.pattern.permute.xlu0 0
      %3999 = vperm.xlu0 %3998, %v3841
      %v4000 = vpop.permute.xlu0 %3999
      %v4066 = vunpack.c.l.b16 %v3746
      %v4067 = vunpack.c.h.b16 %v3746
      %v4068 = vunpack.c.l.b16 %v3747
      %v4069 = vunpack.c.l.b16 %v3748
      %v4070 = vunpack.c.h.b16 %v3748
      %v4071 = vunpack.c.l.b16 %v3749
      %v4072 = vunpack.c.l.b16 %v3750
      %v4073 = vunpack.c.h.b16 %v3750
      %v4074 = vunpack.c.l.b16 %v3751
      %v4075 = vunpack.c.l.b16 %v3752
      %v4076 = vunpack.c.h.b16 %v3752
      %v4077 = vunpack.c.l.b16 %v3753
      %v4078 = vunpack.c.l.b16 %v3754
      %v4079 = vunpack.c.h.b16 %v3754
      %v4080 = vunpack.c.l.b16 %v3755
      %v4081 = vunpack.c.l.b16 %v3756
      %v4082 = vunpack.c.h.b16 %v3756
      %v4083 = vunpack.c.l.b16 %v3757
      %v4084 = vunpack.c.l.b16 %v3758
      %v4085 = vunpack.c.h.b16 %v3758
      %v4086 = vunpack.c.l.b16 %v3759
      %v4087 = vunpack.c.l.b16 %v3760
      %v4088 = vunpack.c.h.b16 %v3760
      %v4089 = vunpack.c.l.b16 %v3761
      %v4090 = vunpack.c.l.b16 %v3762
      %v4091 = vunpack.c.h.b16 %v3762
      %v4092 = vunpack.c.l.b16 %v3763
      %v4093 = vunpack.c.l.b16 %v3764
      %v4094 = vunpack.c.h.b16 %v3764
      %v4095 = vunpack.c.l.b16 %v3765
      %v4096 = vunpack.c.l.b16 %v3766
      %v4097 = vunpack.c.h.b16 %v3766
      %v4098 = vunpack.c.l.b16 %v3767
      %v4099 = vunpack.c.l.b16 %v3768
      %v4100 = vunpack.c.h.b16 %v3768
      %v4101 = vunpack.c.l.b16 %v3769
      %v4102 = vunpack.c.l.b16 %v3770
      %v4103 = vunpack.c.h.b16 %v3770
      %v4104 = vunpack.c.l.b16 %v3771
      %v4105 = vunpack.c.l.b16 %v3772
      %v4106 = vunpack.c.h.b16 %v3772
      %v4107 = vunpack.c.l.b16 %v3773
      %v4108 = vunpack.c.l.b16 %v3774
      %v4109 = vunpack.c.h.b16 %v3774
      %v4110 = vunpack.c.l.b16 %v3775
      %v4111 = vunpack.c.l.b16 %v3776
      %v4112 = vunpack.c.h.b16 %v3776
      %v4113 = vunpack.c.l.b16 %v3777
      %v4114 = vunpack.c.l.b16 %v3778
      %v4115 = vunpack.c.h.b16 %v3778
      %v4116 = vunpack.c.l.b16 %v3779
      %v4117 = vunpack.c.l.b16 %v3780
      %v4118 = vunpack.c.h.b16 %v3780
      %v4119 = vunpack.c.l.b16 %v3781
      %v4120 = vunpack.c.l.b16 %v3782
      %v4121 = vunpack.c.h.b16 %v3782
      %v4122 = vunpack.c.l.b16 %v3783
      %v4123 = vunpack.c.l.b16 %v3784
      %v4124 = vunpack.c.h.b16 %v3784
      %v4125 = vunpack.c.l.b16 %v3785
      %v4126 = vunpack.c.l.b16 %v3786
      %v4127 = vunpack.c.h.b16 %v3786
      %v4128 = vunpack.c.l.b16 %v3787
      %v4129 = vunpack.c.l.b16 %v3788
      %v4130 = vunpack.c.h.b16 %v3788
      %v4131 = vunpack.c.l.b16 %v3789
      %v4132 = vunpack.c.l.b16 %v3790
      %v4133 = vunpack.c.h.b16 %v3790
      %v4134 = vunpack.c.l.b16 %v3791
      %v4135 = vunpack.c.l.b16 %v3792
      %v4136 = vunpack.c.h.b16 %v3792
      %v4137 = vunpack.c.l.b16 %v3793
      %v4138 = vunpack.c.l.b16 %v3794
      %v4139 = vunpack.c.h.b16 %v3794
      %v4140 = vunpack.c.l.b16 %v3795
      %v4141 = vunpack.c.l.b16 %v3796
      %v4142 = vunpack.c.h.b16 %v3796
      %v4143 = vunpack.c.l.b16 %v3797
      %v4144 = vunpack.c.l.b16 %v3798
      %v4145 = vunpack.c.h.b16 %v3798
      %v4146 = vunpack.c.l.b16 %v3799
      %v4147 = vunpack.c.l.b16 %v3800
      %v4148 = vunpack.c.h.b16 %v3800
      %v4149 = vunpack.c.l.b16 %v3801
      %v4150 = vunpack.c.l.b16 %v3802
      %v4151 = vunpack.c.h.b16 %v3802
      %v4152 = vunpack.c.l.b16 %v3803
      %v4153 = vunpack.c.l.b16 %v3804
      %v4154 = vunpack.c.h.b16 %v3804
      %v4155 = vunpack.c.l.b16 %v3805
      %v4156 = vunpack.c.l.b16 %v3806
      %v4157 = vunpack.c.h.b16 %v3806
      %v4158 = vunpack.c.l.b16 %v3807
      %v4159 = vunpack.c.l.b16 %v3808
      %v4160 = vunpack.c.h.b16 %v3808
      %v4161 = vunpack.c.l.b16 %v3809
      %v4162 = vpack.c.b16 %v4069, %v4066
      %v4163 = vpack.c.b16 %v4070, %v4067
      %v4164 = vpack.c.b16 %v4071, %v4068
      %v4165 = vpack.c.b16 %v4075, %v4072
      %v4166 = vpack.c.b16 %v4076, %v4073
      %v4167 = vpack.c.b16 %v4077, %v4074
      %v4168 = vpack.c.b16 %v4081, %v4078
      %v4169 = vpack.c.b16 %v4082, %v4079
      %v4170 = vpack.c.b16 %v4083, %v4080
      %v4171 = vpack.c.b16 %v4087, %v4084
      %v4172 = vpack.c.b16 %v4088, %v4085
      %v4173 = vpack.c.b16 %v4089, %v4086
      %v4174 = vpack.c.b16 %v4093, %v4090
      %v4175 = vpack.c.b16 %v4094, %v4091
      %v4176 = vpack.c.b16 %v4095, %v4092
      %v4177 = vpack.c.b16 %v4099, %v4096
      %v4178 = vpack.c.b16 %v4100, %v4097
      %v4179 = vpack.c.b16 %v4101, %v4098
      %v4180 = vpack.c.b16 %v4105, %v4102
      %v4181 = vpack.c.b16 %v4106, %v4103
      %v4182 = vpack.c.b16 %v4107, %v4104
      %v4183 = vpack.c.b16 %v4111, %v4108
      %v4184 = vpack.c.b16 %v4112, %v4109
      %v4185 = vpack.c.b16 %v4113, %v4110
      %v4186 = vpack.c.b16 %v4117, %v4114
      %v4187 = vpack.c.b16 %v4118, %v4115
      %v4188 = vpack.c.b16 %v4119, %v4116
      %v4189 = vpack.c.b16 %v4123, %v4120
      %v4190 = vpack.c.b16 %v4124, %v4121
      %v4191 = vpack.c.b16 %v4125, %v4122
      %v4192 = vpack.c.b16 %v4129, %v4126
      %v4193 = vpack.c.b16 %v4130, %v4127
      %v4194 = vpack.c.b16 %v4131, %v4128
      %v4195 = vpack.c.b16 %v4135, %v4132
      %v4196 = vpack.c.b16 %v4136, %v4133
      %v4197 = vpack.c.b16 %v4137, %v4134
      %v4198 = vpack.c.b16 %v4141, %v4138
      %v4199 = vpack.c.b16 %v4142, %v4139
      %v4200 = vpack.c.b16 %v4143, %v4140
      %v4201 = vpack.c.b16 %v4147, %v4144
      %v4202 = vpack.c.b16 %v4148, %v4145
      %v4203 = vpack.c.b16 %v4149, %v4146
      %v4204 = vpack.c.b16 %v4153, %v4150
      %v4205 = vpack.c.b16 %v4154, %v4151
      %v4206 = vpack.c.b16 %v4155, %v4152
      %v4207 = vpack.c.b16 %v4159, %v4156
      %v4208 = vpack.c.b16 %v4160, %v4157
      %v4209 = vpack.c.b16 %v4161, %v4158
      %v4243 = vsel %vm1125, %v4164, 0
      %v4246 = vsel %vm1125, %v4167, 0
      %v4249 = vsel %vm1125, %v4170, 0
      %v4252 = vsel %vm1125, %v4173, 0
      %v4255 = vsel %vm1125, %v4176, 0
      %v4258 = vsel %vm1125, %v4179, 0
      %v4261 = vsel %vm1125, %v4182, 0
      %v4264 = vsel %vm1125, %v4185, 0
      %v4267 = vsel %vm1125, %v4188, 0
      %v4270 = vsel %vm1125, %v4191, 0
      %v4273 = vsel %vm1125, %v4194, 0
      %v4276 = vsel %vm1125, %v4197, 0
      %v4279 = vsel %vm1125, %v4200, 0
      %v4282 = vsel %vm1125, %v4203, 0
      %v4285 = vsel %vm1125, %v4206, 0
      %v4288 = vsel %vm1125, %v4209, 0
      %4290 = vmatprep.subr.bf16.mxu0 0
      %4291 = vmatpush1.bf16.msra.mxu0 %v3728
      %4292 = vmatprep.subr.bf16.mxu0 0
      %4293 = vmatpush1.bf16.msra.mxu0 %v3729
      %4294 = vmatprep.subr.bf16.mxu0 0
      %4295 = vmatpush1.bf16.msra.mxu0 %v3730
      %4296 = vmatprep.subr.bf16.mxu0 0
      %4297 = vmatpush1.bf16.msra.mxu0 %v3731
      %4298 = vmatprep.subr.bf16.mxu0 0
      %4299 = vmatpush1.bf16.msra.mxu0 %v3732
      %4300 = vmatprep.subr.bf16.mxu0 0
      %4301 = vmatpush1.bf16.msra.mxu0 %v3733
      %4302 = vmatprep.subr.bf16.mxu0 0
      %4303 = vmatpush1.bf16.msra.mxu0 %v3734
      %4304 = vmatprep.subr.bf16.mxu0 0
      %4305 = vmatpush1.bf16.msra.mxu0 %v3735
      %4306 = vmatprep.subr.bf16.mxu0 0
      %4307 = vmatpush1.bf16.msra.mxu0 %v3736
      %4308 = vmatprep.subr.bf16.mxu0 0
      %4309 = vmatpush1.bf16.msra.mxu0 %v3737
      %4310 = vmatprep.subr.bf16.mxu0 0
      %4311 = vmatpush1.bf16.msra.mxu0 %v3738
      %4312 = vmatprep.subr.bf16.mxu0 0
      %4313 = vmatpush1.bf16.msra.mxu0 %v3739
      %4314 = vmatprep.subr.bf16.mxu0 0
      %4315 = vmatpush1.bf16.msra.mxu0 %v3740
      %4316 = vmatprep.subr.bf16.mxu0 0
      %4317 = vmatpush1.bf16.msra.mxu0 %v3741
      %4318 = vmatprep.subr.bf16.mxu0 0
      %4319 = vmatpush1.bf16.msra.mxu0 %v3742
      %4320 = vmatprep.subr.bf16.mxu0 0
      %4321 = vmatpush1.bf16.msra.mxu0 %v3743
      %4322 = vmatprep.mubr.bf16.mxu0 %v4163
      %4323 = vmatmul.mubr.bf16.gmra.mrb[0].mxu0 %v4162
      %v4324 = vpop.f32.mrb[0].mxu0
      %v4325 = vadd.f32 %v3845, %v4324
      %v4326 = vpop.f32.mrb[0].mxu0
      %v4327 = vpop.f32.mrb[0].mxu0
      %v4328 = vadd.f32 %v3850, %v4327
      %v4329 = vpop.f32.mrb[0].mxu0
      %4330 = vmatprep.mubr.bf16.mxu0 %v4166
      %4331 = vmatmul.mubr.bf16.gmra.mrb[0].mxu0 %v4165
      %v4332 = vpop.f32.mrb[0].mxu0
      %v4333 = vadd.f32 %v3855, %v4332
      %v4334 = vpop.f32.mrb[0].mxu0
      %v4335 = vpop.f32.mrb[0].mxu0
      %v4336 = vadd.f32 %v3860, %v4335
      %v4337 = vpop.f32.mrb[0].mxu0
      %4338 = vmatprep.mubr.bf16.mxu0 %v4169
      %4339 = vmatmul.mubr.bf16.gmra.mrb[0].mxu0 %v4168
      %v4340 = vpop.f32.mrb[0].mxu0
      %v4341 = vadd.f32 %v3865, %v4340
      %v4342 = vpop.f32.mrb[0].mxu0
      %v4343 = vpop.f32.mrb[0].mxu0
      %v4344 = vadd.f32 %v3870, %v4343
      %v4345 = vpop.f32.mrb[0].mxu0
      %4346 = vmatprep.mubr.bf16.mxu0 %v4172
      %4347 = vmatmul.mubr.bf16.gmra.mrb[0].mxu0 %v4171
      %v4348 = vpop.f32.mrb[0].mxu0
      %v4349 = vadd.f32 %v3875, %v4348
      %v4350 = vpop.f32.mrb[0].mxu0
      %v4351 = vpop.f32.mrb[0].mxu0
      %v4352 = vadd.f32 %v3880, %v4351
      %v4353 = vpop.f32.mrb[0].mxu0
      %4354 = vmatprep.mubr.bf16.mxu0 %v4175
      %4355 = vmatmul.mubr.bf16.gmra.mrb[0].mxu0 %v4174
      %v4356 = vpop.f32.mrb[0].mxu0
      %v4357 = vadd.f32 %v3885, %v4356
      %v4358 = vpop.f32.mrb[0].mxu0
      %v4359 = vpop.f32.mrb[0].mxu0
      %v4360 = vadd.f32 %v3890, %v4359
      %v4361 = vpop.f32.mrb[0].mxu0
      %4362 = vmatprep.mubr.bf16.mxu0 %v4178
      %4363 = vmatmul.mubr.bf16.gmra.mrb[0].mxu0 %v4177
      %v4364 = vpop.f32.mrb[0].mxu0
      %v4365 = vadd.f32 %v3895, %v4364
      %v4366 = vpop.f32.mrb[0].mxu0
      %v4367 = vpop.f32.mrb[0].mxu0
      %v4368 = vadd.f32 %v3900, %v4367
      %v4369 = vpop.f32.mrb[0].mxu0
      %4370 = vmatprep.mubr.bf16.mxu0 %v4181
      %4371 = vmatmul.mubr.bf16.gmra.mrb[0].mxu0 %v4180
      %v4372 = vpop.f32.mrb[0].mxu0
      %v4373 = vadd.f32 %v3905, %v4372
      %v4374 = vpop.f32.mrb[0].mxu0
      %v4375 = vpop.f32.mrb[0].mxu0
      %v4376 = vadd.f32 %v3910, %v4375
      %v4377 = vpop.f32.mrb[0].mxu0
      %4378 = vmatprep.mubr.bf16.mxu0 %v4184
      %4379 = vmatmul.mubr.bf16.gmra.mrb[0].mxu0 %v4183
      %v4380 = vpop.f32.mrb[0].mxu0
      %v4381 = vadd.f32 %v3915, %v4380
      %v4382 = vpop.f32.mrb[0].mxu0
      %v4383 = vpop.f32.mrb[0].mxu0
      %v4384 = vadd.f32 %v3920, %v4383
      %v4385 = vpop.f32.mrb[0].mxu0
      %4386 = vmatprep.mubr.bf16.mxu0 %v4187
      %4387 = vmatmul.mubr.bf16.gmra.mrb[0].mxu0 %v4186
      %v4388 = vpop.f32.mrb[0].mxu0
      %v4389 = vadd.f32 %v3925, %v4388
      %v4390 = vpop.f32.mrb[0].mxu0
      %v4391 = vpop.f32.mrb[0].mxu0
      %v4392 = vadd.f32 %v3930, %v4391
      %v4393 = vpop.f32.mrb[0].mxu0
      %4394 = vmatprep.mubr.bf16.mxu0 %v4190
      %4395 = vmatmul.mubr.bf16.gmra.mrb[0].mxu0 %v4189
      %v4396 = vpop.f32.mrb[0].mxu0
      %v4397 = vadd.f32 %v3935, %v4396
      %v4398 = vpop.f32.mrb[0].mxu0
      %v4399 = vpop.f32.mrb[0].mxu0
      %v4400 = vadd.f32 %v3940, %v4399
      %v4401 = vpop.f32.mrb[0].mxu0
      %4402 = vmatprep.mubr.bf16.mxu0 %v4193
      %4403 = vmatmul.mubr.bf16.gmra.mrb[0].mxu0 %v4192
      %v4404 = vpop.f32.mrb[0].mxu0
      %v4405 = vadd.f32 %v3945, %v4404
      %v4406 = vpop.f32.mrb[0].mxu0
      %v4407 = vpop.f32.mrb[0].mxu0
      %v4408 = vadd.f32 %v3950, %v4407
      %v4409 = vpop.f32.mrb[0].mxu0
      %4410 = vmatprep.mubr.bf16.mxu0 %v4196
      %4411 = vmatmul.mubr.bf16.gmra.mrb[0].mxu0 %v4195
      %v4412 = vpop.f32.mrb[0].mxu0
      %v4413 = vadd.f32 %v3955, %v4412
      %v4414 = vpop.f32.mrb[0].mxu0
      %v4415 = vpop.f32.mrb[0].mxu0
      %v4416 = vadd.f32 %v3960, %v4415
      %v4417 = vpop.f32.mrb[0].mxu0
      %4418 = vmatprep.mubr.bf16.mxu0 %v4199
      %4419 = vmatmul.mubr.bf16.gmra.mrb[0].mxu0 %v4198
      %v4420 = vpop.f32.mrb[0].mxu0
      %v4421 = vadd.f32 %v3965, %v4420
      %v4422 = vpop.f32.mrb[0].mxu0
      %v4423 = vpop.f32.mrb[0].mxu0
      %v4424 = vadd.f32 %v3970, %v4423
      %v4425 = vpop.f32.mrb[0].mxu0
      %4426 = vmatprep.mubr.bf16.mxu0 %v4202
      %4427 = vmatmul.mubr.bf16.gmra.mrb[0].mxu0 %v4201
      %v4428 = vpop.f32.mrb[0].mxu0
      %v4429 = vadd.f32 %v3975, %v4428
      %v4430 = vpop.f32.mrb[0].mxu0
      %v4431 = vpop.f32.mrb[0].mxu0
      %v4432 = vadd.f32 %v3980, %v4431
      %v4433 = vpop.f32.mrb[0].mxu0
      %4434 = vmatprep.mubr.bf16.mxu0 %v4205
      %4435 = vmatmul.mubr.bf16.gmra.mrb[0].mxu0 %v4204
      %v4436 = vpop.f32.mrb[0].mxu0
      %v4437 = vadd.f32 %v3985, %v4436
      %v4438 = vpop.f32.mrb[0].mxu0
      %v4439 = vpop.f32.mrb[0].mxu0
      %v4440 = vadd.f32 %v3990, %v4439
      %v4441 = vpop.f32.mrb[0].mxu0
      %4442 = vmatprep.mubr.bf16.mxu0 %v4208
      %4443 = vmatmul.mubr.bf16.gmra.mrb[0].mxu0 %v4207
      %v4444 = vpop.f32.mrb[0].mxu0
      %v4445 = vadd.f32 %v3995, %v4444
      %v4446 = vpop.f32.mrb[0].mxu0
      %v4447 = vpop.f32.mrb[0].mxu0
      %v4448 = vadd.f32 %v4000, %v4447
      %v4449 = vpop.f32.mrb[0].mxu0
      %4450 = vdwg.mxu0
      %4451 = vmatprep.subr.bf16.mxu0 0
      %4452 = vmatpush1.bf16.msra.mxu0 %v3744
      %4453 = vmatprep.subr.bf16.mxu0 0
      %4454 = vmatpush1.bf16.msra.mxu0 %v3745
      %4455 = vmatprep.subr.bf16.mxu0 0
      %4456 = vmatpush1.bf16.msra.mxu0 0
      %4457 = vmatprep.subr.bf16.mxu0 0
      %4458 = vmatpush1.bf16.msra.mxu0 0
      %4459 = vmatprep.subr.bf16.mxu0 0
      %4460 = vmatpush1.bf16.msra.mxu0 0
      %4461 = vmatprep.subr.bf16.mxu0 0
      %4462 = vmatpush1.bf16.msra.mxu0 0
      %4463 = vmatprep.subr.bf16.mxu0 0
      %4464 = vmatpush1.bf16.msra.mxu0 0
      %4465 = vmatprep.subr.bf16.mxu0 0
      %4466 = vmatpush1.bf16.msra.mxu0 0
      %4467 = vmatprep.subr.bf16.mxu0 0
      %4468 = vmatpush1.bf16.msra.mxu0 0
      %4469 = vmatprep.subr.bf16.mxu0 0
      %4470 = vmatpush1.bf16.msra.mxu0 0
      %4471 = vmatprep.subr.bf16.mxu0 0
      %4472 = vmatpush1.bf16.msra.mxu0 0
      %4473 = vmatprep.subr.bf16.mxu0 0
      %4474 = vmatpush1.bf16.msra.mxu0 0
      %4475 = vmatprep.subr.bf16.mxu0 0
      %4476 = vmatpush1.bf16.msra.mxu0 0
      %4477 = vmatprep.subr.bf16.mxu0 0
      %4478 = vmatpush1.bf16.msra.mxu0 0
      %4479 = vmatprep.subr.bf16.mxu0 0
      %4480 = vmatpush1.bf16.msra.mxu0 0
      %4481 = vmatprep.subr.bf16.mxu0 0
      %4482 = vmatpush1.bf16.msra.mxu0 0
      %4483 = vmatprep.mubr.bf16.mxu0 0
      %4484 = vmatmul.mubr.bf16.gmra.mrb[0].mxu0 %v4243
      %v4485 = vpop.f32.mrb[0].mxu0
      %v4486 = vadd.f32 %v4325, %v4485
      %v4487 = vpop.f32.mrb[0].mxu0
      %v4488 = vpop.f32.mrb[0].mxu0
      %v4489 = vadd.f32 %v4328, %v4488
      %v4490 = vpop.f32.mrb[0].mxu0
      %4491 = vmatprep.mubr.bf16.mxu0 0
      %4492 = vmatmul.mubr.bf16.gmra.mrb[0].mxu0 %v4246
      %v4493 = vpop.f32.mrb[0].mxu0
      %v4494 = vadd.f32 %v4333, %v4493
      %v4495 = vpop.f32.mrb[0].mxu0
      %v4496 = vpop.f32.mrb[0].mxu0
      %v4497 = vadd.f32 %v4336, %v4496
      %v4498 = vpop.f32.mrb[0].mxu0
      %4499 = vmatprep.mubr.bf16.mxu0 0
      %4500 = vmatmul.mubr.bf16.gmra.mrb[0].mxu0 %v4249
      %v4501 = vpop.f32.mrb[0].mxu0
      %v4502 = vadd.f32 %v4341, %v4501
      %v4503 = vpop.f32.mrb[0].mxu0
      %v4504 = vpop.f32.mrb[0].mxu0
      %v4505 = vadd.f32 %v4344, %v4504
      %v4506 = vpop.f32.mrb[0].mxu0
      %4507 = vmatprep.mubr.bf16.mxu0 0
      %4508 = vmatmul.mubr.bf16.gmra.mrb[0].mxu0 %v4252
      %v4509 = vpop.f32.mrb[0].mxu0
      %v4510 = vadd.f32 %v4349, %v4509
      %v4511 = vpop.f32.mrb[0].mxu0
      %v4512 = vpop.f32.mrb[0].mxu0
      %v4513 = vadd.f32 %v4352, %v4512
      %v4514 = vpop.f32.mrb[0].mxu0
      %4515 = vmatprep.mubr.bf16.mxu0 0
      %4516 = vmatmul.mubr.bf16.gmra.mrb[0].mxu0 %v4255
      %v4517 = vpop.f32.mrb[0].mxu0
      %v4518 = vadd.f32 %v4357, %v4517
      %v4519 = vpop.f32.mrb[0].mxu0
      %v4520 = vpop.f32.mrb[0].mxu0
      %v4521 = vadd.f32 %v4360, %v4520
      %v4522 = vpop.f32.mrb[0].mxu0
      %4523 = vmatprep.mubr.bf16.mxu0 0
      %4524 = vmatmul.mubr.bf16.gmra.mrb[0].mxu0 %v4258
      %v4525 = vpop.f32.mrb[0].mxu0
      %v4526 = vadd.f32 %v4365, %v4525
      %v4527 = vpop.f32.mrb[0].mxu0
      %v4528 = vpop.f32.mrb[0].mxu0
      %v4529 = vadd.f32 %v4368, %v4528
      %v4530 = vpop.f32.mrb[0].mxu0
      %4531 = vmatprep.mubr.bf16.mxu0 0
      %4532 = vmatmul.mubr.bf16.gmra.mrb[0].mxu0 %v4261
      %v4533 = vpop.f32.mrb[0].mxu0
      %v4534 = vadd.f32 %v4373, %v4533
      %v4535 = vpop.f32.mrb[0].mxu0
      %v4536 = vpop.f32.mrb[0].mxu0
      %v4537 = vadd.f32 %v4376, %v4536
      %v4538 = vpop.f32.mrb[0].mxu0
      %4539 = vmatprep.mubr.bf16.mxu0 0
      %4540 = vmatmul.mubr.bf16.gmra.mrb[0].mxu0 %v4264
      %v4541 = vpop.f32.mrb[0].mxu0
      %v4542 = vadd.f32 %v4381, %v4541
      %v4543 = vpop.f32.mrb[0].mxu0
      %v4544 = vpop.f32.mrb[0].mxu0
      %v4545 = vadd.f32 %v4384, %v4544
      %v4546 = vpop.f32.mrb[0].mxu0
      %4547 = vmatprep.mubr.bf16.mxu0 0
      %4548 = vmatmul.mubr.bf16.gmra.mrb[0].mxu0 %v4267
      %v4549 = vpop.f32.mrb[0].mxu0
      %v4550 = vadd.f32 %v4389, %v4549
      %v4551 = vpop.f32.mrb[0].mxu0
      %v4552 = vpop.f32.mrb[0].mxu0
      %v4553 = vadd.f32 %v4392, %v4552
      %v4554 = vpop.f32.mrb[0].mxu0
      %4555 = vmatprep.mubr.bf16.mxu0 0
      %4556 = vmatmul.mubr.bf16.gmra.mrb[0].mxu0 %v4270
      %v4557 = vpop.f32.mrb[0].mxu0
      %v4558 = vadd.f32 %v4397, %v4557
      %v4559 = vpop.f32.mrb[0].mxu0
      %v4560 = vpop.f32.mrb[0].mxu0
      %v4561 = vadd.f32 %v4400, %v4560
      %v4562 = vpop.f32.mrb[0].mxu0
      %4563 = vmatprep.mubr.bf16.mxu0 0
      %4564 = vmatmul.mubr.bf16.gmra.mrb[0].mxu0 %v4273
      %v4565 = vpop.f32.mrb[0].mxu0
      %v4566 = vadd.f32 %v4405, %v4565
      %v4567 = vpop.f32.mrb[0].mxu0
      %v4568 = vpop.f32.mrb[0].mxu0
      %v4569 = vadd.f32 %v4408, %v4568
      %v4570 = vpop.f32.mrb[0].mxu0
      %4571 = vmatprep.mubr.bf16.mxu0 0
      %4572 = vmatmul.mubr.bf16.gmra.mrb[0].mxu0 %v4276
      %v4573 = vpop.f32.mrb[0].mxu0
      %v4574 = vadd.f32 %v4413, %v4573
      %v4575 = vpop.f32.mrb[0].mxu0
      %v4576 = vpop.f32.mrb[0].mxu0
      %v4577 = vadd.f32 %v4416, %v4576
      %v4578 = vpop.f32.mrb[0].mxu0
      %4579 = vmatprep.mubr.bf16.mxu0 0
      %4580 = vmatmul.mubr.bf16.gmra.mrb[0].mxu0 %v4279
      %v4581 = vpop.f32.mrb[0].mxu0
      %v4582 = vadd.f32 %v4421, %v4581
      %v4583 = vpop.f32.mrb[0].mxu0
      %v4584 = vpop.f32.mrb[0].mxu0
      %v4585 = vadd.f32 %v4424, %v4584
      %v4586 = vpop.f32.mrb[0].mxu0
      %4587 = vmatprep.mubr.bf16.mxu0 0
      %4588 = vmatmul.mubr.bf16.gmra.mrb[0].mxu0 %v4282
      %v4589 = vpop.f32.mrb[0].mxu0
      %v4590 = vadd.f32 %v4429, %v4589
      %v4591 = vpop.f32.mrb[0].mxu0
      %v4592 = vpop.f32.mrb[0].mxu0
      %v4593 = vadd.f32 %v4432, %v4592
      %v4594 = vpop.f32.mrb[0].mxu0
      %4595 = vmatprep.mubr.bf16.mxu0 0
      %4596 = vmatmul.mubr.bf16.gmra.mrb[0].mxu0 %v4285
      %v4597 = vpop.f32.mrb[0].mxu0
      %v4598 = vadd.f32 %v4437, %v4597
      %v4599 = vpop.f32.mrb[0].mxu0
      %v4600 = vpop.f32.mrb[0].mxu0
      %v4601 = vadd.f32 %v4440, %v4600
      %v4602 = vpop.f32.mrb[0].mxu0
      %4603 = vmatprep.mubr.bf16.mxu0 0
      %4604 = vmatmul.mubr.bf16.gmra.mrb[0].mxu0 %v4288
      %v4605 = vpop.f32.mrb[0].mxu0
      %v4606 = vadd.f32 %v4445, %v4605
      %v4607 = vpop.f32.mrb[0].mxu0
      %v4608 = vpop.f32.mrb[0].mxu0
      %v4609 = vadd.f32 %v4448, %v4608
      %v4610 = vpop.f32.mrb[0].mxu0
      %4611 = vdwg.mxu0
      %v4612 = vld [vmem:[%s37] sm:$0xff]
      %v4613 = vld [vmem:[%s37 + $0x8] sm:$0xff]
      %v4614 = vld [vmem:[%s37 + $0x10] sm:$0xff]
      %v4615 = vld [vmem:[%s37 + $0x18] sm:$0xff]
      %v4616 = vld [vmem:[%s37 + $0x20] sm:$0xff]
      %v4617 = vld [vmem:[%s37 + $0x28] sm:$0xff]
      %v4618 = vld [vmem:[%s37 + $0x30] sm:$0xff]
      %v4619 = vld [vmem:[%s37 + $0x38] sm:$0xff]
      %v4620 = vld [vmem:[%s37 + $0x40] sm:$0xff]
      %v4621 = vld [vmem:[%s37 + $0x48] sm:$0xff]
      %v4622 = vld [vmem:[%s37 + $0x50] sm:$0xff]
      %v4623 = vld [vmem:[%s37 + $0x58] sm:$0xff]
      %v4624 = vld [vmem:[%s37 + $0x60] sm:$0xff]
      %v4625 = vld [vmem:[%s37 + $0x68] sm:$0xff]
      %v4626 = vld [vmem:[%s37 + $0x70] sm:$0xff]
      %v4627 = vld [vmem:[%s37 + $0x78] sm:$0xff]
      %v4628 = vld [vmem:[%s37 + $0x80] sm:$0xff]
      %v4629 = vld [vmem:[%s37 + $0x88] sm:$0xff]
      %v4630 = vld [vmem:[%s37 + $0x90] sm:$0xff]
      %v4631 = vld [vmem:[%s37 + $0x98] sm:$0xff]
      %v4632 = vld [vmem:[%s37 + $0xa0] sm:$0xff]
      %v4633 = vld [vmem:[%s37 + $0xa8] sm:$0xff]
      %v4634 = vld [vmem:[%s37 + $0xb0] sm:$0xff]
      %v4635 = vld [vmem:[%s37 + $0xb8] sm:$0xff]
      %v4636 = vld [vmem:[%s37 + $0xc0] sm:$0xff]
      %v4637 = vld [vmem:[%s37 + $0xc8] sm:$0xff]
      %v4638 = vld [vmem:[%s37 + $0xd0] sm:$0xff]
      %v4639 = vld [vmem:[%s37 + $0xd8] sm:$0xff]
      %v4640 = vld [vmem:[%s37 + $0xe0] sm:$0xff]
      %v4641 = vld [vmem:[%s37 + $0xe8] sm:$0xff]
      %v4642 = vld [vmem:[%s37 + $0xf0] sm:$0xff]
      %v4643 = vld [vmem:[%s37 + $0xf8] sm:$0xff]
      %vm4644 = vcmp.gt.f32.partialorder %v4486, 0.0
      %vm4645 = vcmp.gt.f32.partialorder %v4489, 0.0
      %vm4646 = vcmp.gt.f32.partialorder %v4494, 0.0
      %vm4647 = vcmp.gt.f32.partialorder %v4497, 0.0
      %vm4648 = vcmp.gt.f32.partialorder %v4502, 0.0
      %vm4649 = vcmp.gt.f32.partialorder %v4505, 0.0
      %vm4650 = vcmp.gt.f32.partialorder %v4510, 0.0
      %vm4651 = vcmp.gt.f32.partialorder %v4513, 0.0
      %vm4652 = vcmp.gt.f32.partialorder %v4518, 0.0
      %vm4653 = vcmp.gt.f32.partialorder %v4521, 0.0
      %vm4654 = vcmp.gt.f32.partialorder %v4526, 0.0
      %vm4655 = vcmp.gt.f32.partialorder %v4529, 0.0
      %vm4656 = vcmp.gt.f32.partialorder %v4534, 0.0
      %vm4657 = vcmp.gt.f32.partialorder %v4537, 0.0
      %vm4658 = vcmp.gt.f32.partialorder %v4542, 0.0
      %vm4659 = vcmp.gt.f32.partialorder %v4545, 0.0
      %vm4660 = vcmp.gt.f32.partialorder %v4550, 0.0
      %vm4661 = vcmp.gt.f32.partialorder %v4553, 0.0
      %vm4662 = vcmp.gt.f32.partialorder %v4558, 0.0
      %vm4663 = vcmp.gt.f32.partialorder %v4561, 0.0
      %vm4664 = vcmp.gt.f32.partialorder %v4566, 0.0
      %vm4665 = vcmp.gt.f32.partialorder %v4569, 0.0
      %vm4666 = vcmp.gt.f32.partialorder %v4574, 0.0
      %vm4667 = vcmp.gt.f32.partialorder %v4577, 0.0
      %vm4668 = vcmp.gt.f32.partialorder %v4582, 0.0
      %vm4669 = vcmp.gt.f32.partialorder %v4585, 0.0
      %vm4670 = vcmp.gt.f32.partialorder %v4590, 0.0
      %vm4671 = vcmp.gt.f32.partialorder %v4593, 0.0
      %vm4672 = vcmp.gt.f32.partialorder %v4598, 0.0
      %vm4673 = vcmp.gt.f32.partialorder %v4601, 0.0
      %vm4674 = vcmp.gt.f32.partialorder %v4606, 0.0
      %vm4675 = vcmp.gt.f32.partialorder %v4609, 0.0
      %4677 = vset.pattern.permute.xlu0 0
      %4678 = vperm.xlu0 %4677, %v4612
      %v4679 = vpop.permute.xlu0 %4678
      %4682 = vset.pattern.permute.xlu0 0
      %4683 = vperm.xlu0 %4682, %v4613
      %v4684 = vpop.permute.xlu0 %4683
      %4687 = vset.pattern.permute.xlu0 0
      %4688 = vperm.xlu0 %4687, %v4614
      %v4689 = vpop.permute.xlu0 %4688
      %4692 = vset.pattern.permute.xlu0 0
      %4693 = vperm.xlu0 %4692, %v4615
      %v4694 = vpop.permute.xlu0 %4693
      %4697 = vset.pattern.permute.xlu0 0
      %4698 = vperm.xlu0 %4697, %v4616
      %v4699 = vpop.permute.xlu0 %4698
      %4702 = vset.pattern.permute.xlu0 0
      %4703 = vperm.xlu0 %4702, %v4617
      %v4704 = vpop.permute.xlu0 %4703
      %4707 = vset.pattern.permute.xlu0 0
      %4708 = vperm.xlu0 %4707, %v4618
      %v4709 = vpop.permute.xlu0 %4708
      %4712 = vset.pattern.permute.xlu0 0
      %4713 = vperm.xlu0 %4712, %v4619
      %v4714 = vpop.permute.xlu0 %4713
      %4717 = vset.pattern.permute.xlu0 0
      %4718 = vperm.xlu0 %4717, %v4620
      %v4719 = vpop.permute.xlu0 %4718
      %4722 = vset.pattern.permute.xlu0 0
      %4723 = vperm.xlu0 %4722, %v4621
      %v4724 = vpop.permute.xlu0 %4723
      %4727 = vset.pattern.permute.xlu0 0
      %4728 = vperm.xlu0 %4727, %v4622
      %v4729 = vpop.permute.xlu0 %4728
      %4732 = vset.pattern.permute.xlu0 0
      %4733 = vperm.xlu0 %4732, %v4623
      %v4734 = vpop.permute.xlu0 %4733
      %4737 = vset.pattern.permute.xlu0 0
      %4738 = vperm.xlu0 %4737, %v4624
      %v4739 = vpop.permute.xlu0 %4738
      %4742 = vset.pattern.permute.xlu0 0
      %4743 = vperm.xlu0 %4742, %v4625
      %v4744 = vpop.permute.xlu0 %4743
      %4747 = vset.pattern.permute.xlu0 0
      %4748 = vperm.xlu0 %4747, %v4626
      %v4749 = vpop.permute.xlu0 %4748
      %4752 = vset.pattern.permute.xlu0 0
      %4753 = vperm.xlu0 %4752, %v4627
      %v4754 = vpop.permute.xlu0 %4753
      %4757 = vset.pattern.permute.xlu0 0
      %4758 = vperm.xlu0 %4757, %v4628
      %v4759 = vpop.permute.xlu0 %4758
      %4762 = vset.pattern.permute.xlu0 0
      %4763 = vperm.xlu0 %4762, %v4629
      %v4764 = vpop.permute.xlu0 %4763
      %4767 = vset.pattern.permute.xlu0 0
      %4768 = vperm.xlu0 %4767, %v4630
      %v4769 = vpop.permute.xlu0 %4768
      %4772 = vset.pattern.permute.xlu0 0
      %4773 = vperm.xlu0 %4772, %v4631
      %v4774 = vpop.permute.xlu0 %4773
      %4777 = vset.pattern.permute.xlu0 0
      %4778 = vperm.xlu0 %4777, %v4632
      %v4779 = vpop.permute.xlu0 %4778
      %4782 = vset.pattern.permute.xlu0 0
      %4783 = vperm.xlu0 %4782, %v4633
      %v4784 = vpop.permute.xlu0 %4783
      %4787 = vset.pattern.permute.xlu0 0
      %4788 = vperm.xlu0 %4787, %v4634
      %v4789 = vpop.permute.xlu0 %4788
      %4792 = vset.pattern.permute.xlu0 0
      %4793 = vperm.xlu0 %4792, %v4635
      %v4794 = vpop.permute.xlu0 %4793
      %4797 = vset.pattern.permute.xlu0 0
      %4798 = vperm.xlu0 %4797, %v4636
      %v4799 = vpop.permute.xlu0 %4798
      %4802 = vset.pattern.permute.xlu0 0
      %4803 = vperm.xlu0 %4802, %v4637
      %v4804 = vpop.permute.xlu0 %4803
      %4807 = vset.pattern.permute.xlu0 0
      %4808 = vperm.xlu0 %4807, %v4638
      %v4809 = vpop.permute.xlu0 %4808
      %4812 = vset.pattern.permute.xlu0 0
      %4813 = vperm.xlu0 %4812, %v4639
      %v4814 = vpop.permute.xlu0 %4813
      %4817 = vset.pattern.permute.xlu0 0
      %4818 = vperm.xlu0 %4817, %v4640
      %v4819 = vpop.permute.xlu0 %4818
      %4822 = vset.pattern.permute.xlu0 0
      %4823 = vperm.xlu0 %4822, %v4641
      %v4824 = vpop.permute.xlu0 %4823
      %4827 = vset.pattern.permute.xlu0 0
      %4828 = vperm.xlu0 %4827, %v4642
      %v4829 = vpop.permute.xlu0 %4828
      %4832 = vset.pattern.permute.xlu0 0
      %4833 = vperm.xlu0 %4832, %v4643
      %v4834 = vpop.permute.xlu0 %4833
      %v4836 = vmul.f32 %v4679, %v4486
      %v4837 = vmul.f32 %v4684, %v4489
      %v4838 = vmul.f32 %v4689, %v4494
      %v4839 = vmul.f32 %v4694, %v4497
      %v4840 = vmul.f32 %v4699, %v4502
      %v4841 = vmul.f32 %v4704, %v4505
      %v4842 = vmul.f32 %v4709, %v4510
      %v4843 = vmul.f32 %v4714, %v4513
      %v4844 = vmul.f32 %v4719, %v4518
      %v4845 = vmul.f32 %v4724, %v4521
      %v4846 = vmul.f32 %v4729, %v4526
      %v4847 = vmul.f32 %v4734, %v4529
      %v4848 = vmul.f32 %v4739, %v4534
      %v4849 = vmul.f32 %v4744, %v4537
      %v4850 = vmul.f32 %v4749, %v4542
      %v4851 = vmul.f32 %v4754, %v4545
      %v4852 = vmul.f32 %v4759, %v4550
      %v4853 = vmul.f32 %v4764, %v4553
      %v4854 = vmul.f32 %v4769, %v4558
      %v4855 = vmul.f32 %v4774, %v4561
      %v4856 = vmul.f32 %v4779, %v4566
      %v4857 = vmul.f32 %v4784, %v4569
      %v4858 = vmul.f32 %v4789, %v4574
      %v4859 = vmul.f32 %v4794, %v4577
      %v4860 = vmul.f32 %v4799, %v4582
      %v4861 = vmul.f32 %v4804, %v4585
      %v4862 = vmul.f32 %v4809, %v4590
      %v4863 = vmul.f32 %v4814, %v4593
      %v4864 = vmul.f32 %v4819, %v4598
      %v4865 = vmul.f32 %v4824, %v4601
      %v4866 = vmul.f32 %v4829, %v4606
      %v4867 = vmul.f32 %v4834, %v4609
      %v4868 = vsel %vm4644, %v4486, %v4836
      %v4869 = vsel %vm4645, %v4489, %v4837
      %v4870 = vsel %vm4646, %v4494, %v4838
      %v4871 = vsel %vm4647, %v4497, %v4839
      %v4872 = vsel %vm4648, %v4502, %v4840
      %v4873 = vsel %vm4649, %v4505, %v4841
      %v4874 = vsel %vm4650, %v4510, %v4842
      %v4875 = vsel %vm4651, %v4513, %v4843
      %v4876 = vsel %vm4652, %v4518, %v4844
      %v4877 = vsel %vm4653, %v4521, %v4845
      %v4878 = vsel %vm4654, %v4526, %v4846
      %v4879 = vsel %vm4655, %v4529, %v4847
      %v4880 = vsel %vm4656, %v4534, %v4848
      %v4881 = vsel %vm4657, %v4537, %v4849
      %v4882 = vsel %vm4658, %v4542, %v4850
      %v4883 = vsel %vm4659, %v4545, %v4851
      %v4884 = vsel %vm4660, %v4550, %v4852
      %v4885 = vsel %vm4661, %v4553, %v4853
      %v4886 = vsel %vm4662, %v4558, %v4854
      %v4887 = vsel %vm4663, %v4561, %v4855
      %v4888 = vsel %vm4664, %v4566, %v4856
      %v4889 = vsel %vm4665, %v4569, %v4857
      %v4890 = vsel %vm4666, %v4574, %v4858
      %v4891 = vsel %vm4667, %v4577, %v4859
      %v4892 = vsel %vm4668, %v4582, %v4860
      %v4893 = vsel %vm4669, %v4585, %v4861
      %v4894 = vsel %vm4670, %v4590, %v4862
      %v4895 = vsel %vm4671, %v4593, %v4863
      %v4896 = vsel %vm4672, %v4598, %v4864
      %v4897 = vsel %vm4673, %v4601, %v4865
      %v4898 = vsel %vm4674, %v4606, %v4866
      %v4899 = vsel %vm4675, %v4609, %v4867
      %v4900 = vld [vmem:[%s45] sm:$0xff]
      %v4901 = vld [vmem:[%s45 + $0x8] sm:$0xff]
      %v4902 = vld [vmem:[%s45 + $0x10] sm:$0xff]
      %v4903 = vpack.c.bf16 %v4869, %v4868
      %v4904 = vpack.c.bf16 %v4871, %v4870
      %v4905 = vpack.c.bf16 %v4873, %v4872
      %v4906 = vpack.c.bf16 %v4875, %v4874
      %v4907 = vpack.c.bf16 %v4877, %v4876
      %v4908 = vpack.c.bf16 %v4879, %v4878
      %v4909 = vpack.c.bf16 %v4881, %v4880
      %v4910 = vpack.c.bf16 %v4883, %v4882
      %v4911 = vpack.c.bf16 %v4885, %v4884
      %v4912 = vpack.c.bf16 %v4887, %v4886
      %v4913 = vpack.c.bf16 %v4889, %v4888
      %v4914 = vpack.c.bf16 %v4891, %v4890
      %v4915 = vpack.c.bf16 %v4893, %v4892
      %v4916 = vpack.c.bf16 %v4895, %v4894
      %v4917 = vpack.c.bf16 %v4897, %v4896
      %v4918 = vpack.c.bf16 %v4899, %v4898
      %v4922 = vunpack.c.l.b16 %v4900
      %v4923 = vunpack.c.h.b16 %v4900
      %v4924 = vunpack.c.l.b16 %v4901
      %v4925 = vunpack.c.h.b16 %v4901
      %v4926 = vunpack.c.l.b16 %v4902
      %v4927 = vunpack.c.h.b16 %v4902
      %v4928 = vpack.c.b16 %v4924, %v4922
      %v4929 = vpack.c.b16 %v4925, %v4923
      %v4930 = vpack.c.b16 %v4926, %v4926
      %v4931 = vpack.c.b16 %v4927, %v4927
      %4936 = vmatprep.subr.bf16.mxu0 0
      %4937 = vmatpush1.bf16.msra.mxu0 %v4903
      %4938 = vmatprep.subr.bf16.mxu0 0
      %4939 = vmatpush1.bf16.msra.mxu0 %v4904
      %4940 = vmatprep.subr.bf16.mxu0 0
      %4941 = vmatpush1.bf16.msra.mxu0 %v4905
      %4942 = vmatprep.subr.bf16.mxu0 0
      %4943 = vmatpush1.bf16.msra.mxu0 %v4906
      %4944 = vmatprep.subr.bf16.mxu0 0
      %4945 = vmatpush1.bf16.msra.mxu0 %v4907
      %4946 = vmatprep.subr.bf16.mxu0 0
      %4947 = vmatpush1.bf16.msra.mxu0 %v4908
      %4948 = vmatprep.subr.bf16.mxu0 0
      %4949 = vmatpush1.bf16.msra.mxu0 %v4909
      %4950 = vmatprep.subr.bf16.mxu0 0
      %4951 = vmatpush1.bf16.msra.mxu0 %v4910
      %4952 = vmatprep.subr.bf16.mxu0 0
      %4953 = vmatpush1.bf16.msra.mxu0 %v4911
      %4954 = vmatprep.subr.bf16.mxu0 0
      %4955 = vmatpush1.bf16.msra.mxu0 %v4912
      %4956 = vmatprep.subr.bf16.mxu0 0
      %4957 = vmatpush1.bf16.msra.mxu0 %v4913
      %4958 = vmatprep.subr.bf16.mxu0 0
      %4959 = vmatpush1.bf16.msra.mxu0 %v4914
      %4960 = vmatprep.subr.bf16.mxu0 0
      %4961 = vmatpush1.bf16.msra.mxu0 %v4915
      %4962 = vmatprep.subr.bf16.mxu0 0
      %4963 = vmatpush1.bf16.msra.mxu0 %v4916
      %4964 = vmatprep.subr.bf16.mxu0 0
      %4965 = vmatpush1.bf16.msra.mxu0 %v4917
      %4966 = vmatprep.subr.bf16.mxu0 0
      %4967 = vmatpush1.bf16.msra.mxu0 %v4918
      %4968 = vmatprep.mubr.bf16.mxu0 %v4929
      %4969 = vmatmul.mubr.bf16.gmra.mrb[0].mxu0 %v4928
      %v4970 = vpop.f32.mrb[0].mxu0
      %v4971 = vadd.f32 0.0, %v4970
      %v4972 = vpop.f32.mrb[0].mxu0
      %v4973 = vpop.f32.mrb[0].mxu0
      %v4974 = vadd.f32 0.0, %v4973
      %v4975 = vpop.f32.mrb[0].mxu0
      %4976 = vmatprep.mubr.bf16.mxu0 %v4931
      %4977 = vmatmul.mubr.bf16.gmra.mrb[0].mxu0 %v4930
      %v4978 = vpop.f32.mrb[0].mxu0
      %v4979 = vadd.f32 0.0, %v4978
      %v4980 = vpop.f32.mrb[0].mxu0
      %v4981 = vpop.f32.mrb[0].mxu0
      %v4982 = vpop.f32.mrb[0].mxu0
      %4983 = vdwg.mxu0
      %v4984 = vpack.c.bf16 %v4974, %v4971
      %v4985 = vpack.c.bf16 %v4979, %v4979
      %v4986 = vld [vmem:[%s59] sm:$0xff]
      %v4987 = vld [vmem:[%s59 + $0x8] sm:$0xff]
      %v4988 = vld [vmem:[%s59 + $0x10] sm:$0xff]
      %v4989 = vld [vmem:[%s59 + $0x18] sm:$0xff]
      %v4990 = vld [vmem:[%s59 + $0x20] sm:$0xff]
      %v4991 = vld [vmem:[%s59 + $0x28] sm:$0xff]
      %v4992 = vld [vmem:[%s59 + $0x30] sm:$0xff]
      %v4993 = vld [vmem:[%s59 + $0x38] sm:$0xff]
      %v5002 = vunpack.c.l.b16 %v4986
      %v5003 = vunpack.c.h.b16 %v4986
      %v5004 = vunpack.c.l.b16 %v4987
      %v5005 = vunpack.c.h.b16 %v4987
      %v5006 = vunpack.c.l.b16 %v4988
      %v5007 = vunpack.c.h.b16 %v4988
      %v5008 = vunpack.c.l.b16 %v4989
      %v5009 = vunpack.c.h.b16 %v4989
      %v5010 = vunpack.c.l.b16 %v4990
      %v5011 = vunpack.c.h.b16 %v4990
      %v5012 = vunpack.c.l.b16 %v4991
      %v5013 = vunpack.c.h.b16 %v4991
      %v5014 = vunpack.c.l.b16 %v4992
      %v5015 = vunpack.c.h.b16 %v4992
      %v5016 = vunpack.c.l.b16 %v4993
      %v5017 = vunpack.c.h.b16 %v4993
      %v5018 = vpack.c.b16 %v5004, %v5002
      %v5019 = vpack.c.b16 %v5005, %v5003
      %v5020 = vpack.c.b16 %v5008, %v5006
      %v5021 = vpack.c.b16 %v5009, %v5007
      %v5022 = vpack.c.b16 %v5012, %v5010
      %v5023 = vpack.c.b16 %v5013, %v5011
      %v5024 = vpack.c.b16 %v5016, %v5014
      %v5025 = vpack.c.b16 %v5017, %v5015
      %vm5034 = vcmask 523264
      %v5036 = vsel %vm5034, %v4984, 0
      %v5039 = vsel %vm5034, %v4985, 0
      %5041 = vmatprep.subr.bf16.mxu0 %v5019
      %5042 = vmatpush1.bf16.msra.mxu0 %v5018
      %5043 = vmatprep.subr.bf16.mxu0 %v5021
      %5044 = vmatpush1.bf16.msra.mxu0 %v5020
      %5045 = vmatprep.subr.bf16.mxu0 %v5023
      %5046 = vmatpush1.bf16.msra.mxu0 %v5022
      %5047 = vmatprep.subr.bf16.mxu0 %v5025
      %5048 = vmatpush1.bf16.msra.mxu0 %v5024
      %5049 = vmatprep.subr.bf16.mxu0 0
      %5050 = vmatpush1.bf16.msra.mxu0 0
      %5051 = vmatprep.subr.bf16.mxu0 0
      %5052 = vmatpush1.bf16.msra.mxu0 0
      %5053 = vmatprep.subr.bf16.mxu0 0
      %5054 = vmatpush1.bf16.msra.mxu0 0
      %5055 = vmatprep.subr.bf16.mxu0 0
      %5056 = vmatpush1.bf16.msra.mxu0 0
      %5057 = vmatprep.subr.bf16.mxu0 0
      %5058 = vmatpush1.bf16.msra.mxu0 0
      %5059 = vmatprep.subr.bf16.mxu0 0
      %5060 = vmatpush1.bf16.msra.mxu0 0
      %5061 = vmatprep.subr.bf16.mxu0 0
      %5062 = vmatpush1.bf16.msra.mxu0 0
      %5063 = vmatprep.subr.bf16.mxu0 0
      %5064 = vmatpush1.bf16.msra.mxu0 0
      %5065 = vmatprep.subr.bf16.mxu0 0
      %5066 = vmatpush1.bf16.msra.mxu0 0
      %5067 = vmatprep.subr.bf16.mxu0 0
      %5068 = vmatpush1.bf16.msra.mxu0 0
      %5069 = vmatprep.subr.bf16.mxu0 0
      %5070 = vmatpush1.bf16.msra.mxu0 0
      %5071 = vmatprep.subr.bf16.mxu0 0
      %5072 = vmatpush1.bf16.msra.mxu0 0
      %5073 = vmatprep.mubr.bf16.mxu0 0
      %5074 = vmatmul.mubr.bf16.gmra.mrb[0].mxu0 %v5036
      %v5075 = vpop.f32.mrb[0].mxu0
      %v5076 = vadd.f32 0.0, %v5075
      %v5077 = vpop.f32.mrb[0].mxu0
      %v5078 = vadd.f32 0.0, %v5077
      %v5079 = vpop.f32.mrb[0].mxu0
      %v5080 = vadd.f32 0.0, %v5079
      %v5081 = vpop.f32.mrb[0].mxu0
      %v5082 = vadd.f32 0.0, %v5081
      %5083 = vmatprep.mubr.bf16.mxu0 0
      %5084 = vmatmul.mubr.bf16.gmra.mrb[0].mxu0 %v5039
      %v5085 = vpop.f32.mrb[0].mxu0
      %v5086 = vadd.f32 0.0, %v5085
      %v5087 = vpop.f32.mrb[0].mxu0
      %v5088 = vadd.f32 0.0, %v5087
      %v5089 = vpop.f32.mrb[0].mxu0
      %v5090 = vpop.f32.mrb[0].mxu0
      %5091 = vdwg.mxu0
      %v5092 = vld [vmem:[%s43] sm:$0xf]
      %v5093 = vld [vmem:[%s43 + $0x4] sm:$0xf]
      %v5094 = vld [vmem:[%s43 + $0x8] sm:$0xf]
      %v5095 = vld [vmem:[%s1069] sm:$0xff]
      %v5096 = vld [vmem:[%s1069 + $0x8] sm:$0xff]
      %v5097 = vld [vmem:[%s1069 + $0x10] sm:$0xff]
      %v5101 = vunpack.c.l.b16 %v5092
      %v5102 = vunpack.c.l.b16 %v5093
      %v5103 = vunpack.c.l.b16 %v5094
      %v5104 = vpack.c.b16 %v5102, %v5101
      %v5105 = vpack.c.b16 %v5103, %v5103
      %v5109 = vunpack.c.l.b16 %v5095
      %v5110 = vunpack.c.h.b16 %v5095
      %v5111 = vunpack.c.l.b16 %v5096
      %v5112 = vunpack.c.h.b16 %v5096
      %v5113 = vunpack.c.l.b16 %v5097
      %v5114 = vunpack.c.h.b16 %v5097
      %v5115 = vpack.c.b16 %v5111, %v5109
      %v5116 = vpack.c.b16 %v5112, %v5110
      %v5117 = vpack.c.b16 %v5113, %v5113
      %v5118 = vpack.c.b16 %v5114, %v5114
      %vm5121 = vcmask 195584
      %v5123 = vsel %vm5121, %v5104, 0
      %v5126 = vsel %vm5121, %v5105, 0
      %vm5128 = vcmask 1043456
      %v5130 = vsel %vm5128, %v5117, 0
      %v5133 = vsel %vm5128, %v5118, 0
      %5135 = vmatprep.subr.bf16.mxu0 %v5116
      %5136 = vmatpush1.bf16.msra.mxu0 %v5115
      %5137 = vmatprep.subr.bf16.mxu0 %v5133
      %5138 = vmatpush1.bf16.msra.mxu0 %v5130
      %5139 = vmatprep.subr.bf16.mxu0 0
      %5140 = vmatpush1.bf16.msra.mxu0 0
      %5141 = vmatprep.subr.bf16.mxu0 0
      %5142 = vmatpush1.bf16.msra.mxu0 0
      %5143 = vmatprep.subr.bf16.mxu0 0
      %5144 = vmatpush1.bf16.msra.mxu0 0
      %5145 = vmatprep.subr.bf16.mxu0 0
      %5146 = vmatpush1.bf16.msra.mxu0 0
      %5147 = vmatprep.subr.bf16.mxu0 0
      %5148 = vmatpush1.bf16.msra.mxu0 0
      %5149 = vmatprep.subr.bf16.mxu0 0
      %5150 = vmatpush1.bf16.msra.mxu0 0
      %5151 = vmatprep.subr.bf16.mxu0 0
      %5152 = vmatpush1.bf16.msra.mxu0 0
      %5153 = vmatprep.subr.bf16.mxu0 0
      %5154 = vmatpush1.bf16.msra.mxu0 0
      %5155 = vmatprep.subr.bf16.mxu0 0
      %5156 = vmatpush1.bf16.msra.mxu0 0
      %5157 = vmatprep.subr.bf16.mxu0 0
      %5158 = vmatpush1.bf16.msra.mxu0 0
      %5159 = vmatprep.subr.bf16.mxu0 0
      %5160 = vmatpush1.bf16.msra.mxu0 0
      %5161 = vmatprep.subr.bf16.mxu0 0
      %5162 = vmatpush1.bf16.msra.mxu0 0
      %5163 = vmatprep.subr.bf16.mxu0 0
      %5164 = vmatpush1.bf16.msra.mxu0 0
      %5165 = vmatprep.subr.bf16.mxu0 0
      %5166 = vmatpush1.bf16.msra.mxu0 0
      %5167 = vmatprep.mubr.bf16.mxu0 0
      %5168 = vmatmul.mubr.bf16.gmra.mrb[0].mxu0 %v5123
      %v5169 = vpop.f32.mrb[0].mxu0
      %v5170 = vadd.f32 %v5076, %v5169
      %v5171 = vpop.f32.mrb[0].mxu0
      %v5172 = vadd.f32 %v5078, %v5171
      %v5173 = vpop.f32.mrb[0].mxu0
      %v5174 = vadd.f32 %v5080, %v5173
      %v5175 = vpop.f32.mrb[0].mxu0
      %v5176 = vadd.f32 %v5082, %v5175
      %5177 = vmatprep.mubr.bf16.mxu0 0
      %5178 = vmatmul.mubr.bf16.gmra.mrb[0].mxu0 %v5126
      %v5179 = vpop.f32.mrb[0].mxu0
      %v5180 = vadd.f32 %v5086, %v5179
      %v5181 = vpop.f32.mrb[0].mxu0
      %v5182 = vadd.f32 %v5088, %v5181
      %v5183 = vpop.f32.mrb[0].mxu0
      %v5184 = vpop.f32.mrb[0].mxu0
      %5185 = vdwg.mxu0
      %v5186 = vld [vmem:[%s47] sm:$0xff]
      %v5187 = vld [vmem:[%s47 + $0x8] sm:$0xff]
      %v5188 = vld [vmem:[%s47 + $0x10] sm:$0xff]
      %5190 = vset.pattern.permute.xlu0 0
      %5191 = vperm.xlu0 %5190, %v5186
      %v5192 = vpop.permute.xlu0 %5191
      %5195 = vset.pattern.permute.xlu0 0
      %5196 = vperm.xlu0 %5195, %v5187
      %v5197 = vpop.permute.xlu0 %5196
      %5200 = vset.pattern.permute.xlu0 0
      %5201 = vperm.xlu0 %5200, %v5188
      %v5202 = vpop.permute.xlu0 %5201
      %v5204 = vadd.f32 %v5170, %v5192
      %v5205 = vadd.f32 %v5172, %v5192
      %v5206 = vadd.f32 %v5174, %v5197
      %v5207 = vadd.f32 %v5176, %v5197
      %v5208 = vadd.f32 %v5180, %v5202
      %v5209 = vadd.f32 %v5182, %v5202
      %v5210 = vld [vmem:[%s49] sm:$0xff]
      %v5211 = vld [vmem:[%s49 + $0x8] sm:$0xff]
      %v5212 = vld [vmem:[%s49 + $0x10] sm:$0xff]
      %vm5213 = vcmp.gt.f32.partialorder %v5204, 0.0
      %vm5214 = vcmp.gt.f32.partialorder %v5205, 0.0
      %vm5215 = vcmp.gt.f32.partialorder %v5206, 0.0
      %vm5216 = vcmp.gt.f32.partialorder %v5207, 0.0
      %vm5217 = vcmp.gt.f32.partialorder %v5208, 0.0
      %vm5218 = vcmp.gt.f32.partialorder %v5209, 0.0
      %5220 = vset.pattern.permute.xlu0 0
      %5221 = vperm.xlu0 %5220, %v5210
      %v5222 = vpop.permute.xlu0 %5221
      %5225 = vset.pattern.permute.xlu0 0
      %5226 = vperm.xlu0 %5225, %v5211
      %v5227 = vpop.permute.xlu0 %5226
      %5230 = vset.pattern.permute.xlu0 0
      %5231 = vperm.xlu0 %5230, %v5212
      %v5232 = vpop.permute.xlu0 %5231
      %v5234 = vmul.f32 %v5222, %v5204
      %v5235 = vmul.f32 %v5222, %v5205
      %v5236 = vmul.f32 %v5227, %v5206
      %v5237 = vmul.f32 %v5227, %v5207
      %v5238 = vmul.f32 %v5232, %v5208
      %v5239 = vmul.f32 %v5232, %v5209
      %v5240 = vsel %vm5213, %v5204, %v5234
      %v5241 = vsel %vm5214, %v5205, %v5235
      %v5242 = vsel %vm5215, %v5206, %v5236
      %v5243 = vsel %vm5216, %v5207, %v5237
      %v5244 = vsel %vm5217, %v5208, %v5238
      %v5245 = vsel %vm5218, %v5209, %v5239
      %5249 = vrot.lane.b32.xlu0 %v5241, 17
      %v5250 = vpop.permute.xlu0 %5249
      %5251 = vrot.lane.b32.xlu0 %v5243, 17
      %v5252 = vpop.permute.xlu0 %5251
      %5253 = vrot.lane.b32.xlu0 %v5245, 17
      %v5254 = vpop.permute.xlu0 %5253
      %5261 = vrot.lane.b32.xlu0 %v5240, 17
      %v5262 = vpop.permute.xlu0 %5261
      %5263 = vrot.lane.b32.xlu0 %v5242, 17
      %v5264 = vpop.permute.xlu0 %5263
      %5265 = vrot.lane.b32.xlu0 %v5244, 17
      %v5266 = vpop.permute.xlu0 %5265
      %vm5267 = vcmask 138240
      %v5268 = vsel %vm5267, %v5262, %v5250
      %v5269 = vsel %vm5267, %v5264, %v5252
      %v5270 = vsel %vm5267, %v5266, %v5254
      %v5277 = vsel %vm5267, %v5250, %v5262
      %v5278 = vsel %vm5267, %v5252, %v5264
      %v5279 = vsel %vm5267, %v5254, %v5266
      %v5280 = vld [vmem:[%s57] sm:$0x3]
      %v5282 = vlaneseq
      %v5283 = vshrl.u32 %v5282, 7
      %v5284 = vsub.s32 0, %v5283
      %v5285 = vrot.slane %v5280, %v5284
      %v5286 = vlaneseq
      %v5287 = vshrl.u32 %v5286, 7
      %v5288 = vsub.s32 1, %v5287
      %v5289 = vrot.slane %v5280, %v5288
      %v5292 = vmul.f32 %v5277, %v5285
      %v5293 = vmul.f32 %v5268, %v5289
      %v5294 = vmul.f32 %v5278, %v5285
      %v5295 = vmul.f32 %v5269, %v5289
      %v5296 = vmul.f32 %v5279, %v5285
      %v5297 = vmul.f32 %v5270, %v5289
      %5298 = vrot.lane.b32.xlu0 %v5241, 16
      %v5299 = vpop.permute.xlu0 %5298
      %5300 = vrot.lane.b32.xlu0 %v5243, 16
      %v5301 = vpop.permute.xlu0 %5300
      %5302 = vrot.lane.b32.xlu0 %v5245, 16
      %v5303 = vpop.permute.xlu0 %5302
      %5307 = vrot.lane.b32.xlu0 %v5240, 16
      %v5308 = vpop.permute.xlu0 %5307
      %5309 = vrot.lane.b32.xlu0 %v5242, 16
      %v5310 = vpop.permute.xlu0 %5309
      %5311 = vrot.lane.b32.xlu0 %v5244, 16
      %v5312 = vpop.permute.xlu0 %5311
      %v5313 = vsel %vm3193, %v5308, %v5299
      %v5314 = vsel %vm3193, %v5310, %v5301
      %v5315 = vsel %vm3193, %v5312, %v5303
      %v5322 = vsel %vm3193, %v5299, %v5308
      %v5323 = vsel %vm3193, %v5301, %v5310
      %v5324 = vsel %vm3193, %v5303, %v5312
      %s5325 = scalar_lea.vmem %s57, 2
      %v5326 = vld [vmem:[%s5325] sm:$0x3]
      %v5328 = vlaneseq
      %v5329 = vshrl.u32 %v5328, 7
      %v5330 = vsub.s32 0, %v5329
      %v5331 = vrot.slane %v5326, %v5330
      %v5332 = vlaneseq
      %v5333 = vshrl.u32 %v5332, 7
      %v5334 = vsub.s32 1, %v5333
      %v5335 = vrot.slane %v5326, %v5334
      %v5338 = vmul.f32 %v5322, %v5331
      %v5339 = vmul.f32 %v5313, %v5335
      %v5340 = vmul.f32 %v5323, %v5331
      %v5341 = vmul.f32 %v5314, %v5335
      %v5342 = vmul.f32 %v5324, %v5331
      %v5343 = vmul.f32 %v5315, %v5335
      %5344 = vrot.lane.b32.xlu0 %v5241, 15
      %v5345 = vpop.permute.xlu0 %5344
      %5346 = vrot.lane.b32.xlu0 %v5243, 15
      %v5347 = vpop.permute.xlu0 %5346
      %5348 = vrot.lane.b32.xlu0 %v5245, 15
      %v5349 = vpop.permute.xlu0 %5348
      %5353 = vrot.lane.b32.xlu0 %v5240, 15
      %v5354 = vpop.permute.xlu0 %5353
      %5355 = vrot.lane.b32.xlu0 %v5242, 15
      %v5356 = vpop.permute.xlu0 %5355
      %5357 = vrot.lane.b32.xlu0 %v5244, 15
      %v5358 = vpop.permute.xlu0 %5357
      %v5359 = vsel %vm1657, %v5354, %v5345
      %v5360 = vsel %vm1657, %v5356, %v5347
      %v5361 = vsel %vm1657, %v5358, %v5349
      %v5368 = vsel %vm1657, %v5345, %v5354
      %v5369 = vsel %vm1657, %v5347, %v5356
      %v5370 = vsel %vm1657, %v5349, %v5358
      %s5371 = scalar_lea.vmem %s57, 4
      %v5372 = vld [vmem:[%s5371] sm:$0x3]
      %v5374 = vlaneseq
      %v5375 = vshrl.u32 %v5374, 7
      %v5376 = vsub.s32 0, %v5375
      %v5377 = vrot.slane %v5372, %v5376
      %v5378 = vlaneseq
      %v5379 = vshrl.u32 %v5378, 7
      %v5380 = vsub.s32 1, %v5379
      %v5381 = vrot.slane %v5372, %v5380
      %v5384 = vmul.f32 %v5368, %v5377
      %v5385 = vmul.f32 %v5359, %v5381
      %v5386 = vmul.f32 %v5369, %v5377
      %v5387 = vmul.f32 %v5360, %v5381
      %v5388 = vmul.f32 %v5370, %v5377
      %v5389 = vmul.f32 %v5361, %v5381
      %5390 = vrot.lane.b32.xlu0 %v5241, 1
      %v5391 = vpop.permute.xlu0 %5390
      %5392 = vrot.lane.b32.xlu0 %v5243, 1
      %v5393 = vpop.permute.xlu0 %5392
      %5394 = vrot.lane.b32.xlu0 %v5245, 1
      %v5395 = vpop.permute.xlu0 %5394
      %5399 = vrot.lane.b32.xlu0 %v5240, 1
      %v5400 = vpop.permute.xlu0 %5399
      %5401 = vrot.lane.b32.xlu0 %v5242, 1
      %v5402 = vpop.permute.xlu0 %5401
      %5403 = vrot.lane.b32.xlu0 %v5244, 1
      %v5404 = vpop.permute.xlu0 %5403
      %v5405 = vsel %vm1600, %v5400, %v5391
      %v5406 = vsel %vm1600, %v5402, %v5393
      %v5407 = vsel %vm1600, %v5404, %v5395
      %v5414 = vsel %vm1600, %v5391, %v5400
      %v5415 = vsel %vm1600, %v5393, %v5402
      %v5416 = vsel %vm1600, %v5395, %v5404
      %s5417 = scalar_lea.vmem %s57, 6
      %v5418 = vld [vmem:[%s5417] sm:$0x3]
      %v5420 = vlaneseq
      %v5421 = vshrl.u32 %v5420, 7
      %v5422 = vsub.s32 0, %v5421
      %v5423 = vrot.slane %v5418, %v5422
      %v5424 = vlaneseq
      %v5425 = vshrl.u32 %v5424, 7
      %v5426 = vsub.s32 1, %v5425
      %v5427 = vrot.slane %v5418, %v5426
      %v5430 = vmul.f32 %v5414, %v5423
      %v5431 = vmul.f32 %v5405, %v5427
      %v5432 = vmul.f32 %v5415, %v5423
      %v5433 = vmul.f32 %v5406, %v5427
      %v5434 = vmul.f32 %v5416, %v5423
      %v5435 = vmul.f32 %v5407, %v5427
      %5436 = vrot.lane.b32.xlu0 %v5240, 127
      %v5437 = vpop.permute.xlu0 %5436
      %5438 = vrot.lane.b32.xlu0 %v5241, 127
      %v5439 = vpop.permute.xlu0 %5438
      %5440 = vrot.lane.b32.xlu0 %v5242, 127
      %v5441 = vpop.permute.xlu0 %5440
      %5442 = vrot.lane.b32.xlu0 %v5243, 127
      %v5443 = vpop.permute.xlu0 %5442
      %5444 = vrot.lane.b32.xlu0 %v5244, 127
      %v5445 = vpop.permute.xlu0 %5444
      %5446 = vrot.lane.b32.xlu0 %v5245, 127
      %v5447 = vpop.permute.xlu0 %5446
      %vm5448 = vcmask 1039360
      %v5449 = vsel %vm5448, %v5437, %v5439
      %v5450 = vsel %vm5448, %v5441, %v5443
      %v5451 = vsel %vm5448, %v5445, %v5447
      %v5461 = vsel %vm5448, %v5439, %v5437
      %v5462 = vsel %vm5448, %v5443, %v5441
      %v5463 = vsel %vm5448, %v5447, %v5445
      %s5464 = scalar_lea.vmem %s57, 10
      %v5465 = vld [vmem:[%s5464] sm:$0x3]
      %v5467 = vlaneseq
      %v5468 = vshrl.u32 %v5467, 7
      %v5469 = vsub.s32 0, %v5468
      %v5470 = vrot.slane %v5465, %v5469
      %v5471 = vlaneseq
      %v5472 = vshrl.u32 %v5471, 7
      %v5473 = vsub.s32 1, %v5472
      %v5474 = vrot.slane %v5465, %v5473
      %v5477 = vmul.f32 %v5449, %v5470
      %v5478 = vmul.f32 %v5461, %v5474
      %v5479 = vmul.f32 %v5450, %v5470
      %v5480 = vmul.f32 %v5462, %v5474
      %v5481 = vmul.f32 %v5451, %v5470
      %v5482 = vmul.f32 %v5463, %v5474
      %5483 = vrot.lane.b32.xlu0 %v5240, 113
      %v5484 = vpop.permute.xlu0 %5483
      %5485 = vrot.lane.b32.xlu0 %v5241, 113
      %v5486 = vpop.permute.xlu0 %5485
      %5487 = vrot.lane.b32.xlu0 %v5242, 113
      %v5488 = vpop.permute.xlu0 %5487
      %5489 = vrot.lane.b32.xlu0 %v5243, 113
      %v5490 = vpop.permute.xlu0 %5489
      %5491 = vrot.lane.b32.xlu0 %v5244, 113
      %v5492 = vpop.permute.xlu0 %5491
      %5493 = vrot.lane.b32.xlu0 %v5245, 113
      %v5494 = vpop.permute.xlu0 %5493
      %vm5495 = vcmask 924672
      %v5496 = vsel %vm5495, %v5484, %v5486
      %v5497 = vsel %vm5495, %v5488, %v5490
      %v5498 = vsel %vm5495, %v5492, %v5494
      %v5508 = vsel %vm5495, %v5486, %v5484
      %v5509 = vsel %vm5495, %v5490, %v5488
      %v5510 = vsel %vm5495, %v5494, %v5492
      %s5511 = scalar_lea.vmem %s57, 12
      %v5512 = vld [vmem:[%s5511] sm:$0x3]
      %v5514 = vlaneseq
      %v5515 = vshrl.u32 %v5514, 7
      %v5516 = vsub.s32 0, %v5515
      %v5517 = vrot.slane %v5512, %v5516
      %v5518 = vlaneseq
      %v5519 = vshrl.u32 %v5518, 7
      %v5520 = vsub.s32 1, %v5519
      %v5521 = vrot.slane %v5512, %v5520
      %v5524 = vmul.f32 %v5496, %v5517
      %v5525 = vmul.f32 %v5508, %v5521
      %v5526 = vmul.f32 %v5497, %v5517
      %v5527 = vmul.f32 %v5509, %v5521
      %v5528 = vmul.f32 %v5498, %v5517
      %v5529 = vmul.f32 %v5510, %v5521
      %5530 = vrot.lane.b32.xlu0 %v5240, 112
      %v5531 = vpop.permute.xlu0 %5530
      %5532 = vrot.lane.b32.xlu0 %v5241, 112
      %v5533 = vpop.permute.xlu0 %5532
      %5534 = vrot.lane.b32.xlu0 %v5242, 112
      %v5535 = vpop.permute.xlu0 %5534
      %5536 = vrot.lane.b32.xlu0 %v5243, 112
      %v5537 = vpop.permute.xlu0 %5536
      %5538 = vrot.lane.b32.xlu0 %v5244, 112
      %v5539 = vpop.permute.xlu0 %5538
      %5540 = vrot.lane.b32.xlu0 %v5245, 112
      %v5541 = vpop.permute.xlu0 %5540
      %vm5542 = vcmask 916480
      %v5543 = vsel %vm5542, %v5531, %v5533
      %v5544 = vsel %vm5542, %v5535, %v5537
      %v5545 = vsel %vm5542, %v5539, %v5541
      %v5555 = vsel %vm5542, %v5533, %v5531
      %v5556 = vsel %vm5542, %v5537, %v5535
      %v5557 = vsel %vm5542, %v5541, %v5539
      %s5558 = scalar_lea.vmem %s57, 14
      %v5559 = vld [vmem:[%s5558] sm:$0x3]
      %v5561 = vlaneseq
      %v5562 = vshrl.u32 %v5561, 7
      %v5563 = vsub.s32 0, %v5562
      %v5564 = vrot.slane %v5559, %v5563
      %v5565 = vlaneseq
      %v5566 = vshrl.u32 %v5565, 7
      %v5567 = vsub.s32 1, %v5566
      %v5568 = vrot.slane %v5559, %v5567
      %v5571 = vmul.f32 %v5543, %v5564
      %v5572 = vmul.f32 %v5555, %v5568
      %v5573 = vmul.f32 %v5544, %v5564
      %v5574 = vmul.f32 %v5556, %v5568
      %v5575 = vmul.f32 %v5545, %v5564
      %v5576 = vmul.f32 %v5557, %v5568
      %5577 = vrot.lane.b32.xlu0 %v5240, 111
      %v5578 = vpop.permute.xlu0 %5577
      %5579 = vrot.lane.b32.xlu0 %v5241, 111
      %v5580 = vpop.permute.xlu0 %5579
      %5581 = vrot.lane.b32.xlu0 %v5242, 111
      %v5582 = vpop.permute.xlu0 %5581
      %5583 = vrot.lane.b32.xlu0 %v5243, 111
      %v5584 = vpop.permute.xlu0 %5583
      %5585 = vrot.lane.b32.xlu0 %v5244, 111
      %v5586 = vpop.permute.xlu0 %5585
      %5587 = vrot.lane.b32.xlu0 %v5245, 111
      %v5588 = vpop.permute.xlu0 %5587
      %vm5589 = vcmask 908288
      %v5590 = vsel %vm5589, %v5578, %v5580
      %v5591 = vsel %vm5589, %v5582, %v5584
      %v5592 = vsel %vm5589, %v5586, %v5588
      %v5602 = vsel %vm5589, %v5580, %v5578
      %v5603 = vsel %vm5589, %v5584, %v5582
      %v5604 = vsel %vm5589, %v5588, %v5586
      %s5605 = scalar_lea.vmem %s57, 16
      %v5606 = vld [vmem:[%s5605] sm:$0x3]
      %v5608 = vlaneseq
      %v5609 = vshrl.u32 %v5608, 7
      %v5610 = vsub.s32 0, %v5609
      %v5611 = vrot.slane %v5606, %v5610
      %v5612 = vlaneseq
      %v5613 = vshrl.u32 %v5612, 7
      %v5614 = vsub.s32 1, %v5613
      %v5615 = vrot.slane %v5606, %v5614
      %v5618 = vmul.f32 %v5590, %v5611
      %v5619 = vmul.f32 %v5602, %v5615
      %v5620 = vmul.f32 %v5591, %v5611
      %v5621 = vmul.f32 %v5603, %v5615
      %v5622 = vmul.f32 %v5592, %v5611
      %v5623 = vmul.f32 %v5604, %v5615
      %v5624 = vpack.c.bf16 %v5294, %v5292
      %v5625 = vpack.c.bf16 %v5295, %v5293
      %v5626 = vpack.c.bf16 %v5338, %v5296
      %v5627 = vpack.c.bf16 %v5339, %v5297
      %v5628 = vpack.c.bf16 %v5342, %v5340
      %v5629 = vpack.c.bf16 %v5343, %v5341
      %v5630 = vpack.c.bf16 %v5386, %v5384
      %v5631 = vpack.c.bf16 %v5387, %v5385
      %v5632 = vpack.c.bf16 %v5430, %v5388
      %v5633 = vpack.c.bf16 %v5431, %v5389
      %v5634 = vpack.c.bf16 %v5434, %v5432
      %v5635 = vpack.c.bf16 %v5435, %v5433
      %v5636 = vpack.c.bf16 %v5242, %v5240
      %v5637 = vpack.c.bf16 %v5243, %v5241
      %v5638 = vpack.c.bf16 %v5477, %v5244
      %v5639 = vpack.c.bf16 %v5478, %v5245
      %v5640 = vpack.c.bf16 %v5481, %v5479
      %v5641 = vpack.c.bf16 %v5482, %v5480
      %v5642 = vpack.c.bf16 %v5526, %v5524
      %v5643 = vpack.c.bf16 %v5527, %v5525
      %v5644 = vpack.c.bf16 %v5571, %v5528
      %v5645 = vpack.c.bf16 %v5572, %v5529
      %v5646 = vpack.c.bf16 %v5575, %v5573
      %v5647 = vpack.c.bf16 %v5576, %v5574
      %v5648 = vpack.c.bf16 %v5620, %v5618
      %v5649 = vpack.c.bf16 %v5621, %v5619
      %v5650 = vpack.c.bf16 %v5622, %v5622
      %v5651 = vpack.c.bf16 %v5623, %v5623
      %v5652 = vld [vmem:[%s51] sm:$0xff]
      %v5653 = vld [vmem:[%s51 + $0x8] sm:$0xff]
      %v5654 = vld [vmem:[%s51 + $0x10] sm:$0xff]
      %v5655 = vld [vmem:[%s51 + $0x18] sm:$0xff]
      %v5656 = vld [vmem:[%s51 + $0x20] sm:$0xff]
      %v5657 = vld [vmem:[%s51 + $0x28] sm:$0xff]
      %v5658 = vld [vmem:[%s51 + $0x30] sm:$0xff]
      %v5659 = vld [vmem:[%s51 + $0x38] sm:$0xff]
      %v5660 = vld [vmem:[%s51 + $0x40] sm:$0xff]
      %v5661 = vld [vmem:[%s51 + $0x48] sm:$0xff]
      %v5662 = vld [vmem:[%s51 + $0x50] sm:$0xff]
      %v5663 = vld [vmem:[%s51 + $0x58] sm:$0xff]
      %v5664 = vld [vmem:[%s51 + $0x60] sm:$0xff]
      %v5665 = vld [vmem:[%s51 + $0x68] sm:$0xff]
      %v5666 = vld [vmem:[%s51 + $0x70] sm:$0xff]
      %v5667 = vld [vmem:[%s51 + $0x78] sm:$0xff]
      %v5668 = vld [vmem:[%s51 + $0x80] sm:$0xff]
      %v5669 = vld [vmem:[%s51 + $0x88] sm:$0xff]
      %v5670 = vld [vmem:[%s51 + $0x90] sm:$0xff]
      %v5671 = vld [vmem:[%s51 + $0x98] sm:$0xff]
      %v5672 = vld [vmem:[%s51 + $0xa0] sm:$0xff]
      %v5673 = vld [vmem:[%s51 + $0xa8] sm:$0xff]
      %v5674 = vld [vmem:[%s51 + $0xb0] sm:$0xff]
      %v5675 = vld [vmem:[%s51 + $0xb8] sm:$0xff]
      %v5676 = vld [vmem:[%s51 + $0xc0] sm:$0xff]
      %v5677 = vld [vmem:[%s51 + $0xc8] sm:$0xff]
      %v5678 = vld [vmem:[%s51 + $0xd0] sm:$0xff]
      %v5679 = vld [vmem:[%s51 + $0xd8] sm:$0xff]
      %v5680 = vld [vmem:[%s51 + $0xe0] sm:$0xff]
      %v5681 = vld [vmem:[%s51 + $0xe8] sm:$0xff]
      %v5682 = vld [vmem:[%s51 + $0xf0] sm:$0xff]
      %v5683 = vld [vmem:[%s51 + $0xf8] sm:$0xff]
      %v5684 = vld [vmem:[%s53] sm:$0xff]
      %v5685 = vld [vmem:[%s53 + $0x8] sm:$0xff]
      %v5686 = vld [vmem:[%s53 + $0x10] sm:$0xff]
      %v5687 = vld [vmem:[%s53 + $0x18] sm:$0xff]
      %v5688 = vld [vmem:[%s53 + $0x20] sm:$0xff]
      %v5689 = vld [vmem:[%s53 + $0x28] sm:$0xff]
      %v5690 = vld [vmem:[%s53 + $0x30] sm:$0xff]
      %v5691 = vld [vmem:[%s53 + $0x38] sm:$0xff]
      %v5692 = vld [vmem:[%s53 + $0x40] sm:$0xff]
      %v5693 = vld [vmem:[%s53 + $0x48] sm:$0xff]
      %v5694 = vld [vmem:[%s53 + $0x50] sm:$0xff]
      %v5695 = vld [vmem:[%s53 + $0x58] sm:$0xff]
      %v5696 = vld [vmem:[%s53 + $0x60] sm:$0xff]
      %v5697 = vld [vmem:[%s53 + $0x68] sm:$0xff]
      %v5698 = vld [vmem:[%s53 + $0x70] sm:$0xff]
      %v5699 = vld [vmem:[%s53 + $0x78] sm:$0xff]
      %v5700 = vld [vmem:[%s53 + $0x80] sm:$0xff]
      %v5701 = vld [vmem:[%s53 + $0x88] sm:$0xff]
      %v5702 = vld [vmem:[%s53 + $0x90] sm:$0xff]
      %v5703 = vld [vmem:[%s53 + $0x98] sm:$0xff]
      %v5704 = vld [vmem:[%s53 + $0xa0] sm:$0xff]
      %v5705 = vld [vmem:[%s53 + $0xa8] sm:$0xff]
      %v5706 = vld [vmem:[%s53 + $0xb0] sm:$0xff]
      %v5707 = vld [vmem:[%s53 + $0xb8] sm:$0xff]
      %v5708 = vld [vmem:[%s53 + $0xc0] sm:$0xff]
      %v5709 = vld [vmem:[%s53 + $0xc8] sm:$0xff]
      %v5710 = vld [vmem:[%s53 + $0xd0] sm:$0xff]
      %v5711 = vld [vmem:[%s53 + $0xd8] sm:$0xff]
      %v5712 = vld [vmem:[%s53 + $0xe0] sm:$0xff]
      %v5713 = vld [vmem:[%s53 + $0xe8] sm:$0xff]
      %v5714 = vld [vmem:[%s53 + $0xf0] sm:$0xff]
      %v5715 = vld [vmem:[%s53 + $0xf8] sm:$0xff]
      %5717 = vset.pattern.permute.xlu0 0
      %5718 = vperm.xlu0 %5717, %v5684
      %v5719 = vpop.permute.xlu0 %5718
      %5722 = vset.pattern.permute.xlu0 0
      %5723 = vperm.xlu0 %5722, %v5685
      %v5724 = vpop.permute.xlu0 %5723
      %5727 = vset.pattern.permute.xlu0 0
      %5728 = vperm.xlu0 %5727, %v5686
      %v5729 = vpop.permute.xlu0 %5728
      %5732 = vset.pattern.permute.xlu0 0
      %5733 = vperm.xlu0 %5732, %v5687
      %v5734 = vpop.permute.xlu0 %5733
      %5737 = vset.pattern.permute.xlu0 0
      %5738 = vperm.xlu0 %5737, %v5688
      %v5739 = vpop.permute.xlu0 %5738
      %5742 = vset.pattern.permute.xlu0 0
      %5743 = vperm.xlu0 %5742, %v5689
      %v5744 = vpop.permute.xlu0 %5743
      %5747 = vset.pattern.permute.xlu0 0
      %5748 = vperm.xlu0 %5747, %v5690
      %v5749 = vpop.permute.xlu0 %5748
      %5752 = vset.pattern.permute.xlu0 0
      %5753 = vperm.xlu0 %5752, %v5691
      %v5754 = vpop.permute.xlu0 %5753
      %5757 = vset.pattern.permute.xlu0 0
      %5758 = vperm.xlu0 %5757, %v5692
      %v5759 = vpop.permute.xlu0 %5758
      %5762 = vset.pattern.permute.xlu0 0
      %5763 = vperm.xlu0 %5762, %v5693
      %v5764 = vpop.permute.xlu0 %5763
      %5767 = vset.pattern.permute.xlu0 0
      %5768 = vperm.xlu0 %5767, %v5694
      %v5769 = vpop.permute.xlu0 %5768
      %5772 = vset.pattern.permute.xlu0 0
      %5773 = vperm.xlu0 %5772, %v5695
      %v5774 = vpop.permute.xlu0 %5773
      %5777 = vset.pattern.permute.xlu0 0
      %5778 = vperm.xlu0 %5777, %v5696
      %v5779 = vpop.permute.xlu0 %5778
      %5782 = vset.pattern.permute.xlu0 0
      %5783 = vperm.xlu0 %5782, %v5697
      %v5784 = vpop.permute.xlu0 %5783
      %5787 = vset.pattern.permute.xlu0 0
      %5788 = vperm.xlu0 %5787, %v5698
      %v5789 = vpop.permute.xlu0 %5788
      %5792 = vset.pattern.permute.xlu0 0
      %5793 = vperm.xlu0 %5792, %v5699
      %v5794 = vpop.permute.xlu0 %5793
      %5797 = vset.pattern.permute.xlu0 0
      %5798 = vperm.xlu0 %5797, %v5700
      %v5799 = vpop.permute.xlu0 %5798
      %5802 = vset.pattern.permute.xlu0 0
      %5803 = vperm.xlu0 %5802, %v5701
      %v5804 = vpop.permute.xlu0 %5803
      %5807 = vset.pattern.permute.xlu0 0
      %5808 = vperm.xlu0 %5807, %v5702
      %v5809 = vpop.permute.xlu0 %5808
      %5812 = vset.pattern.permute.xlu0 0
      %5813 = vperm.xlu0 %5812, %v5703
      %v5814 = vpop.permute.xlu0 %5813
      %5817 = vset.pattern.permute.xlu0 0
      %5818 = vperm.xlu0 %5817, %v5704
      %v5819 = vpop.permute.xlu0 %5818
      %5822 = vset.pattern.permute.xlu0 0
      %5823 = vperm.xlu0 %5822, %v5705
      %v5824 = vpop.permute.xlu0 %5823
      %5827 = vset.pattern.permute.xlu0 0
      %5828 = vperm.xlu0 %5827, %v5706
      %v5829 = vpop.permute.xlu0 %5828
      %5832 = vset.pattern.permute.xlu0 0
      %5833 = vperm.xlu0 %5832, %v5707
      %v5834 = vpop.permute.xlu0 %5833
      %5837 = vset.pattern.permute.xlu0 0
      %5838 = vperm.xlu0 %5837, %v5708
      %v5839 = vpop.permute.xlu0 %5838
      %5842 = vset.pattern.permute.xlu0 0
      %5843 = vperm.xlu0 %5842, %v5709
      %v5844 = vpop.permute.xlu0 %5843
      %5847 = vset.pattern.permute.xlu0 0
      %5848 = vperm.xlu0 %5847, %v5710
      %v5849 = vpop.permute.xlu0 %5848
      %5852 = vset.pattern.permute.xlu0 0
      %5853 = vperm.xlu0 %5852, %v5711
      %v5854 = vpop.permute.xlu0 %5853
      %5857 = vset.pattern.permute.xlu0 0
      %5858 = vperm.xlu0 %5857, %v5712
      %v5859 = vpop.permute.xlu0 %5858
      %5862 = vset.pattern.permute.xlu0 0
      %5863 = vperm.xlu0 %5862, %v5713
      %v5864 = vpop.permute.xlu0 %5863
      %5867 = vset.pattern.permute.xlu0 0
      %5868 = vperm.xlu0 %5867, %v5714
      %v5869 = vpop.permute.xlu0 %5868
      %5872 = vset.pattern.permute.xlu0 0
      %5873 = vperm.xlu0 %5872, %v5715
      %v5874 = vpop.permute.xlu0 %5873
      %v5908 = vunpack.c.l.b16 %v5652
      %v5909 = vunpack.c.h.b16 %v5652
      %v5910 = vunpack.c.l.b16 %v5653
      %v5911 = vunpack.c.h.b16 %v5653
      %v5912 = vunpack.c.l.b16 %v5654
      %v5913 = vunpack.c.h.b16 %v5654
      %v5914 = vunpack.c.l.b16 %v5655
      %v5915 = vunpack.c.h.b16 %v5655
      %v5916 = vunpack.c.l.b16 %v5656
      %v5917 = vunpack.c.h.b16 %v5656
      %v5918 = vunpack.c.l.b16 %v5657
      %v5919 = vunpack.c.h.b16 %v5657
      %v5920 = vunpack.c.l.b16 %v5658
      %v5921 = vunpack.c.h.b16 %v5658
      %v5922 = vunpack.c.l.b16 %v5659
      %v5923 = vunpack.c.h.b16 %v5659
      %v5924 = vunpack.c.l.b16 %v5660
      %v5925 = vunpack.c.h.b16 %v5660
      %v5926 = vunpack.c.l.b16 %v5661
      %v5927 = vunpack.c.h.b16 %v5661
      %v5928 = vunpack.c.l.b16 %v5662
      %v5929 = vunpack.c.h.b16 %v5662
      %v5930 = vunpack.c.l.b16 %v5663
      %v5931 = vunpack.c.h.b16 %v5663
      %v5932 = vunpack.c.l.b16 %v5664
      %v5933 = vunpack.c.h.b16 %v5664
      %v5934 = vunpack.c.l.b16 %v5665
      %v5935 = vunpack.c.h.b16 %v5665
      %v5936 = vunpack.c.l.b16 %v5666
      %v5937 = vunpack.c.h.b16 %v5666
      %v5938 = vunpack.c.l.b16 %v5667
      %v5939 = vunpack.c.h.b16 %v5667
      %v5940 = vunpack.c.l.b16 %v5668
      %v5941 = vunpack.c.h.b16 %v5668
      %v5942 = vunpack.c.l.b16 %v5669
      %v5943 = vunpack.c.h.b16 %v5669
      %v5944 = vunpack.c.l.b16 %v5670
      %v5945 = vunpack.c.h.b16 %v5670
      %v5946 = vunpack.c.l.b16 %v5671
      %v5947 = vunpack.c.h.b16 %v5671
      %v5948 = vunpack.c.l.b16 %v5672
      %v5949 = vunpack.c.h.b16 %v5672
      %v5950 = vunpack.c.l.b16 %v5673
      %v5951 = vunpack.c.h.b16 %v5673
      %v5952 = vunpack.c.l.b16 %v5674
      %v5953 = vunpack.c.h.b16 %v5674
      %v5954 = vunpack.c.l.b16 %v5675
      %v5955 = vunpack.c.h.b16 %v5675
      %v5956 = vunpack.c.l.b16 %v5676
      %v5957 = vunpack.c.h.b16 %v5676
      %v5958 = vunpack.c.l.b16 %v5677
      %v5959 = vunpack.c.h.b16 %v5677
      %v5960 = vunpack.c.l.b16 %v5678
      %v5961 = vunpack.c.h.b16 %v5678
      %v5962 = vunpack.c.l.b16 %v5679
      %v5963 = vunpack.c.h.b16 %v5679
      %v5964 = vunpack.c.l.b16 %v5680
      %v5965 = vunpack.c.h.b16 %v5680
      %v5966 = vunpack.c.l.b16 %v5681
      %v5967 = vunpack.c.h.b16 %v5681
      %v5968 = vunpack.c.l.b16 %v5682
      %v5969 = vunpack.c.h.b16 %v5682
      %v5970 = vunpack.c.l.b16 %v5683
      %v5971 = vunpack.c.h.b16 %v5683
      %v5972 = vpack.c.b16 %v5910, %v5908
      %v5973 = vpack.c.b16 %v5911, %v5909
      %v5974 = vpack.c.b16 %v5914, %v5912
      %v5975 = vpack.c.b16 %v5915, %v5913
      %v5976 = vpack.c.b16 %v5918, %v5916
      %v5977 = vpack.c.b16 %v5919, %v5917
      %v5978 = vpack.c.b16 %v5922, %v5920
      %v5979 = vpack.c.b16 %v5923, %v5921
      %v5980 = vpack.c.b16 %v5926, %v5924
      %v5981 = vpack.c.b16 %v5927, %v5925
      %v5982 = vpack.c.b16 %v5930, %v5928
      %v5983 = vpack.c.b16 %v5931, %v5929
      %v5984 = vpack.c.b16 %v5934, %v5932
      %v5985 = vpack.c.b16 %v5935, %v5933
      %v5986 = vpack.c.b16 %v5938, %v5936
      %v5987 = vpack.c.b16 %v5939, %v5937
      %v5988 = vpack.c.b16 %v5942, %v5940
      %v5989 = vpack.c.b16 %v5943, %v5941
      %v5990 = vpack.c.b16 %v5946, %v5944
      %v5991 = vpack.c.b16 %v5947, %v5945
      %v5992 = vpack.c.b16 %v5950, %v5948
      %v5993 = vpack.c.b16 %v5951, %v5949
      %v5994 = vpack.c.b16 %v5954, %v5952
      %v5995 = vpack.c.b16 %v5955, %v5953
      %v5996 = vpack.c.b16 %v5958, %v5956
      %v5997 = vpack.c.b16 %v5959, %v5957
      %v5998 = vpack.c.b16 %v5962, %v5960
      %v5999 = vpack.c.b16 %v5963, %v5961
      %v6000 = vpack.c.b16 %v5966, %v5964
      %v6001 = vpack.c.b16 %v5967, %v5965
      %v6002 = vpack.c.b16 %v5970, %v5968
      %v6003 = vpack.c.b16 %v5971, %v5969
      %vm6020 = vcmask 719872
      %v6022 = vsel %vm6020, %v5973, 0
      %v6025 = vsel %vm6020, %v5975, 0
      %v6028 = vsel %vm6020, %v5977, 0
      %v6031 = vsel %vm6020, %v5979, 0
      %v6034 = vsel %vm6020, %v5981, 0
      %v6037 = vsel %vm6020, %v5983, 0
      %v6040 = vsel %vm6020, %v5985, 0
      %v6043 = vsel %vm6020, %v5987, 0
      %v6046 = vsel %vm6020, %v5989, 0
      %v6049 = vsel %vm6020, %v5991, 0
      %v6052 = vsel %vm6020, %v5993, 0
      %v6055 = vsel %vm6020, %v5995, 0
      %v6058 = vsel %vm6020, %v5997, 0
      %v6061 = vsel %vm6020, %v5999, 0
      %v6064 = vsel %vm6020, %v6001, 0
      %v6067 = vsel %vm6020, %v6003, 0
      %v6070 = vsel %vm5128, %v5650, 0
      %v6073 = vsel %vm5128, %v5651, 0
      %6075 = vmatprep.subr.bf16.mxu0 %v5625
      %6076 = vmatpush1.bf16.msra.mxu0 %v5624
      %6077 = vmatprep.subr.bf16.mxu0 %v5627
      %6078 = vmatpush1.bf16.msra.mxu0 %v5626
      %6079 = vmatprep.subr.bf16.mxu0 %v5629
      %6080 = vmatpush1.bf16.msra.mxu0 %v5628
      %6081 = vmatprep.subr.bf16.mxu0 %v5631
      %6082 = vmatpush1.bf16.msra.mxu0 %v5630
      %6083 = vmatprep.subr.bf16.mxu0 %v5633
      %6084 = vmatpush1.bf16.msra.mxu0 %v5632
      %6085 = vmatprep.subr.bf16.mxu0 %v5635
      %6086 = vmatpush1.bf16.msra.mxu0 %v5634
      %6087 = vmatprep.subr.bf16.mxu0 %v5637
      %6088 = vmatpush1.bf16.msra.mxu0 %v5636
      %6089 = vmatprep.subr.bf16.mxu0 %v5639
      %6090 = vmatpush1.bf16.msra.mxu0 %v5638
      %6091 = vmatprep.subr.bf16.mxu0 %v5641
      %6092 = vmatpush1.bf16.msra.mxu0 %v5640
      %6093 = vmatprep.subr.bf16.mxu0 %v5643
      %6094 = vmatpush1.bf16.msra.mxu0 %v5642
      %6095 = vmatprep.subr.bf16.mxu0 %v5645
      %6096 = vmatpush1.bf16.msra.mxu0 %v5644
      %6097 = vmatprep.subr.bf16.mxu0 %v5647
      %6098 = vmatpush1.bf16.msra.mxu0 %v5646
      %6099 = vmatprep.subr.bf16.mxu0 %v5649
      %6100 = vmatpush1.bf16.msra.mxu0 %v5648
      %6101 = vmatprep.subr.bf16.mxu0 %v6073
      %6102 = vmatpush1.bf16.msra.mxu0 %v6070
      %6103 = vmatprep.subr.bf16.mxu0 0
      %6104 = vmatpush1.bf16.msra.mxu0 0
      %6105 = vmatprep.subr.bf16.mxu0 0
      %6106 = vmatpush1.bf16.msra.mxu0 0
      %6107 = vmatprep.mubr.bf16.mxu0 %v6022
      %6108 = vmatmul.mubr.bf16.gmra.mrb[0].mxu0 %v5972
      %v6109 = vpop.f32.mrb[0].mxu0
      %v6110 = vadd.f32 %v5719, %v6109
      %v6111 = vpop.f32.mrb[0].mxu0
      %v6112 = vadd.f32 %v5719, %v6111
      %v6113 = vpop.f32.mrb[0].mxu0
      %v6114 = vadd.f32 %v5724, %v6113
      %v6115 = vpop.f32.mrb[0].mxu0
      %v6116 = vadd.f32 %v5724, %v6115
      %6117 = vmatprep.mubr.bf16.mxu0 %v6025
      %6118 = vmatmul.mubr.bf16.gmra.mrb[0].mxu0 %v5974
      %v6119 = vpop.f32.mrb[0].mxu0
      %v6120 = vadd.f32 %v5729, %v6119
      %v6121 = vpop.f32.mrb[0].mxu0
      %v6122 = vadd.f32 %v5729, %v6121
      %v6123 = vpop.f32.mrb[0].mxu0
      %v6124 = vadd.f32 %v5734, %v6123
      %v6125 = vpop.f32.mrb[0].mxu0
      %v6126 = vadd.f32 %v5734, %v6125
      %6127 = vmatprep.mubr.bf16.mxu0 %v6028
      %6128 = vmatmul.mubr.bf16.gmra.mrb[0].mxu0 %v5976
      %v6129 = vpop.f32.mrb[0].mxu0
      %v6130 = vadd.f32 %v5739, %v6129
      %v6131 = vpop.f32.mrb[0].mxu0
      %v6132 = vadd.f32 %v5739, %v6131
      %v6133 = vpop.f32.mrb[0].mxu0
      %v6134 = vadd.f32 %v5744, %v6133
      %v6135 = vpop.f32.mrb[0].mxu0
      %v6136 = vadd.f32 %v5744, %v6135
      %6137 = vmatprep.mubr.bf16.mxu0 %v6031
      %6138 = vmatmul.mubr.bf16.gmra.mrb[0].mxu0 %v5978
      %v6139 = vpop.f32.mrb[0].mxu0
      %v6140 = vadd.f32 %v5749, %v6139
      %v6141 = vpop.f32.mrb[0].mxu0
      %v6142 = vadd.f32 %v5749, %v6141
      %v6143 = vpop.f32.mrb[0].mxu0
      %v6144 = vadd.f32 %v5754, %v6143
      %v6145 = vpop.f32.mrb[0].mxu0
      %v6146 = vadd.f32 %v5754, %v6145
      %6147 = vmatprep.mubr.bf16.mxu0 %v6034
      %6148 = vmatmul.mubr.bf16.gmra.mrb[0].mxu0 %v5980
      %v6149 = vpop.f32.mrb[0].mxu0
      %v6150 = vadd.f32 %v5759, %v6149
      %v6151 = vpop.f32.mrb[0].mxu0
      %v6152 = vadd.f32 %v5759, %v6151
      %v6153 = vpop.f32.mrb[0].mxu0
      %v6154 = vadd.f32 %v5764, %v6153
      %v6155 = vpop.f32.mrb[0].mxu0
      %v6156 = vadd.f32 %v5764, %v6155
      %6157 = vmatprep.mubr.bf16.mxu0 %v6037
      %6158 = vmatmul.mubr.bf16.gmra.mrb[0].mxu0 %v5982
      %v6159 = vpop.f32.mrb[0].mxu0
      %v6160 = vadd.f32 %v5769, %v6159
      %v6161 = vpop.f32.mrb[0].mxu0
      %v6162 = vadd.f32 %v5769, %v6161
      %v6163 = vpop.f32.mrb[0].mxu0
      %v6164 = vadd.f32 %v5774, %v6163
      %v6165 = vpop.f32.mrb[0].mxu0
      %v6166 = vadd.f32 %v5774, %v6165
      %6167 = vmatprep.mubr.bf16.mxu0 %v6040
      %6168 = vmatmul.mubr.bf16.gmra.mrb[0].mxu0 %v5984
      %v6169 = vpop.f32.mrb[0].mxu0
      %v6170 = vadd.f32 %v5779, %v6169
      %v6171 = vpop.f32.mrb[0].mxu0
      %v6172 = vadd.f32 %v5779, %v6171
      %v6173 = vpop.f32.mrb[0].mxu0
      %v6174 = vadd.f32 %v5784, %v6173
      %v6175 = vpop.f32.mrb[0].mxu0
      %v6176 = vadd.f32 %v5784, %v6175
      %6177 = vmatprep.mubr.bf16.mxu0 %v6043
      %6178 = vmatmul.mubr.bf16.gmra.mrb[0].mxu0 %v5986
      %v6179 = vpop.f32.mrb[0].mxu0
      %v6180 = vadd.f32 %v5789, %v6179
      %v6181 = vpop.f32.mrb[0].mxu0
      %v6182 = vadd.f32 %v5789, %v6181
      %v6183 = vpop.f32.mrb[0].mxu0
      %v6184 = vadd.f32 %v5794, %v6183
      %v6185 = vpop.f32.mrb[0].mxu0
      %v6186 = vadd.f32 %v5794, %v6185
      %6187 = vmatprep.mubr.bf16.mxu0 %v6046
      %6188 = vmatmul.mubr.bf16.gmra.mrb[0].mxu0 %v5988
      %v6189 = vpop.f32.mrb[0].mxu0
      %v6190 = vadd.f32 %v5799, %v6189
      %v6191 = vpop.f32.mrb[0].mxu0
      %v6192 = vadd.f32 %v5799, %v6191
      %v6193 = vpop.f32.mrb[0].mxu0
      %v6194 = vadd.f32 %v5804, %v6193
      %v6195 = vpop.f32.mrb[0].mxu0
      %v6196 = vadd.f32 %v5804, %v6195
      %6197 = vmatprep.mubr.bf16.mxu0 %v6049
      %6198 = vmatmul.mubr.bf16.gmra.mrb[0].mxu0 %v5990
      %v6199 = vpop.f32.mrb[0].mxu0
      %v6200 = vadd.f32 %v5809, %v6199
      %v6201 = vpop.f32.mrb[0].mxu0
      %v6202 = vadd.f32 %v5809, %v6201
      %v6203 = vpop.f32.mrb[0].mxu0
      %v6204 = vadd.f32 %v5814, %v6203
      %v6205 = vpop.f32.mrb[0].mxu0
      %v6206 = vadd.f32 %v5814, %v6205
      %6207 = vmatprep.mubr.bf16.mxu0 %v6052
      %6208 = vmatmul.mubr.bf16.gmra.mrb[0].mxu0 %v5992
      %v6209 = vpop.f32.mrb[0].mxu0
      %v6210 = vadd.f32 %v5819, %v6209
      %v6211 = vpop.f32.mrb[0].mxu0
      %v6212 = vadd.f32 %v5819, %v6211
      %v6213 = vpop.f32.mrb[0].mxu0
      %v6214 = vadd.f32 %v5824, %v6213
      %v6215 = vpop.f32.mrb[0].mxu0
      %v6216 = vadd.f32 %v5824, %v6215
      %6217 = vmatprep.mubr.bf16.mxu0 %v6055
      %6218 = vmatmul.mubr.bf16.gmra.mrb[0].mxu0 %v5994
      %v6219 = vpop.f32.mrb[0].mxu0
      %v6220 = vadd.f32 %v5829, %v6219
      %v6221 = vpop.f32.mrb[0].mxu0
      %v6222 = vadd.f32 %v5829, %v6221
      %v6223 = vpop.f32.mrb[0].mxu0
      %v6224 = vadd.f32 %v5834, %v6223
      %v6225 = vpop.f32.mrb[0].mxu0
      %v6226 = vadd.f32 %v5834, %v6225
      %6227 = vmatprep.mubr.bf16.mxu0 %v6058
      %6228 = vmatmul.mubr.bf16.gmra.mrb[0].mxu0 %v5996
      %v6229 = vpop.f32.mrb[0].mxu0
      %v6230 = vadd.f32 %v5839, %v6229
      %v6231 = vpop.f32.mrb[0].mxu0
      %v6232 = vadd.f32 %v5839, %v6231
      %v6233 = vpop.f32.mrb[0].mxu0
      %v6234 = vadd.f32 %v5844, %v6233
      %v6235 = vpop.f32.mrb[0].mxu0
      %v6236 = vadd.f32 %v5844, %v6235
      %6237 = vmatprep.mubr.bf16.mxu0 %v6061
      %6238 = vmatmul.mubr.bf16.gmra.mrb[0].mxu0 %v5998
      %v6239 = vpop.f32.mrb[0].mxu0
      %v6240 = vadd.f32 %v5849, %v6239
      %v6241 = vpop.f32.mrb[0].mxu0
      %v6242 = vadd.f32 %v5849, %v6241
      %v6243 = vpop.f32.mrb[0].mxu0
      %v6244 = vadd.f32 %v5854, %v6243
      %v6245 = vpop.f32.mrb[0].mxu0
      %v6246 = vadd.f32 %v5854, %v6245
      %6247 = vmatprep.mubr.bf16.mxu0 %v6064
      %6248 = vmatmul.mubr.bf16.gmra.mrb[0].mxu0 %v6000
      %v6249 = vpop.f32.mrb[0].mxu0
      %v6250 = vadd.f32 %v5859, %v6249
      %v6251 = vpop.f32.mrb[0].mxu0
      %v6252 = vadd.f32 %v5859, %v6251
      %v6253 = vpop.f32.mrb[0].mxu0
      %v6254 = vadd.f32 %v5864, %v6253
      %v6255 = vpop.f32.mrb[0].mxu0
      %v6256 = vadd.f32 %v5864, %v6255
      %6257 = vmatprep.mubr.bf16.mxu0 %v6067
      %6258 = vmatmul.mubr.bf16.gmra.mrb[0].mxu0 %v6002
      %v6259 = vpop.f32.mrb[0].mxu0
      %v6260 = vadd.f32 %v5869, %v6259
      %v6261 = vpop.f32.mrb[0].mxu0
      %v6262 = vadd.f32 %v5869, %v6261
      %v6263 = vpop.f32.mrb[0].mxu0
      %v6264 = vadd.f32 %v5874, %v6263
      %v6265 = vpop.f32.mrb[0].mxu0
      %v6266 = vadd.f32 %v5874, %v6265
      %6267 = vdwg.mxu0
      %v6268 = vld [vmem:[%s55] sm:$0xff]
      %v6269 = vld [vmem:[%s55 + $0x8] sm:$0xff]
      %v6270 = vld [vmem:[%s55 + $0x10] sm:$0xff]
      %v6271 = vld [vmem:[%s55 + $0x18] sm:$0xff]
      %v6272 = vld [vmem:[%s55 + $0x20] sm:$0xff]
      %v6273 = vld [vmem:[%s55 + $0x28] sm:$0xff]
      %v6274 = vld [vmem:[%s55 + $0x30] sm:$0xff]
      %v6275 = vld [vmem:[%s55 + $0x38] sm:$0xff]
      %v6276 = vld [vmem:[%s55 + $0x40] sm:$0xff]
      %v6277 = vld [vmem:[%s55 + $0x48] sm:$0xff]
      %v6278 = vld [vmem:[%s55 + $0x50] sm:$0xff]
      %v6279 = vld [vmem:[%s55 + $0x58] sm:$0xff]
      %v6280 = vld [vmem:[%s55 + $0x60] sm:$0xff]
      %v6281 = vld [vmem:[%s55 + $0x68] sm:$0xff]
      %v6282 = vld [vmem:[%s55 + $0x70] sm:$0xff]
      %v6283 = vld [vmem:[%s55 + $0x78] sm:$0xff]
      %v6284 = vld [vmem:[%s55 + $0x80] sm:$0xff]
      %v6285 = vld [vmem:[%s55 + $0x88] sm:$0xff]
      %v6286 = vld [vmem:[%s55 + $0x90] sm:$0xff]
      %v6287 = vld [vmem:[%s55 + $0x98] sm:$0xff]
      %v6288 = vld [vmem:[%s55 + $0xa0] sm:$0xff]
      %v6289 = vld [vmem:[%s55 + $0xa8] sm:$0xff]
      %v6290 = vld [vmem:[%s55 + $0xb0] sm:$0xff]
      %v6291 = vld [vmem:[%s55 + $0xb8] sm:$0xff]
      %v6292 = vld [vmem:[%s55 + $0xc0] sm:$0xff]
      %v6293 = vld [vmem:[%s55 + $0xc8] sm:$0xff]
      %v6294 = vld [vmem:[%s55 + $0xd0] sm:$0xff]
      %v6295 = vld [vmem:[%s55 + $0xd8] sm:$0xff]
      %v6296 = vld [vmem:[%s55 + $0xe0] sm:$0xff]
      %v6297 = vld [vmem:[%s55 + $0xe8] sm:$0xff]
      %v6298 = vld [vmem:[%s55 + $0xf0] sm:$0xff]
      %v6299 = vld [vmem:[%s55 + $0xf8] sm:$0xff]
      %vm6300 = vcmp.gt.f32.partialorder %v6110, 0.0
      %vm6301 = vcmp.gt.f32.partialorder %v6112, 0.0
      %vm6302 = vcmp.gt.f32.partialorder %v6114, 0.0
      %vm6303 = vcmp.gt.f32.partialorder %v6116, 0.0
      %vm6304 = vcmp.gt.f32.partialorder %v6120, 0.0
      %vm6305 = vcmp.gt.f32.partialorder %v6122, 0.0
      %vm6306 = vcmp.gt.f32.partialorder %v6124, 0.0
      %vm6307 = vcmp.gt.f32.partialorder %v6126, 0.0
      %vm6308 = vcmp.gt.f32.partialorder %v6130, 0.0
      %vm6309 = vcmp.gt.f32.partialorder %v6132, 0.0
      %vm6310 = vcmp.gt.f32.partialorder %v6134, 0.0
      %vm6311 = vcmp.gt.f32.partialorder %v6136, 0.0
      %vm6312 = vcmp.gt.f32.partialorder %v6140, 0.0
      %vm6313 = vcmp.gt.f32.partialorder %v6142, 0.0
      %vm6314 = vcmp.gt.f32.partialorder %v6144, 0.0
      %vm6315 = vcmp.gt.f32.partialorder %v6146, 0.0
      %vm6316 = vcmp.gt.f32.partialorder %v6150, 0.0
      %vm6317 = vcmp.gt.f32.partialorder %v6152, 0.0
      %vm6318 = vcmp.gt.f32.partialorder %v6154, 0.0
      %vm6319 = vcmp.gt.f32.partialorder %v6156, 0.0
      %vm6320 = vcmp.gt.f32.partialorder %v6160, 0.0
      %vm6321 = vcmp.gt.f32.partialorder %v6162, 0.0
      %vm6322 = vcmp.gt.f32.partialorder %v6164, 0.0
      %vm6323 = vcmp.gt.f32.partialorder %v6166, 0.0
      %vm6324 = vcmp.gt.f32.partialorder %v6170, 0.0
      %vm6325 = vcmp.gt.f32.partialorder %v6172, 0.0
      %vm6326 = vcmp.gt.f32.partialorder %v6174, 0.0
      %vm6327 = vcmp.gt.f32.partialorder %v6176, 0.0
      %vm6328 = vcmp.gt.f32.partialorder %v6180, 0.0
      %vm6329 = vcmp.gt.f32.partialorder %v6182, 0.0
      %vm6330 = vcmp.gt.f32.partialorder %v6184, 0.0
      %vm6331 = vcmp.gt.f32.partialorder %v6186, 0.0
      %vm6332 = vcmp.gt.f32.partialorder %v6190, 0.0
      %vm6333 = vcmp.gt.f32.partialorder %v6192, 0.0
      %vm6334 = vcmp.gt.f32.partialorder %v6194, 0.0
      %vm6335 = vcmp.gt.f32.partialorder %v6196, 0.0
      %vm6336 = vcmp.gt.f32.partialorder %v6200, 0.0
      %vm6337 = vcmp.gt.f32.partialorder %v6202, 0.0
      %vm6338 = vcmp.gt.f32.partialorder %v6204, 0.0
      %vm6339 = vcmp.gt.f32.partialorder %v6206, 0.0
      %vm6340 = vcmp.gt.f32.partialorder %v6210, 0.0
      %vm6341 = vcmp.gt.f32.partialorder %v6212, 0.0
      %vm6342 = vcmp.gt.f32.partialorder %v6214, 0.0
      %vm6343 = vcmp.gt.f32.partialorder %v6216, 0.0
      %vm6344 = vcmp.gt.f32.partialorder %v6220, 0.0
      %vm6345 = vcmp.gt.f32.partialorder %v6222, 0.0
      %vm6346 = vcmp.gt.f32.partialorder %v6224, 0.0
      %vm6347 = vcmp.gt.f32.partialorder %v6226, 0.0
      %vm6348 = vcmp.gt.f32.partialorder %v6230, 0.0
      %vm6349 = vcmp.gt.f32.partialorder %v6232, 0.0
      %vm6350 = vcmp.gt.f32.partialorder %v6234, 0.0
      %vm6351 = vcmp.gt.f32.partialorder %v6236, 0.0
      %vm6352 = vcmp.gt.f32.partialorder %v6240, 0.0
      %vm6353 = vcmp.gt.f32.partialorder %v6242, 0.0
      %vm6354 = vcmp.gt.f32.partialorder %v6244, 0.0
      %vm6355 = vcmp.gt.f32.partialorder %v6246, 0.0
      %vm6356 = vcmp.gt.f32.partialorder %v6250, 0.0
      %vm6357 = vcmp.gt.f32.partialorder %v6252, 0.0
      %vm6358 = vcmp.gt.f32.partialorder %v6254, 0.0
      %vm6359 = vcmp.gt.f32.partialorder %v6256, 0.0
      %vm6360 = vcmp.gt.f32.partialorder %v6260, 0.0
      %vm6361 = vcmp.gt.f32.partialorder %v6262, 0.0
      %vm6362 = vcmp.gt.f32.partialorder %v6264, 0.0
      %vm6363 = vcmp.gt.f32.partialorder %v6266, 0.0
      %6365 = vset.pattern.permute.xlu0 0
      %6366 = vperm.xlu0 %6365, %v6268
      %v6367 = vpop.permute.xlu0 %6366
      %6370 = vset.pattern.permute.xlu0 0
      %6371 = vperm.xlu0 %6370, %v6269
      %v6372 = vpop.permute.xlu0 %6371
      %6375 = vset.pattern.permute.xlu0 0
      %6376 = vperm.xlu0 %6375, %v6270
      %v6377 = vpop.permute.xlu0 %6376
      %6380 = vset.pattern.permute.xlu0 0
      %6381 = vperm.xlu0 %6380, %v6271
      %v6382 = vpop.permute.xlu0 %6381
      %6385 = vset.pattern.permute.xlu0 0
      %6386 = vperm.xlu0 %6385, %v6272
      %v6387 = vpop.permute.xlu0 %6386
      %6390 = vset.pattern.permute.xlu0 0
      %6391 = vperm.xlu0 %6390, %v6273
      %v6392 = vpop.permute.xlu0 %6391
      %6395 = vset.pattern.permute.xlu0 0
      %6396 = vperm.xlu0 %6395, %v6274
      %v6397 = vpop.permute.xlu0 %6396
      %6400 = vset.pattern.permute.xlu0 0
      %6401 = vperm.xlu0 %6400, %v6275
      %v6402 = vpop.permute.xlu0 %6401
      %6405 = vset.pattern.permute.xlu0 0
      %6406 = vperm.xlu0 %6405, %v6276
      %v6407 = vpop.permute.xlu0 %6406
      %6410 = vset.pattern.permute.xlu0 0
      %6411 = vperm.xlu0 %6410, %v6277
      %v6412 = vpop.permute.xlu0 %6411
      %6415 = vset.pattern.permute.xlu0 0
      %6416 = vperm.xlu0 %6415, %v6278
      %v6417 = vpop.permute.xlu0 %6416
      %6420 = vset.pattern.permute.xlu0 0
      %6421 = vperm.xlu0 %6420, %v6279
      %v6422 = vpop.permute.xlu0 %6421
      %6425 = vset.pattern.permute.xlu0 0
      %6426 = vperm.xlu0 %6425, %v6280
      %v6427 = vpop.permute.xlu0 %6426
      %6430 = vset.pattern.permute.xlu0 0
      %6431 = vperm.xlu0 %6430, %v6281
      %v6432 = vpop.permute.xlu0 %6431
      %6435 = vset.pattern.permute.xlu0 0
      %6436 = vperm.xlu0 %6435, %v6282
      %v6437 = vpop.permute.xlu0 %6436
      %6440 = vset.pattern.permute.xlu0 0
      %6441 = vperm.xlu0 %6440, %v6283
      %v6442 = vpop.permute.xlu0 %6441
      %6445 = vset.pattern.permute.xlu0 0
      %6446 = vperm.xlu0 %6445, %v6284
      %v6447 = vpop.permute.xlu0 %6446
      %6450 = vset.pattern.permute.xlu0 0
      %6451 = vperm.xlu0 %6450, %v6285
      %v6452 = vpop.permute.xlu0 %6451
      %6455 = vset.pattern.permute.xlu0 0
      %6456 = vperm.xlu0 %6455, %v6286
      %v6457 = vpop.permute.xlu0 %6456
      %6460 = vset.pattern.permute.xlu0 0
      %6461 = vperm.xlu0 %6460, %v6287
      %v6462 = vpop.permute.xlu0 %6461
      %6465 = vset.pattern.permute.xlu0 0
      %6466 = vperm.xlu0 %6465, %v6288
      %v6467 = vpop.permute.xlu0 %6466
      %6470 = vset.pattern.permute.xlu0 0
      %6471 = vperm.xlu0 %6470, %v6289
      %v6472 = vpop.permute.xlu0 %6471
      %6475 = vset.pattern.permute.xlu0 0
      %6476 = vperm.xlu0 %6475, %v6290
      %v6477 = vpop.permute.xlu0 %6476
      %6480 = vset.pattern.permute.xlu0 0
      %6481 = vperm.xlu0 %6480, %v6291
      %v6482 = vpop.permute.xlu0 %6481
      %6485 = vset.pattern.permute.xlu0 0
      %6486 = vperm.xlu0 %6485, %v6292
      %v6487 = vpop.permute.xlu0 %6486
      %6490 = vset.pattern.permute.xlu0 0
      %6491 = vperm.xlu0 %6490, %v6293
      %v6492 = vpop.permute.xlu0 %6491
      %6495 = vset.pattern.permute.xlu0 0
      %6496 = vperm.xlu0 %6495, %v6294
      %v6497 = vpop.permute.xlu0 %6496
      %6500 = vset.pattern.permute.xlu0 0
      %6501 = vperm.xlu0 %6500, %v6295
      %v6502 = vpop.permute.xlu0 %6501
      %6505 = vset.pattern.permute.xlu0 0
      %6506 = vperm.xlu0 %6505, %v6296
      %v6507 = vpop.permute.xlu0 %6506
      %6510 = vset.pattern.permute.xlu0 0
      %6511 = vperm.xlu0 %6510, %v6297
      %v6512 = vpop.permute.xlu0 %6511
      %6515 = vset.pattern.permute.xlu0 0
      %6516 = vperm.xlu0 %6515, %v6298
      %v6517 = vpop.permute.xlu0 %6516
      %6520 = vset.pattern.permute.xlu0 0
      %6521 = vperm.xlu0 %6520, %v6299
      %v6522 = vpop.permute.xlu0 %6521
      %v6524 = vmul.f32 %v6367, %v6110
      %v6525 = vmul.f32 %v6367, %v6112
      %v6526 = vmul.f32 %v6372, %v6114
      %v6527 = vmul.f32 %v6372, %v6116
      %v6528 = vmul.f32 %v6377, %v6120
      %v6529 = vmul.f32 %v6377, %v6122
      %v6530 = vmul.f32 %v6382, %v6124
      %v6531 = vmul.f32 %v6382, %v6126
      %v6532 = vmul.f32 %v6387, %v6130
      %v6533 = vmul.f32 %v6387, %v6132
      %v6534 = vmul.f32 %v6392, %v6134
      %v6535 = vmul.f32 %v6392, %v6136
      %v6536 = vmul.f32 %v6397, %v6140
      %v6537 = vmul.f32 %v6397, %v6142
      %v6538 = vmul.f32 %v6402, %v6144
      %v6539 = vmul.f32 %v6402, %v6146
      %v6540 = vmul.f32 %v6407, %v6150
      %v6541 = vmul.f32 %v6407, %v6152
      %v6542 = vmul.f32 %v6412, %v6154
      %v6543 = vmul.f32 %v6412, %v6156
      %v6544 = vmul.f32 %v6417, %v6160
      %v6545 = vmul.f32 %v6417, %v6162
      %v6546 = vmul.f32 %v6422, %v6164
      %v6547 = vmul.f32 %v6422, %v6166
      %v6548 = vmul.f32 %v6427, %v6170
      %v6549 = vmul.f32 %v6427, %v6172
      %v6550 = vmul.f32 %v6432, %v6174
      %v6551 = vmul.f32 %v6432, %v6176
      %v6552 = vmul.f32 %v6437, %v6180
      %v6553 = vmul.f32 %v6437, %v6182
      %v6554 = vmul.f32 %v6442, %v6184
      %v6555 = vmul.f32 %v6442, %v6186
      %v6556 = vmul.f32 %v6447, %v6190
      %v6557 = vmul.f32 %v6447, %v6192
      %v6558 = vmul.f32 %v6452, %v6194
      %v6559 = vmul.f32 %v6452, %v6196
      %v6560 = vmul.f32 %v6457, %v6200
      %v6561 = vmul.f32 %v6457, %v6202
      %v6562 = vmul.f32 %v6462, %v6204
      %v6563 = vmul.f32 %v6462, %v6206
      %v6564 = vmul.f32 %v6467, %v6210
      %v6565 = vmul.f32 %v6467, %v6212
      %v6566 = vmul.f32 %v6472, %v6214
      %v6567 = vmul.f32 %v6472, %v6216
      %v6568 = vmul.f32 %v6477, %v6220
      %v6569 = vmul.f32 %v6477, %v6222
      %v6570 = vmul.f32 %v6482, %v6224
      %v6571 = vmul.f32 %v6482, %v6226
      %v6572 = vmul.f32 %v6487, %v6230
      %v6573 = vmul.f32 %v6487, %v6232
      %v6574 = vmul.f32 %v6492, %v6234
      %v6575 = vmul.f32 %v6492, %v6236
      %v6576 = vmul.f32 %v6497, %v6240
      %v6577 = vmul.f32 %v6497, %v6242
      %v6578 = vmul.f32 %v6502, %v6244
      %v6579 = vmul.f32 %v6502, %v6246
      %v6580 = vmul.f32 %v6507, %v6250
      %v6581 = vmul.f32 %v6507, %v6252
      %v6582 = vmul.f32 %v6512, %v6254
      %v6583 = vmul.f32 %v6512, %v6256
      %v6584 = vmul.f32 %v6517, %v6260
      %v6585 = vmul.f32 %v6517, %v6262
      %v6586 = vmul.f32 %v6522, %v6264
      %v6587 = vmul.f32 %v6522, %v6266
      %v6588 = vsel %vm6300, %v6110, %v6524
      %v6589 = vsel %vm6301, %v6112, %v6525
      %v6590 = vsel %vm6302, %v6114, %v6526
      %v6591 = vsel %vm6303, %v6116, %v6527
      %v6592 = vsel %vm6304, %v6120, %v6528
      %v6593 = vsel %vm6305, %v6122, %v6529
      %v6594 = vsel %vm6306, %v6124, %v6530
      %v6595 = vsel %vm6307, %v6126, %v6531
      %v6596 = vsel %vm6308, %v6130, %v6532
      %v6597 = vsel %vm6309, %v6132, %v6533
      %v6598 = vsel %vm6310, %v6134, %v6534
      %v6599 = vsel %vm6311, %v6136, %v6535
      %v6600 = vsel %vm6312, %v6140, %v6536
      %v6601 = vsel %vm6313, %v6142, %v6537
      %v6602 = vsel %vm6314, %v6144, %v6538
      %v6603 = vsel %vm6315, %v6146, %v6539
      %v6604 = vsel %vm6316, %v6150, %v6540
      %v6605 = vsel %vm6317, %v6152, %v6541
      %v6606 = vsel %vm6318, %v6154, %v6542
      %v6607 = vsel %vm6319, %v6156, %v6543
      %v6608 = vsel %vm6320, %v6160, %v6544
      %v6609 = vsel %vm6321, %v6162, %v6545
      %v6610 = vsel %vm6322, %v6164, %v6546
      %v6611 = vsel %vm6323, %v6166, %v6547
      %v6612 = vsel %vm6324, %v6170, %v6548
      %v6613 = vsel %vm6325, %v6172, %v6549
      %v6614 = vsel %vm6326, %v6174, %v6550
      %v6615 = vsel %vm6327, %v6176, %v6551
      %v6616 = vsel %vm6328, %v6180, %v6552
      %v6617 = vsel %vm6329, %v6182, %v6553
      %v6618 = vsel %vm6330, %v6184, %v6554
      %v6619 = vsel %vm6331, %v6186, %v6555
      %v6620 = vsel %vm6332, %v6190, %v6556
      %v6621 = vsel %vm6333, %v6192, %v6557
      %v6622 = vsel %vm6334, %v6194, %v6558
      %v6623 = vsel %vm6335, %v6196, %v6559
      %v6624 = vsel %vm6336, %v6200, %v6560
      %v6625 = vsel %vm6337, %v6202, %v6561
      %v6626 = vsel %vm6338, %v6204, %v6562
      %v6627 = vsel %vm6339, %v6206, %v6563
      %v6628 = vsel %vm6340, %v6210, %v6564
      %v6629 = vsel %vm6341, %v6212, %v6565
      %v6630 = vsel %vm6342, %v6214, %v6566
      %v6631 = vsel %vm6343, %v6216, %v6567
      %v6632 = vsel %vm6344, %v6220, %v6568
      %v6633 = vsel %vm6345, %v6222, %v6569
      %v6634 = vsel %vm6346, %v6224, %v6570
      %v6635 = vsel %vm6347, %v6226, %v6571
      %v6636 = vsel %vm6348, %v6230, %v6572
      %v6637 = vsel %vm6349, %v6232, %v6573
      %v6638 = vsel %vm6350, %v6234, %v6574
      %v6639 = vsel %vm6351, %v6236, %v6575
      %v6640 = vsel %vm6352, %v6240, %v6576
      %v6641 = vsel %vm6353, %v6242, %v6577
      %v6642 = vsel %vm6354, %v6244, %v6578
      %v6643 = vsel %vm6355, %v6246, %v6579
      %v6644 = vsel %vm6356, %v6250, %v6580
      %v6645 = vsel %vm6357, %v6252, %v6581
      %v6646 = vsel %vm6358, %v6254, %v6582
      %v6647 = vsel %vm6359, %v6256, %v6583
      %v6648 = vsel %vm6360, %v6260, %v6584
      %v6649 = vsel %vm6361, %v6262, %v6585
      %v6650 = vsel %vm6362, %v6264, %v6586
      %v6651 = vsel %vm6363, %v6266, %v6587
      %v6652 = vld [vmem:[%s61] sm:$0xff]
      %v6653 = vpack.c.bf16 %v6590, %v6588
      %v6654 = vpack.c.bf16 %v6591, %v6589
      %v6655 = vpack.c.bf16 %v6594, %v6592
      %v6656 = vpack.c.bf16 %v6595, %v6593
      %v6657 = vpack.c.bf16 %v6598, %v6596
      %v6658 = vpack.c.bf16 %v6599, %v6597
      %v6659 = vpack.c.bf16 %v6602, %v6600
      %v6660 = vpack.c.bf16 %v6603, %v6601
      %v6661 = vpack.c.bf16 %v6606, %v6604
      %v6662 = vpack.c.bf16 %v6607, %v6605
      %v6663 = vpack.c.bf16 %v6610, %v6608
      %v6664 = vpack.c.bf16 %v6611, %v6609
      %v6665 = vpack.c.bf16 %v6614, %v6612
      %v6666 = vpack.c.bf16 %v6615, %v6613
      %v6667 = vpack.c.bf16 %v6618, %v6616
      %v6668 = vpack.c.bf16 %v6619, %v6617
      %v6669 = vpack.c.bf16 %v6622, %v6620
      %v6670 = vpack.c.bf16 %v6623, %v6621
      %v6671 = vpack.c.bf16 %v6626, %v6624
      %v6672 = vpack.c.bf16 %v6627, %v6625
      %v6673 = vpack.c.bf16 %v6630, %v6628
      %v6674 = vpack.c.bf16 %v6631, %v6629
      %v6675 = vpack.c.bf16 %v6634, %v6632
      %v6676 = vpack.c.bf16 %v6635, %v6633
      %v6677 = vpack.c.bf16 %v6638, %v6636
      %v6678 = vpack.c.bf16 %v6639, %v6637
      %v6679 = vpack.c.bf16 %v6642, %v6640
      %v6680 = vpack.c.bf16 %v6643, %v6641
      %v6681 = vpack.c.bf16 %v6646, %v6644
      %v6682 = vpack.c.bf16 %v6647, %v6645
      %v6683 = vpack.c.bf16 %v6650, %v6648
      %v6684 = vpack.c.bf16 %v6651, %v6649
      %v6686 = vunpack.c.l.b16 %v6652
      %v6687 = vunpack.c.h.b16 %v6652
      %v6688 = vpack.c.b16 %v6686, %v6686
      %v6689 = vpack.c.b16 %v6687, %v6687
      %6692 = vmatprep.subr.bf16.mxu0 %v6654
      %6693 = vmatpush1.bf16.msra.mxu0 %v6653
      %6694 = vmatprep.subr.bf16.mxu0 %v6656
      %6695 = vmatpush1.bf16.msra.mxu0 %v6655
      %6696 = vmatprep.subr.bf16.mxu0 %v6658
      %6697 = vmatpush1.bf16.msra.mxu0 %v6657
      %6698 = vmatprep.subr.bf16.mxu0 %v6660
      %6699 = vmatpush1.bf16.msra.mxu0 %v6659
      %6700 = vmatprep.subr.bf16.mxu0 %v6662
      %6701 = vmatpush1.bf16.msra.mxu0 %v6661
      %6702 = vmatprep.subr.bf16.mxu0 %v6664
      %6703 = vmatpush1.bf16.msra.mxu0 %v6663
      %6704 = vmatprep.subr.bf16.mxu0 %v6666
      %6705 = vmatpush1.bf16.msra.mxu0 %v6665
      %6706 = vmatprep.subr.bf16.mxu0 %v6668
      %6707 = vmatpush1.bf16.msra.mxu0 %v6667
      %6708 = vmatprep.subr.bf16.mxu0 %v6670
      %6709 = vmatpush1.bf16.msra.mxu0 %v6669
      %6710 = vmatprep.subr.bf16.mxu0 %v6672
      %6711 = vmatpush1.bf16.msra.mxu0 %v6671
      %6712 = vmatprep.subr.bf16.mxu0 %v6674
      %6713 = vmatpush1.bf16.msra.mxu0 %v6673
      %6714 = vmatprep.subr.bf16.mxu0 %v6676
      %6715 = vmatpush1.bf16.msra.mxu0 %v6675
      %6716 = vmatprep.subr.bf16.mxu0 %v6678
      %6717 = vmatpush1.bf16.msra.mxu0 %v6677
      %6718 = vmatprep.subr.bf16.mxu0 %v6680
      %6719 = vmatpush1.bf16.msra.mxu0 %v6679
      %6720 = vmatprep.subr.bf16.mxu0 %v6682
      %6721 = vmatpush1.bf16.msra.mxu0 %v6681
      %6722 = vmatprep.subr.bf16.mxu0 %v6684
      %6723 = vmatpush1.bf16.msra.mxu0 %v6683
      %6724 = vmatprep.mubr.bf16.mxu0 %v6689
      %6725 = vmatmul.mubr.bf16.gmra.mrb[0].mxu0 %v6688
      %v6726 = vpop.f32.mrb[0].mxu0
      %v6727 = vadd.f32 0.0, %v6726
      %v6728 = vpop.f32.mrb[0].mxu0
      %v6729 = vadd.f32 0.0, %v6728
      %v6730 = vpop.f32.mrb[0].mxu0
      %v6731 = vpop.f32.mrb[0].mxu0
      %6732 = vdwg.mxu0
      %v6733 = vpack.c.bf16 %v6727, %v6727
      %v6734 = vpack.c.bf16 %v6729, %v6729
      %v6735 = vld [vmem:[%s65] sm:$0xff]
      %v6736 = vld [vmem:[%s65 + $0x8] sm:$0xff]
      %v6737 = vld [vmem:[%s65 + $0x10] sm:$0xff]
      %v6738 = vld [vmem:[%s65 + $0x18] sm:$0xff]
      %v6739 = vld [vmem:[%s65 + $0x20] sm:$0xff]
      %v6740 = vld [vmem:[%s65 + $0x28] sm:$0xff]
      %v6741 = vld [vmem:[%s65 + $0x30] sm:$0xff]
      %v6742 = vld [vmem:[%s65 + $0x38] sm:$0xff]
      %v6743 = vld [vmem:[%s65 + $0x40] sm:$0xff]
      %v6744 = vld [vmem:[%s65 + $0x48] sm:$0xff]
      %v6745 = vld [vmem:[%s65 + $0x50] sm:$0xff]
      %v6746 = vld [vmem:[%s65 + $0x58] sm:$0xff]
      %v6747 = vld [vmem:[%s65 + $0x60] sm:$0xff]
      %v6748 = vld [vmem:[%s65 + $0x68] sm:$0xff]
      %v6749 = vld [vmem:[%s65 + $0x70] sm:$0xff]
      %v6750 = vld [vmem:[%s65 + $0x78] sm:$0xff]
      %v6751 = vld [vmem:[%s65 + $0x80] sm:$0xff]
      %v6752 = vld [vmem:[%s65 + $0x88] sm:$0xff]
      %v6753 = vld [vmem:[%s65 + $0x90] sm:$0xff]
      %v6754 = vld [vmem:[%s65 + $0x98] sm:$0xff]
      %v6755 = vld [vmem:[%s65 + $0xa0] sm:$0xff]
      %v6756 = vld [vmem:[%s65 + $0xa8] sm:$0xff]
      %v6757 = vld [vmem:[%s65 + $0xb0] sm:$0xff]
      %v6758 = vld [vmem:[%s65 + $0xb8] sm:$0xff]
      %v6759 = vld [vmem:[%s65 + $0xc0] sm:$0xff]
      %v6760 = vld [vmem:[%s65 + $0xc8] sm:$0xff]
      %v6761 = vld [vmem:[%s65 + $0xd0] sm:$0xff]
      %v6762 = vld [vmem:[%s65 + $0xd8] sm:$0xff]
      %v6763 = vld [vmem:[%s65 + $0xe0] sm:$0xff]
      %v6764 = vld [vmem:[%s65 + $0xe8] sm:$0xff]
      %v6765 = vld [vmem:[%s65 + $0xf0] sm:$0xff]
      %v6766 = vld [vmem:[%s65 + $0xf8] sm:$0xff]
      %v6767 = vld [vmem:[%s65 + $0x100] sm:$0xff]
      %v6768 = vld [vmem:[%s65 + $0x108] sm:$0xff]
      %v6769 = vld [vmem:[%s65 + $0x110] sm:$0xff]
      %v6770 = vld [vmem:[%s65 + $0x118] sm:$0xff]
      %v6771 = vld [vmem:[%s65 + $0x120] sm:$0xff]
      %v6772 = vld [vmem:[%s65 + $0x128] sm:$0xff]
      %v6773 = vld [vmem:[%s65 + $0x130] sm:$0xff]
      %v6774 = vld [vmem:[%s65 + $0x138] sm:$0xff]
      %v6775 = vld [vmem:[%s65 + $0x140] sm:$0xff]
      %v6776 = vld [vmem:[%s65 + $0x148] sm:$0xff]
      %v6777 = vld [vmem:[%s65 + $0x150] sm:$0xff]
      %v6778 = vld [vmem:[%s65 + $0x158] sm:$0xff]
      %v6779 = vld [vmem:[%s65 + $0x160] sm:$0xff]
      %v6780 = vld [vmem:[%s65 + $0x168] sm:$0xff]
      %v6781 = vld [vmem:[%s65 + $0x170] sm:$0xff]
      %v6782 = vld [vmem:[%s65 + $0x178] sm:$0xff]
      %v6783 = vld [vmem:[%s65 + $0x180] sm:$0xff]
      %v6784 = vld [vmem:[%s65 + $0x188] sm:$0xff]
      %v6785 = vld [vmem:[%s65 + $0x190] sm:$0xff]
      %v6786 = vld [vmem:[%s65 + $0x198] sm:$0xff]
      %v6787 = vld [vmem:[%s65 + $0x1a0] sm:$0xff]
      %v6788 = vld [vmem:[%s65 + $0x1a8] sm:$0xff]
      %v6789 = vld [vmem:[%s65 + $0x1b0] sm:$0xff]
      %v6790 = vld [vmem:[%s65 + $0x1b8] sm:$0xff]
      %v6791 = vld [vmem:[%s65 + $0x1c0] sm:$0xff]
      %v6792 = vld [vmem:[%s65 + $0x1c8] sm:$0xff]
      %v6793 = vld [vmem:[%s65 + $0x1d0] sm:$0xff]
      %v6794 = vld [vmem:[%s65 + $0x1d8] sm:$0xff]
      %v6795 = vld [vmem:[%s65 + $0x1e0] sm:$0xff]
      %v6796 = vld [vmem:[%s65 + $0x1e8] sm:$0xff]
      %v6797 = vld [vmem:[%s65 + $0x1f0] sm:$0xff]
      %v6798 = vld [vmem:[%s65 + $0x1f8] sm:$0xff]
      %v6799 = vld [vmem:[%s65 + $0x200] sm:$0xff]
      %v6800 = vld [vmem:[%s65 + $0x208] sm:$0xff]
      %v6801 = vld [vmem:[%s65 + $0x210] sm:$0xff]
      %v6802 = vld [vmem:[%s65 + $0x218] sm:$0xff]
      %v6803 = vld [vmem:[%s65 + $0x220] sm:$0xff]
      %v6804 = vld [vmem:[%s65 + $0x228] sm:$0xff]
      %v6805 = vld [vmem:[%s65 + $0x230] sm:$0xff]
      %v6806 = vld [vmem:[%s65 + $0x238] sm:$0xff]
      %v6807 = vld [vmem:[%s65 + $0x240] sm:$0xff]
      %v6808 = vld [vmem:[%s65 + $0x248] sm:$0xff]
      %v6809 = vld [vmem:[%s65 + $0x250] sm:$0xff]
      %v6810 = vld [vmem:[%s65 + $0x258] sm:$0xff]
      %v6811 = vld [vmem:[%s65 + $0x260] sm:$0xff]
      %v6812 = vld [vmem:[%s65 + $0x268] sm:$0xff]
      %v6813 = vld [vmem:[%s65 + $0x270] sm:$0xff]
      %v6814 = vld [vmem:[%s65 + $0x278] sm:$0xff]
      %v6815 = vld [vmem:[%s65 + $0x280] sm:$0xff]
      %v6816 = vld [vmem:[%s65 + $0x288] sm:$0xff]
      %v6817 = vld [vmem:[%s65 + $0x290] sm:$0xff]
      %v6818 = vld [vmem:[%s65 + $0x298] sm:$0xff]
      %v6819 = vld [vmem:[%s65 + $0x2a0] sm:$0xff]
      %v6820 = vld [vmem:[%s65 + $0x2a8] sm:$0xff]
      %v6821 = vld [vmem:[%s65 + $0x2b0] sm:$0xff]
      %v6822 = vld [vmem:[%s65 + $0x2b8] sm:$0xff]
      %v6823 = vld [vmem:[%s65 + $0x2c0] sm:$0xff]
      %v6824 = vld [vmem:[%s65 + $0x2c8] sm:$0xff]
      %v6825 = vld [vmem:[%s65 + $0x2d0] sm:$0xff]
      %v6826 = vld [vmem:[%s65 + $0x2d8] sm:$0xff]
      %v6827 = vld [vmem:[%s65 + $0x2e0] sm:$0xff]
      %v6828 = vld [vmem:[%s65 + $0x2e8] sm:$0xff]
      %v6829 = vld [vmem:[%s65 + $0x2f0] sm:$0xff]
      %v6830 = vld [vmem:[%s65 + $0x2f8] sm:$0xff]
      %v6831 = vld [vmem:[%s65 + $0x300] sm:$0xff]
      %v6832 = vld [vmem:[%s65 + $0x308] sm:$0xff]
      %v6833 = vld [vmem:[%s65 + $0x310] sm:$0xff]
      %v6834 = vld [vmem:[%s65 + $0x318] sm:$0xff]
      %v6835 = vld [vmem:[%s65 + $0x320] sm:$0xff]
      %v6836 = vld [vmem:[%s65 + $0x328] sm:$0xff]
      %v6837 = vld [vmem:[%s65 + $0x330] sm:$0xff]
      %v6838 = vld [vmem:[%s65 + $0x338] sm:$0xff]
      %v6839 = vld [vmem:[%s65 + $0x340] sm:$0xff]
      %v6840 = vld [vmem:[%s65 + $0x348] sm:$0xff]
      %v6841 = vld [vmem:[%s65 + $0x350] sm:$0xff]
      %v6842 = vld [vmem:[%s65 + $0x358] sm:$0xff]
      %v6843 = vld [vmem:[%s65 + $0x360] sm:$0xff]
      %v6844 = vld [vmem:[%s65 + $0x368] sm:$0xff]
      %v6845 = vld [vmem:[%s65 + $0x370] sm:$0xff]
      %v6846 = vld [vmem:[%s65 + $0x378] sm:$0xff]
      %v6847 = vld [vmem:[%s65 + $0x380] sm:$0xff]
      %v6848 = vld [vmem:[%s65 + $0x388] sm:$0xff]
      %v6849 = vld [vmem:[%s65 + $0x390] sm:$0xff]
      %v6850 = vld [vmem:[%s65 + $0x398] sm:$0xff]
      %v6851 = vld [vmem:[%s65 + $0x3a0] sm:$0xff]
      %v6852 = vld [vmem:[%s65 + $0x3a8] sm:$0xff]
      %v6853 = vld [vmem:[%s65 + $0x3b0] sm:$0xff]
      %v6854 = vld [vmem:[%s65 + $0x3b8] sm:$0xff]
      %v6855 = vld [vmem:[%s65 + $0x3c0] sm:$0xff]
      %v6856 = vld [vmem:[%s65 + $0x3c8] sm:$0xff]
      %v6857 = vld [vmem:[%s65 + $0x3d0] sm:$0xff]
      %v6858 = vld [vmem:[%s65 + $0x3d8] sm:$0xff]
      %v6859 = vld [vmem:[%s65 + $0x3e0] sm:$0xff]
      %v6860 = vld [vmem:[%s65 + $0x3e8] sm:$0xff]
      %v6861 = vld [vmem:[%s65 + $0x3f0] sm:$0xff]
      %v6862 = vld [vmem:[%s65 + $0x3f8] sm:$0xff]
      %v6863 = vld [vmem:[%s63] sm:$0xff]
      %6865 = vset.pattern.permute.xlu0 0
      %6866 = vperm.xlu0 %6865, %v6863
      %v6867 = vpop.permute.xlu0 %6866
      %v6997 = vunpack.c.l.b16 %v6735
      %v6998 = vunpack.c.h.b16 %v6735
      %v6999 = vunpack.c.l.b16 %v6736
      %v7000 = vunpack.c.h.b16 %v6736
      %v7001 = vunpack.c.l.b16 %v6737
      %v7002 = vunpack.c.h.b16 %v6737
      %v7003 = vunpack.c.l.b16 %v6738
      %v7004 = vunpack.c.h.b16 %v6738
      %v7005 = vunpack.c.l.b16 %v6739
      %v7006 = vunpack.c.h.b16 %v6739
      %v7007 = vunpack.c.l.b16 %v6740
      %v7008 = vunpack.c.h.b16 %v6740
      %v7009 = vunpack.c.l.b16 %v6741
      %v7010 = vunpack.c.h.b16 %v6741
      %v7011 = vunpack.c.l.b16 %v6742
      %v7012 = vunpack.c.h.b16 %v6742
      %v7013 = vunpack.c.l.b16 %v6743
      %v7014 = vunpack.c.h.b16 %v6743
      %v7015 = vunpack.c.l.b16 %v6744
      %v7016 = vunpack.c.h.b16 %v6744
      %v7017 = vunpack.c.l.b16 %v6745
      %v7018 = vunpack.c.h.b16 %v6745
      %v7019 = vunpack.c.l.b16 %v6746
      %v7020 = vunpack.c.h.b16 %v6746
      %v7021 = vunpack.c.l.b16 %v6747
      %v7022 = vunpack.c.h.b16 %v6747
      %v7023 = vunpack.c.l.b16 %v6748
      %v7024 = vunpack.c.h.b16 %v6748
      %v7025 = vunpack.c.l.b16 %v6749
      %v7026 = vunpack.c.h.b16 %v6749
      %v7027 = vunpack.c.l.b16 %v6750
      %v7028 = vunpack.c.h.b16 %v6750
      %v7029 = vunpack.c.l.b16 %v6751
      %v7030 = vunpack.c.h.b16 %v6751
      %v7031 = vunpack.c.l.b16 %v6752
      %v7032 = vunpack.c.h.b16 %v6752
      %v7033 = vunpack.c.l.b16 %v6753
      %v7034 = vunpack.c.h.b16 %v6753
      %v7035 = vunpack.c.l.b16 %v6754
      %v7036 = vunpack.c.h.b16 %v6754
      %v7037 = vunpack.c.l.b16 %v6755
      %v7038 = vunpack.c.h.b16 %v6755
      %v7039 = vunpack.c.l.b16 %v6756
      %v7040 = vunpack.c.h.b16 %v6756
      %v7041 = vunpack.c.l.b16 %v6757
      %v7042 = vunpack.c.h.b16 %v6757
      %v7043 = vunpack.c.l.b16 %v6758
      %v7044 = vunpack.c.h.b16 %v6758
      %v7045 = vunpack.c.l.b16 %v6759
      %v7046 = vunpack.c.h.b16 %v6759
      %v7047 = vunpack.c.l.b16 %v6760
      %v7048 = vunpack.c.h.b16 %v6760
      %v7049 = vunpack.c.l.b16 %v6761
      %v7050 = vunpack.c.h.b16 %v6761
      %v7051 = vunpack.c.l.b16 %v6762
      %v7052 = vunpack.c.h.b16 %v6762
      %v7053 = vunpack.c.l.b16 %v6763
      %v7054 = vunpack.c.h.b16 %v6763
      %v7055 = vunpack.c.l.b16 %v6764
      %v7056 = vunpack.c.h.b16 %v6764
      %v7057 = vunpack.c.l.b16 %v6765
      %v7058 = vunpack.c.h.b16 %v6765
      %v7059 = vunpack.c.l.b16 %v6766
      %v7060 = vunpack.c.h.b16 %v6766
      %v7061 = vunpack.c.l.b16 %v6767
      %v7062 = vunpack.c.h.b16 %v6767
      %v7063 = vunpack.c.l.b16 %v6768
      %v7064 = vunpack.c.h.b16 %v6768
      %v7065 = vunpack.c.l.b16 %v6769
      %v7066 = vunpack.c.h.b16 %v6769
      %v7067 = vunpack.c.l.b16 %v6770
      %v7068 = vunpack.c.h.b16 %v6770
      %v7069 = vunpack.c.l.b16 %v6771
      %v7070 = vunpack.c.h.b16 %v6771
      %v7071 = vunpack.c.l.b16 %v6772
      %v7072 = vunpack.c.h.b16 %v6772
      %v7073 = vunpack.c.l.b16 %v6773
      %v7074 = vunpack.c.h.b16 %v6773
      %v7075 = vunpack.c.l.b16 %v6774
      %v7076 = vunpack.c.h.b16 %v6774
      %v7077 = vunpack.c.l.b16 %v6775
      %v7078 = vunpack.c.h.b16 %v6775
      %v7079 = vunpack.c.l.b16 %v6776
      %v7080 = vunpack.c.h.b16 %v6776
      %v7081 = vunpack.c.l.b16 %v6777
      %v7082 = vunpack.c.h.b16 %v6777
      %v7083 = vunpack.c.l.b16 %v6778
      %v7084 = vunpack.c.h.b16 %v6778
      %v7085 = vunpack.c.l.b16 %v6779
      %v7086 = vunpack.c.h.b16 %v6779
      %v7087 = vunpack.c.l.b16 %v6780
      %v7088 = vunpack.c.h.b16 %v6780
      %v7089 = vunpack.c.l.b16 %v6781
      %v7090 = vunpack.c.h.b16 %v6781
      %v7091 = vunpack.c.l.b16 %v6782
      %v7092 = vunpack.c.h.b16 %v6782
      %v7093 = vunpack.c.l.b16 %v6783
      %v7094 = vunpack.c.h.b16 %v6783
      %v7095 = vunpack.c.l.b16 %v6784
      %v7096 = vunpack.c.h.b16 %v6784
      %v7097 = vunpack.c.l.b16 %v6785
      %v7098 = vunpack.c.h.b16 %v6785
      %v7099 = vunpack.c.l.b16 %v6786
      %v7100 = vunpack.c.h.b16 %v6786
      %v7101 = vunpack.c.l.b16 %v6787
      %v7102 = vunpack.c.h.b16 %v6787
      %v7103 = vunpack.c.l.b16 %v6788
      %v7104 = vunpack.c.h.b16 %v6788
      %v7105 = vunpack.c.l.b16 %v6789
      %v7106 = vunpack.c.h.b16 %v6789
      %v7107 = vunpack.c.l.b16 %v6790
      %v7108 = vunpack.c.h.b16 %v6790
      %v7109 = vunpack.c.l.b16 %v6791
      %v7110 = vunpack.c.h.b16 %v6791
      %v7111 = vunpack.c.l.b16 %v6792
      %v7112 = vunpack.c.h.b16 %v6792
      %v7113 = vunpack.c.l.b16 %v6793
      %v7114 = vunpack.c.h.b16 %v6793
      %v7115 = vunpack.c.l.b16 %v6794
      %v7116 = vunpack.c.h.b16 %v6794
      %v7117 = vunpack.c.l.b16 %v6795
      %v7118 = vunpack.c.h.b16 %v6795
      %v7119 = vunpack.c.l.b16 %v6796
      %v7120 = vunpack.c.h.b16 %v6796
      %v7121 = vunpack.c.l.b16 %v6797
      %v7122 = vunpack.c.h.b16 %v6797
      %v7123 = vunpack.c.l.b16 %v6798
      %v7124 = vunpack.c.h.b16 %v6798
      %v7125 = vunpack.c.l.b16 %v6799
      %v7126 = vunpack.c.h.b16 %v6799
      %v7127 = vunpack.c.l.b16 %v6800
      %v7128 = vunpack.c.h.b16 %v6800
      %v7129 = vunpack.c.l.b16 %v6801
      %v7130 = vunpack.c.h.b16 %v6801
      %v7131 = vunpack.c.l.b16 %v6802
      %v7132 = vunpack.c.h.b16 %v6802
      %v7133 = vunpack.c.l.b16 %v6803
      %v7134 = vunpack.c.h.b16 %v6803
      %v7135 = vunpack.c.l.b16 %v6804
      %v7136 = vunpack.c.h.b16 %v6804
      %v7137 = vunpack.c.l.b16 %v6805
      %v7138 = vunpack.c.h.b16 %v6805
      %v7139 = vunpack.c.l.b16 %v6806
      %v7140 = vunpack.c.h.b16 %v6806
      %v7141 = vunpack.c.l.b16 %v6807
      %v7142 = vunpack.c.h.b16 %v6807
      %v7143 = vunpack.c.l.b16 %v6808
      %v7144 = vunpack.c.h.b16 %v6808
      %v7145 = vunpack.c.l.b16 %v6809
      %v7146 = vunpack.c.h.b16 %v6809
      %v7147 = vunpack.c.l.b16 %v6810
      %v7148 = vunpack.c.h.b16 %v6810
      %v7149 = vunpack.c.l.b16 %v6811
      %v7150 = vunpack.c.h.b16 %v6811
      %v7151 = vunpack.c.l.b16 %v6812
      %v7152 = vunpack.c.h.b16 %v6812
      %v7153 = vunpack.c.l.b16 %v6813
      %v7154 = vunpack.c.h.b16 %v6813
      %v7155 = vunpack.c.l.b16 %v6814
      %v7156 = vunpack.c.h.b16 %v6814
      %v7157 = vunpack.c.l.b16 %v6815
      %v7158 = vunpack.c.h.b16 %v6815
      %v7159 = vunpack.c.l.b16 %v6816
      %v7160 = vunpack.c.h.b16 %v6816
      %v7161 = vunpack.c.l.b16 %v6817
      %v7162 = vunpack.c.h.b16 %v6817
      %v7163 = vunpack.c.l.b16 %v6818
      %v7164 = vunpack.c.h.b16 %v6818
      %v7165 = vunpack.c.l.b16 %v6819
      %v7166 = vunpack.c.h.b16 %v6819
      %v7167 = vunpack.c.l.b16 %v6820
      %v7168 = vunpack.c.h.b16 %v6820
      %v7169 = vunpack.c.l.b16 %v6821
      %v7170 = vunpack.c.h.b16 %v6821
      %v7171 = vunpack.c.l.b16 %v6822
      %v7172 = vunpack.c.h.b16 %v6822
      %v7173 = vunpack.c.l.b16 %v6823
      %v7174 = vunpack.c.h.b16 %v6823
      %v7175 = vunpack.c.l.b16 %v6824
      %v7176 = vunpack.c.h.b16 %v6824
      %v7177 = vunpack.c.l.b16 %v6825
      %v7178 = vunpack.c.h.b16 %v6825
      %v7179 = vunpack.c.l.b16 %v6826
      %v7180 = vunpack.c.h.b16 %v6826
      %v7181 = vunpack.c.l.b16 %v6827
      %v7182 = vunpack.c.h.b16 %v6827
      %v7183 = vunpack.c.l.b16 %v6828
      %v7184 = vunpack.c.h.b16 %v6828
      %v7185 = vunpack.c.l.b16 %v6829
      %v7186 = vunpack.c.h.b16 %v6829
      %v7187 = vunpack.c.l.b16 %v6830
      %v7188 = vunpack.c.h.b16 %v6830
      %v7189 = vunpack.c.l.b16 %v6831
      %v7190 = vunpack.c.h.b16 %v6831
      %v7191 = vunpack.c.l.b16 %v6832
      %v7192 = vunpack.c.h.b16 %v6832
      %v7193 = vunpack.c.l.b16 %v6833
      %v7194 = vunpack.c.h.b16 %v6833
      %v7195 = vunpack.c.l.b16 %v6834
      %v7196 = vunpack.c.h.b16 %v6834
      %v7197 = vunpack.c.l.b16 %v6835
      %v7198 = vunpack.c.h.b16 %v6835
      %v7199 = vunpack.c.l.b16 %v6836
      %v7200 = vunpack.c.h.b16 %v6836
      %v7201 = vunpack.c.l.b16 %v6837
      %v7202 = vunpack.c.h.b16 %v6837
      %v7203 = vunpack.c.l.b16 %v6838
      %v7204 = vunpack.c.h.b16 %v6838
      %v7205 = vunpack.c.l.b16 %v6839
      %v7206 = vunpack.c.h.b16 %v6839
      %v7207 = vunpack.c.l.b16 %v6840
      %v7208 = vunpack.c.h.b16 %v6840
      %v7209 = vunpack.c.l.b16 %v6841
      %v7210 = vunpack.c.h.b16 %v6841
      %v7211 = vunpack.c.l.b16 %v6842
      %v7212 = vunpack.c.h.b16 %v6842
      %v7213 = vunpack.c.l.b16 %v6843
      %v7214 = vunpack.c.h.b16 %v6843
      %v7215 = vunpack.c.l.b16 %v6844
      %v7216 = vunpack.c.h.b16 %v6844
      %v7217 = vunpack.c.l.b16 %v6845
      %v7218 = vunpack.c.h.b16 %v6845
      %v7219 = vunpack.c.l.b16 %v6846
      %v7220 = vunpack.c.h.b16 %v6846
      %v7221 = vunpack.c.l.b16 %v6847
      %v7222 = vunpack.c.h.b16 %v6847
      %v7223 = vunpack.c.l.b16 %v6848
      %v7224 = vunpack.c.h.b16 %v6848
      %v7225 = vunpack.c.l.b16 %v6849
      %v7226 = vunpack.c.h.b16 %v6849
      %v7227 = vunpack.c.l.b16 %v6850
      %v7228 = vunpack.c.h.b16 %v6850
      %v7229 = vunpack.c.l.b16 %v6851
      %v7230 = vunpack.c.h.b16 %v6851
      %v7231 = vunpack.c.l.b16 %v6852
      %v7232 = vunpack.c.h.b16 %v6852
      %v7233 = vunpack.c.l.b16 %v6853
      %v7234 = vunpack.c.h.b16 %v6853
      %v7235 = vunpack.c.l.b16 %v6854
      %v7236 = vunpack.c.h.b16 %v6854
      %v7237 = vunpack.c.l.b16 %v6855
      %v7238 = vunpack.c.h.b16 %v6855
      %v7239 = vunpack.c.l.b16 %v6856
      %v7240 = vunpack.c.h.b16 %v6856
      %v7241 = vunpack.c.l.b16 %v6857
      %v7242 = vunpack.c.h.b16 %v6857
      %v7243 = vunpack.c.l.b16 %v6858
      %v7244 = vunpack.c.h.b16 %v6858
      %v7245 = vunpack.c.l.b16 %v6859
      %v7246 = vunpack.c.h.b16 %v6859
      %v7247 = vunpack.c.l.b16 %v6860
      %v7248 = vunpack.c.h.b16 %v6860
      %v7249 = vunpack.c.l.b16 %v6861
      %v7250 = vunpack.c.h.b16 %v6861
      %v7251 = vunpack.c.l.b16 %v6862
      %v7252 = vunpack.c.h.b16 %v6862
      %v7253 = vpack.c.b16 %v7005, %v6997
      %v7254 = vpack.c.b16 %v7006, %v6998
      %v7255 = vpack.c.b16 %v7007, %v6999
      %v7256 = vpack.c.b16 %v7008, %v7000
      %v7257 = vpack.c.b16 %v7009, %v7001
      %v7258 = vpack.c.b16 %v7010, %v7002
      %v7259 = vpack.c.b16 %v7011, %v7003
      %v7260 = vpack.c.b16 %v7012, %v7004
      %v7261 = vpack.c.b16 %v7021, %v7013
      %v7262 = vpack.c.b16 %v7022, %v7014
      %v7263 = vpack.c.b16 %v7023, %v7015
      %v7264 = vpack.c.b16 %v7024, %v7016
      %v7265 = vpack.c.b16 %v7025, %v7017
      %v7266 = vpack.c.b16 %v7026, %v7018
      %v7267 = vpack.c.b16 %v7027, %v7019
      %v7268 = vpack.c.b16 %v7028, %v7020
      %v7269 = vpack.c.b16 %v7037, %v7029
      %v7270 = vpack.c.b16 %v7038, %v7030
      %v7271 = vpack.c.b16 %v7039, %v7031
      %v7272 = vpack.c.b16 %v7040, %v7032
      %v7273 = vpack.c.b16 %v7041, %v7033
      %v7274 = vpack.c.b16 %v7042, %v7034
      %v7275 = vpack.c.b16 %v7043, %v7035
      %v7276 = vpack.c.b16 %v7044, %v7036
      %v7277 = vpack.c.b16 %v7053, %v7045
      %v7278 = vpack.c.b16 %v7054, %v7046
      %v7279 = vpack.c.b16 %v7055, %v7047
      %v7280 = vpack.c.b16 %v7056, %v7048
      %v7281 = vpack.c.b16 %v7057, %v7049
      %v7282 = vpack.c.b16 %v7058, %v7050
      %v7283 = vpack.c.b16 %v7059, %v7051
      %v7284 = vpack.c.b16 %v7060, %v7052
      %v7285 = vpack.c.b16 %v7069, %v7061
      %v7286 = vpack.c.b16 %v7070, %v7062
      %v7287 = vpack.c.b16 %v7071, %v7063
      %v7288 = vpack.c.b16 %v7072, %v7064
      %v7289 = vpack.c.b16 %v7073, %v7065
      %v7290 = vpack.c.b16 %v7074, %v7066
      %v7291 = vpack.c.b16 %v7075, %v7067
      %v7292 = vpack.c.b16 %v7076, %v7068
      %v7293 = vpack.c.b16 %v7085, %v7077
      %v7294 = vpack.c.b16 %v7086, %v7078
      %v7295 = vpack.c.b16 %v7087, %v7079
      %v7296 = vpack.c.b16 %v7088, %v7080
      %v7297 = vpack.c.b16 %v7089, %v7081
      %v7298 = vpack.c.b16 %v7090, %v7082
      %v7299 = vpack.c.b16 %v7091, %v7083
      %v7300 = vpack.c.b16 %v7092, %v7084
      %v7301 = vpack.c.b16 %v7101, %v7093
      %v7302 = vpack.c.b16 %v7102, %v7094
      %v7303 = vpack.c.b16 %v7103, %v7095
      %v7304 = vpack.c.b16 %v7104, %v7096
      %v7305 = vpack.c.b16 %v7105, %v7097
      %v7306 = vpack.c.b16 %v7106, %v7098
      %v7307 = vpack.c.b16 %v7107, %v7099
      %v7308 = vpack.c.b16 %v7108, %v7100
      %v7309 = vpack.c.b16 %v7117, %v7109
      %v7310 = vpack.c.b16 %v7118, %v7110
      %v7311 = vpack.c.b16 %v7119, %v7111
      %v7312 = vpack.c.b16 %v7120, %v7112
      %v7313 = vpack.c.b16 %v7121, %v7113
      %v7314 = vpack.c.b16 %v7122, %v7114
      %v7315 = vpack.c.b16 %v7123, %v7115
      %v7316 = vpack.c.b16 %v7124, %v7116
      %v7317 = vpack.c.b16 %v7133, %v7125
      %v7318 = vpack.c.b16 %v7134, %v7126
      %v7319 = vpack.c.b16 %v7135, %v7127
      %v7320 = vpack.c.b16 %v7136, %v7128
      %v7321 = vpack.c.b16 %v7137, %v7129
      %v7322 = vpack.c.b16 %v7138, %v7130
      %v7323 = vpack.c.b16 %v7139, %v7131
      %v7324 = vpack.c.b16 %v7140, %v7132
      %v7325 = vpack.c.b16 %v7149, %v7141
      %v7326 = vpack.c.b16 %v7150, %v7142
      %v7327 = vpack.c.b16 %v7151, %v7143
      %v7328 = vpack.c.b16 %v7152, %v7144
      %v7329 = vpack.c.b16 %v7153, %v7145
      %v7330 = vpack.c.b16 %v7154, %v7146
      %v7331 = vpack.c.b16 %v7155, %v7147
      %v7332 = vpack.c.b16 %v7156, %v7148
      %v7333 = vpack.c.b16 %v7165, %v7157
      %v7334 = vpack.c.b16 %v7166, %v7158
      %v7335 = vpack.c.b16 %v7167, %v7159
      %v7336 = vpack.c.b16 %v7168, %v7160
      %v7337 = vpack.c.b16 %v7169, %v7161
      %v7338 = vpack.c.b16 %v7170, %v7162
      %v7339 = vpack.c.b16 %v7171, %v7163
      %v7340 = vpack.c.b16 %v7172, %v7164
      %v7341 = vpack.c.b16 %v7181, %v7173
      %v7342 = vpack.c.b16 %v7182, %v7174
      %v7343 = vpack.c.b16 %v7183, %v7175
      %v7344 = vpack.c.b16 %v7184, %v7176
      %v7345 = vpack.c.b16 %v7185, %v7177
      %v7346 = vpack.c.b16 %v7186, %v7178
      %v7347 = vpack.c.b16 %v7187, %v7179
      %v7348 = vpack.c.b16 %v7188, %v7180
      %v7349 = vpack.c.b16 %v7197, %v7189
      %v7350 = vpack.c.b16 %v7198, %v7190
      %v7351 = vpack.c.b16 %v7199, %v7191
      %v7352 = vpack.c.b16 %v7200, %v7192
      %v7353 = vpack.c.b16 %v7201, %v7193
      %v7354 = vpack.c.b16 %v7202, %v7194
      %v7355 = vpack.c.b16 %v7203, %v7195
      %v7356 = vpack.c.b16 %v7204, %v7196
      %v7357 = vpack.c.b16 %v7213, %v7205
      %v7358 = vpack.c.b16 %v7214, %v7206
      %v7359 = vpack.c.b16 %v7215, %v7207
      %v7360 = vpack.c.b16 %v7216, %v7208
      %v7361 = vpack.c.b16 %v7217, %v7209
      %v7362 = vpack.c.b16 %v7218, %v7210
      %v7363 = vpack.c.b16 %v7219, %v7211
      %v7364 = vpack.c.b16 %v7220, %v7212
      %v7365 = vpack.c.b16 %v7229, %v7221
      %v7366 = vpack.c.b16 %v7230, %v7222
      %v7367 = vpack.c.b16 %v7231, %v7223
      %v7368 = vpack.c.b16 %v7232, %v7224
      %v7369 = vpack.c.b16 %v7233, %v7225
      %v7370 = vpack.c.b16 %v7234, %v7226
      %v7371 = vpack.c.b16 %v7235, %v7227
      %v7372 = vpack.c.b16 %v7236, %v7228
      %v7373 = vpack.c.b16 %v7245, %v7237
      %v7374 = vpack.c.b16 %v7246, %v7238
      %v7375 = vpack.c.b16 %v7247, %v7239
      %v7376 = vpack.c.b16 %v7248, %v7240
      %v7377 = vpack.c.b16 %v7249, %v7241
      %v7378 = vpack.c.b16 %v7250, %v7242
      %v7379 = vpack.c.b16 %v7251, %v7243
      %v7380 = vpack.c.b16 %v7252, %v7244
      %7509 = vmatprep.subr.bf16.mxu0 %v7254
      %7510 = vmatpush1.bf16.msra.mxu0 %v7253
      %7511 = vmatprep.subr.bf16.mxu0 %v7262
      %7512 = vmatpush1.bf16.msra.mxu0 %v7261
      %7513 = vmatprep.subr.bf16.mxu0 %v7270
      %7514 = vmatpush1.bf16.msra.mxu0 %v7269
      %7515 = vmatprep.subr.bf16.mxu0 %v7278
      %7516 = vmatpush1.bf16.msra.mxu0 %v7277
      %7517 = vmatprep.subr.bf16.mxu0 %v7286
      %7518 = vmatpush1.bf16.msra.mxu0 %v7285
      %7519 = vmatprep.subr.bf16.mxu0 %v7294
      %7520 = vmatpush1.bf16.msra.mxu0 %v7293
      %7521 = vmatprep.subr.bf16.mxu0 %v7302
      %7522 = vmatpush1.bf16.msra.mxu0 %v7301
      %7523 = vmatprep.subr.bf16.mxu0 %v7310
      %7524 = vmatpush1.bf16.msra.mxu0 %v7309
      %7525 = vmatprep.subr.bf16.mxu0 %v7318
      %7526 = vmatpush1.bf16.msra.mxu0 %v7317
      %7527 = vmatprep.subr.bf16.mxu0 %v7326
      %7528 = vmatpush1.bf16.msra.mxu0 %v7325
      %7529 = vmatprep.subr.bf16.mxu0 %v7334
      %7530 = vmatpush1.bf16.msra.mxu0 %v7333
      %7531 = vmatprep.subr.bf16.mxu0 %v7342
      %7532 = vmatpush1.bf16.msra.mxu0 %v7341
      %7533 = vmatprep.subr.bf16.mxu0 %v7350
      %7534 = vmatpush1.bf16.msra.mxu0 %v7349
      %7535 = vmatprep.subr.bf16.mxu0 %v7358
      %7536 = vmatpush1.bf16.msra.mxu0 %v7357
      %7537 = vmatprep.subr.bf16.mxu0 %v7366
      %7538 = vmatpush1.bf16.msra.mxu0 %v7365
      %7539 = vmatprep.subr.bf16.mxu0 %v7374
      %7540 = vmatpush1.bf16.msra.mxu0 %v7373
      %7541 = vmatprep.mubr.bf16.mxu0 %v6734
      %7542 = vmatmul.mubr.bf16.gmra.mrb[0].mxu0 %v6733
      %v7543 = vpop.f32.mrb[0].mxu0
      %v7544 = vadd.f32 %v6867, %v7543
      %v7545 = vpop.f32.mrb[0].mxu0
      %v7546 = vadd.f32 %v6867, %v7545
      %v7547 = vpop.f32.mrb[0].mxu0
      %v7548 = vpop.f32.mrb[0].mxu0
      %7549 = vdwg.mxu0
      %7550 = vmatprep.subr.bf16.mxu0 %v7256
      %7551 = vmatpush1.bf16.msra.mxu0 %v7255
      %7552 = vmatprep.subr.bf16.mxu0 %v7264
      %7553 = vmatpush1.bf16.msra.mxu0 %v7263
      %7554 = vmatprep.subr.bf16.mxu0 %v7272
      %7555 = vmatpush1.bf16.msra.mxu0 %v7271
      %7556 = vmatprep.subr.bf16.mxu0 %v7280
      %7557 = vmatpush1.bf16.msra.mxu0 %v7279
      %7558 = vmatprep.subr.bf16.mxu0 %v7288
      %7559 = vmatpush1.bf16.msra.mxu0 %v7287
      %7560 = vmatprep.subr.bf16.mxu0 %v7296
      %7561 = vmatpush1.bf16.msra.mxu0 %v7295
      %7562 = vmatprep.subr.bf16.mxu0 %v7304
      %7563 = vmatpush1.bf16.msra.mxu0 %v7303
      %7564 = vmatprep.subr.bf16.mxu0 %v7312
      %7565 = vmatpush1.bf16.msra.mxu0 %v7311
      %7566 = vmatprep.subr.bf16.mxu0 %v7320
      %7567 = vmatpush1.bf16.msra.mxu0 %v7319
      %7568 = vmatprep.subr.bf16.mxu0 %v7328
      %7569 = vmatpush1.bf16.msra.mxu0 %v7327
      %7570 = vmatprep.subr.bf16.mxu0 %v7336
      %7571 = vmatpush1.bf16.msra.mxu0 %v7335
      %7572 = vmatprep.subr.bf16.mxu0 %v7344
      %7573 = vmatpush1.bf16.msra.mxu0 %v7343
      %7574 = vmatprep.subr.bf16.mxu0 %v7352
      %7575 = vmatpush1.bf16.msra.mxu0 %v7351
      %7576 = vmatprep.subr.bf16.mxu0 %v7360
      %7577 = vmatpush1.bf16.msra.mxu0 %v7359
      %7578 = vmatprep.subr.bf16.mxu0 %v7368
      %7579 = vmatpush1.bf16.msra.mxu0 %v7367
      %7580 = vmatprep.subr.bf16.mxu0 %v7376
      %7581 = vmatpush1.bf16.msra.mxu0 %v7375
      %7582 = vmatprep.mubr.bf16.mxu0 %v6734
      %7583 = vmatmul.mubr.bf16.gmra.mrb[0].mxu0 %v6733
      %v7584 = vpop.f32.mrb[0].mxu0
      %v7585 = vadd.f32 %v6867, %v7584
      %v7586 = vpop.f32.mrb[0].mxu0
      %v7587 = vadd.f32 %v6867, %v7586
      %v7588 = vpop.f32.mrb[0].mxu0
      %v7589 = vpop.f32.mrb[0].mxu0
      %7590 = vdwg.mxu0
      %7591 = vmatprep.subr.bf16.mxu0 %v7258
      %7592 = vmatpush1.bf16.msra.mxu0 %v7257
      %7593 = vmatprep.subr.bf16.mxu0 %v7266
      %7594 = vmatpush1.bf16.msra.mxu0 %v7265
      %7595 = vmatprep.subr.bf16.mxu0 %v7274
      %7596 = vmatpush1.bf16.msra.mxu0 %v7273
      %7597 = vmatprep.subr.bf16.mxu0 %v7282
      %7598 = vmatpush1.bf16.msra.mxu0 %v7281
      %7599 = vmatprep.subr.bf16.mxu0 %v7290
      %7600 = vmatpush1.bf16.msra.mxu0 %v7289
      %7601 = vmatprep.subr.bf16.mxu0 %v7298
      %7602 = vmatpush1.bf16.msra.mxu0 %v7297
      %7603 = vmatprep.subr.bf16.mxu0 %v7306
      %7604 = vmatpush1.bf16.msra.mxu0 %v7305
      %7605 = vmatprep.subr.bf16.mxu0 %v7314
      %7606 = vmatpush1.bf16.msra.mxu0 %v7313
      %7607 = vmatprep.subr.bf16.mxu0 %v7322
      %7608 = vmatpush1.bf16.msra.mxu0 %v7321
      %7609 = vmatprep.subr.bf16.mxu0 %v7330
      %7610 = vmatpush1.bf16.msra.mxu0 %v7329
      %7611 = vmatprep.subr.bf16.mxu0 %v7338
      %7612 = vmatpush1.bf16.msra.mxu0 %v7337
      %7613 = vmatprep.subr.bf16.mxu0 %v7346
      %7614 = vmatpush1.bf16.msra.mxu0 %v7345
      %7615 = vmatprep.subr.bf16.mxu0 %v7354
      %7616 = vmatpush1.bf16.msra.mxu0 %v7353
      %7617 = vmatprep.subr.bf16.mxu0 %v7362
      %7618 = vmatpush1.bf16.msra.mxu0 %v7361
      %7619 = vmatprep.subr.bf16.mxu0 %v7370
      %7620 = vmatpush1.bf16.msra.mxu0 %v7369
      %7621 = vmatprep.subr.bf16.mxu0 %v7378
      %7622 = vmatpush1.bf16.msra.mxu0 %v7377
      %7623 = vmatprep.mubr.bf16.mxu0 %v6734
      %7624 = vmatmul.mubr.bf16.gmra.mrb[0].mxu0 %v6733
      %v7625 = vpop.f32.mrb[0].mxu0
      %v7626 = vadd.f32 %v6867, %v7625
      %v7627 = vpop.f32.mrb[0].mxu0
      %v7628 = vadd.f32 %v6867, %v7627
      %v7629 = vpop.f32.mrb[0].mxu0
      %v7630 = vpop.f32.mrb[0].mxu0
      %7631 = vdwg.mxu0
      %7632 = vmatprep.subr.bf16.mxu0 %v7260
      %7633 = vmatpush1.bf16.msra.mxu0 %v7259
      %7634 = vmatprep.subr.bf16.mxu0 %v7268
      %7635 = vmatpush1.bf16.msra.mxu0 %v7267
      %7636 = vmatprep.subr.bf16.mxu0 %v7276
      %7637 = vmatpush1.bf16.msra.mxu0 %v7275
      %7638 = vmatprep.subr.bf16.mxu0 %v7284
      %7639 = vmatpush1.bf16.msra.mxu0 %v7283
      %7640 = vmatprep.subr.bf16.mxu0 %v7292
      %7641 = vmatpush1.bf16.msra.mxu0 %v7291
      %7642 = vmatprep.subr.bf16.mxu0 %v7300
      %7643 = vmatpush1.bf16.msra.mxu0 %v7299
      %7644 = vmatprep.subr.bf16.mxu0 %v7308
      %7645 = vmatpush1.bf16.msra.mxu0 %v7307
      %7646 = vmatprep.subr.bf16.mxu0 %v7316
      %7647 = vmatpush1.bf16.msra.mxu0 %v7315
      %7648 = vmatprep.subr.bf16.mxu0 %v7324
      %7649 = vmatpush1.bf16.msra.mxu0 %v7323
      %7650 = vmatprep.subr.bf16.mxu0 %v7332
      %7651 = vmatpush1.bf16.msra.mxu0 %v7331
      %7652 = vmatprep.subr.bf16.mxu0 %v7340
      %7653 = vmatpush1.bf16.msra.mxu0 %v7339
      %7654 = vmatprep.subr.bf16.mxu0 %v7348
      %7655 = vmatpush1.bf16.msra.mxu0 %v7347
      %7656 = vmatprep.subr.bf16.mxu0 %v7356
      %7657 = vmatpush1.bf16.msra.mxu0 %v7355
      %7658 = vmatprep.subr.bf16.mxu0 %v7364
      %7659 = vmatpush1.bf16.msra.mxu0 %v7363
      %7660 = vmatprep.subr.bf16.mxu0 %v7372
      %7661 = vmatpush1.bf16.msra.mxu0 %v7371
      %7662 = vmatprep.subr.bf16.mxu0 %v7380
      %7663 = vmatpush1.bf16.msra.mxu0 %v7379
      %7664 = vmatprep.mubr.bf16.mxu0 %v6734
      %7665 = vmatmul.mubr.bf16.gmra.mrb[0].mxu0 %v6733
      %v7666 = vpop.f32.mrb[0].mxu0
      %v7667 = vadd.f32 %v6867, %v7666
      %v7668 = vpop.f32.mrb[0].mxu0
      %v7669 = vadd.f32 %v6867, %v7668
      %v7670 = vpop.f32.mrb[0].mxu0
      %v7671 = vpop.f32.mrb[0].mxu0
      %7672 = vdwg.mxu0
      %7673 = vst [vmem:[%s1074] sm:$0xff] %v7544
      %7674 = vst [vmem:[%s1074 + $0x8] sm:$0xff] %v7546
      %7675 = vst [vmem:[%s1074 + $0x10] sm:$0xff] %v7585
      %7676 = vst [vmem:[%s1074 + $0x18] sm:$0xff] %v7587
      %7677 = vst [vmem:[%s1074 + $0x20] sm:$0xff] %v7626
      %7678 = vst [vmem:[%s1074 + $0x28] sm:$0xff] %v7628
      %7679 = vst [vmem:[%s1074 + $0x30] sm:$0xff] %v7667
      %7680 = vst [vmem:[%s1074 + $0x38] sm:$0xff] %v7669
      %p7681 = scmp.lt.s32.totalorder %s78, 1
      %s7682 = scalar_select %p7681, %s78, 1
      %s7683 = smul.addr %s7682, 8
      %s7684 = smul.addr %s7683, 8
      %s7685 = scalar_lea.vmem %s67, %s7684
      // Predicated region
      $region153: #{skhead_apply.1} parent=151 // pred_check
        %p7686 = pneg %p809
      $region154: #{skhead_apply.1} parent=151 // pred_check_branch
        %7688 = sbr.rel (%p7686) target = $region156
      $region155: #{skhead_apply.1} parent=151 // pred_region
        _
      $region156: #{skhead_apply.1} parent=151 // pred_fallthru
        _
    $region152: #{skhead_apply.1} parent=5 // pred_fallthru
      _
    %p7689 = scmp.le.s32.totalorder 2, %s73
    // Predicated region
    $region157: #{skhead_apply.1} parent=5 // pred_check
      %p7690 = pneg %p7689
    $region158: #{skhead_apply.1} parent=5 // pred_check_branch
      %7692 = sbr.rel (%p7690) target = $region160
    $region159: #{skhead_apply.1} parent=5 // pred_region
      %s7693 = ssub.s32 %s73, 2
      // Predicated region
      $region161: #{skhead_apply.1} parent=159 // pred_check
        %p7694 = pneg %p815
      $region162: #{skhead_apply.1} parent=159 // pred_check_branch
        %7696 = sbr.rel (%p7694) target = $region164
      $region163: #{skhead_apply.1} parent=159 // pred_region
        %p7697 = scmp.lt.s32.totalorder %s79, 1
        %s7698 = scalar_select %p7697, %s79, 1
        %s7699 = smul.addr %s7698, 8
        %s7700 = smul.addr %s7699, 8
        %s7701 = scalar_lea.vmem %s67, %s7700
      $region164: #{skhead_apply.1} parent=159 // pred_fallthru
        _
    $region160: #{skhead_apply.1} parent=5 // pred_fallthru
      _
  $region6: #{skhead_apply.1} parent=0 // loop_footer
    %s77 = sadd.s32 1, %s73
  $region7: #{skhead_apply.1} parent=0 // loop_footer_branch
    %72 = sbr.rel target = $region3
  $region8: #{skhead_apply.1} parent=0 // loop_exit
    _

</llo_original>
